<compile_context>
chip_gen: v7x
topology: tpu7x:2x2x1
jax: 0.10.0
libtpu: 0.0.40
codegen_flags: <defaults>
</compile_context>

<pallas_src>
import functools
import math

import jax
import jax.numpy as jnp
import numpy as np
from jax.experimental import pallas as pl
from jax.experimental.pallas import tpu as pltpu

_EPS = 1e-5


def _taps9(x, *, H, W, C, first_col, last_col):
    """Build the (H*W, 9C) bf16 conv LHS for a reflection-padded 3x3 conv.

    K ordering is (ky, kx, ci) to match w.reshape(9C, C) of an HWIO weight.
    x: (H, W, C) float32.
    first_col / last_col: (1, W, C) bool masks (hoisted by the caller).
    """
    # Reflection pad along H (row -1 -> row 1, row H -> row H-2): whole-slab
    # copies on the untiled major axis.
    xr = jnp.concatenate([x[1:2], x, x[H - 2:H - 1]], axis=0)            # (H+2, W, C)
    Hp = H + 2
    flat = xr.reshape(Hp * W, C)
    # dx = -1 / +1 taps via XLU sublane rotation of the flattened slab; the
    # cross-row wrap only pollutes the boundary columns, which are overwritten
    # by the reflection fix below.
    left = pltpu.roll(flat, 1, 0).reshape(Hp, W, C)                      # x[.., j-1]
    right = pltpu.roll(flat, Hp * W - 1, 0).reshape(Hp, W, C)            # x[.., j+1]
    left = jnp.where(first_col, xr[:, 1:2, :], left)                     # col -1 -> col 1
    right = jnp.where(last_col, xr[:, W - 2:W - 1, :], right)            # col W  -> col W-2
    taps = (left.astype(jnp.bfloat16),
            xr.astype(jnp.bfloat16),
            right.astype(jnp.bfloat16))
    # Single lane-axis concat of nine aligned (H, W, C) slices -> K = 9C.
    cat9 = jnp.concatenate([t[dy:dy + H] for dy in range(3) for t in taps],
                           axis=-1)                                      # (H, W, 9C)
    return cat9.reshape(H * W, 9 * C)


def _instnorm(acc, *, n_pix, relu):
    """InstanceNorm2d (affine=False, biased variance, eps=1e-5), two-pass
    variance for numerical safety.  acc: (H*W, C) float32."""
    inv_n = 1.0 / float(n_pix)
    mean = jnp.sum(acc, axis=0, keepdims=True) * inv_n
    d = acc - mean
    var = jnp.sum(d * d, axis=0, keepdims=True) * inv_n
    y = d * jax.lax.rsqrt(var + _EPS)
    if relu:
        y = jnp.maximum(y, 0.0)
    return y


def _transformer_kernel(v_ref, x_ref, w1_ref, w2_ref, o_ref, *, H, W, C, S):
    """Fused Transformer forward for one batch element:
       out = base * x + sum_s v_s * conv_block_s(x)
    with base = sum of all active style weights (residual + identity terms).

    v_ref : SMEM (S+1,) f32 = [base, v_0, ..., v_{S-1}]
    w1_ref: VMEM (9C, S*C)  bf16  (all styles' conv1, batched along N)
    w2_ref: VMEM (S, 9C, C) bf16
    """
    x = x_ref[0]                                            # (H, W, C) f32
    n_pix = H * W

    # Hoisted boundary masks for the reflection fix (reused by every _taps9).
    col = jax.lax.broadcasted_iota(jnp.int32, (1, W, C), 1)
    first_col = col == 0
    last_col = col == (W - 1)

    # conv1 LHS is shared by every style; conv1 itself is ONE matmul with
    # N = S*C (fills the wide MXU when S >= 2).
    lhs1 = _taps9(x, H=H, W=W, C=C, first_col=first_col, last_col=last_col)
    acc1 = jnp.dot(lhs1, w1_ref[...], preferred_element_type=jnp.float32)  # (H*W, S*C)

    total = v_ref[0] * x.reshape(n_pix, C)                  # base * x, f32
    for s in range(S):                                      # static unroll over active styles
        h = _instnorm(acc1[:, s * C:(s + 1) * C], n_pix=n_pix, relu=True)
        lhs2 = _taps9(h.reshape(H, W, C), H=H, W=W, C=C,
                      first_col=first_col, last_col=last_col)
        acc2 = jnp.dot(lhs2, w2_ref[s], preferred_element_type=jnp.float32)
        y = _instnorm(acc2, n_pix=n_pix, relu=False)
        total = total + v_ref[1 + s] * y
    o_ref[0] = total.reshape(H, W, C).astype(o_ref.dtype)


def transformer_forward(x_nchw, style_label, params_list):
    """Mirrors Transformer.forward: x = (image NCHW, style labels).
    style_label must be concrete host values (PyTorch uses data-dependent
    `if v:` to skip inactive styles, so the *active set* is static); the
    blend *values* are passed to the kernel through SMEM, so changing them
    does not retrace."""
    B, C, H, W = x_nchw.shape
    n_blocks = len(params_list)                             # index n_blocks == Identity
    x = jnp.transpose(x_nchw, (0, 2, 3, 1))                 # NCHW -> NHWC, once

    active = [(i, float(v)) for i, v in enumerate(style_label) if v]
    base = sum(v for _, v in active)                        # every active term contributes v*x
    blocks = [(i, v) for i, v in active if i < n_blocks]    # residual-block styles only

    if not blocks:                                          # only Identity active
        out = base * x
    else:
        S = len(blocks)
        # HWIO (3,3,C,C) -> (9C, C); conv1 weights concatenated along N across
        # styles -> (9C, S*C).  bf16 on the host side halves the weight DMA.
        # Conv bias is intentionally dropped: a per-channel constant is exactly
        # cancelled by InstanceNorm(affine=False).
        w1 = jnp.concatenate(
            [params_list[i]["w1"].reshape(9 * C, C) for i, _ in blocks],
            axis=-1).astype(jnp.bfloat16)                   # (9C, S*C)
        w2 = jnp.stack(
            [params_list[i]["w2"].reshape(9 * C, C) for i, _ in blocks]
        ).astype(jnp.bfloat16)                              # (S, 9C, C)
        vvec = jnp.asarray([base] + [v for _, v in blocks], dtype=jnp.float32)

        kernel = functools.partial(_transformer_kernel, H=H, W=W, C=C, S=S)
        out = pl.pallas_call(
            kernel,
            out_shape=jax.ShapeDtypeStruct((B, H, W, C), jnp.float32),
            grid=(B,),
            in_specs=[
                # style blend weights: tiny f32 vector, lives in SMEM.
                pl.BlockSpec(memory_space=pltpu.MemorySpace.SMEM),
                pl.BlockSpec((1, H, W, C), lambda b: (b, 0, 0, 0)),
                # constant index_maps: weight tiles DMA'd once, resident across
                # all grid steps.
                pl.BlockSpec((9 * C, S * C), lambda b: (0, 0)),
                pl.BlockSpec((S, 9 * C, C), lambda b: (0, 0, 0)),
            ],
            out_specs=pl.BlockSpec((1, H, W, C), lambda b: (b, 0, 0, 0)),
            compiler_params=pltpu.CompilerParams(
                dimension_semantics=("parallel",),
                vmem_limit_bytes=48 * 1024 * 1024),
        )(vvec, x, w1, w2)
    return jnp.transpose(out, (0, 3, 1, 2))                 # NHWC -> NCHW


# ---------------------------------------------------------------------------
# Pure-JAX reference (f32 HIGHEST; keeps the conv bias to check that dropping
# it in the kernel is a mathematical no-op under InstanceNorm(affine=False)).
# ---------------------------------------------------------------------------
def _ref_conv_in(x, w, b, relu):
    xp = jnp.pad(x, ((0, 0), (1, 1), (1, 1), (0, 0)), mode="reflect")
    y = jax.lax.conv_general_dilated(
        xp, w, (1, 1), "VALID",
        dimension_numbers=("NHWC", "HWIO", "NHWC"),
        precision=jax.lax.Precision.HIGHEST) + b
    mean = jnp.mean(y, axis=(1, 2), keepdims=True)
    var = jnp.mean((y - mean) ** 2, axis=(1, 2), keepdims=True)
    y = (y - mean) * jax.lax.rsqrt(var + _EPS)
    return jnp.maximum(y, 0.0) if relu else y


def _ref_forward(x_nchw, style_label, params_list):
    x = jnp.transpose(x_nchw, (0, 2, 3, 1))
    n_blocks = len(params_list)
    total = None
    for i, v in enumerate(style_label):
        if not v:
            continue
        v = float(v)
        if i < n_blocks:
            p = params_list[i]
            y = _ref_conv_in(x, p["w1"], p["b1"], True)
            y = x + _ref_conv_in(y, p["w2"], p["b2"], False)
        else:
            y = x
        yi = y * v
        total = yi if total is None else total + yi
    return jnp.transpose(total, (0, 3, 1, 2))


# ---------------------------------------------------------------------------
if __name__ == "__main__":
    n_styles, ngf = 3, 32
    C = ngf * 4                    # in_features of each ResidualBlock = 128
    B, H, W = 2, 16, 16

    key = jax.random.PRNGKey(0)
    keys = jax.random.split(key, 1 + 4 * n_styles)
    x = jax.random.normal(keys[0], (B, C, H, W), jnp.float32)

    fan = 9 * C
    params_list = []
    k = 1
    for _ in range(n_styles):
        p = {
            "w1": jax.random.normal(keys[k + 0], (3, 3, C, C), jnp.float32) / math.sqrt(fan),
            "b1": jax.random.normal(keys[k + 1], (C,), jnp.float32) * 0.01,
            "w2": jax.random.normal(keys[k + 2], (3, 3, C, C), jnp.float32) / math.sqrt(fan),
            "b2": jax.random.normal(keys[k + 3], (C,), jnp.float32) * 0.01,
        }
        params_list.append(p)
        k += 4

    # auto_id=True -> len(transformers) == n_styles + 1; last entry is Identity.
    # styles 0 and 2 active (exercises the N = S*C MXU batching with S = 2),
    # style 1 inactive (skipped like `if v`), Identity weighted 0.5.
    style_label = np.array([1.0, 0.0, 0.7, 0.5], dtype=np.float32)

    out = transformer_forward(x, style_label, params_list)
    out = jax.block_until_ready(out)

    ref = jax.block_until_ready(_ref_forward(x, style_label, params_list))
    # Kernel uses bf16 MXU inputs with f32 accumulation; reference is f32 HIGHEST.
    np.testing.assert_allclose(np.asarray(out), np.asarray(ref),
                               rtol=2e-2, atol=5e-2)
    print("KERNEL_OK")
</pallas_src>

<mosaic_0001>
module attributes {stable_mosaic.version = 11 : i64} {
  func.func @_transformer_kernel(%arg0: i32, %arg1: memref<3xf32, #tpu.memory_space<smem>>, %arg2: memref<1x16x16x128xf32, #tpu.memory_space<vmem>>, %arg3: memref<1152x256xbf16, #tpu.memory_space<vmem>>, %arg4: memref<2x1152x128xbf16, #tpu.memory_space<vmem>>, %arg5: memref<1x16x16x128xf32, #tpu.memory_space<vmem>>) attributes {dimension_semantics = [#tpu.dimension_semantics<parallel>], iteration_bounds = array<i64: 2>, scalar_prefetch = 0 : i64, scratch_operands = 0 : i64, tpu.core_type = #tpu.core_type<tc>, window_params = [{transform_indices = @transform_0, window_bounds = array<i64: 3>}, {transform_indices = @transform_1, window_bounds = array<i64: 1, 16, 16, 128>}, {pipeline_mode = #tpu.pipeline_mode<synchronous>, transform_indices = @transform_2, window_bounds = array<i64: 1152, 256>}, {pipeline_mode = #tpu.pipeline_mode<synchronous>, transform_indices = @transform_3, window_bounds = array<i64: 2, 1152, 128>}, {transform_indices = @transform_4, window_bounds = array<i64: 1, 16, 16, 128>}]} {
    %c0 = arith.constant 0 : index
    %c0_0 = arith.constant 0 : index
    %c0_1 = arith.constant 0 : index
    %c0_2 = arith.constant 0 : index
    %0 = vector.load %arg2[%c0, %c0_0, %c0_1, %c0_2] : memref<1x16x16x128xf32, #tpu.memory_space<vmem>>, vector<1x16x16x128xf32>
    %1 = vector.shape_cast %0 : vector<1x16x16x128xf32> to vector<16x16x128xf32>
    %2 = tpu.iota {dimensions = array<i32: 1>} : vector<1x16x128xi32>
    %c0_i32 = arith.constant 0 : i32
    %3 = vector.broadcast %c0_i32 : i32 to vector<1x16x128xi32>
    %4 = arith.cmpi eq, %2, %3 : vector<1x16x128xi32>
    %c15_i32 = arith.constant 15 : i32
    %5 = vector.broadcast %c15_i32 : i32 to vector<1x16x128xi32>
    %6 = arith.cmpi eq, %2, %5 : vector<1x16x128xi32>
    %7 = vector.extract_strided_slice %1 {offsets = [1, 0, 0], sizes = [1, 16, 128], strides = [1, 1, 1]} : vector<16x16x128xf32> to vector<1x16x128xf32>
    %8 = vector.extract_strided_slice %1 {offsets = [14, 0, 0], sizes = [1, 16, 128], strides = [1, 1, 1]} : vector<16x16x128xf32> to vector<1x16x128xf32>
    %9 = tpu.concatenate %7, %1, %8 in 0 : vector<1x16x128xf32>, vector<16x16x128xf32>, vector<1x16x128xf32> -> vector<18x16x128xf32>
    %10 = vector.shape_cast %9 : vector<18x16x128xf32> to vector<288x128xf32>
    %c1_i32 = arith.constant 1 : i32
    %11 = tpu.dynamic_rotate %10 by %c1_i32 dim 0 : vector<288x128xf32>, i32 -> vector<288x128xf32>
    %12 = vector.shape_cast %11 : vector<288x128xf32> to vector<18x16x128xf32>
    %c287_i32 = arith.constant 287 : i32
    %13 = tpu.dynamic_rotate %10 by %c287_i32 dim 0 : vector<288x128xf32>, i32 -> vector<288x128xf32>
    %14 = vector.shape_cast %13 : vector<288x128xf32> to vector<18x16x128xf32>
    %15 = vector.extract_strided_slice %9 {offsets = [0, 1, 0], sizes = [18, 1, 128], strides = [1, 1, 1]} : vector<18x16x128xf32> to vector<18x1x128xf32>
    %16 = vector.shape_cast %4 : vector<1x16x128xi1> to vector<1x16x128xi1>
    %17 = vector.broadcast %16 : vector<1x16x128xi1> to vector<18x16x128xi1>
    %18 = vector.shape_cast %15 : vector<18x1x128xf32> to vector<18x1x128xf32>
    %19 = vector.broadcast %18 : vector<18x1x128xf32> to vector<18x16x128xf32>
    %20 = arith.select %17, %19, %12 : vector<18x16x128xi1>, vector<18x16x128xf32>
    %21 = vector.extract_strided_slice %9 {offsets = [0, 14, 0], sizes = [18, 1, 128], strides = [1, 1, 1]} : vector<18x16x128xf32> to vector<18x1x128xf32>
    %22 = vector.shape_cast %6 : vector<1x16x128xi1> to vector<1x16x128xi1>
    %23 = vector.broadcast %22 : vector<1x16x128xi1> to vector<18x16x128xi1>
    %24 = vector.shape_cast %21 : vector<18x1x128xf32> to vector<18x1x128xf32>
    %25 = vector.broadcast %24 : vector<18x1x128xf32> to vector<18x16x128xf32>
    %26 = arith.select %23, %25, %14 : vector<18x16x128xi1>, vector<18x16x128xf32>
    %27 = arith.truncf %20 : vector<18x16x128xf32> to vector<18x16x128xbf16>
    %28 = arith.truncf %9 : vector<18x16x128xf32> to vector<18x16x128xbf16>
    %29 = arith.truncf %26 : vector<18x16x128xf32> to vector<18x16x128xbf16>
    %30 = vector.extract_strided_slice %27 {offsets = [0, 0, 0], sizes = [16, 16, 128], strides = [1, 1, 1]} : vector<18x16x128xbf16> to vector<16x16x128xbf16>
    %31 = vector.extract_strided_slice %28 {offsets = [0, 0, 0], sizes = [16, 16, 128], strides = [1, 1, 1]} : vector<18x16x128xbf16> to vector<16x16x128xbf16>
    %32 = vector.extract_strided_slice %29 {offsets = [0, 0, 0], sizes = [16, 16, 128], strides = [1, 1, 1]} : vector<18x16x128xbf16> to vector<16x16x128xbf16>
    %33 = vector.extract_strided_slice %27 {offsets = [1, 0, 0], sizes = [16, 16, 128], strides = [1, 1, 1]} : vector<18x16x128xbf16> to vector<16x16x128xbf16>
    %34 = vector.extract_strided_slice %28 {offsets = [1, 0, 0], sizes = [16, 16, 128], strides = [1, 1, 1]} : vector<18x16x128xbf16> to vector<16x16x128xbf16>
    %35 = vector.extract_strided_slice %29 {offsets = [1, 0, 0], sizes = [16, 16, 128], strides = [1, 1, 1]} : vector<18x16x128xbf16> to vector<16x16x128xbf16>
    %36 = vector.extract_strided_slice %27 {offsets = [2, 0, 0], sizes = [16, 16, 128], strides = [1, 1, 1]} : vector<18x16x128xbf16> to vector<16x16x128xbf16>
    %37 = vector.extract_strided_slice %28 {offsets = [2, 0, 0], sizes = [16, 16, 128], strides = [1, 1, 1]} : vector<18x16x128xbf16> to vector<16x16x128xbf16>
    %38 = vector.extract_strided_slice %29 {offsets = [2, 0, 0], sizes = [16, 16, 128], strides = [1, 1, 1]} : vector<18x16x128xbf16> to vector<16x16x128xbf16>
    %39 = tpu.concatenate %30, %31, %32, %33, %34, %35, %36, %37, %38 in 2 : vector<16x16x128xbf16>, vector<16x16x128xbf16>, vector<16x16x128xbf16>, vector<16x16x128xbf16>, vector<16x16x128xbf16>, vector<16x16x128xbf16>, vector<16x16x128xbf16>, vector<16x16x128xbf16>, vector<16x16x128xbf16> -> vector<16x16x1152xbf16>
    %40 = vector.shape_cast %39 : vector<16x16x1152xbf16> to vector<256x1152xbf16>
    %c0_3 = arith.constant 0 : index
    %c0_4 = arith.constant 0 : index
    %41 = vector.load %arg3[%c0_3, %c0_4] : memref<1152x256xbf16, #tpu.memory_space<vmem>>, vector<1152x256xbf16>
    %cst = arith.constant dense<0.000000e+00> : vector<256x256xf32>
    %42 = tpu.matmul %40, %41, %cst {dimension_numbers = #tpu.dot_dimension_numbers<[1], [0], [0], [1], [0, 0, 1, 1], [], []>} : vector<256x1152xbf16>, vector<1152x256xbf16>, vector<256x256xf32> -> vector<256x256xf32>
    %c0_5 = arith.constant 0 : index
    %43 = memref.load %arg1[%c0_5] : memref<3xf32, #tpu.memory_space<smem>>
    %44 = vector.shape_cast %1 : vector<16x16x128xf32> to vector<256x128xf32>
    %45 = vector.broadcast %43 : f32 to vector<256x128xf32>
    %46 = arith.mulf %45, %44 : vector<256x128xf32>
    %47 = vector.extract_strided_slice %42 {offsets = [0, 0], sizes = [256, 128], strides = [1, 1]} : vector<256x256xf32> to vector<256x128xf32>
    %cst_6 = arith.constant dense<0.000000e+00> : vector<128xf32>
    %48 = vector.multi_reduction <add>, %47, %cst_6 [0] : vector<256x128xf32> to vector<128xf32>
    %49 = vector.shape_cast %48 : vector<128xf32> to vector<1x128xf32>
    %cst_7 = arith.constant 3.906250e-03 : f32
    %50 = vector.broadcast %cst_7 : f32 to vector<1x128xf32>
    %51 = arith.mulf %49, %50 : vector<1x128xf32>
    %52 = vector.broadcast %51 : vector<1x128xf32> to vector<256x128xf32>
    %53 = arith.subf %47, %52 : vector<256x128xf32>
    %54 = arith.mulf %53, %53 : vector<256x128xf32>
    %cst_8 = arith.constant dense<0.000000e+00> : vector<128xf32>
    %55 = vector.multi_reduction <add>, %54, %cst_8 [0] : vector<256x128xf32> to vector<128xf32>
    %56 = vector.shape_cast %55 : vector<128xf32> to vector<1x128xf32>
    %cst_9 = arith.constant 3.906250e-03 : f32
    %57 = vector.broadcast %cst_9 : f32 to vector<1x128xf32>
    %58 = arith.mulf %56, %57 : vector<1x128xf32>
    %cst_10 = arith.constant 9.99999974E-6 : f32
    %59 = vector.broadcast %cst_10 : f32 to vector<1x128xf32>
    %60 = arith.addf %58, %59 : vector<1x128xf32>
    %61 = math.rsqrt %60 : vector<1x128xf32>
    %62 = vector.broadcast %61 : vector<1x128xf32> to vector<256x128xf32>
    %63 = arith.mulf %53, %62 : vector<256x128xf32>
    %cst_11 = arith.constant 0.000000e+00 : f32
    %64 = vector.broadcast %cst_11 : f32 to vector<256x128xf32>
    %65 = arith.maximumf %63, %64 : vector<256x128xf32>
    %66 = vector.shape_cast %65 : vector<256x128xf32> to vector<16x16x128xf32>
    %67 = vector.extract_strided_slice %66 {offsets = [1, 0, 0], sizes = [1, 16, 128], strides = [1, 1, 1]} : vector<16x16x128xf32> to vector<1x16x128xf32>
    %68 = vector.extract_strided_slice %66 {offsets = [14, 0, 0], sizes = [1, 16, 128], strides = [1, 1, 1]} : vector<16x16x128xf32> to vector<1x16x128xf32>
    %69 = tpu.concatenate %67, %66, %68 in 0 : vector<1x16x128xf32>, vector<16x16x128xf32>, vector<1x16x128xf32> -> vector<18x16x128xf32>
    %70 = vector.shape_cast %69 : vector<18x16x128xf32> to vector<288x128xf32>
    %c1_i32_12 = arith.constant 1 : i32
    %71 = tpu.dynamic_rotate %70 by %c1_i32_12 dim 0 : vector<288x128xf32>, i32 -> vector<288x128xf32>
    %72 = vector.shape_cast %71 : vector<288x128xf32> to vector<18x16x128xf32>
    %c287_i32_13 = arith.constant 287 : i32
    %73 = tpu.dynamic_rotate %70 by %c287_i32_13 dim 0 : vector<288x128xf32>, i32 -> vector<288x128xf32>
    %74 = vector.shape_cast %73 : vector<288x128xf32> to vector<18x16x128xf32>
    %75 = vector.extract_strided_slice %69 {offsets = [0, 1, 0], sizes = [18, 1, 128], strides = [1, 1, 1]} : vector<18x16x128xf32> to vector<18x1x128xf32>
    %76 = vector.shape_cast %4 : vector<1x16x128xi1> to vector<1x16x128xi1>
    %77 = vector.broadcast %76 : vector<1x16x128xi1> to vector<18x16x128xi1>
    %78 = vector.shape_cast %75 : vector<18x1x128xf32> to vector<18x1x128xf32>
    %79 = vector.broadcast %78 : vector<18x1x128xf32> to vector<18x16x128xf32>
    %80 = arith.select %77, %79, %72 : vector<18x16x128xi1>, vector<18x16x128xf32>
    %81 = vector.extract_strided_slice %69 {offsets = [0, 14, 0], sizes = [18, 1, 128], strides = [1, 1, 1]} : vector<18x16x128xf32> to vector<18x1x128xf32>
    %82 = vector.shape_cast %6 : vector<1x16x128xi1> to vector<1x16x128xi1>
    %83 = vector.broadcast %82 : vector<1x16x128xi1> to vector<18x16x128xi1>
    %84 = vector.shape_cast %81 : vector<18x1x128xf32> to vector<18x1x128xf32>
    %85 = vector.broadcast %84 : vector<18x1x128xf32> to vector<18x16x128xf32>
    %86 = arith.select %83, %85, %74 : vector<18x16x128xi1>, vector<18x16x128xf32>
    %87 = arith.truncf %80 : vector<18x16x128xf32> to vector<18x16x128xbf16>
    %88 = arith.truncf %69 : vector<18x16x128xf32> to vector<18x16x128xbf16>
    %89 = arith.truncf %86 : vector<18x16x128xf32> to vector<18x16x128xbf16>
    %90 = vector.extract_strided_slice %87 {offsets = [0, 0, 0], sizes = [16, 16, 128], strides = [1, 1, 1]} : vector<18x16x128xbf16> to vector<16x16x128xbf16>
    %91 = vector.extract_strided_slice %88 {offsets = [0, 0, 0], sizes = [16, 16, 128], strides = [1, 1, 1]} : vector<18x16x128xbf16> to vector<16x16x128xbf16>
    %92 = vector.extract_strided_slice %89 {offsets = [0, 0, 0], sizes = [16, 16, 128], strides = [1, 1, 1]} : vector<18x16x128xbf16> to vector<16x16x128xbf16>
    %93 = vector.extract_strided_slice %87 {offsets = [1, 0, 0], sizes = [16, 16, 128], strides = [1, 1, 1]} : vector<18x16x128xbf16> to vector<16x16x128xbf16>
    %94 = vector.extract_strided_slice %88 {offsets = [1, 0, 0], sizes = [16, 16, 128], strides = [1, 1, 1]} : vector<18x16x128xbf16> to vector<16x16x128xbf16>
    %95 = vector.extract_strided_slice %89 {offsets = [1, 0, 0], sizes = [16, 16, 128], strides = [1, 1, 1]} : vector<18x16x128xbf16> to vector<16x16x128xbf16>
    %96 = vector.extract_strided_slice %87 {offsets = [2, 0, 0], sizes = [16, 16, 128], strides = [1, 1, 1]} : vector<18x16x128xbf16> to vector<16x16x128xbf16>
    %97 = vector.extract_strided_slice %88 {offsets = [2, 0, 0], sizes = [16, 16, 128], strides = [1, 1, 1]} : vector<18x16x128xbf16> to vector<16x16x128xbf16>
    %98 = vector.extract_strided_slice %89 {offsets = [2, 0, 0], sizes = [16, 16, 128], strides = [1, 1, 1]} : vector<18x16x128xbf16> to vector<16x16x128xbf16>
    %99 = tpu.concatenate %90, %91, %92, %93, %94, %95, %96, %97, %98 in 2 : vector<16x16x128xbf16>, vector<16x16x128xbf16>, vector<16x16x128xbf16>, vector<16x16x128xbf16>, vector<16x16x128xbf16>, vector<16x16x128xbf16>, vector<16x16x128xbf16>, vector<16x16x128xbf16>, vector<16x16x128xbf16> -> vector<16x16x1152xbf16>
    %100 = vector.shape_cast %99 : vector<16x16x1152xbf16> to vector<256x1152xbf16>
    %c0_14 = arith.constant 0 : index
    %c0_15 = arith.constant 0 : index
    %c0_16 = arith.constant 0 : index
    %101 = vector.load %arg4[%c0_14, %c0_15, %c0_16] : memref<2x1152x128xbf16, #tpu.memory_space<vmem>>, vector<1x1152x128xbf16>
    %102 = vector.shape_cast %101 : vector<1x1152x128xbf16> to vector<1152x128xbf16>
    %cst_17 = arith.constant dense<0.000000e+00> : vector<256x128xf32>
    %103 = tpu.matmul %100, %102, %cst_17 {dimension_numbers = #tpu.dot_dimension_numbers<[1], [0], [0], [1], [0, 0, 1, 1], [], []>} : vector<256x1152xbf16>, vector<1152x128xbf16>, vector<256x128xf32> -> vector<256x128xf32>
    %cst_18 = arith.constant dense<0.000000e+00> : vector<128xf32>
    %104 = vector.multi_reduction <add>, %103, %cst_18 [0] : vector<256x128xf32> to vector<128xf32>
    %105 = vector.shape_cast %104 : vector<128xf32> to vector<1x128xf32>
    %cst_19 = arith.constant 3.906250e-03 : f32
    %106 = vector.broadcast %cst_19 : f32 to vector<1x128xf32>
    %107 = arith.mulf %105, %106 : vector<1x128xf32>
    %108 = vector.broadcast %107 : vector<1x128xf32> to vector<256x128xf32>
    %109 = arith.subf %103, %108 : vector<256x128xf32>
    %110 = arith.mulf %109, %109 : vector<256x128xf32>
    %cst_20 = arith.constant dense<0.000000e+00> : vector<128xf32>
    %111 = vector.multi_reduction <add>, %110, %cst_20 [0] : vector<256x128xf32> to vector<128xf32>
    %112 = vector.shape_cast %111 : vector<128xf32> to vector<1x128xf32>
    %cst_21 = arith.constant 3.906250e-03 : f32
    %113 = vector.broadcast %cst_21 : f32 to vector<1x128xf32>
    %114 = arith.mulf %112, %113 : vector<1x128xf32>
    %cst_22 = arith.constant 9.99999974E-6 : f32
    %115 = vector.broadcast %cst_22 : f32 to vector<1x128xf32>
    %116 = arith.addf %114, %115 : vector<1x128xf32>
    %117 = math.rsqrt %116 : vector<1x128xf32>
    %118 = vector.broadcast %117 : vector<1x128xf32> to vector<256x128xf32>
    %119 = arith.mulf %109, %118 : vector<256x128xf32>
    %c1 = arith.constant 1 : index
    %120 = memref.load %arg1[%c1] : memref<3xf32, #tpu.memory_space<smem>>
    %121 = vector.broadcast %120 : f32 to vector<256x128xf32>
    %122 = arith.mulf %121, %119 : vector<256x128xf32>
    %123 = arith.addf %46, %122 : vector<256x128xf32>
    %124 = vector.extract_strided_slice %42 {offsets = [0, 128], sizes = [256, 128], strides = [1, 1]} : vector<256x256xf32> to vector<256x128xf32>
    %cst_23 = arith.constant dense<0.000000e+00> : vector<128xf32>
    %125 = vector.multi_reduction <add>, %124, %cst_23 [0] : vector<256x128xf32> to vector<128xf32>
    %126 = vector.shape_cast %125 : vector<128xf32> to vector<1x128xf32>
    %cst_24 = arith.constant 3.906250e-03 : f32
    %127 = vector.broadcast %cst_24 : f32 to vector<1x128xf32>
    %128 = arith.mulf %126, %127 : vector<1x128xf32>
    %129 = vector.broadcast %128 : vector<1x128xf32> to vector<256x128xf32>
    %130 = arith.subf %124, %129 : vector<256x128xf32>
    %131 = arith.mulf %130, %130 : vector<256x128xf32>
    %cst_25 = arith.constant dense<0.000000e+00> : vector<128xf32>
    %132 = vector.multi_reduction <add>, %131, %cst_25 [0] : vector<256x128xf32> to vector<128xf32>
    %133 = vector.shape_cast %132 : vector<128xf32> to vector<1x128xf32>
    %cst_26 = arith.constant 3.906250e-03 : f32
    %134 = vector.broadcast %cst_26 : f32 to vector<1x128xf32>
    %135 = arith.mulf %133, %134 : vector<1x128xf32>
    %cst_27 = arith.constant 9.99999974E-6 : f32
    %136 = vector.broadcast %cst_27 : f32 to vector<1x128xf32>
    %137 = arith.addf %135, %136 : vector<1x128xf32>
    %138 = math.rsqrt %137 : vector<1x128xf32>
    %139 = vector.broadcast %138 : vector<1x128xf32> to vector<256x128xf32>
    %140 = arith.mulf %130, %139 : vector<256x128xf32>
    %cst_28 = arith.constant 0.000000e+00 : f32
    %141 = vector.broadcast %cst_28 : f32 to vector<256x128xf32>
    %142 = arith.maximumf %140, %141 : vector<256x128xf32>
    %143 = vector.shape_cast %142 : vector<256x128xf32> to vector<16x16x128xf32>
    %144 = vector.extract_strided_slice %143 {offsets = [1, 0, 0], sizes = [1, 16, 128], strides = [1, 1, 1]} : vector<16x16x128xf32> to vector<1x16x128xf32>
    %145 = vector.extract_strided_slice %143 {offsets = [14, 0, 0], sizes = [1, 16, 128], strides = [1, 1, 1]} : vector<16x16x128xf32> to vector<1x16x128xf32>
    %146 = tpu.concatenate %144, %143, %145 in 0 : vector<1x16x128xf32>, vector<16x16x128xf32>, vector<1x16x128xf32> -> vector<18x16x128xf32>
    %147 = vector.shape_cast %146 : vector<18x16x128xf32> to vector<288x128xf32>
    %c1_i32_29 = arith.constant 1 : i32
    %148 = tpu.dynamic_rotate %147 by %c1_i32_29 dim 0 : vector<288x128xf32>, i32 -> vector<288x128xf32>
    %149 = vector.shape_cast %148 : vector<288x128xf32> to vector<18x16x128xf32>
    %c287_i32_30 = arith.constant 287 : i32
    %150 = tpu.dynamic_rotate %147 by %c287_i32_30 dim 0 : vector<288x128xf32>, i32 -> vector<288x128xf32>
    %151 = vector.shape_cast %150 : vector<288x128xf32> to vector<18x16x128xf32>
    %152 = vector.extract_strided_slice %146 {offsets = [0, 1, 0], sizes = [18, 1, 128], strides = [1, 1, 1]} : vector<18x16x128xf32> to vector<18x1x128xf32>
    %153 = vector.shape_cast %4 : vector<1x16x128xi1> to vector<1x16x128xi1>
    %154 = vector.broadcast %153 : vector<1x16x128xi1> to vector<18x16x128xi1>
    %155 = vector.shape_cast %152 : vector<18x1x128xf32> to vector<18x1x128xf32>
    %156 = vector.broadcast %155 : vector<18x1x128xf32> to vector<18x16x128xf32>
    %157 = arith.select %154, %156, %149 : vector<18x16x128xi1>, vector<18x16x128xf32>
    %158 = vector.extract_strided_slice %146 {offsets = [0, 14, 0], sizes = [18, 1, 128], strides = [1, 1, 1]} : vector<18x16x128xf32> to vector<18x1x128xf32>
    %159 = vector.shape_cast %6 : vector<1x16x128xi1> to vector<1x16x128xi1>
    %160 = vector.broadcast %159 : vector<1x16x128xi1> to vector<18x16x128xi1>
    %161 = vector.shape_cast %158 : vector<18x1x128xf32> to vector<18x1x128xf32>
    %162 = vector.broadcast %161 : vector<18x1x128xf32> to vector<18x16x128xf32>
    %163 = arith.select %160, %162, %151 : vector<18x16x128xi1>, vector<18x16x128xf32>
    %164 = arith.truncf %157 : vector<18x16x128xf32> to vector<18x16x128xbf16>
    %165 = arith.truncf %146 : vector<18x16x128xf32> to vector<18x16x128xbf16>
    %166 = arith.truncf %163 : vector<18x16x128xf32> to vector<18x16x128xbf16>
    %167 = vector.extract_strided_slice %164 {offsets = [0, 0, 0], sizes = [16, 16, 128], strides = [1, 1, 1]} : vector<18x16x128xbf16> to vector<16x16x128xbf16>
    %168 = vector.extract_strided_slice %165 {offsets = [0, 0, 0], sizes = [16, 16, 128], strides = [1, 1, 1]} : vector<18x16x128xbf16> to vector<16x16x128xbf16>
    %169 = vector.extract_strided_slice %166 {offsets = [0, 0, 0], sizes = [16, 16, 128], strides = [1, 1, 1]} : vector<18x16x128xbf16> to vector<16x16x128xbf16>
    %170 = vector.extract_strided_slice %164 {offsets = [1, 0, 0], sizes = [16, 16, 128], strides = [1, 1, 1]} : vector<18x16x128xbf16> to vector<16x16x128xbf16>
    %171 = vector.extract_strided_slice %165 {offsets = [1, 0, 0], sizes = [16, 16, 128], strides = [1, 1, 1]} : vector<18x16x128xbf16> to vector<16x16x128xbf16>
    %172 = vector.extract_strided_slice %166 {offsets = [1, 0, 0], sizes = [16, 16, 128], strides = [1, 1, 1]} : vector<18x16x128xbf16> to vector<16x16x128xbf16>
    %173 = vector.extract_strided_slice %164 {offsets = [2, 0, 0], sizes = [16, 16, 128], strides = [1, 1, 1]} : vector<18x16x128xbf16> to vector<16x16x128xbf16>
    %174 = vector.extract_strided_slice %165 {offsets = [2, 0, 0], sizes = [16, 16, 128], strides = [1, 1, 1]} : vector<18x16x128xbf16> to vector<16x16x128xbf16>
    %175 = vector.extract_strided_slice %166 {offsets = [2, 0, 0], sizes = [16, 16, 128], strides = [1, 1, 1]} : vector<18x16x128xbf16> to vector<16x16x128xbf16>
    %176 = tpu.concatenate %167, %168, %169, %170, %171, %172, %173, %174, %175 in 2 : vector<16x16x128xbf16>, vector<16x16x128xbf16>, vector<16x16x128xbf16>, vector<16x16x128xbf16>, vector<16x16x128xbf16>, vector<16x16x128xbf16>, vector<16x16x128xbf16>, vector<16x16x128xbf16>, vector<16x16x128xbf16> -> vector<16x16x1152xbf16>
    %177 = vector.shape_cast %176 : vector<16x16x1152xbf16> to vector<256x1152xbf16>
    %c1_31 = arith.constant 1 : index
    %c0_32 = arith.constant 0 : index
    %c0_33 = arith.constant 0 : index
    %178 = vector.load %arg4[%c1_31, %c0_32, %c0_33] : memref<2x1152x128xbf16, #tpu.memory_space<vmem>>, vector<1x1152x128xbf16>
    %179 = vector.shape_cast %178 : vector<1x1152x128xbf16> to vector<1152x128xbf16>
    %cst_34 = arith.constant dense<0.000000e+00> : vector<256x128xf32>
    %180 = tpu.matmul %177, %179, %cst_34 {dimension_numbers = #tpu.dot_dimension_numbers<[1], [0], [0], [1], [0, 0, 1, 1], [], []>} : vector<256x1152xbf16>, vector<1152x128xbf16>, vector<256x128xf32> -> vector<256x128xf32>
    %cst_35 = arith.constant dense<0.000000e+00> : vector<128xf32>
    %181 = vector.multi_reduction <add>, %180, %cst_35 [0] : vector<256x128xf32> to vector<128xf32>
    %182 = vector.shape_cast %181 : vector<128xf32> to vector<1x128xf32>
    %cst_36 = arith.constant 3.906250e-03 : f32
    %183 = vector.broadcast %cst_36 : f32 to vector<1x128xf32>
    %184 = arith.mulf %182, %183 : vector<1x128xf32>
    %185 = vector.broadcast %184 : vector<1x128xf32> to vector<256x128xf32>
    %186 = arith.subf %180, %185 : vector<256x128xf32>
    %187 = arith.mulf %186, %186 : vector<256x128xf32>
    %cst_37 = arith.constant dense<0.000000e+00> : vector<128xf32>
    %188 = vector.multi_reduction <add>, %187, %cst_37 [0] : vector<256x128xf32> to vector<128xf32>
    %189 = vector.shape_cast %188 : vector<128xf32> to vector<1x128xf32>
    %cst_38 = arith.constant 3.906250e-03 : f32
    %190 = vector.broadcast %cst_38 : f32 to vector<1x128xf32>
    %191 = arith.mulf %189, %190 : vector<1x128xf32>
    %cst_39 = arith.constant 9.99999974E-6 : f32
    %192 = vector.broadcast %cst_39 : f32 to vector<1x128xf32>
    %193 = arith.addf %191, %192 : vector<1x128xf32>
    %194 = math.rsqrt %193 : vector<1x128xf32>
    %195 = vector.broadcast %194 : vector<1x128xf32> to vector<256x128xf32>
    %196 = arith.mulf %186, %195 : vector<256x128xf32>
    %c2 = arith.constant 2 : index
    %197 = memref.load %arg1[%c2] : memref<3xf32, #tpu.memory_space<smem>>
    %198 = vector.broadcast %197 : f32 to vector<256x128xf32>
    %199 = arith.mulf %198, %196 : vector<256x128xf32>
    %200 = arith.addf %123, %199 : vector<256x128xf32>
    %201 = vector.shape_cast %200 : vector<256x128xf32> to vector<16x16x128xf32>
    %c0_40 = arith.constant 0 : index
    %c0_41 = arith.constant 0 : index
    %c0_42 = arith.constant 0 : index
    %c0_43 = arith.constant 0 : index
    %202 = vector.load %arg5[%c0_40, %c0_41, %c0_42, %c0_43] : memref<1x16x16x128xf32, #tpu.memory_space<vmem>>, vector<1x16x16x128xf32>
    %203 = vector.shape_cast %202 : vector<1x16x16x128xf32> to vector<16x16x128xf32>
    %204 = vector.shape_cast %201 : vector<16x16x128xf32> to vector<1x16x16x128xf32>
    tpu.vector_store %arg5[%c0_40, %c0_41, %c0_42, %c0_43], %204 {strides = array<i32>} : memref<1x16x16x128xf32, #tpu.memory_space<vmem>>, vector<1x16x16x128xf32>,
    return
  }
  func.func @transform_0(%arg0: i32) -> i32 {
    %c0_i32 = arith.constant 0 : i32
    %c0_i32_0 = arith.constant 0 : i32
    return %c0_i32 : i32
  }
  func.func @transform_1(%arg0: i32) -> (i32, i32, i32, i32) {
    %c0_i32 = arith.constant 0 : i32
    %c0_i32_0 = arith.constant 0 : i32
    %c0_i32_1 = arith.constant 0 : i32
    %c0_i32_2 = arith.constant 0 : i32
    return %arg0, %c0_i32, %c0_i32_0, %c0_i32_1 : i32, i32, i32, i32
  }
  func.func @transform_2(%arg0: i32) -> (i32, i32) {
    %c0_i32 = arith.constant 0 : i32
    %c0_i32_0 = arith.constant 0 : i32
    %c0_i32_1 = arith.constant 0 : i32
    return %c0_i32, %c0_i32_0 : i32, i32
  }
  func.func @transform_3(%arg0: i32) -> (i32, i32, i32) {
    %c0_i32 = arith.constant 0 : i32
    %c0_i32_0 = arith.constant 0 : i32
    %c0_i32_1 = arith.constant 0 : i32
    %c0_i32_2 = arith.constant 0 : i32
    return %c0_i32, %c0_i32_0, %c0_i32_1 : i32, i32, i32
  }
  func.func @transform_4(%arg0: i32) -> (i32, i32, i32, i32) {
    %c0_i32 = arith.constant 0 : i32
    %c0_i32_0 = arith.constant 0 : i32
    %c0_i32_1 = arith.constant 0 : i32
    %c0_i32_2 = arith.constant 0 : i32
    return %arg0, %c0_i32, %c0_i32_0, %c0_i32_1 : i32, i32, i32, i32
  }
}

</mosaic_0001>

<llo_original>
// kernel: tpu_custom_call.1
$region0: #{tpu_custom_call.1}
  #allocation0 [shape = 'u32[]', space=smem, size = 0x4, offset = 0x4, fixed_abs, tag = 'smem constant byte address 0x4 - core index']
  #allocation1 [shape = 'u32[144,128]{1,0:T(1,128)}', space=vmem, size = 0x12000, scoped, tag = 'internal scratch']
  %s0 = inlined_call_operand.hbm [shape: f32[3], index: 0, kind: input, shape index: {}]
  %s1 = inlined_call_operand.hbm [shape: f32[2,16,16,128], index: 1, kind: input, shape index: {}]
  %s2 = inlined_call_operand.hbm [shape: bf16[1152,256], index: 2, kind: input, shape index: {}]
  %s3 = inlined_call_operand.hbm [shape: bf16[2,1152,128], index: 3, kind: input, shape index: {}]
  %s4 = inlined_call_operand.hbm [shape: f32[2,16,16,128], index: 4, kind: output, shape index: {}]
  %s5 = sld [smem:[#allocation0]]
  $region65: #{tpu_custom_call.1} parent=0
    _
  %s7 = ssub.s32 1, %s5
  %s8 = scalar_select 0, %s7, %s5
  $region1: #{tpu_custom_call.1} parent=0
    #allocation2 [shape = 'u8[512]{0}', space=smem, size = 0x200, scoped, tag = 'input window, operand 0, single buffered']
    #allocation3 [shape = 's32[2]{0}', space=sflag, size = 0x8, scoped, tag = 'scoped memory for tpu_custom_call.1']
    #allocation4 [shape = 's32[2]{0}', space=sflag, size = 0x8, scoped, tag = 'scoped memory for tpu_custom_call.1']
    #allocation5 [shape = 's32[2]{0}', space=sflag, size = 0x8, scoped, tag = 'scoped memory for tpu_custom_call.1']
    #allocation6 [shape = 'u8[262144]{0}', space=vmem, size = 0x40000, scoped, tag = 'input window, operand 1']
    #allocation7 [shape = 'u8[589824]{0}', space=vmem, size = 0x90000, scoped, tag = 'input window, operand 2, single buffered']
    #allocation8 [shape = 's32[1]{0}', space=sflag, size = 0x4, scoped, tag = 'scoped memory for tpu_custom_call.1']
    #allocation9 [shape = 'u8[589824]{0}', space=vmem, size = 0x90000, scoped, tag = 'input window, operand 3, single buffered']
    #allocation10 [shape = 'u8[262144]{0}', space=vmem, size = 0x40000, scoped, tag = 'output window, operand 0']
    %9 = vsyncpa [#allocation5], 0
    %10 = vsyncpa [#allocation3], 0
    %s11 = scalar_lea.sflag [#allocation3], 1
    %12 = vsyncpa %s11, 0
    %13 = vsyncpa [#allocation8], 0
    %14 = vsyncpa [#allocation4], 0
    %s15 = scalar_lea.sflag [#allocation4], 1
    %16 = vsyncpa %s15, 0
    loop: start=0, step=1, limit=4
    $region2: #{tpu_custom_call.1} parent=1 // loop_pre_header
      _
    $region3: #{tpu_custom_call.1} parent=1 // loop_header
      %s18 = sphi 0, %s22
      %p19 = scmp.ge.s32.totalorder %s18, 4
      %s26 = sphi 0, %s26
      %s28 = sphi 0, %s26
      %s29 = sphi 0, %s28
      %s43 = sphi 0, %s29
      %s49 = sphi 0, %s51
      %s52 = sphi 0, %s49
      %s53 = sphi 0, %s52
      %s69 = sphi 0, %s53
      %s73 = sphi 0, %s73
      %s75 = sphi 0, %s73
      %s76 = sphi 0, %s75
      %s90 = sphi 0, %s76
      %s94 = sphi 0, %s94
      %s96 = sphi 0, %s94
      %s97 = sphi 0, %s96
      %s111 = sphi 0, %s97
      %s117 = sphi 0, %s119
      %s120 = sphi 0, %s117
      %s121 = sphi 0, %s120
      %s137 = sphi 0, %s121
    $region4: #{tpu_custom_call.1} parent=1 // loop_header_branch
      %21 = sbr.rel (%p19) target = $region8
    $region5: #{tpu_custom_call.1} parent=1 // loop_body
      %s23 = ssub.s32 %s18, 1
      %s24 = ssub.s32 %s18, 2
      %s25 = sadd.s32 %s18, 1
      %s27 = sadd.s32 %s26, 1
      %p30 = scmp.eq.s32.totalorder %s18, 1
      %p31 = scmp.ne.s32.totalorder %s26, %s28
      %p32 = scmp.eq.s32.totalorder %s18, 0
      %p33 = por %p31, %p32
      %p34 = scmp.ne.s32.totalorder %s26, %s28
      %p35 = scmp.eq.s32.totalorder %s23, 1
      %p36 = por %p34, %p35
      %p37 = scmp.ne.s32.totalorder %s28, %s29
      %p38 = scmp.eq.s32.totalorder %s23, 0
      %p39 = por %p37, %p38
      %p40 = scmp.ne.s32.totalorder %s28, %s29
      %p41 = scmp.eq.s32.totalorder %s24, 1
      %p42 = por %p40, %p41
      %p44 = scmp.ne.s32.totalorder %s29, %s43
      %p45 = scmp.eq.s32.totalorder %s24, 0
      %p46 = por %p44, %p45
      %s47 = ssub.s32 %s18, %s25
      %p48 = scmp.eq.s32.totalorder %s47, 0
      %s50 = sadd.s32 %s49, 1
      %s51 = scalar_select %p48, %s49, %s50
      %p54 = pneg %p48
      %p55 = scmp.eq.s32.totalorder %s18, 1
      %p56 = por %p54, %p55
      %p57 = scmp.ne.s32.totalorder %s49, %s52
      %p58 = scmp.eq.s32.totalorder %s18, 0
      %p59 = por %p57, %p58
      %p60 = scmp.ne.s32.totalorder %s49, %s52
      %p61 = scmp.eq.s32.totalorder %s23, 1
      %p62 = por %p60, %p61
      %p63 = scmp.ne.s32.totalorder %s52, %s53
      %p64 = scmp.eq.s32.totalorder %s23, 0
      %p65 = por %p63, %p64
      %p66 = scmp.ne.s32.totalorder %s52, %s53
      %p67 = scmp.eq.s32.totalorder %s24, 1
      %p68 = por %p66, %p67
      %p70 = scmp.ne.s32.totalorder %s53, %s69
      %p71 = scmp.eq.s32.totalorder %s24, 0
      %p72 = por %p70, %p71
      %s74 = sadd.s32 %s73, 1
      %p77 = scmp.eq.s32.totalorder %s18, 1
      %p78 = scmp.ne.s32.totalorder %s73, %s75
      %p79 = scmp.eq.s32.totalorder %s18, 0
      %p80 = por %p78, %p79
      %p81 = scmp.ne.s32.totalorder %s73, %s75
      %p82 = scmp.eq.s32.totalorder %s23, 1
      %p83 = por %p81, %p82
      %p84 = scmp.ne.s32.totalorder %s75, %s76
      %p85 = scmp.eq.s32.totalorder %s23, 0
      %p86 = por %p84, %p85
      %p87 = scmp.ne.s32.totalorder %s75, %s76
      %p88 = scmp.eq.s32.totalorder %s24, 1
      %p89 = por %p87, %p88
      %p91 = scmp.ne.s32.totalorder %s76, %s90
      %p92 = scmp.eq.s32.totalorder %s24, 0
      %p93 = por %p91, %p92
      %s95 = sadd.s32 %s94, 1
      %p98 = scmp.eq.s32.totalorder %s18, 1
      %p99 = scmp.ne.s32.totalorder %s94, %s96
      %p100 = scmp.eq.s32.totalorder %s18, 0
      %p101 = por %p99, %p100
      %p102 = scmp.ne.s32.totalorder %s94, %s96
      %p103 = scmp.eq.s32.totalorder %s23, 1
      %p104 = por %p102, %p103
      %p105 = scmp.ne.s32.totalorder %s96, %s97
      %p106 = scmp.eq.s32.totalorder %s23, 0
      %p107 = por %p105, %p106
      %p108 = scmp.ne.s32.totalorder %s96, %s97
      %p109 = scmp.eq.s32.totalorder %s24, 1
      %p110 = por %p108, %p109
      %p112 = scmp.ne.s32.totalorder %s97, %s111
      %p113 = scmp.eq.s32.totalorder %s24, 0
      %p114 = por %p112, %p113
      %s115 = ssub.s32 %s18, %s25
      %p116 = scmp.eq.s32.totalorder %s115, 0
      %s118 = sadd.s32 %s117, 1
      %s119 = scalar_select %p116, %s117, %s118
      %p122 = pneg %p116
      %p123 = scmp.eq.s32.totalorder %s18, 1
      %p124 = por %p122, %p123
      %p125 = scmp.ne.s32.totalorder %s117, %s120
      %p126 = scmp.eq.s32.totalorder %s18, 0
      %p127 = por %p125, %p126
      %p128 = scmp.ne.s32.totalorder %s117, %s120
      %p129 = scmp.eq.s32.totalorder %s23, 1
      %p130 = por %p128, %p129
      %p131 = scmp.ne.s32.totalorder %s120, %s121
      %p132 = scmp.eq.s32.totalorder %s23, 0
      %p133 = por %p131, %p132
      %p134 = scmp.ne.s32.totalorder %s120, %s121
      %p135 = scmp.eq.s32.totalorder %s24, 1
      %p136 = por %p134, %p135
      %p138 = scmp.ne.s32.totalorder %s121, %s137
      %p139 = scmp.eq.s32.totalorder %s24, 0
      %p140 = por %p138, %p139
      %p141 = scmp.le.s32.totalorder 1, %s18
      %p142 = scmp.lt.s32.totalorder %s18, 3
      %p143 = pnand %p141, %p142
      %p144 = pneg %p143
      // Predicated region
      $region9: #{tpu_custom_call.1} parent=5 // pred_check
        _
      $region10: #{tpu_custom_call.1} parent=5 // pred_check_branch
        %146 = sbr.rel (%p143) target = $region12
      $region11: #{tpu_custom_call.1} parent=5 // pred_region
        %s147 = ssub.s32 %s18, 1
        // Predicated region
        $region13: #{tpu_custom_call.1} parent=11 // pred_check
          %p148 = pneg %p39
        $region14: #{tpu_custom_call.1} parent=11 // pred_check_branch
          %150 = sbr.rel (%p148) target = $region16
        $region15: #{tpu_custom_call.1} parent=11 // pred_region
          %s152 = ssub.s32 16, 16
          %153 = vsyncadd [#allocation5], %s152
          %156 = dma.hbm_to_smem %s0, 16, [#allocation2], [#allocation5]
        $region16: #{tpu_custom_call.1} parent=11 // pred_fallthru
          _
        // Predicated region
        $region17: #{tpu_custom_call.1} parent=11 // pred_check
          %p157 = pneg %p86
        $region18: #{tpu_custom_call.1} parent=11 // pred_check_branch
          %159 = sbr.rel (%p157) target = $region20
        $region19: #{tpu_custom_call.1} parent=11 // pred_region
          %s161 = ssub.s32 18432, 18432
          %162 = vsyncadd [#allocation8], %s161
          %s163 = sshll.u32 [#allocation7], 4
          %s164 = int_to_ptr.vmem [resolvable:$true] %s163
          %169 = dma.hbm_to_vmem [thread:$0]  %s2, 18432, %s164, [#allocation8], 128, 128, 8
        $region20: #{tpu_custom_call.1} parent=11 // pred_fallthru
          _
        // Predicated region
        $region21: #{tpu_custom_call.1} parent=11 // pred_check
          %p170 = pneg %p107
        $region22: #{tpu_custom_call.1} parent=11 // pred_check_branch
          %172 = sbr.rel (%p170) target = $region24
        $region23: #{tpu_custom_call.1} parent=11 // pred_region
          %s174 = ssub.s32 18432, 18432
          %175 = vsyncadd [#allocation8], %s174
          %s176 = sshll.u32 [#allocation9], 4
          %s177 = int_to_ptr.vmem [resolvable:$true] %s176
          %182 = dma.hbm_to_vmem [thread:$0]  %s3, 18432, %s177, [#allocation8], 64, 64, 4
        $region24: #{tpu_custom_call.1} parent=11 // pred_fallthru
          _
      $region12: #{tpu_custom_call.1} parent=5 // pred_fallthru
        _
      %p183 = scmp.lt.s32.totalorder %s18, 2
      // Predicated region
      $region25: #{tpu_custom_call.1} parent=5 // pred_check
        %p184 = pneg %p183
      $region26: #{tpu_custom_call.1} parent=5 // pred_check_branch
        %186 = sbr.rel (%p184) target = $region28
      $region27: #{tpu_custom_call.1} parent=5 // pred_region
        // Predicated region
        $region29: #{tpu_custom_call.1} parent=27 // pred_check
          %p187 = pneg %p59
        $region30: #{tpu_custom_call.1} parent=27 // pred_check_branch
          %189 = sbr.rel (%p187) target = $region32
        $region31: #{tpu_custom_call.1} parent=27 // pred_region
          %s190 = sand.u32 %s49, 1
          %s191 = scalar_lea.sflag [#allocation3], %s190
          %s192 = sand.u32 %s49, 1
          %s193 = smul.addr %s192, 256
          %s194 = scalar_lea.vmem [#allocation6], %s193
          %s196 = ssub.s32 4096, 4096
          %197 = vsyncadd %s191, %s196
          %s198 = smul.addr %s18, 32
          %s199 = smul.addr %s198, 128
          %s200 = scalar_lea.hbm %s1, %s199
          %s201 = sshll.u32 %s194, 4
          %s202 = int_to_ptr.vmem [resolvable:$true] %s201
          %207 = dma.hbm_to_vmem [thread:$0]  %s200, 4096, %s202, %s191, 128, 128, 8
        $region32: #{tpu_custom_call.1} parent=27 // pred_fallthru
          _
      $region28: #{tpu_custom_call.1} parent=5 // pred_fallthru
        _
      %p208 = scmp.le.s32.totalorder 1, %s18
      %p209 = scmp.lt.s32.totalorder %s18, 3
      %p210 = pnand %p208, %p209
      %p211 = pneg %p210
      // Predicated region
      $region33: #{tpu_custom_call.1} parent=5 // pred_check
        _
      $region34: #{tpu_custom_call.1} parent=5 // pred_check_branch
        %213 = sbr.rel (%p210) target = $region36
      $region35: #{tpu_custom_call.1} parent=5 // pred_region
        %s214 = ssub.s32 %s18, 1
        // Predicated region
        $region37: #{tpu_custom_call.1} parent=35 // pred_check
          %p215 = pneg %p39
        $region38: #{tpu_custom_call.1} parent=35 // pred_check_branch
          %217 = sbr.rel (%p215) target = $region40
        $region39: #{tpu_custom_call.1} parent=35 // pred_region
          %218 = dma.done [#allocation5], 16
        $region40: #{tpu_custom_call.1} parent=35 // pred_fallthru
          _
        %s219 = sand.u32 %s52, 1
        %s220 = scalar_lea.sflag [#allocation3], %s219
        %s221 = sand.u32 %s52, 1
        %s222 = smul.addr %s221, 256
        %s223 = scalar_lea.vmem [#allocation6], %s222
        // Predicated region
        $region41: #{tpu_custom_call.1} parent=35 // pred_check
          %p224 = pneg %p65
        $region42: #{tpu_custom_call.1} parent=35 // pred_check_branch
          %226 = sbr.rel (%p224) target = $region44
        $region43: #{tpu_custom_call.1} parent=35 // pred_region
          %227 = dma.done %s220, 4096
        $region44: #{tpu_custom_call.1} parent=35 // pred_fallthru
          _
        // Predicated region
        $region45: #{tpu_custom_call.1} parent=35 // pred_check
          %p228 = pneg %p86
        $region46: #{tpu_custom_call.1} parent=35 // pred_check_branch
          %230 = sbr.rel (%p228) target = $region48
        $region47: #{tpu_custom_call.1} parent=35 // pred_region
          %231 = dma.done [#allocation8], 18432
        $region48: #{tpu_custom_call.1} parent=35 // pred_fallthru
          _
        // Predicated region
        $region49: #{tpu_custom_call.1} parent=35 // pred_check
          %p232 = pneg %p107
        $region50: #{tpu_custom_call.1} parent=35 // pred_check_branch
          %234 = sbr.rel (%p232) target = $region52
        $region51: #{tpu_custom_call.1} parent=35 // pred_region
          %235 = dma.done [#allocation8], 18432
        $region52: #{tpu_custom_call.1} parent=35 // pred_fallthru
          _
        %236 = sfence
        %p237 = pneg %p39
        %p238 = pneg %p36
        %s239 = sand.u32 %s52, 1
        %s240 = scalar_lea.sflag [#allocation3], %s239
        %s241 = sand.u32 %s52, 1
        %s242 = smul.addr %s241, 256
        %s243 = scalar_lea.vmem [#allocation6], %s242
        %p244 = pneg %p65
        %p245 = pneg %p62
        %p246 = pneg %p86
        %p247 = pneg %p83
        %p248 = pneg %p107
        %p249 = pneg %p104
        %p250 = pneg %p133
        %p251 = pneg %p130
        %s252 = sand.u32 %s120, 1
        %s253 = scalar_lea.sflag [#allocation4], %s252
        %s254 = sand.u32 %s120, 1
        %s255 = smul.addr %s254, 256
        %s256 = scalar_lea.vmem [#allocation10], %s255
        %v258 = vld [vmem:[%s223] sm:$0xff]
        %v259 = vld [vmem:[%s223 + $0x8] sm:$0xff]
        %v260 = vld [vmem:[%s223 + $0x10] sm:$0xff]
        %v261 = vld [vmem:[%s223 + $0x18] sm:$0xff]
        %v262 = vld [vmem:[%s223 + $0x20] sm:$0xff]
        %v263 = vld [vmem:[%s223 + $0x28] sm:$0xff]
        %v264 = vld [vmem:[%s223 + $0x30] sm:$0xff]
        %v265 = vld [vmem:[%s223 + $0x38] sm:$0xff]
        %v266 = vld [vmem:[%s223 + $0x40] sm:$0xff]
        %v267 = vld [vmem:[%s223 + $0x48] sm:$0xff]
        %v268 = vld [vmem:[%s223 + $0x50] sm:$0xff]
        %v269 = vld [vmem:[%s223 + $0x58] sm:$0xff]
        %v270 = vld [vmem:[%s223 + $0x60] sm:$0xff]
        %v271 = vld [vmem:[%s223 + $0x68] sm:$0xff]
        %v272 = vld [vmem:[%s223 + $0x70] sm:$0xff]
        %v273 = vld [vmem:[%s223 + $0x78] sm:$0xff]
        %v274 = vld [vmem:[%s223 + $0x80] sm:$0xff]
        %v275 = vld [vmem:[%s223 + $0x88] sm:$0xff]
        %v276 = vld [vmem:[%s223 + $0x90] sm:$0xff]
        %v277 = vld [vmem:[%s223 + $0x98] sm:$0xff]
        %v278 = vld [vmem:[%s223 + $0xa0] sm:$0xff]
        %v279 = vld [vmem:[%s223 + $0xa8] sm:$0xff]
        %v280 = vld [vmem:[%s223 + $0xb0] sm:$0xff]
        %v281 = vld [vmem:[%s223 + $0xb8] sm:$0xff]
        %v282 = vld [vmem:[%s223 + $0xc0] sm:$0xff]
        %v283 = vld [vmem:[%s223 + $0xc8] sm:$0xff]
        %v284 = vld [vmem:[%s223 + $0xd0] sm:$0xff]
        %v285 = vld [vmem:[%s223 + $0xd8] sm:$0xff]
        %v286 = vld [vmem:[%s223 + $0xe0] sm:$0xff]
        %v287 = vld [vmem:[%s223 + $0xe8] sm:$0xff]
        %v288 = vld [vmem:[%s223 + $0xf0] sm:$0xff]
        %v289 = vld [vmem:[%s223 + $0xf8] sm:$0xff]
        %v290 = vlaneseq
        %v291 = vshrl.u32 %v290, 7
        %v292 = vadd.s32 %v291, 8
        %vm293 = vcmp.eq.s32.totalorder %v291, 0
        %vm294 = vcmp.eq.s32.totalorder %v292, 0
        %vm295 = vcmp.eq.s32.totalorder %v291, 15
        %vm296 = vcmp.eq.s32.totalorder %v292, 15
        %v297 = vrot.slane %v260, 7
        %v298 = vrot.slane %v261, 7
        %v299 = vrot.slane %v258, 7
        %v300 = vrot.slane %v259, 7
        %v301 = vrot.slane %v262, 7
        %v302 = vrot.slane %v263, 7
        %v303 = vrot.slane %v264, 7
        %v304 = vrot.slane %v265, 7
        %v305 = vrot.slane %v266, 7
        %v306 = vrot.slane %v267, 7
        %v307 = vrot.slane %v268, 7
        %v308 = vrot.slane %v269, 7
        %v309 = vrot.slane %v270, 7
        %v310 = vrot.slane %v271, 7
        %v311 = vrot.slane %v272, 7
        %v312 = vrot.slane %v273, 7
        %v313 = vrot.slane %v274, 7
        %v314 = vrot.slane %v275, 7
        %v315 = vrot.slane %v276, 7
        %v316 = vrot.slane %v277, 7
        %v317 = vrot.slane %v278, 7
        %v318 = vrot.slane %v279, 7
        %v319 = vrot.slane %v280, 7
        %v320 = vrot.slane %v281, 7
        %v321 = vrot.slane %v282, 7
        %v322 = vrot.slane %v283, 7
        %v323 = vrot.slane %v284, 7
        %v324 = vrot.slane %v285, 7
        %v325 = vrot.slane %v286, 7
        %v326 = vrot.slane %v287, 7
        %v327 = vrot.slane %v288, 7
        %v328 = vrot.slane %v289, 7
        %vm329 = vcmp.lt.s32.totalorder %v291, 1
        %v330 = vsel %vm329, %v325, %v326
        %v331 = vsel %vm329, %v328, %v325
        %v332 = vsel %vm329, %v327, %v328
        %v333 = vsel %vm329, %v326, %v327
        %v334 = vsel %vm329, %v324, %v325
        %v335 = vsel %vm329, %v323, %v324
        %v336 = vsel %vm329, %v322, %v323
        %v337 = vsel %vm329, %v321, %v322
        %v338 = vsel %vm329, %v320, %v321
        %v339 = vsel %vm329, %v319, %v320
        %v340 = vsel %vm329, %v318, %v319
        %v341 = vsel %vm329, %v317, %v318
        %v342 = vsel %vm329, %v316, %v317
        %v343 = vsel %vm329, %v315, %v316
        %v344 = vsel %vm329, %v314, %v315
        %v345 = vsel %vm329, %v313, %v314
        %v346 = vsel %vm329, %v312, %v313
        %v347 = vsel %vm329, %v311, %v312
        %v348 = vsel %vm329, %v310, %v311
        %v349 = vsel %vm329, %v309, %v310
        %v350 = vsel %vm329, %v308, %v309
        %v351 = vsel %vm329, %v307, %v308
        %v352 = vsel %vm329, %v306, %v307
        %v353 = vsel %vm329, %v305, %v306
        %v354 = vsel %vm329, %v304, %v305
        %v355 = vsel %vm329, %v303, %v304
        %v356 = vsel %vm329, %v302, %v303
        %v357 = vsel %vm329, %v301, %v302
        %v358 = vsel %vm329, %v298, %v301
        %v359 = vsel %vm329, %v297, %v298
        %v360 = vsel %vm329, %v300, %v297
        %v361 = vsel %vm329, %v299, %v300
        %v362 = vsel %vm329, %v298, %v299
        %v363 = vsel %vm329, %v326, %v297
        %v364 = vrot.slane %v260, 1
        %v365 = vrot.slane %v261, 1
        %v366 = vrot.slane %v258, 1
        %v367 = vrot.slane %v259, 1
        %v368 = vrot.slane %v262, 1
        %v369 = vrot.slane %v263, 1
        %v370 = vrot.slane %v264, 1
        %v371 = vrot.slane %v265, 1
        %v372 = vrot.slane %v266, 1
        %v373 = vrot.slane %v267, 1
        %v374 = vrot.slane %v268, 1
        %v375 = vrot.slane %v269, 1
        %v376 = vrot.slane %v270, 1
        %v377 = vrot.slane %v271, 1
        %v378 = vrot.slane %v272, 1
        %v379 = vrot.slane %v273, 1
        %v380 = vrot.slane %v274, 1
        %v381 = vrot.slane %v275, 1
        %v382 = vrot.slane %v276, 1
        %v383 = vrot.slane %v277, 1
        %v384 = vrot.slane %v278, 1
        %v385 = vrot.slane %v279, 1
        %v386 = vrot.slane %v280, 1
        %v387 = vrot.slane %v281, 1
        %v388 = vrot.slane %v282, 1
        %v389 = vrot.slane %v283, 1
        %v390 = vrot.slane %v284, 1
        %v391 = vrot.slane %v285, 1
        %v392 = vrot.slane %v286, 1
        %v393 = vrot.slane %v287, 1
        %v394 = vrot.slane %v288, 1
        %v395 = vrot.slane %v289, 1
        %vm396 = vcmp.lt.s32.totalorder %v291, 7
        %v397 = vsel %vm396, %v392, %v393
        %v398 = vsel %vm396, %v395, %v392
        %v399 = vsel %vm396, %v394, %v395
        %v400 = vsel %vm396, %v393, %v394
        %v401 = vsel %vm396, %v391, %v392
        %v402 = vsel %vm396, %v390, %v391
        %v403 = vsel %vm396, %v389, %v390
        %v404 = vsel %vm396, %v388, %v389
        %v405 = vsel %vm396, %v387, %v388
        %v406 = vsel %vm396, %v386, %v387
        %v407 = vsel %vm396, %v385, %v386
        %v408 = vsel %vm396, %v384, %v385
        %v409 = vsel %vm396, %v383, %v384
        %v410 = vsel %vm396, %v382, %v383
        %v411 = vsel %vm396, %v381, %v382
        %v412 = vsel %vm396, %v380, %v381
        %v413 = vsel %vm396, %v379, %v380
        %v414 = vsel %vm396, %v378, %v379
        %v415 = vsel %vm396, %v377, %v378
        %v416 = vsel %vm396, %v376, %v377
        %v417 = vsel %vm396, %v375, %v376
        %v418 = vsel %vm396, %v374, %v375
        %v419 = vsel %vm396, %v373, %v374
        %v420 = vsel %vm396, %v372, %v373
        %v421 = vsel %vm396, %v371, %v372
        %v422 = vsel %vm396, %v370, %v371
        %v423 = vsel %vm396, %v369, %v370
        %v424 = vsel %vm396, %v368, %v369
        %v425 = vsel %vm396, %v365, %v368
        %v426 = vsel %vm396, %v364, %v365
        %v427 = vsel %vm396, %v367, %v364
        %v428 = vsel %vm396, %v366, %v367
        %v429 = vsel %vm396, %v365, %v366
        %v430 = vsel %vm396, %v393, %v364
        %v431 = vsel %vm293, 1, 0
        %v432 = vsel %vm294, 1, 0
        %vm433 = vcmp.eq.s32.totalorder %v431, 1
        %vm434 = vcmp.eq.s32.totalorder %v432, 1
        %v435 = vlaneseq
        %v436 = vshrl.u32 %v435, 7
        %v437 = vsub.s32 1, %v436
        %v438 = vrot.slane %v260, %v437
        %v439 = vlaneseq
        %v440 = vshrl.u32 %v439, 7
        %v441 = vsub.s32 1, %v440
        %v442 = vrot.slane %v258, %v441
        %v443 = vlaneseq
        %v444 = vshrl.u32 %v443, 7
        %v445 = vsub.s32 1, %v444
        %v446 = vrot.slane %v262, %v445
        %v447 = vlaneseq
        %v448 = vshrl.u32 %v447, 7
        %v449 = vsub.s32 1, %v448
        %v450 = vrot.slane %v264, %v449
        %v451 = vlaneseq
        %v452 = vshrl.u32 %v451, 7
        %v453 = vsub.s32 1, %v452
        %v454 = vrot.slane %v266, %v453
        %v455 = vlaneseq
        %v456 = vshrl.u32 %v455, 7
        %v457 = vsub.s32 1, %v456
        %v458 = vrot.slane %v268, %v457
        %v459 = vlaneseq
        %v460 = vshrl.u32 %v459, 7
        %v461 = vsub.s32 1, %v460
        %v462 = vrot.slane %v270, %v461
        %v463 = vlaneseq
        %v464 = vshrl.u32 %v463, 7
        %v465 = vsub.s32 1, %v464
        %v466 = vrot.slane %v272, %v465
        %v467 = vlaneseq
        %v468 = vshrl.u32 %v467, 7
        %v469 = vsub.s32 1, %v468
        %v470 = vrot.slane %v274, %v469
        %v471 = vlaneseq
        %v472 = vshrl.u32 %v471, 7
        %v473 = vsub.s32 1, %v472
        %v474 = vrot.slane %v276, %v473
        %v475 = vlaneseq
        %v476 = vshrl.u32 %v475, 7
        %v477 = vsub.s32 1, %v476
        %v478 = vrot.slane %v278, %v477
        %v479 = vlaneseq
        %v480 = vshrl.u32 %v479, 7
        %v481 = vsub.s32 1, %v480
        %v482 = vrot.slane %v280, %v481
        %v483 = vlaneseq
        %v484 = vshrl.u32 %v483, 7
        %v485 = vsub.s32 1, %v484
        %v486 = vrot.slane %v282, %v485
        %v487 = vlaneseq
        %v488 = vshrl.u32 %v487, 7
        %v489 = vsub.s32 1, %v488
        %v490 = vrot.slane %v284, %v489
        %v491 = vlaneseq
        %v492 = vshrl.u32 %v491, 7
        %v493 = vsub.s32 1, %v492
        %v494 = vrot.slane %v286, %v493
        %v495 = vlaneseq
        %v496 = vshrl.u32 %v495, 7
        %v497 = vsub.s32 1, %v496
        %v498 = vrot.slane %v288, %v497
        %v499 = vsel %vm433, %v438, %v363
        %v500 = vsel %vm434, %v438, %v359
        %v501 = vsel %vm433, %v442, %v362
        %v502 = vsel %vm434, %v442, %v361
        %v503 = vsel %vm433, %v438, %v360
        %v504 = vsel %vm433, %v446, %v358
        %v505 = vsel %vm434, %v446, %v357
        %v506 = vsel %vm433, %v450, %v356
        %v507 = vsel %vm434, %v450, %v355
        %v508 = vsel %vm433, %v454, %v354
        %v509 = vsel %vm434, %v454, %v353
        %v510 = vsel %vm433, %v458, %v352
        %v511 = vsel %vm434, %v458, %v351
        %v512 = vsel %vm433, %v462, %v350
        %v513 = vsel %vm434, %v462, %v349
        %v514 = vsel %vm433, %v466, %v348
        %v515 = vsel %vm434, %v466, %v347
        %v516 = vsel %vm433, %v470, %v346
        %v517 = vsel %vm434, %v470, %v345
        %v518 = vsel %vm433, %v474, %v344
        %v519 = vsel %vm434, %v474, %v343
        %v520 = vsel %vm433, %v478, %v342
        %v521 = vsel %vm434, %v478, %v341
        %v522 = vsel %vm433, %v482, %v340
        %v523 = vsel %vm434, %v482, %v339
        %v524 = vsel %vm433, %v486, %v338
        %v525 = vsel %vm434, %v486, %v337
        %v526 = vsel %vm433, %v490, %v336
        %v527 = vsel %vm434, %v490, %v335
        %v528 = vsel %vm433, %v494, %v334
        %v529 = vsel %vm434, %v494, %v330
        %v530 = vsel %vm433, %v498, %v333
        %v531 = vsel %vm434, %v498, %v332
        %v532 = vsel %vm433, %v494, %v331
        %v533 = vsel %vm295, 1, 0
        %v534 = vsel %vm296, 1, 0
        %vm535 = vcmp.eq.s32.totalorder %v533, 1
        %vm536 = vcmp.eq.s32.totalorder %v534, 1
        %v537 = vlaneseq
        %v538 = vshrl.u32 %v537, 7
        %v539 = vsub.s32 6, %v538
        %v540 = vrot.slane %v261, %v539
        %v541 = vlaneseq
        %v542 = vshrl.u32 %v541, 7
        %v543 = vsub.s32 6, %v542
        %v544 = vrot.slane %v259, %v543
        %v545 = vlaneseq
        %v546 = vshrl.u32 %v545, 7
        %v547 = vsub.s32 6, %v546
        %v548 = vrot.slane %v263, %v547
        %v549 = vlaneseq
        %v550 = vshrl.u32 %v549, 7
        %v551 = vsub.s32 6, %v550
        %v552 = vrot.slane %v265, %v551
        %v553 = vlaneseq
        %v554 = vshrl.u32 %v553, 7
        %v555 = vsub.s32 6, %v554
        %v556 = vrot.slane %v267, %v555
        %v557 = vlaneseq
        %v558 = vshrl.u32 %v557, 7
        %v559 = vsub.s32 6, %v558
        %v560 = vrot.slane %v269, %v559
        %v561 = vlaneseq
        %v562 = vshrl.u32 %v561, 7
        %v563 = vsub.s32 6, %v562
        %v564 = vrot.slane %v271, %v563
        %v565 = vlaneseq
        %v566 = vshrl.u32 %v565, 7
        %v567 = vsub.s32 6, %v566
        %v568 = vrot.slane %v273, %v567
        %v569 = vlaneseq
        %v570 = vshrl.u32 %v569, 7
        %v571 = vsub.s32 6, %v570
        %v572 = vrot.slane %v275, %v571
        %v573 = vlaneseq
        %v574 = vshrl.u32 %v573, 7
        %v575 = vsub.s32 6, %v574
        %v576 = vrot.slane %v277, %v575
        %v577 = vlaneseq
        %v578 = vshrl.u32 %v577, 7
        %v579 = vsub.s32 6, %v578
        %v580 = vrot.slane %v279, %v579
        %v581 = vlaneseq
        %v582 = vshrl.u32 %v581, 7
        %v583 = vsub.s32 6, %v582
        %v584 = vrot.slane %v281, %v583
        %v585 = vlaneseq
        %v586 = vshrl.u32 %v585, 7
        %v587 = vsub.s32 6, %v586
        %v588 = vrot.slane %v283, %v587
        %v589 = vlaneseq
        %v590 = vshrl.u32 %v589, 7
        %v591 = vsub.s32 6, %v590
        %v592 = vrot.slane %v285, %v591
        %v593 = vlaneseq
        %v594 = vshrl.u32 %v593, 7
        %v595 = vsub.s32 6, %v594
        %v596 = vrot.slane %v287, %v595
        %v597 = vlaneseq
        %v598 = vshrl.u32 %v597, 7
        %v599 = vsub.s32 6, %v598
        %v600 = vrot.slane %v289, %v599
        %v601 = vsel %vm535, %v540, %v426
        %v602 = vsel %vm536, %v540, %v429
        %v603 = vsel %vm535, %v544, %v428
        %v604 = vsel %vm536, %v544, %v427
        %v605 = vsel %vm536, %v540, %v425
        %v606 = vsel %vm535, %v548, %v424
        %v607 = vsel %vm536, %v548, %v423
        %v608 = vsel %vm535, %v552, %v422
        %v609 = vsel %vm536, %v552, %v421
        %v610 = vsel %vm535, %v556, %v420
        %v611 = vsel %vm536, %v556, %v419
        %v612 = vsel %vm535, %v560, %v418
        %v613 = vsel %vm536, %v560, %v417
        %v614 = vsel %vm535, %v564, %v416
        %v615 = vsel %vm536, %v564, %v415
        %v616 = vsel %vm535, %v568, %v414
        %v617 = vsel %vm536, %v568, %v413
        %v618 = vsel %vm535, %v572, %v412
        %v619 = vsel %vm536, %v572, %v411
        %v620 = vsel %vm535, %v576, %v410
        %v621 = vsel %vm536, %v576, %v409
        %v622 = vsel %vm535, %v580, %v408
        %v623 = vsel %vm536, %v580, %v407
        %v624 = vsel %vm535, %v584, %v406
        %v625 = vsel %vm536, %v584, %v405
        %v626 = vsel %vm535, %v588, %v404
        %v627 = vsel %vm536, %v588, %v403
        %v628 = vsel %vm535, %v592, %v402
        %v629 = vsel %vm536, %v592, %v401
        %v630 = vsel %vm535, %v596, %v397
        %v631 = vsel %vm536, %v596, %v400
        %v632 = vsel %vm535, %v600, %v399
        %v633 = vsel %vm536, %v600, %v398
        %v634 = vsel %vm536, %v596, %v430
        %v635 = vpack.c.bf16 %v500, %v499
        %v636 = vpack.c.bf16 %v502, %v501
        %v637 = vpack.c.bf16 %v500, %v503
        %v638 = vpack.c.bf16 %v505, %v504
        %v639 = vpack.c.bf16 %v507, %v506
        %v640 = vpack.c.bf16 %v509, %v508
        %v641 = vpack.c.bf16 %v511, %v510
        %v642 = vpack.c.bf16 %v513, %v512
        %v643 = vpack.c.bf16 %v515, %v514
        %v644 = vpack.c.bf16 %v517, %v516
        %v645 = vpack.c.bf16 %v519, %v518
        %v646 = vpack.c.bf16 %v521, %v520
        %v647 = vpack.c.bf16 %v523, %v522
        %v648 = vpack.c.bf16 %v525, %v524
        %v649 = vpack.c.bf16 %v527, %v526
        %v650 = vpack.c.bf16 %v529, %v528
        %v651 = vpack.c.bf16 %v531, %v530
        %v652 = vpack.c.bf16 %v529, %v532
        %v653 = vpack.c.bf16 %v261, %v260
        %v654 = vpack.c.bf16 %v259, %v258
        %v655 = vpack.c.bf16 %v263, %v262
        %v656 = vpack.c.bf16 %v265, %v264
        %v657 = vpack.c.bf16 %v267, %v266
        %v658 = vpack.c.bf16 %v269, %v268
        %v659 = vpack.c.bf16 %v271, %v270
        %v660 = vpack.c.bf16 %v273, %v272
        %v661 = vpack.c.bf16 %v275, %v274
        %v662 = vpack.c.bf16 %v277, %v276
        %v663 = vpack.c.bf16 %v279, %v278
        %v664 = vpack.c.bf16 %v281, %v280
        %v665 = vpack.c.bf16 %v283, %v282
        %v666 = vpack.c.bf16 %v285, %v284
        %v667 = vpack.c.bf16 %v287, %v286
        %v668 = vpack.c.bf16 %v289, %v288
        %v669 = vpack.c.bf16 %v602, %v601
        %v670 = vpack.c.bf16 %v604, %v603
        %v671 = vpack.c.bf16 %v605, %v601
        %v672 = vpack.c.bf16 %v607, %v606
        %v673 = vpack.c.bf16 %v609, %v608
        %v674 = vpack.c.bf16 %v611, %v610
        %v675 = vpack.c.bf16 %v613, %v612
        %v676 = vpack.c.bf16 %v615, %v614
        %v677 = vpack.c.bf16 %v617, %v616
        %v678 = vpack.c.bf16 %v619, %v618
        %v679 = vpack.c.bf16 %v621, %v620
        %v680 = vpack.c.bf16 %v623, %v622
        %v681 = vpack.c.bf16 %v625, %v624
        %v682 = vpack.c.bf16 %v627, %v626
        %v683 = vpack.c.bf16 %v629, %v628
        %v684 = vpack.c.bf16 %v631, %v630
        %v685 = vpack.c.bf16 %v633, %v632
        %v686 = vpack.c.bf16 %v634, %v630
        %v687 = vld [vmem:[#allocation7] sm:$0xff]
        %v688 = vld [vmem:[#allocation7 + $0x8] sm:$0xff]
        %v689 = vld [vmem:[#allocation7 + $0x10] sm:$0xff]
        %v690 = vld [vmem:[#allocation7 + $0x18] sm:$0xff]
        %v691 = vld [vmem:[#allocation7 + $0x20] sm:$0xff]
        %v692 = vld [vmem:[#allocation7 + $0x28] sm:$0xff]
        %v693 = vld [vmem:[#allocation7 + $0x30] sm:$0xff]
        %v694 = vld [vmem:[#allocation7 + $0x38] sm:$0xff]
        %v695 = vld [vmem:[#allocation7 + $0x40] sm:$0xff]
        %v696 = vld [vmem:[#allocation7 + $0x48] sm:$0xff]
        %v697 = vld [vmem:[#allocation7 + $0x50] sm:$0xff]
        %v698 = vld [vmem:[#allocation7 + $0x58] sm:$0xff]
        %v699 = vld [vmem:[#allocation7 + $0x60] sm:$0xff]
        %v700 = vld [vmem:[#allocation7 + $0x68] sm:$0xff]
        %v701 = vld [vmem:[#allocation7 + $0x70] sm:$0xff]
        %v702 = vld [vmem:[#allocation7 + $0x78] sm:$0xff]
        %v703 = vld [vmem:[#allocation7 + $0x80] sm:$0xff]
        %v704 = vld [vmem:[#allocation7 + $0x88] sm:$0xff]
        %v705 = vld [vmem:[#allocation7 + $0x90] sm:$0xff]
        %v706 = vld [vmem:[#allocation7 + $0x98] sm:$0xff]
        %v707 = vld [vmem:[#allocation7 + $0xa0] sm:$0xff]
        %v708 = vld [vmem:[#allocation7 + $0xa8] sm:$0xff]
        %v709 = vld [vmem:[#allocation7 + $0xb0] sm:$0xff]
        %v710 = vld [vmem:[#allocation7 + $0xb8] sm:$0xff]
        %v711 = vld [vmem:[#allocation7 + $0xc0] sm:$0xff]
        %v712 = vld [vmem:[#allocation7 + $0xc8] sm:$0xff]
        %v713 = vld [vmem:[#allocation7 + $0xd0] sm:$0xff]
        %v714 = vld [vmem:[#allocation7 + $0xd8] sm:$0xff]
        %v715 = vld [vmem:[#allocation7 + $0xe0] sm:$0xff]
        %v716 = vld [vmem:[#allocation7 + $0xe8] sm:$0xff]
        %v717 = vld [vmem:[#allocation7 + $0xf0] sm:$0xff]
        %v718 = vld [vmem:[#allocation7 + $0xf8] sm:$0xff]
        %v719 = vld [vmem:[#allocation7 + $0x100] sm:$0xff]
        %v720 = vld [vmem:[#allocation7 + $0x108] sm:$0xff]
        %v721 = vld [vmem:[#allocation7 + $0x110] sm:$0xff]
        %v722 = vld [vmem:[#allocation7 + $0x118] sm:$0xff]
        %v723 = vld [vmem:[#allocation7 + $0x120] sm:$0xff]
        %v724 = vld [vmem:[#allocation7 + $0x128] sm:$0xff]
        %v725 = vld [vmem:[#allocation7 + $0x130] sm:$0xff]
        %v726 = vld [vmem:[#allocation7 + $0x138] sm:$0xff]
        %v727 = vld [vmem:[#allocation7 + $0x140] sm:$0xff]
        %v728 = vld [vmem:[#allocation7 + $0x148] sm:$0xff]
        %v729 = vld [vmem:[#allocation7 + $0x150] sm:$0xff]
        %v730 = vld [vmem:[#allocation7 + $0x158] sm:$0xff]
        %v731 = vld [vmem:[#allocation7 + $0x160] sm:$0xff]
        %v732 = vld [vmem:[#allocation7 + $0x168] sm:$0xff]
        %v733 = vld [vmem:[#allocation7 + $0x170] sm:$0xff]
        %v734 = vld [vmem:[#allocation7 + $0x178] sm:$0xff]
        %v735 = vld [vmem:[#allocation7 + $0x180] sm:$0xff]
        %v736 = vld [vmem:[#allocation7 + $0x188] sm:$0xff]
        %v737 = vld [vmem:[#allocation7 + $0x190] sm:$0xff]
        %v738 = vld [vmem:[#allocation7 + $0x198] sm:$0xff]
        %v739 = vld [vmem:[#allocation7 + $0x1a0] sm:$0xff]
        %v740 = vld [vmem:[#allocation7 + $0x1a8] sm:$0xff]
        %v741 = vld [vmem:[#allocation7 + $0x1b0] sm:$0xff]
        %v742 = vld [vmem:[#allocation7 + $0x1b8] sm:$0xff]
        %v743 = vld [vmem:[#allocation7 + $0x1c0] sm:$0xff]
        %v744 = vld [vmem:[#allocation7 + $0x1c8] sm:$0xff]
        %v745 = vld [vmem:[#allocation7 + $0x1d0] sm:$0xff]
        %v746 = vld [vmem:[#allocation7 + $0x1d8] sm:$0xff]
        %v747 = vld [vmem:[#allocation7 + $0x1e0] sm:$0xff]
        %v748 = vld [vmem:[#allocation7 + $0x1e8] sm:$0xff]
        %v749 = vld [vmem:[#allocation7 + $0x1f0] sm:$0xff]
        %v750 = vld [vmem:[#allocation7 + $0x1f8] sm:$0xff]
        %v751 = vld [vmem:[#allocation7 + $0x200] sm:$0xff]
        %v752 = vld [vmem:[#allocation7 + $0x208] sm:$0xff]
        %v753 = vld [vmem:[#allocation7 + $0x210] sm:$0xff]
        %v754 = vld [vmem:[#allocation7 + $0x218] sm:$0xff]
        %v755 = vld [vmem:[#allocation7 + $0x220] sm:$0xff]
        %v756 = vld [vmem:[#allocation7 + $0x228] sm:$0xff]
        %v757 = vld [vmem:[#allocation7 + $0x230] sm:$0xff]
        %v758 = vld [vmem:[#allocation7 + $0x238] sm:$0xff]
        %v759 = vld [vmem:[#allocation7 + $0x240] sm:$0xff]
        %v760 = vld [vmem:[#allocation7 + $0x248] sm:$0xff]
        %v761 = vld [vmem:[#allocation7 + $0x250] sm:$0xff]
        %v762 = vld [vmem:[#allocation7 + $0x258] sm:$0xff]
        %v763 = vld [vmem:[#allocation7 + $0x260] sm:$0xff]
        %v764 = vld [vmem:[#allocation7 + $0x268] sm:$0xff]
        %v765 = vld [vmem:[#allocation7 + $0x270] sm:$0xff]
        %v766 = vld [vmem:[#allocation7 + $0x278] sm:$0xff]
        %v767 = vld [vmem:[#allocation7 + $0x280] sm:$0xff]
        %v768 = vld [vmem:[#allocation7 + $0x288] sm:$0xff]
        %v769 = vld [vmem:[#allocation7 + $0x290] sm:$0xff]
        %v770 = vld [vmem:[#allocation7 + $0x298] sm:$0xff]
        %v771 = vld [vmem:[#allocation7 + $0x2a0] sm:$0xff]
        %v772 = vld [vmem:[#allocation7 + $0x2a8] sm:$0xff]
        %v773 = vld [vmem:[#allocation7 + $0x2b0] sm:$0xff]
        %v774 = vld [vmem:[#allocation7 + $0x2b8] sm:$0xff]
        %v775 = vld [vmem:[#allocation7 + $0x2c0] sm:$0xff]
        %v776 = vld [vmem:[#allocation7 + $0x2c8] sm:$0xff]
        %v777 = vld [vmem:[#allocation7 + $0x2d0] sm:$0xff]
        %v778 = vld [vmem:[#allocation7 + $0x2d8] sm:$0xff]
        %v779 = vld [vmem:[#allocation7 + $0x2e0] sm:$0xff]
        %v780 = vld [vmem:[#allocation7 + $0x2e8] sm:$0xff]
        %v781 = vld [vmem:[#allocation7 + $0x2f0] sm:$0xff]
        %v782 = vld [vmem:[#allocation7 + $0x2f8] sm:$0xff]
        %v783 = vld [vmem:[#allocation7 + $0x300] sm:$0xff]
        %v784 = vld [vmem:[#allocation7 + $0x308] sm:$0xff]
        %v785 = vld [vmem:[#allocation7 + $0x310] sm:$0xff]
        %v786 = vld [vmem:[#allocation7 + $0x318] sm:$0xff]
        %v787 = vld [vmem:[#allocation7 + $0x320] sm:$0xff]
        %v788 = vld [vmem:[#allocation7 + $0x328] sm:$0xff]
        %v789 = vld [vmem:[#allocation7 + $0x330] sm:$0xff]
        %v790 = vld [vmem:[#allocation7 + $0x338] sm:$0xff]
        %v791 = vld [vmem:[#allocation7 + $0x340] sm:$0xff]
        %v792 = vld [vmem:[#allocation7 + $0x348] sm:$0xff]
        %v793 = vld [vmem:[#allocation7 + $0x350] sm:$0xff]
        %v794 = vld [vmem:[#allocation7 + $0x358] sm:$0xff]
        %v795 = vld [vmem:[#allocation7 + $0x360] sm:$0xff]
        %v796 = vld [vmem:[#allocation7 + $0x368] sm:$0xff]
        %v797 = vld [vmem:[#allocation7 + $0x370] sm:$0xff]
        %v798 = vld [vmem:[#allocation7 + $0x378] sm:$0xff]
        %v799 = vld [vmem:[#allocation7 + $0x380] sm:$0xff]
        %v800 = vld [vmem:[#allocation7 + $0x388] sm:$0xff]
        %v801 = vld [vmem:[#allocation7 + $0x390] sm:$0xff]
        %v802 = vld [vmem:[#allocation7 + $0x398] sm:$0xff]
        %v803 = vld [vmem:[#allocation7 + $0x3a0] sm:$0xff]
        %v804 = vld [vmem:[#allocation7 + $0x3a8] sm:$0xff]
        %v805 = vld [vmem:[#allocation7 + $0x3b0] sm:$0xff]
        %v806 = vld [vmem:[#allocation7 + $0x3b8] sm:$0xff]
        %v807 = vld [vmem:[#allocation7 + $0x3c0] sm:$0xff]
        %v808 = vld [vmem:[#allocation7 + $0x3c8] sm:$0xff]
        %v809 = vld [vmem:[#allocation7 + $0x3d0] sm:$0xff]
        %v810 = vld [vmem:[#allocation7 + $0x3d8] sm:$0xff]
        %v811 = vld [vmem:[#allocation7 + $0x3e0] sm:$0xff]
        %v812 = vld [vmem:[#allocation7 + $0x3e8] sm:$0xff]
        %v813 = vld [vmem:[#allocation7 + $0x3f0] sm:$0xff]
        %v814 = vld [vmem:[#allocation7 + $0x3f8] sm:$0xff]
        %v815 = vld [vmem:[#allocation7 + $0x400] sm:$0xff]
        %v816 = vld [vmem:[#allocation7 + $0x408] sm:$0xff]
        %v817 = vld [vmem:[#allocation7 + $0x410] sm:$0xff]
        %v818 = vld [vmem:[#allocation7 + $0x418] sm:$0xff]
        %v819 = vld [vmem:[#allocation7 + $0x420] sm:$0xff]
        %v820 = vld [vmem:[#allocation7 + $0x428] sm:$0xff]
        %v821 = vld [vmem:[#allocation7 + $0x430] sm:$0xff]
        %v822 = vld [vmem:[#allocation7 + $0x438] sm:$0xff]
        %v823 = vld [vmem:[#allocation7 + $0x440] sm:$0xff]
        %v824 = vld [vmem:[#allocation7 + $0x448] sm:$0xff]
        %v825 = vld [vmem:[#allocation7 + $0x450] sm:$0xff]
        %v826 = vld [vmem:[#allocation7 + $0x458] sm:$0xff]
        %v827 = vld [vmem:[#allocation7 + $0x460] sm:$0xff]
        %v828 = vld [vmem:[#allocation7 + $0x468] sm:$0xff]
        %v829 = vld [vmem:[#allocation7 + $0x470] sm:$0xff]
        %v830 = vld [vmem:[#allocation7 + $0x478] sm:$0xff]
        %v975 = vunpack.c.l.b16 %v687
        %v976 = vunpack.c.h.b16 %v687
        %v977 = vunpack.c.l.b16 %v688
        %v978 = vunpack.c.h.b16 %v688
        %v979 = vunpack.c.l.b16 %v689
        %v980 = vunpack.c.h.b16 %v689
        %v981 = vunpack.c.l.b16 %v690
        %v982 = vunpack.c.h.b16 %v690
        %v983 = vunpack.c.l.b16 %v691
        %v984 = vunpack.c.h.b16 %v691
        %v985 = vunpack.c.l.b16 %v692
        %v986 = vunpack.c.h.b16 %v692
        %v987 = vunpack.c.l.b16 %v693
        %v988 = vunpack.c.h.b16 %v693
        %v989 = vunpack.c.l.b16 %v694
        %v990 = vunpack.c.h.b16 %v694
        %v991 = vunpack.c.l.b16 %v695
        %v992 = vunpack.c.h.b16 %v695
        %v993 = vunpack.c.l.b16 %v696
        %v994 = vunpack.c.h.b16 %v696
        %v995 = vunpack.c.l.b16 %v697
        %v996 = vunpack.c.h.b16 %v697
        %v997 = vunpack.c.l.b16 %v698
        %v998 = vunpack.c.h.b16 %v698
        %v999 = vunpack.c.l.b16 %v699
        %v1000 = vunpack.c.h.b16 %v699
        %v1001 = vunpack.c.l.b16 %v700
        %v1002 = vunpack.c.h.b16 %v700
        %v1003 = vunpack.c.l.b16 %v701
        %v1004 = vunpack.c.h.b16 %v701
        %v1005 = vunpack.c.l.b16 %v702
        %v1006 = vunpack.c.h.b16 %v702
        %v1007 = vunpack.c.l.b16 %v703
        %v1008 = vunpack.c.h.b16 %v703
        %v1009 = vunpack.c.l.b16 %v704
        %v1010 = vunpack.c.h.b16 %v704
        %v1011 = vunpack.c.l.b16 %v705
        %v1012 = vunpack.c.h.b16 %v705
        %v1013 = vunpack.c.l.b16 %v706
        %v1014 = vunpack.c.h.b16 %v706
        %v1015 = vunpack.c.l.b16 %v707
        %v1016 = vunpack.c.h.b16 %v707
        %v1017 = vunpack.c.l.b16 %v708
        %v1018 = vunpack.c.h.b16 %v708
        %v1019 = vunpack.c.l.b16 %v709
        %v1020 = vunpack.c.h.b16 %v709
        %v1021 = vunpack.c.l.b16 %v710
        %v1022 = vunpack.c.h.b16 %v710
        %v1023 = vunpack.c.l.b16 %v711
        %v1024 = vunpack.c.h.b16 %v711
        %v1025 = vunpack.c.l.b16 %v712
        %v1026 = vunpack.c.h.b16 %v712
        %v1027 = vunpack.c.l.b16 %v713
        %v1028 = vunpack.c.h.b16 %v713
        %v1029 = vunpack.c.l.b16 %v714
        %v1030 = vunpack.c.h.b16 %v714
        %v1031 = vunpack.c.l.b16 %v715
        %v1032 = vunpack.c.h.b16 %v715
        %v1033 = vunpack.c.l.b16 %v716
        %v1034 = vunpack.c.h.b16 %v716
        %v1035 = vunpack.c.l.b16 %v717
        %v1036 = vunpack.c.h.b16 %v717
        %v1037 = vunpack.c.l.b16 %v718
        %v1038 = vunpack.c.h.b16 %v718
        %v1039 = vunpack.c.l.b16 %v719
        %v1040 = vunpack.c.h.b16 %v719
        %v1041 = vunpack.c.l.b16 %v720
        %v1042 = vunpack.c.h.b16 %v720
        %v1043 = vunpack.c.l.b16 %v721
        %v1044 = vunpack.c.h.b16 %v721
        %v1045 = vunpack.c.l.b16 %v722
        %v1046 = vunpack.c.h.b16 %v722
        %v1047 = vunpack.c.l.b16 %v723
        %v1048 = vunpack.c.h.b16 %v723
        %v1049 = vunpack.c.l.b16 %v724
        %v1050 = vunpack.c.h.b16 %v724
        %v1051 = vunpack.c.l.b16 %v725
        %v1052 = vunpack.c.h.b16 %v725
        %v1053 = vunpack.c.l.b16 %v726
        %v1054 = vunpack.c.h.b16 %v726
        %v1055 = vunpack.c.l.b16 %v727
        %v1056 = vunpack.c.h.b16 %v727
        %v1057 = vunpack.c.l.b16 %v728
        %v1058 = vunpack.c.h.b16 %v728
        %v1059 = vunpack.c.l.b16 %v729
        %v1060 = vunpack.c.h.b16 %v729
        %v1061 = vunpack.c.l.b16 %v730
        %v1062 = vunpack.c.h.b16 %v730
        %v1063 = vunpack.c.l.b16 %v731
        %v1064 = vunpack.c.h.b16 %v731
        %v1065 = vunpack.c.l.b16 %v732
        %v1066 = vunpack.c.h.b16 %v732
        %v1067 = vunpack.c.l.b16 %v733
        %v1068 = vunpack.c.h.b16 %v733
        %v1069 = vunpack.c.l.b16 %v734
        %v1070 = vunpack.c.h.b16 %v734
        %v1071 = vunpack.c.l.b16 %v735
        %v1072 = vunpack.c.h.b16 %v735
        %v1073 = vunpack.c.l.b16 %v736
        %v1074 = vunpack.c.h.b16 %v736
        %v1075 = vunpack.c.l.b16 %v737
        %v1076 = vunpack.c.h.b16 %v737
        %v1077 = vunpack.c.l.b16 %v738
        %v1078 = vunpack.c.h.b16 %v738
        %v1079 = vunpack.c.l.b16 %v739
        %v1080 = vunpack.c.h.b16 %v739
        %v1081 = vunpack.c.l.b16 %v740
        %v1082 = vunpack.c.h.b16 %v740
        %v1083 = vunpack.c.l.b16 %v741
        %v1084 = vunpack.c.h.b16 %v741
        %v1085 = vunpack.c.l.b16 %v742
        %v1086 = vunpack.c.h.b16 %v742
        %v1087 = vunpack.c.l.b16 %v743
        %v1088 = vunpack.c.h.b16 %v743
        %v1089 = vunpack.c.l.b16 %v744
        %v1090 = vunpack.c.h.b16 %v744
        %v1091 = vunpack.c.l.b16 %v745
        %v1092 = vunpack.c.h.b16 %v745
        %v1093 = vunpack.c.l.b16 %v746
        %v1094 = vunpack.c.h.b16 %v746
        %v1095 = vunpack.c.l.b16 %v747
        %v1096 = vunpack.c.h.b16 %v747
        %v1097 = vunpack.c.l.b16 %v748
        %v1098 = vunpack.c.h.b16 %v748
        %v1099 = vunpack.c.l.b16 %v749
        %v1100 = vunpack.c.h.b16 %v749
        %v1101 = vunpack.c.l.b16 %v750
        %v1102 = vunpack.c.h.b16 %v750
        %v1103 = vunpack.c.l.b16 %v751
        %v1104 = vunpack.c.h.b16 %v751
        %v1105 = vunpack.c.l.b16 %v752
        %v1106 = vunpack.c.h.b16 %v752
        %v1107 = vunpack.c.l.b16 %v753
        %v1108 = vunpack.c.h.b16 %v753
        %v1109 = vunpack.c.l.b16 %v754
        %v1110 = vunpack.c.h.b16 %v754
        %v1111 = vunpack.c.l.b16 %v755
        %v1112 = vunpack.c.h.b16 %v755
        %v1113 = vunpack.c.l.b16 %v756
        %v1114 = vunpack.c.h.b16 %v756
        %v1115 = vunpack.c.l.b16 %v757
        %v1116 = vunpack.c.h.b16 %v757
        %v1117 = vunpack.c.l.b16 %v758
        %v1118 = vunpack.c.h.b16 %v758
        %v1119 = vunpack.c.l.b16 %v759
        %v1120 = vunpack.c.h.b16 %v759
        %v1121 = vunpack.c.l.b16 %v760
        %v1122 = vunpack.c.h.b16 %v760
        %v1123 = vunpack.c.l.b16 %v761
        %v1124 = vunpack.c.h.b16 %v761
        %v1125 = vunpack.c.l.b16 %v762
        %v1126 = vunpack.c.h.b16 %v762
        %v1127 = vunpack.c.l.b16 %v763
        %v1128 = vunpack.c.h.b16 %v763
        %v1129 = vunpack.c.l.b16 %v764
        %v1130 = vunpack.c.h.b16 %v764
        %v1131 = vunpack.c.l.b16 %v765
        %v1132 = vunpack.c.h.b16 %v765
        %v1133 = vunpack.c.l.b16 %v766
        %v1134 = vunpack.c.h.b16 %v766
        %v1135 = vunpack.c.l.b16 %v767
        %v1136 = vunpack.c.h.b16 %v767
        %v1137 = vunpack.c.l.b16 %v768
        %v1138 = vunpack.c.h.b16 %v768
        %v1139 = vunpack.c.l.b16 %v769
        %v1140 = vunpack.c.h.b16 %v769
        %v1141 = vunpack.c.l.b16 %v770
        %v1142 = vunpack.c.h.b16 %v770
        %v1143 = vunpack.c.l.b16 %v771
        %v1144 = vunpack.c.h.b16 %v771
        %v1145 = vunpack.c.l.b16 %v772
        %v1146 = vunpack.c.h.b16 %v772
        %v1147 = vunpack.c.l.b16 %v773
        %v1148 = vunpack.c.h.b16 %v773
        %v1149 = vunpack.c.l.b16 %v774
        %v1150 = vunpack.c.h.b16 %v774
        %v1151 = vunpack.c.l.b16 %v775
        %v1152 = vunpack.c.h.b16 %v775
        %v1153 = vunpack.c.l.b16 %v776
        %v1154 = vunpack.c.h.b16 %v776
        %v1155 = vunpack.c.l.b16 %v777
        %v1156 = vunpack.c.h.b16 %v777
        %v1157 = vunpack.c.l.b16 %v778
        %v1158 = vunpack.c.h.b16 %v778
        %v1159 = vunpack.c.l.b16 %v779
        %v1160 = vunpack.c.h.b16 %v779
        %v1161 = vunpack.c.l.b16 %v780
        %v1162 = vunpack.c.h.b16 %v780
        %v1163 = vunpack.c.l.b16 %v781
        %v1164 = vunpack.c.h.b16 %v781
        %v1165 = vunpack.c.l.b16 %v782
        %v1166 = vunpack.c.h.b16 %v782
        %v1167 = vunpack.c.l.b16 %v783
        %v1168 = vunpack.c.h.b16 %v783
        %v1169 = vunpack.c.l.b16 %v784
        %v1170 = vunpack.c.h.b16 %v784
        %v1171 = vunpack.c.l.b16 %v785
        %v1172 = vunpack.c.h.b16 %v785
        %v1173 = vunpack.c.l.b16 %v786
        %v1174 = vunpack.c.h.b16 %v786
        %v1175 = vunpack.c.l.b16 %v787
        %v1176 = vunpack.c.h.b16 %v787
        %v1177 = vunpack.c.l.b16 %v788
        %v1178 = vunpack.c.h.b16 %v788
        %v1179 = vunpack.c.l.b16 %v789
        %v1180 = vunpack.c.h.b16 %v789
        %v1181 = vunpack.c.l.b16 %v790
        %v1182 = vunpack.c.h.b16 %v790
        %v1183 = vunpack.c.l.b16 %v791
        %v1184 = vunpack.c.h.b16 %v791
        %v1185 = vunpack.c.l.b16 %v792
        %v1186 = vunpack.c.h.b16 %v792
        %v1187 = vunpack.c.l.b16 %v793
        %v1188 = vunpack.c.h.b16 %v793
        %v1189 = vunpack.c.l.b16 %v794
        %v1190 = vunpack.c.h.b16 %v794
        %v1191 = vunpack.c.l.b16 %v795
        %v1192 = vunpack.c.h.b16 %v795
        %v1193 = vunpack.c.l.b16 %v796
        %v1194 = vunpack.c.h.b16 %v796
        %v1195 = vunpack.c.l.b16 %v797
        %v1196 = vunpack.c.h.b16 %v797
        %v1197 = vunpack.c.l.b16 %v798
        %v1198 = vunpack.c.h.b16 %v798
        %v1199 = vunpack.c.l.b16 %v799
        %v1200 = vunpack.c.h.b16 %v799
        %v1201 = vunpack.c.l.b16 %v800
        %v1202 = vunpack.c.h.b16 %v800
        %v1203 = vunpack.c.l.b16 %v801
        %v1204 = vunpack.c.h.b16 %v801
        %v1205 = vunpack.c.l.b16 %v802
        %v1206 = vunpack.c.h.b16 %v802
        %v1207 = vunpack.c.l.b16 %v803
        %v1208 = vunpack.c.h.b16 %v803
        %v1209 = vunpack.c.l.b16 %v804
        %v1210 = vunpack.c.h.b16 %v804
        %v1211 = vunpack.c.l.b16 %v805
        %v1212 = vunpack.c.h.b16 %v805
        %v1213 = vunpack.c.l.b16 %v806
        %v1214 = vunpack.c.h.b16 %v806
        %v1215 = vunpack.c.l.b16 %v807
        %v1216 = vunpack.c.h.b16 %v807
        %v1217 = vunpack.c.l.b16 %v808
        %v1218 = vunpack.c.h.b16 %v808
        %v1219 = vunpack.c.l.b16 %v809
        %v1220 = vunpack.c.h.b16 %v809
        %v1221 = vunpack.c.l.b16 %v810
        %v1222 = vunpack.c.h.b16 %v810
        %v1223 = vunpack.c.l.b16 %v811
        %v1224 = vunpack.c.h.b16 %v811
        %v1225 = vunpack.c.l.b16 %v812
        %v1226 = vunpack.c.h.b16 %v812
        %v1227 = vunpack.c.l.b16 %v813
        %v1228 = vunpack.c.h.b16 %v813
        %v1229 = vunpack.c.l.b16 %v814
        %v1230 = vunpack.c.h.b16 %v814
        %v1231 = vunpack.c.l.b16 %v815
        %v1232 = vunpack.c.h.b16 %v815
        %v1233 = vunpack.c.l.b16 %v816
        %v1234 = vunpack.c.h.b16 %v816
        %v1235 = vunpack.c.l.b16 %v817
        %v1236 = vunpack.c.h.b16 %v817
        %v1237 = vunpack.c.l.b16 %v818
        %v1238 = vunpack.c.h.b16 %v818
        %v1239 = vunpack.c.l.b16 %v819
        %v1240 = vunpack.c.h.b16 %v819
        %v1241 = vunpack.c.l.b16 %v820
        %v1242 = vunpack.c.h.b16 %v820
        %v1243 = vunpack.c.l.b16 %v821
        %v1244 = vunpack.c.h.b16 %v821
        %v1245 = vunpack.c.l.b16 %v822
        %v1246 = vunpack.c.h.b16 %v822
        %v1247 = vunpack.c.l.b16 %v823
        %v1248 = vunpack.c.h.b16 %v823
        %v1249 = vunpack.c.l.b16 %v824
        %v1250 = vunpack.c.h.b16 %v824
        %v1251 = vunpack.c.l.b16 %v825
        %v1252 = vunpack.c.h.b16 %v825
        %v1253 = vunpack.c.l.b16 %v826
        %v1254 = vunpack.c.h.b16 %v826
        %v1255 = vunpack.c.l.b16 %v827
        %v1256 = vunpack.c.h.b16 %v827
        %v1257 = vunpack.c.l.b16 %v828
        %v1258 = vunpack.c.h.b16 %v828
        %v1259 = vunpack.c.l.b16 %v829
        %v1260 = vunpack.c.h.b16 %v829
        %v1261 = vunpack.c.l.b16 %v830
        %v1262 = vunpack.c.h.b16 %v830
        %v1263 = vpack.c.b16 %v977, %v975
        %v1264 = vpack.c.b16 %v978, %v976
        %v1265 = vpack.c.b16 %v981, %v979
        %v1266 = vpack.c.b16 %v982, %v980
        %v1267 = vpack.c.b16 %v985, %v983
        %v1268 = vpack.c.b16 %v986, %v984
        %v1269 = vpack.c.b16 %v989, %v987
        %v1270 = vpack.c.b16 %v990, %v988
        %v1271 = vpack.c.b16 %v993, %v991
        %v1272 = vpack.c.b16 %v994, %v992
        %v1273 = vpack.c.b16 %v997, %v995
        %v1274 = vpack.c.b16 %v998, %v996
        %v1275 = vpack.c.b16 %v1001, %v999
        %v1276 = vpack.c.b16 %v1002, %v1000
        %v1277 = vpack.c.b16 %v1005, %v1003
        %v1278 = vpack.c.b16 %v1006, %v1004
        %v1279 = vpack.c.b16 %v1009, %v1007
        %v1280 = vpack.c.b16 %v1010, %v1008
        %v1281 = vpack.c.b16 %v1013, %v1011
        %v1282 = vpack.c.b16 %v1014, %v1012
        %v1283 = vpack.c.b16 %v1017, %v1015
        %v1284 = vpack.c.b16 %v1018, %v1016
        %v1285 = vpack.c.b16 %v1021, %v1019
        %v1286 = vpack.c.b16 %v1022, %v1020
        %v1287 = vpack.c.b16 %v1025, %v1023
        %v1288 = vpack.c.b16 %v1026, %v1024
        %v1289 = vpack.c.b16 %v1029, %v1027
        %v1290 = vpack.c.b16 %v1030, %v1028
        %v1291 = vpack.c.b16 %v1033, %v1031
        %v1292 = vpack.c.b16 %v1034, %v1032
        %v1293 = vpack.c.b16 %v1037, %v1035
        %v1294 = vpack.c.b16 %v1038, %v1036
        %v1295 = vpack.c.b16 %v1041, %v1039
        %v1296 = vpack.c.b16 %v1042, %v1040
        %v1297 = vpack.c.b16 %v1045, %v1043
        %v1298 = vpack.c.b16 %v1046, %v1044
        %v1299 = vpack.c.b16 %v1049, %v1047
        %v1300 = vpack.c.b16 %v1050, %v1048
        %v1301 = vpack.c.b16 %v1053, %v1051
        %v1302 = vpack.c.b16 %v1054, %v1052
        %v1303 = vpack.c.b16 %v1057, %v1055
        %v1304 = vpack.c.b16 %v1058, %v1056
        %v1305 = vpack.c.b16 %v1061, %v1059
        %v1306 = vpack.c.b16 %v1062, %v1060
        %v1307 = vpack.c.b16 %v1065, %v1063
        %v1308 = vpack.c.b16 %v1066, %v1064
        %v1309 = vpack.c.b16 %v1069, %v1067
        %v1310 = vpack.c.b16 %v1070, %v1068
        %v1311 = vpack.c.b16 %v1073, %v1071
        %v1312 = vpack.c.b16 %v1074, %v1072
        %v1313 = vpack.c.b16 %v1077, %v1075
        %v1314 = vpack.c.b16 %v1078, %v1076
        %v1315 = vpack.c.b16 %v1081, %v1079
        %v1316 = vpack.c.b16 %v1082, %v1080
        %v1317 = vpack.c.b16 %v1085, %v1083
        %v1318 = vpack.c.b16 %v1086, %v1084
        %v1319 = vpack.c.b16 %v1089, %v1087
        %v1320 = vpack.c.b16 %v1090, %v1088
        %v1321 = vpack.c.b16 %v1093, %v1091
        %v1322 = vpack.c.b16 %v1094, %v1092
        %v1323 = vpack.c.b16 %v1097, %v1095
        %v1324 = vpack.c.b16 %v1098, %v1096
        %v1325 = vpack.c.b16 %v1101, %v1099
        %v1326 = vpack.c.b16 %v1102, %v1100
        %v1327 = vpack.c.b16 %v1105, %v1103
        %v1328 = vpack.c.b16 %v1106, %v1104
        %v1329 = vpack.c.b16 %v1109, %v1107
        %v1330 = vpack.c.b16 %v1110, %v1108
        %v1331 = vpack.c.b16 %v1113, %v1111
        %v1332 = vpack.c.b16 %v1114, %v1112
        %v1333 = vpack.c.b16 %v1117, %v1115
        %v1334 = vpack.c.b16 %v1118, %v1116
        %v1335 = vpack.c.b16 %v1121, %v1119
        %v1336 = vpack.c.b16 %v1122, %v1120
        %v1337 = vpack.c.b16 %v1125, %v1123
        %v1338 = vpack.c.b16 %v1126, %v1124
        %v1339 = vpack.c.b16 %v1129, %v1127
        %v1340 = vpack.c.b16 %v1130, %v1128
        %v1341 = vpack.c.b16 %v1133, %v1131
        %v1342 = vpack.c.b16 %v1134, %v1132
        %v1343 = vpack.c.b16 %v1137, %v1135
        %v1344 = vpack.c.b16 %v1138, %v1136
        %v1345 = vpack.c.b16 %v1141, %v1139
        %v1346 = vpack.c.b16 %v1142, %v1140
        %v1347 = vpack.c.b16 %v1145, %v1143
        %v1348 = vpack.c.b16 %v1146, %v1144
        %v1349 = vpack.c.b16 %v1149, %v1147
        %v1350 = vpack.c.b16 %v1150, %v1148
        %v1351 = vpack.c.b16 %v1153, %v1151
        %v1352 = vpack.c.b16 %v1154, %v1152
        %v1353 = vpack.c.b16 %v1157, %v1155
        %v1354 = vpack.c.b16 %v1158, %v1156
        %v1355 = vpack.c.b16 %v1161, %v1159
        %v1356 = vpack.c.b16 %v1162, %v1160
        %v1357 = vpack.c.b16 %v1165, %v1163
        %v1358 = vpack.c.b16 %v1166, %v1164
        %v1359 = vpack.c.b16 %v1169, %v1167
        %v1360 = vpack.c.b16 %v1170, %v1168
        %v1361 = vpack.c.b16 %v1173, %v1171
        %v1362 = vpack.c.b16 %v1174, %v1172
        %v1363 = vpack.c.b16 %v1177, %v1175
        %v1364 = vpack.c.b16 %v1178, %v1176
        %v1365 = vpack.c.b16 %v1181, %v1179
        %v1366 = vpack.c.b16 %v1182, %v1180
        %v1367 = vpack.c.b16 %v1185, %v1183
        %v1368 = vpack.c.b16 %v1186, %v1184
        %v1369 = vpack.c.b16 %v1189, %v1187
        %v1370 = vpack.c.b16 %v1190, %v1188
        %v1371 = vpack.c.b16 %v1193, %v1191
        %v1372 = vpack.c.b16 %v1194, %v1192
        %v1373 = vpack.c.b16 %v1197, %v1195
        %v1374 = vpack.c.b16 %v1198, %v1196
        %v1375 = vpack.c.b16 %v1201, %v1199
        %v1376 = vpack.c.b16 %v1202, %v1200
        %v1377 = vpack.c.b16 %v1205, %v1203
        %v1378 = vpack.c.b16 %v1206, %v1204
        %v1379 = vpack.c.b16 %v1209, %v1207
        %v1380 = vpack.c.b16 %v1210, %v1208
        %v1381 = vpack.c.b16 %v1213, %v1211
        %v1382 = vpack.c.b16 %v1214, %v1212
        %v1383 = vpack.c.b16 %v1217, %v1215
        %v1384 = vpack.c.b16 %v1218, %v1216
        %v1385 = vpack.c.b16 %v1221, %v1219
        %v1386 = vpack.c.b16 %v1222, %v1220
        %v1387 = vpack.c.b16 %v1225, %v1223
        %v1388 = vpack.c.b16 %v1226, %v1224
        %v1389 = vpack.c.b16 %v1229, %v1227
        %v1390 = vpack.c.b16 %v1230, %v1228
        %v1391 = vpack.c.b16 %v1233, %v1231
        %v1392 = vpack.c.b16 %v1234, %v1232
        %v1393 = vpack.c.b16 %v1237, %v1235
        %v1394 = vpack.c.b16 %v1238, %v1236
        %v1395 = vpack.c.b16 %v1241, %v1239
        %v1396 = vpack.c.b16 %v1242, %v1240
        %v1397 = vpack.c.b16 %v1245, %v1243
        %v1398 = vpack.c.b16 %v1246, %v1244
        %v1399 = vpack.c.b16 %v1249, %v1247
        %v1400 = vpack.c.b16 %v1250, %v1248
        %v1401 = vpack.c.b16 %v1253, %v1251
        %v1402 = vpack.c.b16 %v1254, %v1252
        %v1403 = vpack.c.b16 %v1257, %v1255
        %v1404 = vpack.c.b16 %v1258, %v1256
        %v1405 = vpack.c.b16 %v1261, %v1259
        %v1406 = vpack.c.b16 %v1262, %v1260
        %1551 = vmatprep.subr.bf16.mxu0 %v1264
        %1552 = vmatpush1.bf16.msra.mxu0 %v1263
        %1553 = vmatprep.subr.bf16.mxu0 %v1266
        %1554 = vmatpush1.bf16.msra.mxu0 %v1265
        %1555 = vmatprep.subr.bf16.mxu0 %v1268
        %1556 = vmatpush1.bf16.msra.mxu0 %v1267
        %1557 = vmatprep.subr.bf16.mxu0 %v1270
        %1558 = vmatpush1.bf16.msra.mxu0 %v1269
        %1559 = vmatprep.subr.bf16.mxu0 %v1272
        %1560 = vmatpush1.bf16.msra.mxu0 %v1271
        %1561 = vmatprep.subr.bf16.mxu0 %v1274
        %1562 = vmatpush1.bf16.msra.mxu0 %v1273
        %1563 = vmatprep.subr.bf16.mxu0 %v1276
        %1564 = vmatpush1.bf16.msra.mxu0 %v1275
        %1565 = vmatprep.subr.bf16.mxu0 %v1278
        %1566 = vmatpush1.bf16.msra.mxu0 %v1277
        %1567 = vmatprep.subr.bf16.mxu0 %v1280
        %1568 = vmatpush1.bf16.msra.mxu0 %v1279
        %1569 = vmatprep.subr.bf16.mxu0 %v1282
        %1570 = vmatpush1.bf16.msra.mxu0 %v1281
        %1571 = vmatprep.subr.bf16.mxu0 %v1284
        %1572 = vmatpush1.bf16.msra.mxu0 %v1283
        %1573 = vmatprep.subr.bf16.mxu0 %v1286
        %1574 = vmatpush1.bf16.msra.mxu0 %v1285
        %1575 = vmatprep.subr.bf16.mxu0 %v1288
        %1576 = vmatpush1.bf16.msra.mxu0 %v1287
        %1577 = vmatprep.subr.bf16.mxu0 %v1290
        %1578 = vmatpush1.bf16.msra.mxu0 %v1289
        %1579 = vmatprep.subr.bf16.mxu0 %v1292
        %1580 = vmatpush1.bf16.msra.mxu0 %v1291
        %1581 = vmatprep.subr.bf16.mxu0 %v1294
        %1582 = vmatpush1.bf16.msra.mxu0 %v1293
        %1583 = vmatprep.mubr.bf16.mxu0 %v653
        %1584 = vmatmul.mubr.bf16.gmra.mrb[0].mxu0 %v635
        %v1585 = vpop.f32.mrb[0].mxu0
        %v1586 = vadd.f32 0.0, %v1585
        %v1587 = vpop.f32.mrb[0].mxu0
        %v1588 = vadd.f32 0.0, %v1587
        %v1589 = vpop.f32.mrb[0].mxu0
        %v1590 = vadd.f32 0.0, %v1589
        %v1591 = vpop.f32.mrb[0].mxu0
        %v1592 = vadd.f32 0.0, %v1591
        %1593 = vmatprep.mubr.bf16.mxu0 %v654
        %1594 = vmatmul.mubr.bf16.gmra.mrb[0].mxu0 %v636
        %v1595 = vpop.f32.mrb[0].mxu0
        %v1596 = vadd.f32 0.0, %v1595
        %v1597 = vpop.f32.mrb[0].mxu0
        %v1598 = vadd.f32 0.0, %v1597
        %v1599 = vpop.f32.mrb[0].mxu0
        %v1600 = vadd.f32 0.0, %v1599
        %v1601 = vpop.f32.mrb[0].mxu0
        %v1602 = vadd.f32 0.0, %v1601
        %1603 = vmatprep.mubr.bf16.mxu0 %v653
        %1604 = vmatmul.mubr.bf16.gmra.mrb[0].mxu0 %v637
        %v1605 = vpop.f32.mrb[0].mxu0
        %v1606 = vadd.f32 0.0, %v1605
        %v1607 = vpop.f32.mrb[0].mxu0
        %v1608 = vadd.f32 0.0, %v1607
        %v1609 = vpop.f32.mrb[0].mxu0
        %v1610 = vadd.f32 0.0, %v1609
        %v1611 = vpop.f32.mrb[0].mxu0
        %v1612 = vadd.f32 0.0, %v1611
        %1613 = vmatprep.mubr.bf16.mxu0 %v655
        %1614 = vmatmul.mubr.bf16.gmra.mrb[0].mxu0 %v638
        %v1615 = vpop.f32.mrb[0].mxu0
        %v1616 = vadd.f32 0.0, %v1615
        %v1617 = vpop.f32.mrb[0].mxu0
        %v1618 = vadd.f32 0.0, %v1617
        %v1619 = vpop.f32.mrb[0].mxu0
        %v1620 = vadd.f32 0.0, %v1619
        %v1621 = vpop.f32.mrb[0].mxu0
        %v1622 = vadd.f32 0.0, %v1621
        %1623 = vmatprep.mubr.bf16.mxu0 %v656
        %1624 = vmatmul.mubr.bf16.gmra.mrb[0].mxu0 %v639
        %v1625 = vpop.f32.mrb[0].mxu0
        %v1626 = vadd.f32 0.0, %v1625
        %v1627 = vpop.f32.mrb[0].mxu0
        %v1628 = vadd.f32 0.0, %v1627
        %v1629 = vpop.f32.mrb[0].mxu0
        %v1630 = vadd.f32 0.0, %v1629
        %v1631 = vpop.f32.mrb[0].mxu0
        %v1632 = vadd.f32 0.0, %v1631
        %1633 = vmatprep.mubr.bf16.mxu0 %v657
        %1634 = vmatmul.mubr.bf16.gmra.mrb[0].mxu0 %v640
        %v1635 = vpop.f32.mrb[0].mxu0
        %v1636 = vadd.f32 0.0, %v1635
        %v1637 = vpop.f32.mrb[0].mxu0
        %v1638 = vadd.f32 0.0, %v1637
        %v1639 = vpop.f32.mrb[0].mxu0
        %v1640 = vadd.f32 0.0, %v1639
        %v1641 = vpop.f32.mrb[0].mxu0
        %v1642 = vadd.f32 0.0, %v1641
        %1643 = vmatprep.mubr.bf16.mxu0 %v658
        %1644 = vmatmul.mubr.bf16.gmra.mrb[0].mxu0 %v641
        %v1645 = vpop.f32.mrb[0].mxu0
        %v1646 = vadd.f32 0.0, %v1645
        %v1647 = vpop.f32.mrb[0].mxu0
        %v1648 = vadd.f32 0.0, %v1647
        %v1649 = vpop.f32.mrb[0].mxu0
        %v1650 = vadd.f32 0.0, %v1649
        %v1651 = vpop.f32.mrb[0].mxu0
        %v1652 = vadd.f32 0.0, %v1651
        %1653 = vmatprep.mubr.bf16.mxu0 %v659
        %1654 = vmatmul.mubr.bf16.gmra.mrb[0].mxu0 %v642
        %v1655 = vpop.f32.mrb[0].mxu0
        %v1656 = vadd.f32 0.0, %v1655
        %v1657 = vpop.f32.mrb[0].mxu0
        %v1658 = vadd.f32 0.0, %v1657
        %v1659 = vpop.f32.mrb[0].mxu0
        %v1660 = vadd.f32 0.0, %v1659
        %v1661 = vpop.f32.mrb[0].mxu0
        %v1662 = vadd.f32 0.0, %v1661
        %1663 = vmatprep.mubr.bf16.mxu0 %v660
        %1664 = vmatmul.mubr.bf16.gmra.mrb[0].mxu0 %v643
        %v1665 = vpop.f32.mrb[0].mxu0
        %v1666 = vadd.f32 0.0, %v1665
        %v1667 = vpop.f32.mrb[0].mxu0
        %v1668 = vadd.f32 0.0, %v1667
        %v1669 = vpop.f32.mrb[0].mxu0
        %v1670 = vadd.f32 0.0, %v1669
        %v1671 = vpop.f32.mrb[0].mxu0
        %v1672 = vadd.f32 0.0, %v1671
        %1673 = vmatprep.mubr.bf16.mxu0 %v661
        %1674 = vmatmul.mubr.bf16.gmra.mrb[0].mxu0 %v644
        %v1675 = vpop.f32.mrb[0].mxu0
        %v1676 = vadd.f32 0.0, %v1675
        %v1677 = vpop.f32.mrb[0].mxu0
        %v1678 = vadd.f32 0.0, %v1677
        %v1679 = vpop.f32.mrb[0].mxu0
        %v1680 = vadd.f32 0.0, %v1679
        %v1681 = vpop.f32.mrb[0].mxu0
        %v1682 = vadd.f32 0.0, %v1681
        %1683 = vmatprep.mubr.bf16.mxu0 %v662
        %1684 = vmatmul.mubr.bf16.gmra.mrb[0].mxu0 %v645
        %v1685 = vpop.f32.mrb[0].mxu0
        %v1686 = vadd.f32 0.0, %v1685
        %v1687 = vpop.f32.mrb[0].mxu0
        %v1688 = vadd.f32 0.0, %v1687
        %v1689 = vpop.f32.mrb[0].mxu0
        %v1690 = vadd.f32 0.0, %v1689
        %v1691 = vpop.f32.mrb[0].mxu0
        %v1692 = vadd.f32 0.0, %v1691
        %1693 = vmatprep.mubr.bf16.mxu0 %v663
        %1694 = vmatmul.mubr.bf16.gmra.mrb[0].mxu0 %v646
        %v1695 = vpop.f32.mrb[0].mxu0
        %v1696 = vadd.f32 0.0, %v1695
        %v1697 = vpop.f32.mrb[0].mxu0
        %v1698 = vadd.f32 0.0, %v1697
        %v1699 = vpop.f32.mrb[0].mxu0
        %v1700 = vadd.f32 0.0, %v1699
        %v1701 = vpop.f32.mrb[0].mxu0
        %v1702 = vadd.f32 0.0, %v1701
        %1703 = vmatprep.mubr.bf16.mxu0 %v664
        %1704 = vmatmul.mubr.bf16.gmra.mrb[0].mxu0 %v647
        %v1705 = vpop.f32.mrb[0].mxu0
        %v1706 = vadd.f32 0.0, %v1705
        %v1707 = vpop.f32.mrb[0].mxu0
        %v1708 = vadd.f32 0.0, %v1707
        %v1709 = vpop.f32.mrb[0].mxu0
        %v1710 = vadd.f32 0.0, %v1709
        %v1711 = vpop.f32.mrb[0].mxu0
        %v1712 = vadd.f32 0.0, %v1711
        %1713 = vmatprep.mubr.bf16.mxu0 %v665
        %1714 = vmatmul.mubr.bf16.gmra.mrb[0].mxu0 %v648
        %v1715 = vpop.f32.mrb[0].mxu0
        %v1716 = vadd.f32 0.0, %v1715
        %v1717 = vpop.f32.mrb[0].mxu0
        %v1718 = vadd.f32 0.0, %v1717
        %v1719 = vpop.f32.mrb[0].mxu0
        %v1720 = vadd.f32 0.0, %v1719
        %v1721 = vpop.f32.mrb[0].mxu0
        %v1722 = vadd.f32 0.0, %v1721
        %1723 = vmatprep.mubr.bf16.mxu0 %v666
        %1724 = vmatmul.mubr.bf16.gmra.mrb[0].mxu0 %v649
        %v1725 = vpop.f32.mrb[0].mxu0
        %v1726 = vadd.f32 0.0, %v1725
        %v1727 = vpop.f32.mrb[0].mxu0
        %v1728 = vadd.f32 0.0, %v1727
        %v1729 = vpop.f32.mrb[0].mxu0
        %v1730 = vadd.f32 0.0, %v1729
        %v1731 = vpop.f32.mrb[0].mxu0
        %v1732 = vadd.f32 0.0, %v1731
        %1733 = vmatprep.mubr.bf16.mxu0 %v667
        %1734 = vmatmul.mubr.bf16.gmra.mrb[0].mxu0 %v650
        %v1735 = vpop.f32.mrb[0].mxu0
        %v1736 = vadd.f32 0.0, %v1735
        %v1737 = vpop.f32.mrb[0].mxu0
        %v1738 = vadd.f32 0.0, %v1737
        %v1739 = vpop.f32.mrb[0].mxu0
        %v1740 = vadd.f32 0.0, %v1739
        %v1741 = vpop.f32.mrb[0].mxu0
        %v1742 = vadd.f32 0.0, %v1741
        %1743 = vdwg.mxu0
        %1744 = vmatprep.subr.bf16.mxu0 %v1296
        %1745 = vmatpush1.bf16.msra.mxu0 %v1295
        %1746 = vmatprep.subr.bf16.mxu0 %v1298
        %1747 = vmatpush1.bf16.msra.mxu0 %v1297
        %1748 = vmatprep.subr.bf16.mxu0 %v1300
        %1749 = vmatpush1.bf16.msra.mxu0 %v1299
        %1750 = vmatprep.subr.bf16.mxu0 %v1302
        %1751 = vmatpush1.bf16.msra.mxu0 %v1301
        %1752 = vmatprep.subr.bf16.mxu0 %v1304
        %1753 = vmatpush1.bf16.msra.mxu0 %v1303
        %1754 = vmatprep.subr.bf16.mxu0 %v1306
        %1755 = vmatpush1.bf16.msra.mxu0 %v1305
        %1756 = vmatprep.subr.bf16.mxu0 %v1308
        %1757 = vmatpush1.bf16.msra.mxu0 %v1307
        %1758 = vmatprep.subr.bf16.mxu0 %v1310
        %1759 = vmatpush1.bf16.msra.mxu0 %v1309
        %1760 = vmatprep.subr.bf16.mxu0 %v1312
        %1761 = vmatpush1.bf16.msra.mxu0 %v1311
        %1762 = vmatprep.subr.bf16.mxu0 %v1314
        %1763 = vmatpush1.bf16.msra.mxu0 %v1313
        %1764 = vmatprep.subr.bf16.mxu0 %v1316
        %1765 = vmatpush1.bf16.msra.mxu0 %v1315
        %1766 = vmatprep.subr.bf16.mxu0 %v1318
        %1767 = vmatpush1.bf16.msra.mxu0 %v1317
        %1768 = vmatprep.subr.bf16.mxu0 %v1320
        %1769 = vmatpush1.bf16.msra.mxu0 %v1319
        %1770 = vmatprep.subr.bf16.mxu0 %v1322
        %1771 = vmatpush1.bf16.msra.mxu0 %v1321
        %1772 = vmatprep.subr.bf16.mxu0 %v1324
        %1773 = vmatpush1.bf16.msra.mxu0 %v1323
        %1774 = vmatprep.subr.bf16.mxu0 %v1326
        %1775 = vmatpush1.bf16.msra.mxu0 %v1325
        %1776 = vmatprep.mubr.bf16.mxu0 %v636
        %1777 = vmatmul.mubr.bf16.gmra.mrb[0].mxu0 %v669
        %v1778 = vpop.f32.mrb[0].mxu0
        %v1779 = vadd.f32 %v1586, %v1778
        %v1780 = vpop.f32.mrb[0].mxu0
        %v1781 = vadd.f32 %v1588, %v1780
        %v1782 = vpop.f32.mrb[0].mxu0
        %v1783 = vadd.f32 %v1590, %v1782
        %v1784 = vpop.f32.mrb[0].mxu0
        %v1785 = vadd.f32 %v1592, %v1784
        %1786 = vmatprep.mubr.bf16.mxu0 %v637
        %1787 = vmatmul.mubr.bf16.gmra.mrb[0].mxu0 %v670
        %v1788 = vpop.f32.mrb[0].mxu0
        %v1789 = vadd.f32 %v1596, %v1788
        %v1790 = vpop.f32.mrb[0].mxu0
        %v1791 = vadd.f32 %v1598, %v1790
        %v1792 = vpop.f32.mrb[0].mxu0
        %v1793 = vadd.f32 %v1600, %v1792
        %v1794 = vpop.f32.mrb[0].mxu0
        %v1795 = vadd.f32 %v1602, %v1794
        %1796 = vmatprep.mubr.bf16.mxu0 %v638
        %1797 = vmatmul.mubr.bf16.gmra.mrb[0].mxu0 %v671
        %v1798 = vpop.f32.mrb[0].mxu0
        %v1799 = vadd.f32 %v1606, %v1798
        %v1800 = vpop.f32.mrb[0].mxu0
        %v1801 = vadd.f32 %v1608, %v1800
        %v1802 = vpop.f32.mrb[0].mxu0
        %v1803 = vadd.f32 %v1610, %v1802
        %v1804 = vpop.f32.mrb[0].mxu0
        %v1805 = vadd.f32 %v1612, %v1804
        %1806 = vmatprep.mubr.bf16.mxu0 %v639
        %1807 = vmatmul.mubr.bf16.gmra.mrb[0].mxu0 %v672
        %v1808 = vpop.f32.mrb[0].mxu0
        %v1809 = vadd.f32 %v1616, %v1808
        %v1810 = vpop.f32.mrb[0].mxu0
        %v1811 = vadd.f32 %v1618, %v1810
        %v1812 = vpop.f32.mrb[0].mxu0
        %v1813 = vadd.f32 %v1620, %v1812
        %v1814 = vpop.f32.mrb[0].mxu0
        %v1815 = vadd.f32 %v1622, %v1814
        %1816 = vmatprep.mubr.bf16.mxu0 %v640
        %1817 = vmatmul.mubr.bf16.gmra.mrb[0].mxu0 %v673
        %v1818 = vpop.f32.mrb[0].mxu0
        %v1819 = vadd.f32 %v1626, %v1818
        %v1820 = vpop.f32.mrb[0].mxu0
        %v1821 = vadd.f32 %v1628, %v1820
        %v1822 = vpop.f32.mrb[0].mxu0
        %v1823 = vadd.f32 %v1630, %v1822
        %v1824 = vpop.f32.mrb[0].mxu0
        %v1825 = vadd.f32 %v1632, %v1824
        %1826 = vmatprep.mubr.bf16.mxu0 %v641
        %1827 = vmatmul.mubr.bf16.gmra.mrb[0].mxu0 %v674
        %v1828 = vpop.f32.mrb[0].mxu0
        %v1829 = vadd.f32 %v1636, %v1828
        %v1830 = vpop.f32.mrb[0].mxu0
        %v1831 = vadd.f32 %v1638, %v1830
        %v1832 = vpop.f32.mrb[0].mxu0
        %v1833 = vadd.f32 %v1640, %v1832
        %v1834 = vpop.f32.mrb[0].mxu0
        %v1835 = vadd.f32 %v1642, %v1834
        %1836 = vmatprep.mubr.bf16.mxu0 %v642
        %1837 = vmatmul.mubr.bf16.gmra.mrb[0].mxu0 %v675
        %v1838 = vpop.f32.mrb[0].mxu0
        %v1839 = vadd.f32 %v1646, %v1838
        %v1840 = vpop.f32.mrb[0].mxu0
        %v1841 = vadd.f32 %v1648, %v1840
        %v1842 = vpop.f32.mrb[0].mxu0
        %v1843 = vadd.f32 %v1650, %v1842
        %v1844 = vpop.f32.mrb[0].mxu0
        %v1845 = vadd.f32 %v1652, %v1844
        %1846 = vmatprep.mubr.bf16.mxu0 %v643
        %1847 = vmatmul.mubr.bf16.gmra.mrb[0].mxu0 %v676
        %v1848 = vpop.f32.mrb[0].mxu0
        %v1849 = vadd.f32 %v1656, %v1848
        %v1850 = vpop.f32.mrb[0].mxu0
        %v1851 = vadd.f32 %v1658, %v1850
        %v1852 = vpop.f32.mrb[0].mxu0
        %v1853 = vadd.f32 %v1660, %v1852
        %v1854 = vpop.f32.mrb[0].mxu0
        %v1855 = vadd.f32 %v1662, %v1854
        %1856 = vmatprep.mubr.bf16.mxu0 %v644
        %1857 = vmatmul.mubr.bf16.gmra.mrb[0].mxu0 %v677
        %v1858 = vpop.f32.mrb[0].mxu0
        %v1859 = vadd.f32 %v1666, %v1858
        %v1860 = vpop.f32.mrb[0].mxu0
        %v1861 = vadd.f32 %v1668, %v1860
        %v1862 = vpop.f32.mrb[0].mxu0
        %v1863 = vadd.f32 %v1670, %v1862
        %v1864 = vpop.f32.mrb[0].mxu0
        %v1865 = vadd.f32 %v1672, %v1864
        %1866 = vmatprep.mubr.bf16.mxu0 %v645
        %1867 = vmatmul.mubr.bf16.gmra.mrb[0].mxu0 %v678
        %v1868 = vpop.f32.mrb[0].mxu0
        %v1869 = vadd.f32 %v1676, %v1868
        %v1870 = vpop.f32.mrb[0].mxu0
        %v1871 = vadd.f32 %v1678, %v1870
        %v1872 = vpop.f32.mrb[0].mxu0
        %v1873 = vadd.f32 %v1680, %v1872
        %v1874 = vpop.f32.mrb[0].mxu0
        %v1875 = vadd.f32 %v1682, %v1874
        %1876 = vmatprep.mubr.bf16.mxu0 %v646
        %1877 = vmatmul.mubr.bf16.gmra.mrb[0].mxu0 %v679
        %v1878 = vpop.f32.mrb[0].mxu0
        %v1879 = vadd.f32 %v1686, %v1878
        %v1880 = vpop.f32.mrb[0].mxu0
        %v1881 = vadd.f32 %v1688, %v1880
        %v1882 = vpop.f32.mrb[0].mxu0
        %v1883 = vadd.f32 %v1690, %v1882
        %v1884 = vpop.f32.mrb[0].mxu0
        %v1885 = vadd.f32 %v1692, %v1884
        %1886 = vmatprep.mubr.bf16.mxu0 %v647
        %1887 = vmatmul.mubr.bf16.gmra.mrb[0].mxu0 %v680
        %v1888 = vpop.f32.mrb[0].mxu0
        %v1889 = vadd.f32 %v1696, %v1888
        %v1890 = vpop.f32.mrb[0].mxu0
        %v1891 = vadd.f32 %v1698, %v1890
        %v1892 = vpop.f32.mrb[0].mxu0
        %v1893 = vadd.f32 %v1700, %v1892
        %v1894 = vpop.f32.mrb[0].mxu0
        %v1895 = vadd.f32 %v1702, %v1894
        %1896 = vmatprep.mubr.bf16.mxu0 %v648
        %1897 = vmatmul.mubr.bf16.gmra.mrb[0].mxu0 %v681
        %v1898 = vpop.f32.mrb[0].mxu0
        %v1899 = vadd.f32 %v1706, %v1898
        %v1900 = vpop.f32.mrb[0].mxu0
        %v1901 = vadd.f32 %v1708, %v1900
        %v1902 = vpop.f32.mrb[0].mxu0
        %v1903 = vadd.f32 %v1710, %v1902
        %v1904 = vpop.f32.mrb[0].mxu0
        %v1905 = vadd.f32 %v1712, %v1904
        %1906 = vmatprep.mubr.bf16.mxu0 %v649
        %1907 = vmatmul.mubr.bf16.gmra.mrb[0].mxu0 %v682
        %v1908 = vpop.f32.mrb[0].mxu0
        %v1909 = vadd.f32 %v1716, %v1908
        %v1910 = vpop.f32.mrb[0].mxu0
        %v1911 = vadd.f32 %v1718, %v1910
        %v1912 = vpop.f32.mrb[0].mxu0
        %v1913 = vadd.f32 %v1720, %v1912
        %v1914 = vpop.f32.mrb[0].mxu0
        %v1915 = vadd.f32 %v1722, %v1914
        %1916 = vmatprep.mubr.bf16.mxu0 %v650
        %1917 = vmatmul.mubr.bf16.gmra.mrb[0].mxu0 %v683
        %v1918 = vpop.f32.mrb[0].mxu0
        %v1919 = vadd.f32 %v1726, %v1918
        %v1920 = vpop.f32.mrb[0].mxu0
        %v1921 = vadd.f32 %v1728, %v1920
        %v1922 = vpop.f32.mrb[0].mxu0
        %v1923 = vadd.f32 %v1730, %v1922
        %v1924 = vpop.f32.mrb[0].mxu0
        %v1925 = vadd.f32 %v1732, %v1924
        %1926 = vmatprep.mubr.bf16.mxu0 %v651
        %1927 = vmatmul.mubr.bf16.gmra.mrb[0].mxu0 %v684
        %v1928 = vpop.f32.mrb[0].mxu0
        %v1929 = vadd.f32 %v1736, %v1928
        %v1930 = vpop.f32.mrb[0].mxu0
        %v1931 = vadd.f32 %v1738, %v1930
        %v1932 = vpop.f32.mrb[0].mxu0
        %v1933 = vadd.f32 %v1740, %v1932
        %v1934 = vpop.f32.mrb[0].mxu0
        %v1935 = vadd.f32 %v1742, %v1934
        %1936 = vdwg.mxu0
        %1937 = vmatprep.subr.bf16.mxu0 %v1328
        %1938 = vmatpush1.bf16.msra.mxu0 %v1327
        %1939 = vmatprep.subr.bf16.mxu0 %v1330
        %1940 = vmatpush1.bf16.msra.mxu0 %v1329
        %1941 = vmatprep.subr.bf16.mxu0 %v1332
        %1942 = vmatpush1.bf16.msra.mxu0 %v1331
        %1943 = vmatprep.subr.bf16.mxu0 %v1334
        %1944 = vmatpush1.bf16.msra.mxu0 %v1333
        %1945 = vmatprep.subr.bf16.mxu0 %v1336
        %1946 = vmatpush1.bf16.msra.mxu0 %v1335
        %1947 = vmatprep.subr.bf16.mxu0 %v1338
        %1948 = vmatpush1.bf16.msra.mxu0 %v1337
        %1949 = vmatprep.subr.bf16.mxu0 %v1340
        %1950 = vmatpush1.bf16.msra.mxu0 %v1339
        %1951 = vmatprep.subr.bf16.mxu0 %v1342
        %1952 = vmatpush1.bf16.msra.mxu0 %v1341
        %1953 = vmatprep.subr.bf16.mxu0 %v1344
        %1954 = vmatpush1.bf16.msra.mxu0 %v1343
        %1955 = vmatprep.subr.bf16.mxu0 %v1346
        %1956 = vmatpush1.bf16.msra.mxu0 %v1345
        %1957 = vmatprep.subr.bf16.mxu0 %v1348
        %1958 = vmatpush1.bf16.msra.mxu0 %v1347
        %1959 = vmatprep.subr.bf16.mxu0 %v1350
        %1960 = vmatpush1.bf16.msra.mxu0 %v1349
        %1961 = vmatprep.subr.bf16.mxu0 %v1352
        %1962 = vmatpush1.bf16.msra.mxu0 %v1351
        %1963 = vmatprep.subr.bf16.mxu0 %v1354
        %1964 = vmatpush1.bf16.msra.mxu0 %v1353
        %1965 = vmatprep.subr.bf16.mxu0 %v1356
        %1966 = vmatpush1.bf16.msra.mxu0 %v1355
        %1967 = vmatprep.subr.bf16.mxu0 %v1358
        %1968 = vmatpush1.bf16.msra.mxu0 %v1357
        %1969 = vmatprep.mubr.bf16.mxu0 %v670
        %1970 = vmatmul.mubr.bf16.gmra.mrb[0].mxu0 %v654
        %v1971 = vpop.f32.mrb[0].mxu0
        %v1972 = vadd.f32 %v1779, %v1971
        %v1973 = vpop.f32.mrb[0].mxu0
        %v1974 = vadd.f32 %v1781, %v1973
        %v1975 = vpop.f32.mrb[0].mxu0
        %v1976 = vadd.f32 %v1783, %v1975
        %v1977 = vpop.f32.mrb[0].mxu0
        %v1978 = vadd.f32 %v1785, %v1977
        %1979 = vmatprep.mubr.bf16.mxu0 %v671
        %1980 = vmatmul.mubr.bf16.gmra.mrb[0].mxu0 %v653
        %v1981 = vpop.f32.mrb[0].mxu0
        %v1982 = vadd.f32 %v1789, %v1981
        %v1983 = vpop.f32.mrb[0].mxu0
        %v1984 = vadd.f32 %v1791, %v1983
        %v1985 = vpop.f32.mrb[0].mxu0
        %v1986 = vadd.f32 %v1793, %v1985
        %v1987 = vpop.f32.mrb[0].mxu0
        %v1988 = vadd.f32 %v1795, %v1987
        %1989 = vmatprep.mubr.bf16.mxu0 %v672
        %1990 = vmatmul.mubr.bf16.gmra.mrb[0].mxu0 %v655
        %v1991 = vpop.f32.mrb[0].mxu0
        %v1992 = vadd.f32 %v1799, %v1991
        %v1993 = vpop.f32.mrb[0].mxu0
        %v1994 = vadd.f32 %v1801, %v1993
        %v1995 = vpop.f32.mrb[0].mxu0
        %v1996 = vadd.f32 %v1803, %v1995
        %v1997 = vpop.f32.mrb[0].mxu0
        %v1998 = vadd.f32 %v1805, %v1997
        %1999 = vmatprep.mubr.bf16.mxu0 %v673
        %2000 = vmatmul.mubr.bf16.gmra.mrb[0].mxu0 %v656
        %v2001 = vpop.f32.mrb[0].mxu0
        %v2002 = vadd.f32 %v1809, %v2001
        %v2003 = vpop.f32.mrb[0].mxu0
        %v2004 = vadd.f32 %v1811, %v2003
        %v2005 = vpop.f32.mrb[0].mxu0
        %v2006 = vadd.f32 %v1813, %v2005
        %v2007 = vpop.f32.mrb[0].mxu0
        %v2008 = vadd.f32 %v1815, %v2007
        %2009 = vmatprep.mubr.bf16.mxu0 %v674
        %2010 = vmatmul.mubr.bf16.gmra.mrb[0].mxu0 %v657
        %v2011 = vpop.f32.mrb[0].mxu0
        %v2012 = vadd.f32 %v1819, %v2011
        %v2013 = vpop.f32.mrb[0].mxu0
        %v2014 = vadd.f32 %v1821, %v2013
        %v2015 = vpop.f32.mrb[0].mxu0
        %v2016 = vadd.f32 %v1823, %v2015
        %v2017 = vpop.f32.mrb[0].mxu0
        %v2018 = vadd.f32 %v1825, %v2017
        %2019 = vmatprep.mubr.bf16.mxu0 %v675
        %2020 = vmatmul.mubr.bf16.gmra.mrb[0].mxu0 %v658
        %v2021 = vpop.f32.mrb[0].mxu0
        %v2022 = vadd.f32 %v1829, %v2021
        %v2023 = vpop.f32.mrb[0].mxu0
        %v2024 = vadd.f32 %v1831, %v2023
        %v2025 = vpop.f32.mrb[0].mxu0
        %v2026 = vadd.f32 %v1833, %v2025
        %v2027 = vpop.f32.mrb[0].mxu0
        %v2028 = vadd.f32 %v1835, %v2027
        %2029 = vmatprep.mubr.bf16.mxu0 %v676
        %2030 = vmatmul.mubr.bf16.gmra.mrb[0].mxu0 %v659
        %v2031 = vpop.f32.mrb[0].mxu0
        %v2032 = vadd.f32 %v1839, %v2031
        %v2033 = vpop.f32.mrb[0].mxu0
        %v2034 = vadd.f32 %v1841, %v2033
        %v2035 = vpop.f32.mrb[0].mxu0
        %v2036 = vadd.f32 %v1843, %v2035
        %v2037 = vpop.f32.mrb[0].mxu0
        %v2038 = vadd.f32 %v1845, %v2037
        %2039 = vmatprep.mubr.bf16.mxu0 %v677
        %2040 = vmatmul.mubr.bf16.gmra.mrb[0].mxu0 %v660
        %v2041 = vpop.f32.mrb[0].mxu0
        %v2042 = vadd.f32 %v1849, %v2041
        %v2043 = vpop.f32.mrb[0].mxu0
        %v2044 = vadd.f32 %v1851, %v2043
        %v2045 = vpop.f32.mrb[0].mxu0
        %v2046 = vadd.f32 %v1853, %v2045
        %v2047 = vpop.f32.mrb[0].mxu0
        %v2048 = vadd.f32 %v1855, %v2047
        %2049 = vmatprep.mubr.bf16.mxu0 %v678
        %2050 = vmatmul.mubr.bf16.gmra.mrb[0].mxu0 %v661
        %v2051 = vpop.f32.mrb[0].mxu0
        %v2052 = vadd.f32 %v1859, %v2051
        %v2053 = vpop.f32.mrb[0].mxu0
        %v2054 = vadd.f32 %v1861, %v2053
        %v2055 = vpop.f32.mrb[0].mxu0
        %v2056 = vadd.f32 %v1863, %v2055
        %v2057 = vpop.f32.mrb[0].mxu0
        %v2058 = vadd.f32 %v1865, %v2057
        %2059 = vmatprep.mubr.bf16.mxu0 %v679
        %2060 = vmatmul.mubr.bf16.gmra.mrb[0].mxu0 %v662
        %v2061 = vpop.f32.mrb[0].mxu0
        %v2062 = vadd.f32 %v1869, %v2061
        %v2063 = vpop.f32.mrb[0].mxu0
        %v2064 = vadd.f32 %v1871, %v2063
        %v2065 = vpop.f32.mrb[0].mxu0
        %v2066 = vadd.f32 %v1873, %v2065
        %v2067 = vpop.f32.mrb[0].mxu0
        %v2068 = vadd.f32 %v1875, %v2067
        %2069 = vmatprep.mubr.bf16.mxu0 %v680
        %2070 = vmatmul.mubr.bf16.gmra.mrb[0].mxu0 %v663
        %v2071 = vpop.f32.mrb[0].mxu0
        %v2072 = vadd.f32 %v1879, %v2071
        %v2073 = vpop.f32.mrb[0].mxu0
        %v2074 = vadd.f32 %v1881, %v2073
        %v2075 = vpop.f32.mrb[0].mxu0
        %v2076 = vadd.f32 %v1883, %v2075
        %v2077 = vpop.f32.mrb[0].mxu0
        %v2078 = vadd.f32 %v1885, %v2077
        %2079 = vmatprep.mubr.bf16.mxu0 %v681
        %2080 = vmatmul.mubr.bf16.gmra.mrb[0].mxu0 %v664
        %v2081 = vpop.f32.mrb[0].mxu0
        %v2082 = vadd.f32 %v1889, %v2081
        %v2083 = vpop.f32.mrb[0].mxu0
        %v2084 = vadd.f32 %v1891, %v2083
        %v2085 = vpop.f32.mrb[0].mxu0
        %v2086 = vadd.f32 %v1893, %v2085
        %v2087 = vpop.f32.mrb[0].mxu0
        %v2088 = vadd.f32 %v1895, %v2087
        %2089 = vmatprep.mubr.bf16.mxu0 %v682
        %2090 = vmatmul.mubr.bf16.gmra.mrb[0].mxu0 %v665
        %v2091 = vpop.f32.mrb[0].mxu0
        %v2092 = vadd.f32 %v1899, %v2091
        %v2093 = vpop.f32.mrb[0].mxu0
        %v2094 = vadd.f32 %v1901, %v2093
        %v2095 = vpop.f32.mrb[0].mxu0
        %v2096 = vadd.f32 %v1903, %v2095
        %v2097 = vpop.f32.mrb[0].mxu0
        %v2098 = vadd.f32 %v1905, %v2097
        %2099 = vmatprep.mubr.bf16.mxu0 %v683
        %2100 = vmatmul.mubr.bf16.gmra.mrb[0].mxu0 %v666
        %v2101 = vpop.f32.mrb[0].mxu0
        %v2102 = vadd.f32 %v1909, %v2101
        %v2103 = vpop.f32.mrb[0].mxu0
        %v2104 = vadd.f32 %v1911, %v2103
        %v2105 = vpop.f32.mrb[0].mxu0
        %v2106 = vadd.f32 %v1913, %v2105
        %v2107 = vpop.f32.mrb[0].mxu0
        %v2108 = vadd.f32 %v1915, %v2107
        %2109 = vmatprep.mubr.bf16.mxu0 %v684
        %2110 = vmatmul.mubr.bf16.gmra.mrb[0].mxu0 %v667
        %v2111 = vpop.f32.mrb[0].mxu0
        %v2112 = vadd.f32 %v1919, %v2111
        %v2113 = vpop.f32.mrb[0].mxu0
        %v2114 = vadd.f32 %v1921, %v2113
        %v2115 = vpop.f32.mrb[0].mxu0
        %v2116 = vadd.f32 %v1923, %v2115
        %v2117 = vpop.f32.mrb[0].mxu0
        %v2118 = vadd.f32 %v1925, %v2117
        %2119 = vmatprep.mubr.bf16.mxu0 %v685
        %2120 = vmatmul.mubr.bf16.gmra.mrb[0].mxu0 %v668
        %v2121 = vpop.f32.mrb[0].mxu0
        %v2122 = vadd.f32 %v1929, %v2121
        %v2123 = vpop.f32.mrb[0].mxu0
        %v2124 = vadd.f32 %v1931, %v2123
        %v2125 = vpop.f32.mrb[0].mxu0
        %v2126 = vadd.f32 %v1933, %v2125
        %v2127 = vpop.f32.mrb[0].mxu0
        %v2128 = vadd.f32 %v1935, %v2127
        %2129 = vdwg.mxu0
        %2130 = vmatprep.subr.bf16.mxu0 %v1360
        %2131 = vmatpush1.bf16.msra.mxu0 %v1359
        %2132 = vmatprep.subr.bf16.mxu0 %v1362
        %2133 = vmatpush1.bf16.msra.mxu0 %v1361
        %2134 = vmatprep.subr.bf16.mxu0 %v1364
        %2135 = vmatpush1.bf16.msra.mxu0 %v1363
        %2136 = vmatprep.subr.bf16.mxu0 %v1366
        %2137 = vmatpush1.bf16.msra.mxu0 %v1365
        %2138 = vmatprep.subr.bf16.mxu0 %v1368
        %2139 = vmatpush1.bf16.msra.mxu0 %v1367
        %2140 = vmatprep.subr.bf16.mxu0 %v1370
        %2141 = vmatpush1.bf16.msra.mxu0 %v1369
        %2142 = vmatprep.subr.bf16.mxu0 %v1372
        %2143 = vmatpush1.bf16.msra.mxu0 %v1371
        %2144 = vmatprep.subr.bf16.mxu0 %v1374
        %2145 = vmatpush1.bf16.msra.mxu0 %v1373
        %2146 = vmatprep.subr.bf16.mxu0 %v1376
        %2147 = vmatpush1.bf16.msra.mxu0 %v1375
        %2148 = vmatprep.subr.bf16.mxu0 %v1378
        %2149 = vmatpush1.bf16.msra.mxu0 %v1377
        %2150 = vmatprep.subr.bf16.mxu0 %v1380
        %2151 = vmatpush1.bf16.msra.mxu0 %v1379
        %2152 = vmatprep.subr.bf16.mxu0 %v1382
        %2153 = vmatpush1.bf16.msra.mxu0 %v1381
        %2154 = vmatprep.subr.bf16.mxu0 %v1384
        %2155 = vmatpush1.bf16.msra.mxu0 %v1383
        %2156 = vmatprep.subr.bf16.mxu0 %v1386
        %2157 = vmatpush1.bf16.msra.mxu0 %v1385
        %2158 = vmatprep.subr.bf16.mxu0 %v1388
        %2159 = vmatpush1.bf16.msra.mxu0 %v1387
        %2160 = vmatprep.subr.bf16.mxu0 %v1390
        %2161 = vmatpush1.bf16.msra.mxu0 %v1389
        %2162 = vmatprep.mubr.bf16.mxu0 %v653
        %2163 = vmatmul.mubr.bf16.gmra.mrb[0].mxu0 %v637
        %v2164 = vpop.f32.mrb[0].mxu0
        %v2165 = vadd.f32 %v1972, %v2164
        %v2166 = vpop.f32.mrb[0].mxu0
        %v2167 = vadd.f32 %v1974, %v2166
        %v2168 = vpop.f32.mrb[0].mxu0
        %v2169 = vadd.f32 %v1976, %v2168
        %v2170 = vpop.f32.mrb[0].mxu0
        %v2171 = vadd.f32 %v1978, %v2170
        %2172 = vmatprep.mubr.bf16.mxu0 %v655
        %2173 = vmatmul.mubr.bf16.gmra.mrb[0].mxu0 %v638
        %v2174 = vpop.f32.mrb[0].mxu0
        %v2175 = vadd.f32 %v1982, %v2174
        %v2176 = vpop.f32.mrb[0].mxu0
        %v2177 = vadd.f32 %v1984, %v2176
        %v2178 = vpop.f32.mrb[0].mxu0
        %v2179 = vadd.f32 %v1986, %v2178
        %v2180 = vpop.f32.mrb[0].mxu0
        %v2181 = vadd.f32 %v1988, %v2180
        %2182 = vmatprep.mubr.bf16.mxu0 %v656
        %2183 = vmatmul.mubr.bf16.gmra.mrb[0].mxu0 %v639
        %v2184 = vpop.f32.mrb[0].mxu0
        %v2185 = vadd.f32 %v1992, %v2184
        %v2186 = vpop.f32.mrb[0].mxu0
        %v2187 = vadd.f32 %v1994, %v2186
        %v2188 = vpop.f32.mrb[0].mxu0
        %v2189 = vadd.f32 %v1996, %v2188
        %v2190 = vpop.f32.mrb[0].mxu0
        %v2191 = vadd.f32 %v1998, %v2190
        %2192 = vmatprep.mubr.bf16.mxu0 %v657
        %2193 = vmatmul.mubr.bf16.gmra.mrb[0].mxu0 %v640
        %v2194 = vpop.f32.mrb[0].mxu0
        %v2195 = vadd.f32 %v2002, %v2194
        %v2196 = vpop.f32.mrb[0].mxu0
        %v2197 = vadd.f32 %v2004, %v2196
        %v2198 = vpop.f32.mrb[0].mxu0
        %v2199 = vadd.f32 %v2006, %v2198
        %v2200 = vpop.f32.mrb[0].mxu0
        %v2201 = vadd.f32 %v2008, %v2200
        %2202 = vmatprep.mubr.bf16.mxu0 %v658
        %2203 = vmatmul.mubr.bf16.gmra.mrb[0].mxu0 %v641
        %v2204 = vpop.f32.mrb[0].mxu0
        %v2205 = vadd.f32 %v2012, %v2204
        %v2206 = vpop.f32.mrb[0].mxu0
        %v2207 = vadd.f32 %v2014, %v2206
        %v2208 = vpop.f32.mrb[0].mxu0
        %v2209 = vadd.f32 %v2016, %v2208
        %v2210 = vpop.f32.mrb[0].mxu0
        %v2211 = vadd.f32 %v2018, %v2210
        %2212 = vmatprep.mubr.bf16.mxu0 %v659
        %2213 = vmatmul.mubr.bf16.gmra.mrb[0].mxu0 %v642
        %v2214 = vpop.f32.mrb[0].mxu0
        %v2215 = vadd.f32 %v2022, %v2214
        %v2216 = vpop.f32.mrb[0].mxu0
        %v2217 = vadd.f32 %v2024, %v2216
        %v2218 = vpop.f32.mrb[0].mxu0
        %v2219 = vadd.f32 %v2026, %v2218
        %v2220 = vpop.f32.mrb[0].mxu0
        %v2221 = vadd.f32 %v2028, %v2220
        %2222 = vmatprep.mubr.bf16.mxu0 %v660
        %2223 = vmatmul.mubr.bf16.gmra.mrb[0].mxu0 %v643
        %v2224 = vpop.f32.mrb[0].mxu0
        %v2225 = vadd.f32 %v2032, %v2224
        %v2226 = vpop.f32.mrb[0].mxu0
        %v2227 = vadd.f32 %v2034, %v2226
        %v2228 = vpop.f32.mrb[0].mxu0
        %v2229 = vadd.f32 %v2036, %v2228
        %v2230 = vpop.f32.mrb[0].mxu0
        %v2231 = vadd.f32 %v2038, %v2230
        %2232 = vmatprep.mubr.bf16.mxu0 %v661
        %2233 = vmatmul.mubr.bf16.gmra.mrb[0].mxu0 %v644
        %v2234 = vpop.f32.mrb[0].mxu0
        %v2235 = vadd.f32 %v2042, %v2234
        %v2236 = vpop.f32.mrb[0].mxu0
        %v2237 = vadd.f32 %v2044, %v2236
        %v2238 = vpop.f32.mrb[0].mxu0
        %v2239 = vadd.f32 %v2046, %v2238
        %v2240 = vpop.f32.mrb[0].mxu0
        %v2241 = vadd.f32 %v2048, %v2240
        %2242 = vmatprep.mubr.bf16.mxu0 %v662
        %2243 = vmatmul.mubr.bf16.gmra.mrb[0].mxu0 %v645
        %v2244 = vpop.f32.mrb[0].mxu0
        %v2245 = vadd.f32 %v2052, %v2244
        %v2246 = vpop.f32.mrb[0].mxu0
        %v2247 = vadd.f32 %v2054, %v2246
        %v2248 = vpop.f32.mrb[0].mxu0
        %v2249 = vadd.f32 %v2056, %v2248
        %v2250 = vpop.f32.mrb[0].mxu0
        %v2251 = vadd.f32 %v2058, %v2250
        %2252 = vmatprep.mubr.bf16.mxu0 %v663
        %2253 = vmatmul.mubr.bf16.gmra.mrb[0].mxu0 %v646
        %v2254 = vpop.f32.mrb[0].mxu0
        %v2255 = vadd.f32 %v2062, %v2254
        %v2256 = vpop.f32.mrb[0].mxu0
        %v2257 = vadd.f32 %v2064, %v2256
        %v2258 = vpop.f32.mrb[0].mxu0
        %v2259 = vadd.f32 %v2066, %v2258
        %v2260 = vpop.f32.mrb[0].mxu0
        %v2261 = vadd.f32 %v2068, %v2260
        %2262 = vmatprep.mubr.bf16.mxu0 %v664
        %2263 = vmatmul.mubr.bf16.gmra.mrb[0].mxu0 %v647
        %v2264 = vpop.f32.mrb[0].mxu0
        %v2265 = vadd.f32 %v2072, %v2264
        %v2266 = vpop.f32.mrb[0].mxu0
        %v2267 = vadd.f32 %v2074, %v2266
        %v2268 = vpop.f32.mrb[0].mxu0
        %v2269 = vadd.f32 %v2076, %v2268
        %v2270 = vpop.f32.mrb[0].mxu0
        %v2271 = vadd.f32 %v2078, %v2270
        %2272 = vmatprep.mubr.bf16.mxu0 %v665
        %2273 = vmatmul.mubr.bf16.gmra.mrb[0].mxu0 %v648
        %v2274 = vpop.f32.mrb[0].mxu0
        %v2275 = vadd.f32 %v2082, %v2274
        %v2276 = vpop.f32.mrb[0].mxu0
        %v2277 = vadd.f32 %v2084, %v2276
        %v2278 = vpop.f32.mrb[0].mxu0
        %v2279 = vadd.f32 %v2086, %v2278
        %v2280 = vpop.f32.mrb[0].mxu0
        %v2281 = vadd.f32 %v2088, %v2280
        %2282 = vmatprep.mubr.bf16.mxu0 %v666
        %2283 = vmatmul.mubr.bf16.gmra.mrb[0].mxu0 %v649
        %v2284 = vpop.f32.mrb[0].mxu0
        %v2285 = vadd.f32 %v2092, %v2284
        %v2286 = vpop.f32.mrb[0].mxu0
        %v2287 = vadd.f32 %v2094, %v2286
        %v2288 = vpop.f32.mrb[0].mxu0
        %v2289 = vadd.f32 %v2096, %v2288
        %v2290 = vpop.f32.mrb[0].mxu0
        %v2291 = vadd.f32 %v2098, %v2290
        %2292 = vmatprep.mubr.bf16.mxu0 %v667
        %2293 = vmatmul.mubr.bf16.gmra.mrb[0].mxu0 %v650
        %v2294 = vpop.f32.mrb[0].mxu0
        %v2295 = vadd.f32 %v2102, %v2294
        %v2296 = vpop.f32.mrb[0].mxu0
        %v2297 = vadd.f32 %v2104, %v2296
        %v2298 = vpop.f32.mrb[0].mxu0
        %v2299 = vadd.f32 %v2106, %v2298
        %v2300 = vpop.f32.mrb[0].mxu0
        %v2301 = vadd.f32 %v2108, %v2300
        %2302 = vmatprep.mubr.bf16.mxu0 %v668
        %2303 = vmatmul.mubr.bf16.gmra.mrb[0].mxu0 %v651
        %v2304 = vpop.f32.mrb[0].mxu0
        %v2305 = vadd.f32 %v2112, %v2304
        %v2306 = vpop.f32.mrb[0].mxu0
        %v2307 = vadd.f32 %v2114, %v2306
        %v2308 = vpop.f32.mrb[0].mxu0
        %v2309 = vadd.f32 %v2116, %v2308
        %v2310 = vpop.f32.mrb[0].mxu0
        %v2311 = vadd.f32 %v2118, %v2310
        %2312 = vmatprep.mubr.bf16.mxu0 %v667
        %2313 = vmatmul.mubr.bf16.gmra.mrb[0].mxu0 %v652
        %v2314 = vpop.f32.mrb[0].mxu0
        %v2315 = vadd.f32 %v2122, %v2314
        %v2316 = vpop.f32.mrb[0].mxu0
        %v2317 = vadd.f32 %v2124, %v2316
        %v2318 = vpop.f32.mrb[0].mxu0
        %v2319 = vadd.f32 %v2126, %v2318
        %v2320 = vpop.f32.mrb[0].mxu0
        %v2321 = vadd.f32 %v2128, %v2320
        %2322 = vdwg.mxu0
        %2323 = vmatprep.subr.bf16.mxu0 %v1392
        %2324 = vmatpush1.bf16.msra.mxu0 %v1391
        %2325 = vmatprep.subr.bf16.mxu0 %v1394
        %2326 = vmatpush1.bf16.msra.mxu0 %v1393
        %2327 = vmatprep.subr.bf16.mxu0 %v1396
        %2328 = vmatpush1.bf16.msra.mxu0 %v1395
        %2329 = vmatprep.subr.bf16.mxu0 %v1398
        %2330 = vmatpush1.bf16.msra.mxu0 %v1397
        %2331 = vmatprep.subr.bf16.mxu0 %v1400
        %2332 = vmatpush1.bf16.msra.mxu0 %v1399
        %2333 = vmatprep.subr.bf16.mxu0 %v1402
        %2334 = vmatpush1.bf16.msra.mxu0 %v1401
        %2335 = vmatprep.subr.bf16.mxu0 %v1404
        %2336 = vmatpush1.bf16.msra.mxu0 %v1403
        %2337 = vmatprep.subr.bf16.mxu0 %v1406
        %2338 = vmatpush1.bf16.msra.mxu0 %v1405
        %2339 = vmatprep.subr.bf16.mxu0 0
        %2340 = vmatpush1.bf16.msra.mxu0 0
        %2341 = vmatprep.subr.bf16.mxu0 0
        %2342 = vmatpush1.bf16.msra.mxu0 0
        %2343 = vmatprep.subr.bf16.mxu0 0
        %2344 = vmatpush1.bf16.msra.mxu0 0
        %2345 = vmatprep.subr.bf16.mxu0 0
        %2346 = vmatpush1.bf16.msra.mxu0 0
        %2347 = vmatprep.subr.bf16.mxu0 0
        %2348 = vmatpush1.bf16.msra.mxu0 0
        %2349 = vmatprep.subr.bf16.mxu0 0
        %2350 = vmatpush1.bf16.msra.mxu0 0
        %2351 = vmatprep.subr.bf16.mxu0 0
        %2352 = vmatpush1.bf16.msra.mxu0 0
        %2353 = vmatprep.subr.bf16.mxu0 0
        %2354 = vmatpush1.bf16.msra.mxu0 0
        %2355 = vmatprep.mubr.bf16.mxu0 0
        %2356 = vmatmul.mubr.bf16.gmra.mrb[0].mxu0 %v671
        %v2357 = vpop.f32.mrb[0].mxu0
        %v2358 = vadd.f32 %v2165, %v2357
        %v2359 = vpop.f32.mrb[0].mxu0
        %v2360 = vadd.f32 %v2167, %v2359
        %v2361 = vpop.f32.mrb[0].mxu0
        %v2362 = vadd.f32 %v2169, %v2361
        %v2363 = vpop.f32.mrb[0].mxu0
        %v2364 = vadd.f32 %v2171, %v2363
        %2365 = vmatprep.mubr.bf16.mxu0 0
        %2366 = vmatmul.mubr.bf16.gmra.mrb[0].mxu0 %v672
        %v2367 = vpop.f32.mrb[0].mxu0
        %v2368 = vadd.f32 %v2175, %v2367
        %v2369 = vpop.f32.mrb[0].mxu0
        %v2370 = vadd.f32 %v2177, %v2369
        %v2371 = vpop.f32.mrb[0].mxu0
        %v2372 = vadd.f32 %v2179, %v2371
        %v2373 = vpop.f32.mrb[0].mxu0
        %v2374 = vadd.f32 %v2181, %v2373
        %2375 = vmatprep.mubr.bf16.mxu0 0
        %2376 = vmatmul.mubr.bf16.gmra.mrb[0].mxu0 %v673
        %v2377 = vpop.f32.mrb[0].mxu0
        %v2378 = vadd.f32 %v2185, %v2377
        %v2379 = vpop.f32.mrb[0].mxu0
        %v2380 = vadd.f32 %v2187, %v2379
        %v2381 = vpop.f32.mrb[0].mxu0
        %v2382 = vadd.f32 %v2189, %v2381
        %v2383 = vpop.f32.mrb[0].mxu0
        %v2384 = vadd.f32 %v2191, %v2383
        %2385 = vmatprep.mubr.bf16.mxu0 0
        %2386 = vmatmul.mubr.bf16.gmra.mrb[0].mxu0 %v674
        %v2387 = vpop.f32.mrb[0].mxu0
        %v2388 = vadd.f32 %v2195, %v2387
        %v2389 = vpop.f32.mrb[0].mxu0
        %v2390 = vadd.f32 %v2197, %v2389
        %v2391 = vpop.f32.mrb[0].mxu0
        %v2392 = vadd.f32 %v2199, %v2391
        %v2393 = vpop.f32.mrb[0].mxu0
        %v2394 = vadd.f32 %v2201, %v2393
        %2395 = vmatprep.mubr.bf16.mxu0 0
        %2396 = vmatmul.mubr.bf16.gmra.mrb[0].mxu0 %v675
        %v2397 = vpop.f32.mrb[0].mxu0
        %v2398 = vadd.f32 %v2205, %v2397
        %v2399 = vpop.f32.mrb[0].mxu0
        %v2400 = vadd.f32 %v2207, %v2399
        %v2401 = vpop.f32.mrb[0].mxu0
        %v2402 = vadd.f32 %v2209, %v2401
        %v2403 = vpop.f32.mrb[0].mxu0
        %v2404 = vadd.f32 %v2211, %v2403
        %2405 = vmatprep.mubr.bf16.mxu0 0
        %2406 = vmatmul.mubr.bf16.gmra.mrb[0].mxu0 %v676
        %v2407 = vpop.f32.mrb[0].mxu0
        %v2408 = vadd.f32 %v2215, %v2407
        %v2409 = vpop.f32.mrb[0].mxu0
        %v2410 = vadd.f32 %v2217, %v2409
        %v2411 = vpop.f32.mrb[0].mxu0
        %v2412 = vadd.f32 %v2219, %v2411
        %v2413 = vpop.f32.mrb[0].mxu0
        %v2414 = vadd.f32 %v2221, %v2413
        %2415 = vmatprep.mubr.bf16.mxu0 0
        %2416 = vmatmul.mubr.bf16.gmra.mrb[0].mxu0 %v677
        %v2417 = vpop.f32.mrb[0].mxu0
        %v2418 = vadd.f32 %v2225, %v2417
        %v2419 = vpop.f32.mrb[0].mxu0
        %v2420 = vadd.f32 %v2227, %v2419
        %v2421 = vpop.f32.mrb[0].mxu0
        %v2422 = vadd.f32 %v2229, %v2421
        %v2423 = vpop.f32.mrb[0].mxu0
        %v2424 = vadd.f32 %v2231, %v2423
        %2425 = vmatprep.mubr.bf16.mxu0 0
        %2426 = vmatmul.mubr.bf16.gmra.mrb[0].mxu0 %v678
        %v2427 = vpop.f32.mrb[0].mxu0
        %v2428 = vadd.f32 %v2235, %v2427
        %v2429 = vpop.f32.mrb[0].mxu0
        %v2430 = vadd.f32 %v2237, %v2429
        %v2431 = vpop.f32.mrb[0].mxu0
        %v2432 = vadd.f32 %v2239, %v2431
        %v2433 = vpop.f32.mrb[0].mxu0
        %v2434 = vadd.f32 %v2241, %v2433
        %2435 = vmatprep.mubr.bf16.mxu0 0
        %2436 = vmatmul.mubr.bf16.gmra.mrb[0].mxu0 %v679
        %v2437 = vpop.f32.mrb[0].mxu0
        %v2438 = vadd.f32 %v2245, %v2437
        %v2439 = vpop.f32.mrb[0].mxu0
        %v2440 = vadd.f32 %v2247, %v2439
        %v2441 = vpop.f32.mrb[0].mxu0
        %v2442 = vadd.f32 %v2249, %v2441
        %v2443 = vpop.f32.mrb[0].mxu0
        %v2444 = vadd.f32 %v2251, %v2443
        %2445 = vmatprep.mubr.bf16.mxu0 0
        %2446 = vmatmul.mubr.bf16.gmra.mrb[0].mxu0 %v680
        %v2447 = vpop.f32.mrb[0].mxu0
        %v2448 = vadd.f32 %v2255, %v2447
        %v2449 = vpop.f32.mrb[0].mxu0
        %v2450 = vadd.f32 %v2257, %v2449
        %v2451 = vpop.f32.mrb[0].mxu0
        %v2452 = vadd.f32 %v2259, %v2451
        %v2453 = vpop.f32.mrb[0].mxu0
        %v2454 = vadd.f32 %v2261, %v2453
        %2455 = vmatprep.mubr.bf16.mxu0 0
        %2456 = vmatmul.mubr.bf16.gmra.mrb[0].mxu0 %v681
        %v2457 = vpop.f32.mrb[0].mxu0
        %v2458 = vadd.f32 %v2265, %v2457
        %v2459 = vpop.f32.mrb[0].mxu0
        %v2460 = vadd.f32 %v2267, %v2459
        %v2461 = vpop.f32.mrb[0].mxu0
        %v2462 = vadd.f32 %v2269, %v2461
        %v2463 = vpop.f32.mrb[0].mxu0
        %v2464 = vadd.f32 %v2271, %v2463
        %2465 = vmatprep.mubr.bf16.mxu0 0
        %2466 = vmatmul.mubr.bf16.gmra.mrb[0].mxu0 %v682
        %v2467 = vpop.f32.mrb[0].mxu0
        %v2468 = vadd.f32 %v2275, %v2467
        %v2469 = vpop.f32.mrb[0].mxu0
        %v2470 = vadd.f32 %v2277, %v2469
        %v2471 = vpop.f32.mrb[0].mxu0
        %v2472 = vadd.f32 %v2279, %v2471
        %v2473 = vpop.f32.mrb[0].mxu0
        %v2474 = vadd.f32 %v2281, %v2473
        %2475 = vmatprep.mubr.bf16.mxu0 0
        %2476 = vmatmul.mubr.bf16.gmra.mrb[0].mxu0 %v683
        %v2477 = vpop.f32.mrb[0].mxu0
        %v2478 = vadd.f32 %v2285, %v2477
        %v2479 = vpop.f32.mrb[0].mxu0
        %v2480 = vadd.f32 %v2287, %v2479
        %v2481 = vpop.f32.mrb[0].mxu0
        %v2482 = vadd.f32 %v2289, %v2481
        %v2483 = vpop.f32.mrb[0].mxu0
        %v2484 = vadd.f32 %v2291, %v2483
        %2485 = vmatprep.mubr.bf16.mxu0 0
        %2486 = vmatmul.mubr.bf16.gmra.mrb[0].mxu0 %v684
        %v2487 = vpop.f32.mrb[0].mxu0
        %v2488 = vadd.f32 %v2295, %v2487
        %v2489 = vpop.f32.mrb[0].mxu0
        %v2490 = vadd.f32 %v2297, %v2489
        %v2491 = vpop.f32.mrb[0].mxu0
        %v2492 = vadd.f32 %v2299, %v2491
        %v2493 = vpop.f32.mrb[0].mxu0
        %v2494 = vadd.f32 %v2301, %v2493
        %2495 = vmatprep.mubr.bf16.mxu0 0
        %2496 = vmatmul.mubr.bf16.gmra.mrb[0].mxu0 %v685
        %v2497 = vpop.f32.mrb[0].mxu0
        %v2498 = vadd.f32 %v2305, %v2497
        %v2499 = vpop.f32.mrb[0].mxu0
        %v2500 = vadd.f32 %v2307, %v2499
        %v2501 = vpop.f32.mrb[0].mxu0
        %v2502 = vadd.f32 %v2309, %v2501
        %v2503 = vpop.f32.mrb[0].mxu0
        %v2504 = vadd.f32 %v2311, %v2503
        %2505 = vmatprep.mubr.bf16.mxu0 0
        %2506 = vmatmul.mubr.bf16.gmra.mrb[0].mxu0 %v686
        %v2507 = vpop.f32.mrb[0].mxu0
        %v2508 = vadd.f32 %v2315, %v2507
        %v2509 = vpop.f32.mrb[0].mxu0
        %v2510 = vadd.f32 %v2317, %v2509
        %v2511 = vpop.f32.mrb[0].mxu0
        %v2512 = vadd.f32 %v2319, %v2511
        %v2513 = vpop.f32.mrb[0].mxu0
        %v2514 = vadd.f32 %v2321, %v2513
        %2515 = vdwg.mxu0
        %s2516 = sld [smem:[#allocation2]]
        %v2517 = vstv %s2516
        %v2518 = vmul.f32 %v2517, %v258
        %v2519 = vmul.f32 %v2517, %v259
        %v2520 = vmul.f32 %v2517, %v260
        %v2521 = vmul.f32 %v2517, %v261
        %v2522 = vmul.f32 %v2517, %v262
        %v2523 = vmul.f32 %v2517, %v263
        %v2524 = vmul.f32 %v2517, %v264
        %v2525 = vmul.f32 %v2517, %v265
        %v2526 = vmul.f32 %v2517, %v266
        %v2527 = vmul.f32 %v2517, %v267
        %v2528 = vmul.f32 %v2517, %v268
        %v2529 = vmul.f32 %v2517, %v269
        %v2530 = vmul.f32 %v2517, %v270
        %v2531 = vmul.f32 %v2517, %v271
        %v2532 = vmul.f32 %v2517, %v272
        %v2533 = vmul.f32 %v2517, %v273
        %v2534 = vmul.f32 %v2517, %v274
        %v2535 = vmul.f32 %v2517, %v275
        %v2536 = vmul.f32 %v2517, %v276
        %v2537 = vmul.f32 %v2517, %v277
        %v2538 = vmul.f32 %v2517, %v278
        %v2539 = vmul.f32 %v2517, %v279
        %v2540 = vmul.f32 %v2517, %v280
        %v2541 = vmul.f32 %v2517, %v281
        %v2542 = vmul.f32 %v2517, %v282
        %v2543 = vmul.f32 %v2517, %v283
        %v2544 = vmul.f32 %v2517, %v284
        %v2545 = vmul.f32 %v2517, %v285
        %v2546 = vmul.f32 %v2517, %v286
        %v2547 = vmul.f32 %v2517, %v287
        %v2548 = vmul.f32 %v2517, %v288
        %v2549 = vmul.f32 %v2517, %v289
        %v2550 = vadd.f32 %v2358, %v2362
        %v2551 = vadd.f32 %v2550, %v2368
        %v2552 = vadd.f32 %v2551, %v2372
        %v2553 = vadd.f32 %v2552, %v2378
        %v2554 = vadd.f32 %v2553, %v2382
        %v2555 = vadd.f32 %v2554, %v2388
        %v2556 = vadd.f32 %v2555, %v2392
        %v2557 = vadd.f32 %v2556, %v2398
        %v2558 = vadd.f32 %v2557, %v2402
        %v2559 = vadd.f32 %v2558, %v2408
        %v2560 = vadd.f32 %v2559, %v2412
        %v2561 = vadd.f32 %v2560, %v2418
        %v2562 = vadd.f32 %v2561, %v2422
        %v2563 = vadd.f32 %v2562, %v2428
        %v2564 = vadd.f32 %v2563, %v2432
        %v2565 = vadd.f32 %v2564, %v2438
        %v2566 = vadd.f32 %v2565, %v2442
        %v2567 = vadd.f32 %v2566, %v2448
        %v2568 = vadd.f32 %v2567, %v2452
        %v2569 = vadd.f32 %v2568, %v2458
        %v2570 = vadd.f32 %v2569, %v2462
        %v2571 = vadd.f32 %v2570, %v2468
        %v2572 = vadd.f32 %v2571, %v2472
        %v2573 = vadd.f32 %v2572, %v2478
        %v2574 = vadd.f32 %v2573, %v2482
        %v2575 = vadd.f32 %v2574, %v2488
        %v2576 = vadd.f32 %v2575, %v2492
        %v2577 = vadd.f32 %v2576, %v2498
        %v2578 = vadd.f32 %v2577, %v2502
        %v2579 = vadd.f32 %v2578, %v2508
        %v2580 = vadd.f32 %v2579, %v2512
        %v2581 = vrot.slane %v2580, 4
        %v2582 = vadd.f32 %v2580, %v2581
        %v2583 = vrot.slane %v2582, 2
        %v2584 = vadd.f32 %v2582, %v2583
        %v2585 = vrot.slane %v2584, 1
        %v2586 = vadd.f32 %v2584, %v2585
        %v2587 = vmul.f32 %v2586, 0.00390625
        %v2588 = vsub.f32 %v2358, %v2587
        %v2589 = vsub.f32 %v2362, %v2587
        %v2590 = vsub.f32 %v2368, %v2587
        %v2591 = vsub.f32 %v2372, %v2587
        %v2592 = vsub.f32 %v2378, %v2587
        %v2593 = vsub.f32 %v2382, %v2587
        %v2594 = vsub.f32 %v2388, %v2587
        %v2595 = vsub.f32 %v2392, %v2587
        %v2596 = vsub.f32 %v2398, %v2587
        %v2597 = vsub.f32 %v2402, %v2587
        %v2598 = vsub.f32 %v2408, %v2587
        %v2599 = vsub.f32 %v2412, %v2587
        %v2600 = vsub.f32 %v2418, %v2587
        %v2601 = vsub.f32 %v2422, %v2587
        %v2602 = vsub.f32 %v2428, %v2587
        %v2603 = vsub.f32 %v2432, %v2587
        %v2604 = vsub.f32 %v2438, %v2587
        %v2605 = vsub.f32 %v2442, %v2587
        %v2606 = vsub.f32 %v2448, %v2587
        %v2607 = vsub.f32 %v2452, %v2587
        %v2608 = vsub.f32 %v2458, %v2587
        %v2609 = vsub.f32 %v2462, %v2587
        %v2610 = vsub.f32 %v2468, %v2587
        %v2611 = vsub.f32 %v2472, %v2587
        %v2612 = vsub.f32 %v2478, %v2587
        %v2613 = vsub.f32 %v2482, %v2587
        %v2614 = vsub.f32 %v2488, %v2587
        %v2615 = vsub.f32 %v2492, %v2587
        %v2616 = vsub.f32 %v2498, %v2587
        %v2617 = vsub.f32 %v2502, %v2587
        %v2618 = vsub.f32 %v2508, %v2587
        %v2619 = vsub.f32 %v2512, %v2587
        %v2620 = vmul.f32 %v2588, %v2588
        %v2621 = vmul.f32 %v2589, %v2589
        %v2622 = vmul.f32 %v2590, %v2590
        %v2623 = vmul.f32 %v2591, %v2591
        %v2624 = vmul.f32 %v2592, %v2592
        %v2625 = vmul.f32 %v2593, %v2593
        %v2626 = vmul.f32 %v2594, %v2594
        %v2627 = vmul.f32 %v2595, %v2595
        %v2628 = vmul.f32 %v2596, %v2596
        %v2629 = vmul.f32 %v2597, %v2597
        %v2630 = vmul.f32 %v2598, %v2598
        %v2631 = vmul.f32 %v2599, %v2599
        %v2632 = vmul.f32 %v2600, %v2600
        %v2633 = vmul.f32 %v2601, %v2601
        %v2634 = vmul.f32 %v2602, %v2602
        %v2635 = vmul.f32 %v2603, %v2603
        %v2636 = vmul.f32 %v2604, %v2604
        %v2637 = vmul.f32 %v2605, %v2605
        %v2638 = vmul.f32 %v2606, %v2606
        %v2639 = vmul.f32 %v2607, %v2607
        %v2640 = vmul.f32 %v2608, %v2608
        %v2641 = vmul.f32 %v2609, %v2609
        %v2642 = vmul.f32 %v2610, %v2610
        %v2643 = vmul.f32 %v2611, %v2611
        %v2644 = vmul.f32 %v2612, %v2612
        %v2645 = vmul.f32 %v2613, %v2613
        %v2646 = vmul.f32 %v2614, %v2614
        %v2647 = vmul.f32 %v2615, %v2615
        %v2648 = vmul.f32 %v2616, %v2616
        %v2649 = vmul.f32 %v2617, %v2617
        %v2650 = vmul.f32 %v2618, %v2618
        %v2651 = vmul.f32 %v2619, %v2619
        %v2652 = vadd.f32 %v2620, %v2621
        %v2653 = vadd.f32 %v2652, %v2622
        %v2654 = vadd.f32 %v2653, %v2623
        %v2655 = vadd.f32 %v2654, %v2624
        %v2656 = vadd.f32 %v2655, %v2625
        %v2657 = vadd.f32 %v2656, %v2626
        %v2658 = vadd.f32 %v2657, %v2627
        %v2659 = vadd.f32 %v2658, %v2628
        %v2660 = vadd.f32 %v2659, %v2629
        %v2661 = vadd.f32 %v2660, %v2630
        %v2662 = vadd.f32 %v2661, %v2631
        %v2663 = vadd.f32 %v2662, %v2632
        %v2664 = vadd.f32 %v2663, %v2633
        %v2665 = vadd.f32 %v2664, %v2634
        %v2666 = vadd.f32 %v2665, %v2635
        %v2667 = vadd.f32 %v2666, %v2636
        %v2668 = vadd.f32 %v2667, %v2637
        %v2669 = vadd.f32 %v2668, %v2638
        %v2670 = vadd.f32 %v2669, %v2639
        %v2671 = vadd.f32 %v2670, %v2640
        %v2672 = vadd.f32 %v2671, %v2641
        %v2673 = vadd.f32 %v2672, %v2642
        %v2674 = vadd.f32 %v2673, %v2643
        %v2675 = vadd.f32 %v2674, %v2644
        %v2676 = vadd.f32 %v2675, %v2645
        %v2677 = vadd.f32 %v2676, %v2646
        %v2678 = vadd.f32 %v2677, %v2647
        %v2679 = vadd.f32 %v2678, %v2648
        %v2680 = vadd.f32 %v2679, %v2649
        %v2681 = vadd.f32 %v2680, %v2650
        %v2682 = vadd.f32 %v2681, %v2651
        %v2683 = vrot.slane %v2682, 4
        %v2684 = vadd.f32 %v2682, %v2683
        %v2685 = vrot.slane %v2684, 2
        %v2686 = vadd.f32 %v2684, %v2685
        %v2687 = vrot.slane %v2686, 1
        %v2688 = vadd.f32 %v2686, %v2687
        %v2689 = vmul.f32 %v2688, 0.00390625
        %v2690 = vadd.f32 %v2689, 1e-05
        %v2691 = vrsqrt.pop %v2690
        %v2692 = vmul.f32 %v2588, %v2691
        %v2693 = vmul.f32 %v2589, %v2691
        %v2694 = vmul.f32 %v2590, %v2691
        %v2695 = vmul.f32 %v2591, %v2691
        %v2696 = vmul.f32 %v2592, %v2691
        %v2697 = vmul.f32 %v2593, %v2691
        %v2698 = vmul.f32 %v2594, %v2691
        %v2699 = vmul.f32 %v2595, %v2691
        %v2700 = vmul.f32 %v2596, %v2691
        %v2701 = vmul.f32 %v2597, %v2691
        %v2702 = vmul.f32 %v2598, %v2691
        %v2703 = vmul.f32 %v2599, %v2691
        %v2704 = vmul.f32 %v2600, %v2691
        %v2705 = vmul.f32 %v2601, %v2691
        %v2706 = vmul.f32 %v2602, %v2691
        %v2707 = vmul.f32 %v2603, %v2691
        %v2708 = vmul.f32 %v2604, %v2691
        %v2709 = vmul.f32 %v2605, %v2691
        %v2710 = vmul.f32 %v2606, %v2691
        %v2711 = vmul.f32 %v2607, %v2691
        %v2712 = vmul.f32 %v2608, %v2691
        %v2713 = vmul.f32 %v2609, %v2691
        %v2714 = vmul.f32 %v2610, %v2691
        %v2715 = vmul.f32 %v2611, %v2691
        %v2716 = vmul.f32 %v2612, %v2691
        %v2717 = vmul.f32 %v2613, %v2691
        %v2718 = vmul.f32 %v2614, %v2691
        %v2719 = vmul.f32 %v2615, %v2691
        %v2720 = vmul.f32 %v2616, %v2691
        %v2721 = vmul.f32 %v2617, %v2691
        %v2722 = vmul.f32 %v2618, %v2691
        %v2723 = vmul.f32 %v2619, %v2691
        %v2724 = vmax.f32 %v2692, 0.0
        %v2725 = vmax.f32 %v2693, 0.0
        %v2726 = vmax.f32 %v2694, 0.0
        %v2727 = vmax.f32 %v2695, 0.0
        %v2728 = vmax.f32 %v2696, 0.0
        %v2729 = vmax.f32 %v2697, 0.0
        %v2730 = vmax.f32 %v2698, 0.0
        %v2731 = vmax.f32 %v2699, 0.0
        %v2732 = vmax.f32 %v2700, 0.0
        %v2733 = vmax.f32 %v2701, 0.0
        %v2734 = vmax.f32 %v2702, 0.0
        %v2735 = vmax.f32 %v2703, 0.0
        %v2736 = vmax.f32 %v2704, 0.0
        %v2737 = vmax.f32 %v2705, 0.0
        %v2738 = vmax.f32 %v2706, 0.0
        %v2739 = vmax.f32 %v2707, 0.0
        %v2740 = vmax.f32 %v2708, 0.0
        %v2741 = vmax.f32 %v2709, 0.0
        %v2742 = vmax.f32 %v2710, 0.0
        %v2743 = vmax.f32 %v2711, 0.0
        %v2744 = vmax.f32 %v2712, 0.0
        %v2745 = vmax.f32 %v2713, 0.0
        %v2746 = vmax.f32 %v2714, 0.0
        %v2747 = vmax.f32 %v2715, 0.0
        %v2748 = vmax.f32 %v2716, 0.0
        %v2749 = vmax.f32 %v2717, 0.0
        %v2750 = vmax.f32 %v2718, 0.0
        %v2751 = vmax.f32 %v2719, 0.0
        %v2752 = vmax.f32 %v2720, 0.0
        %v2753 = vmax.f32 %v2721, 0.0
        %v2754 = vmax.f32 %v2722, 0.0
        %v2755 = vmax.f32 %v2723, 0.0
        %v2756 = vrot.slane %v2726, 7
        %v2757 = vrot.slane %v2727, 7
        %v2758 = vrot.slane %v2724, 7
        %v2759 = vrot.slane %v2725, 7
        %v2760 = vrot.slane %v2728, 7
        %v2761 = vrot.slane %v2729, 7
        %v2762 = vrot.slane %v2730, 7
        %v2763 = vrot.slane %v2731, 7
        %v2764 = vrot.slane %v2732, 7
        %v2765 = vrot.slane %v2733, 7
        %v2766 = vrot.slane %v2734, 7
        %v2767 = vrot.slane %v2735, 7
        %v2768 = vrot.slane %v2736, 7
        %v2769 = vrot.slane %v2737, 7
        %v2770 = vrot.slane %v2738, 7
        %v2771 = vrot.slane %v2739, 7
        %v2772 = vrot.slane %v2740, 7
        %v2773 = vrot.slane %v2741, 7
        %v2774 = vrot.slane %v2742, 7
        %v2775 = vrot.slane %v2743, 7
        %v2776 = vrot.slane %v2744, 7
        %v2777 = vrot.slane %v2745, 7
        %v2778 = vrot.slane %v2746, 7
        %v2779 = vrot.slane %v2747, 7
        %v2780 = vrot.slane %v2748, 7
        %v2781 = vrot.slane %v2749, 7
        %v2782 = vrot.slane %v2750, 7
        %v2783 = vrot.slane %v2751, 7
        %v2784 = vrot.slane %v2752, 7
        %v2785 = vrot.slane %v2753, 7
        %v2786 = vrot.slane %v2754, 7
        %v2787 = vrot.slane %v2755, 7
        %v2788 = vsel %vm329, %v2784, %v2785
        %v2789 = vsel %vm329, %v2787, %v2784
        %v2790 = vsel %vm329, %v2786, %v2787
        %v2791 = vsel %vm329, %v2785, %v2786
        %v2792 = vsel %vm329, %v2783, %v2784
        %v2793 = vsel %vm329, %v2782, %v2783
        %v2794 = vsel %vm329, %v2781, %v2782
        %v2795 = vsel %vm329, %v2780, %v2781
        %v2796 = vsel %vm329, %v2779, %v2780
        %v2797 = vsel %vm329, %v2778, %v2779
        %v2798 = vsel %vm329, %v2777, %v2778
        %v2799 = vsel %vm329, %v2776, %v2777
        %v2800 = vsel %vm329, %v2775, %v2776
        %v2801 = vsel %vm329, %v2774, %v2775
        %v2802 = vsel %vm329, %v2773, %v2774
        %v2803 = vsel %vm329, %v2772, %v2773
        %v2804 = vsel %vm329, %v2771, %v2772
        %v2805 = vsel %vm329, %v2770, %v2771
        %v2806 = vsel %vm329, %v2769, %v2770
        %v2807 = vsel %vm329, %v2768, %v2769
        %v2808 = vsel %vm329, %v2767, %v2768
        %v2809 = vsel %vm329, %v2766, %v2767
        %v2810 = vsel %vm329, %v2765, %v2766
        %v2811 = vsel %vm329, %v2764, %v2765
        %v2812 = vsel %vm329, %v2763, %v2764
        %v2813 = vsel %vm329, %v2762, %v2763
        %v2814 = vsel %vm329, %v2761, %v2762
        %v2815 = vsel %vm329, %v2760, %v2761
        %v2816 = vsel %vm329, %v2757, %v2760
        %v2817 = vsel %vm329, %v2756, %v2757
        %v2818 = vsel %vm329, %v2759, %v2756
        %v2819 = vsel %vm329, %v2758, %v2759
        %v2820 = vsel %vm329, %v2757, %v2758
        %v2821 = vsel %vm329, %v2785, %v2756
        %v2822 = vrot.slane %v2726, 1
        %v2823 = vrot.slane %v2727, 1
        %v2824 = vrot.slane %v2724, 1
        %v2825 = vrot.slane %v2725, 1
        %v2826 = vrot.slane %v2728, 1
        %v2827 = vrot.slane %v2729, 1
        %v2828 = vrot.slane %v2730, 1
        %v2829 = vrot.slane %v2731, 1
        %v2830 = vrot.slane %v2732, 1
        %v2831 = vrot.slane %v2733, 1
        %v2832 = vrot.slane %v2734, 1
        %v2833 = vrot.slane %v2735, 1
        %v2834 = vrot.slane %v2736, 1
        %v2835 = vrot.slane %v2737, 1
        %v2836 = vrot.slane %v2738, 1
        %v2837 = vrot.slane %v2739, 1
        %v2838 = vrot.slane %v2740, 1
        %v2839 = vrot.slane %v2741, 1
        %v2840 = vrot.slane %v2742, 1
        %v2841 = vrot.slane %v2743, 1
        %v2842 = vrot.slane %v2744, 1
        %v2843 = vrot.slane %v2745, 1
        %v2844 = vrot.slane %v2746, 1
        %v2845 = vrot.slane %v2747, 1
        %v2846 = vrot.slane %v2748, 1
        %v2847 = vrot.slane %v2749, 1
        %v2848 = vrot.slane %v2750, 1
        %v2849 = vrot.slane %v2751, 1
        %v2850 = vrot.slane %v2752, 1
        %v2851 = vrot.slane %v2753, 1
        %v2852 = vrot.slane %v2754, 1
        %v2853 = vrot.slane %v2755, 1
        %v2854 = vsel %vm396, %v2850, %v2851
        %v2855 = vsel %vm396, %v2853, %v2850
        %v2856 = vsel %vm396, %v2852, %v2853
        %v2857 = vsel %vm396, %v2851, %v2852
        %v2858 = vsel %vm396, %v2849, %v2850
        %v2859 = vsel %vm396, %v2848, %v2849
        %v2860 = vsel %vm396, %v2847, %v2848
        %v2861 = vsel %vm396, %v2846, %v2847
        %v2862 = vsel %vm396, %v2845, %v2846
        %v2863 = vsel %vm396, %v2844, %v2845
        %v2864 = vsel %vm396, %v2843, %v2844
        %v2865 = vsel %vm396, %v2842, %v2843
        %v2866 = vsel %vm396, %v2841, %v2842
        %v2867 = vsel %vm396, %v2840, %v2841
        %v2868 = vsel %vm396, %v2839, %v2840
        %v2869 = vsel %vm396, %v2838, %v2839
        %v2870 = vsel %vm396, %v2837, %v2838
        %v2871 = vsel %vm396, %v2836, %v2837
        %v2872 = vsel %vm396, %v2835, %v2836
        %v2873 = vsel %vm396, %v2834, %v2835
        %v2874 = vsel %vm396, %v2833, %v2834
        %v2875 = vsel %vm396, %v2832, %v2833
        %v2876 = vsel %vm396, %v2831, %v2832
        %v2877 = vsel %vm396, %v2830, %v2831
        %v2878 = vsel %vm396, %v2829, %v2830
        %v2879 = vsel %vm396, %v2828, %v2829
        %v2880 = vsel %vm396, %v2827, %v2828
        %v2881 = vsel %vm396, %v2826, %v2827
        %v2882 = vsel %vm396, %v2823, %v2826
        %v2883 = vsel %vm396, %v2822, %v2823
        %v2884 = vsel %vm396, %v2825, %v2822
        %v2885 = vsel %vm396, %v2824, %v2825
        %v2886 = vsel %vm396, %v2823, %v2824
        %v2887 = vsel %vm396, %v2851, %v2822
        %v2888 = vlaneseq
        %v2889 = vshrl.u32 %v2888, 7
        %v2890 = vsub.s32 1, %v2889
        %v2891 = vrot.slane %v2726, %v2890
        %v2892 = vlaneseq
        %v2893 = vshrl.u32 %v2892, 7
        %v2894 = vsub.s32 1, %v2893
        %v2895 = vrot.slane %v2724, %v2894
        %v2896 = vlaneseq
        %v2897 = vshrl.u32 %v2896, 7
        %v2898 = vsub.s32 1, %v2897
        %v2899 = vrot.slane %v2728, %v2898
        %v2900 = vlaneseq
        %v2901 = vshrl.u32 %v2900, 7
        %v2902 = vsub.s32 1, %v2901
        %v2903 = vrot.slane %v2730, %v2902
        %v2904 = vlaneseq
        %v2905 = vshrl.u32 %v2904, 7
        %v2906 = vsub.s32 1, %v2905
        %v2907 = vrot.slane %v2732, %v2906
        %v2908 = vlaneseq
        %v2909 = vshrl.u32 %v2908, 7
        %v2910 = vsub.s32 1, %v2909
        %v2911 = vrot.slane %v2734, %v2910
        %v2912 = vlaneseq
        %v2913 = vshrl.u32 %v2912, 7
        %v2914 = vsub.s32 1, %v2913
        %v2915 = vrot.slane %v2736, %v2914
        %v2916 = vlaneseq
        %v2917 = vshrl.u32 %v2916, 7
        %v2918 = vsub.s32 1, %v2917
        %v2919 = vrot.slane %v2738, %v2918
        %v2920 = vlaneseq
        %v2921 = vshrl.u32 %v2920, 7
        %v2922 = vsub.s32 1, %v2921
        %v2923 = vrot.slane %v2740, %v2922
        %v2924 = vlaneseq
        %v2925 = vshrl.u32 %v2924, 7
        %v2926 = vsub.s32 1, %v2925
        %v2927 = vrot.slane %v2742, %v2926
        %v2928 = vlaneseq
        %v2929 = vshrl.u32 %v2928, 7
        %v2930 = vsub.s32 1, %v2929
        %v2931 = vrot.slane %v2744, %v2930
        %v2932 = vlaneseq
        %v2933 = vshrl.u32 %v2932, 7
        %v2934 = vsub.s32 1, %v2933
        %v2935 = vrot.slane %v2746, %v2934
        %v2936 = vlaneseq
        %v2937 = vshrl.u32 %v2936, 7
        %v2938 = vsub.s32 1, %v2937
        %v2939 = vrot.slane %v2748, %v2938
        %v2940 = vlaneseq
        %v2941 = vshrl.u32 %v2940, 7
        %v2942 = vsub.s32 1, %v2941
        %v2943 = vrot.slane %v2750, %v2942
        %v2944 = vlaneseq
        %v2945 = vshrl.u32 %v2944, 7
        %v2946 = vsub.s32 1, %v2945
        %v2947 = vrot.slane %v2752, %v2946
        %v2948 = vlaneseq
        %v2949 = vshrl.u32 %v2948, 7
        %v2950 = vsub.s32 1, %v2949
        %v2951 = vrot.slane %v2754, %v2950
        %v2952 = vsel %vm433, %v2891, %v2821
        %v2953 = vsel %vm434, %v2891, %v2817
        %v2954 = vsel %vm433, %v2895, %v2820
        %v2955 = vsel %vm434, %v2895, %v2819
        %v2956 = vsel %vm433, %v2891, %v2818
        %v2957 = vsel %vm433, %v2899, %v2816
        %v2958 = vsel %vm434, %v2899, %v2815
        %v2959 = vsel %vm433, %v2903, %v2814
        %v2960 = vsel %vm434, %v2903, %v2813
        %v2961 = vsel %vm433, %v2907, %v2812
        %v2962 = vsel %vm434, %v2907, %v2811
        %v2963 = vsel %vm433, %v2911, %v2810
        %v2964 = vsel %vm434, %v2911, %v2809
        %v2965 = vsel %vm433, %v2915, %v2808
        %v2966 = vsel %vm434, %v2915, %v2807
        %v2967 = vsel %vm433, %v2919, %v2806
        %v2968 = vsel %vm434, %v2919, %v2805
        %v2969 = vsel %vm433, %v2923, %v2804
        %v2970 = vsel %vm434, %v2923, %v2803
        %v2971 = vsel %vm433, %v2927, %v2802
        %v2972 = vsel %vm434, %v2927, %v2801
        %v2973 = vsel %vm433, %v2931, %v2800
        %v2974 = vsel %vm434, %v2931, %v2799
        %v2975 = vsel %vm433, %v2935, %v2798
        %v2976 = vsel %vm434, %v2935, %v2797
        %v2977 = vsel %vm433, %v2939, %v2796
        %v2978 = vsel %vm434, %v2939, %v2795
        %v2979 = vsel %vm433, %v2943, %v2794
        %v2980 = vsel %vm434, %v2943, %v2793
        %v2981 = vsel %vm433, %v2947, %v2792
        %v2982 = vsel %vm434, %v2947, %v2788
        %v2983 = vsel %vm433, %v2951, %v2791
        %v2984 = vsel %vm434, %v2951, %v2790
        %v2985 = vsel %vm433, %v2947, %v2789
        %v2986 = vlaneseq
        %v2987 = vshrl.u32 %v2986, 7
        %v2988 = vsub.s32 6, %v2987
        %v2989 = vrot.slane %v2727, %v2988
        %v2990 = vlaneseq
        %v2991 = vshrl.u32 %v2990, 7
        %v2992 = vsub.s32 6, %v2991
        %v2993 = vrot.slane %v2725, %v2992
        %v2994 = vlaneseq
        %v2995 = vshrl.u32 %v2994, 7
        %v2996 = vsub.s32 6, %v2995
        %v2997 = vrot.slane %v2729, %v2996
        %v2998 = vlaneseq
        %v2999 = vshrl.u32 %v2998, 7
        %v3000 = vsub.s32 6, %v2999
        %v3001 = vrot.slane %v2731, %v3000
        %v3002 = vlaneseq
        %v3003 = vshrl.u32 %v3002, 7
        %v3004 = vsub.s32 6, %v3003
        %v3005 = vrot.slane %v2733, %v3004
        %v3006 = vlaneseq
        %v3007 = vshrl.u32 %v3006, 7
        %v3008 = vsub.s32 6, %v3007
        %v3009 = vrot.slane %v2735, %v3008
        %v3010 = vlaneseq
        %v3011 = vshrl.u32 %v3010, 7
        %v3012 = vsub.s32 6, %v3011
        %v3013 = vrot.slane %v2737, %v3012
        %v3014 = vlaneseq
        %v3015 = vshrl.u32 %v3014, 7
        %v3016 = vsub.s32 6, %v3015
        %v3017 = vrot.slane %v2739, %v3016
        %v3018 = vlaneseq
        %v3019 = vshrl.u32 %v3018, 7
        %v3020 = vsub.s32 6, %v3019
        %v3021 = vrot.slane %v2741, %v3020
        %v3022 = vlaneseq
        %v3023 = vshrl.u32 %v3022, 7
        %v3024 = vsub.s32 6, %v3023
        %v3025 = vrot.slane %v2743, %v3024
        %v3026 = vlaneseq
        %v3027 = vshrl.u32 %v3026, 7
        %v3028 = vsub.s32 6, %v3027
        %v3029 = vrot.slane %v2745, %v3028
        %v3030 = vlaneseq
        %v3031 = vshrl.u32 %v3030, 7
        %v3032 = vsub.s32 6, %v3031
        %v3033 = vrot.slane %v2747, %v3032
        %v3034 = vlaneseq
        %v3035 = vshrl.u32 %v3034, 7
        %v3036 = vsub.s32 6, %v3035
        %v3037 = vrot.slane %v2749, %v3036
        %v3038 = vlaneseq
        %v3039 = vshrl.u32 %v3038, 7
        %v3040 = vsub.s32 6, %v3039
        %v3041 = vrot.slane %v2751, %v3040
        %v3042 = vlaneseq
        %v3043 = vshrl.u32 %v3042, 7
        %v3044 = vsub.s32 6, %v3043
        %v3045 = vrot.slane %v2753, %v3044
        %v3046 = vlaneseq
        %v3047 = vshrl.u32 %v3046, 7
        %v3048 = vsub.s32 6, %v3047
        %v3049 = vrot.slane %v2755, %v3048
        %v3050 = vsel %vm535, %v2989, %v2883
        %v3051 = vsel %vm536, %v2989, %v2886
        %v3052 = vsel %vm535, %v2993, %v2885
        %v3053 = vsel %vm536, %v2993, %v2884
        %v3054 = vsel %vm536, %v2989, %v2882
        %v3055 = vsel %vm535, %v2997, %v2881
        %v3056 = vsel %vm536, %v2997, %v2880
        %v3057 = vsel %vm535, %v3001, %v2879
        %v3058 = vsel %vm536, %v3001, %v2878
        %v3059 = vsel %vm535, %v3005, %v2877
        %v3060 = vsel %vm536, %v3005, %v2876
        %v3061 = vsel %vm535, %v3009, %v2875
        %v3062 = vsel %vm536, %v3009, %v2874
        %v3063 = vsel %vm535, %v3013, %v2873
        %v3064 = vsel %vm536, %v3013, %v2872
        %v3065 = vsel %vm535, %v3017, %v2871
        %v3066 = vsel %vm536, %v3017, %v2870
        %v3067 = vsel %vm535, %v3021, %v2869
        %v3068 = vsel %vm536, %v3021, %v2868
        %v3069 = vsel %vm535, %v3025, %v2867
        %v3070 = vsel %vm536, %v3025, %v2866
        %v3071 = vsel %vm535, %v3029, %v2865
        %v3072 = vsel %vm536, %v3029, %v2864
        %v3073 = vsel %vm535, %v3033, %v2863
        %v3074 = vsel %vm536, %v3033, %v2862
        %v3075 = vsel %vm535, %v3037, %v2861
        %v3076 = vsel %vm536, %v3037, %v2860
        %v3077 = vsel %vm535, %v3041, %v2859
        %v3078 = vsel %vm536, %v3041, %v2858
        %v3079 = vsel %vm535, %v3045, %v2854
        %v3080 = vsel %vm536, %v3045, %v2857
        %v3081 = vsel %vm535, %v3049, %v2856
        %v3082 = vsel %vm536, %v3049, %v2855
        %v3083 = vsel %vm536, %v3045, %v2887
        %v3084 = vpack.c.bf16 %v2953, %v2952
        %v3085 = vpack.c.bf16 %v2955, %v2954
        %v3086 = vpack.c.bf16 %v2953, %v2956
        %v3087 = vpack.c.bf16 %v2958, %v2957
        %v3088 = vpack.c.bf16 %v2960, %v2959
        %v3089 = vpack.c.bf16 %v2962, %v2961
        %v3090 = vpack.c.bf16 %v2964, %v2963
        %v3091 = vpack.c.bf16 %v2966, %v2965
        %v3092 = vpack.c.bf16 %v2968, %v2967
        %v3093 = vpack.c.bf16 %v2970, %v2969
        %v3094 = vpack.c.bf16 %v2972, %v2971
        %v3095 = vpack.c.bf16 %v2974, %v2973
        %v3096 = vpack.c.bf16 %v2976, %v2975
        %v3097 = vpack.c.bf16 %v2978, %v2977
        %v3098 = vpack.c.bf16 %v2980, %v2979
        %v3099 = vpack.c.bf16 %v2982, %v2981
        %v3100 = vpack.c.bf16 %v2984, %v2983
        %v3101 = vpack.c.bf16 %v2982, %v2985
        %v3102 = vpack.c.bf16 %v2727, %v2726
        %v3103 = vpack.c.bf16 %v2725, %v2724
        %v3104 = vpack.c.bf16 %v2729, %v2728
        %v3105 = vpack.c.bf16 %v2731, %v2730
        %v3106 = vpack.c.bf16 %v2733, %v2732
        %v3107 = vpack.c.bf16 %v2735, %v2734
        %v3108 = vpack.c.bf16 %v2737, %v2736
        %v3109 = vpack.c.bf16 %v2739, %v2738
        %v3110 = vpack.c.bf16 %v2741, %v2740
        %v3111 = vpack.c.bf16 %v2743, %v2742
        %v3112 = vpack.c.bf16 %v2745, %v2744
        %v3113 = vpack.c.bf16 %v2747, %v2746
        %v3114 = vpack.c.bf16 %v2749, %v2748
        %v3115 = vpack.c.bf16 %v2751, %v2750
        %v3116 = vpack.c.bf16 %v2753, %v2752
        %v3117 = vpack.c.bf16 %v2755, %v2754
        %v3118 = vpack.c.bf16 %v3051, %v3050
        %v3119 = vpack.c.bf16 %v3053, %v3052
        %v3120 = vpack.c.bf16 %v3054, %v3050
        %v3121 = vpack.c.bf16 %v3056, %v3055
        %v3122 = vpack.c.bf16 %v3058, %v3057
        %v3123 = vpack.c.bf16 %v3060, %v3059
        %v3124 = vpack.c.bf16 %v3062, %v3061
        %v3125 = vpack.c.bf16 %v3064, %v3063
        %v3126 = vpack.c.bf16 %v3066, %v3065
        %v3127 = vpack.c.bf16 %v3068, %v3067
        %v3128 = vpack.c.bf16 %v3070, %v3069
        %v3129 = vpack.c.bf16 %v3072, %v3071
        %v3130 = vpack.c.bf16 %v3074, %v3073
        %v3131 = vpack.c.bf16 %v3076, %v3075
        %v3132 = vpack.c.bf16 %v3078, %v3077
        %v3133 = vpack.c.bf16 %v3080, %v3079
        %v3134 = vpack.c.bf16 %v3082, %v3081
        %v3135 = vpack.c.bf16 %v3083, %v3079
        %v3136 = vld [vmem:[#allocation9] sm:$0xf]
        %v3137 = vld [vmem:[#allocation9 + $0x4] sm:$0xf]
        %v3138 = vld [vmem:[#allocation9 + $0x8] sm:$0xf]
        %v3139 = vld [vmem:[#allocation9 + $0xc] sm:$0xf]
        %v3140 = vld [vmem:[#allocation9 + $0x10] sm:$0xf]
        %v3141 = vld [vmem:[#allocation9 + $0x14] sm:$0xf]
        %v3142 = vld [vmem:[#allocation9 + $0x18] sm:$0xf]
        %v3143 = vld [vmem:[#allocation9 + $0x1c] sm:$0xf]
        %v3144 = vld [vmem:[#allocation9 + $0x20] sm:$0xf]
        %v3145 = vld [vmem:[#allocation9 + $0x24] sm:$0xf]
        %v3146 = vld [vmem:[#allocation9 + $0x28] sm:$0xf]
        %v3147 = vld [vmem:[#allocation9 + $0x2c] sm:$0xf]
        %v3148 = vld [vmem:[#allocation9 + $0x30] sm:$0xf]
        %v3149 = vld [vmem:[#allocation9 + $0x34] sm:$0xf]
        %v3150 = vld [vmem:[#allocation9 + $0x38] sm:$0xf]
        %v3151 = vld [vmem:[#allocation9 + $0x3c] sm:$0xf]
        %v3152 = vld [vmem:[#allocation9 + $0x40] sm:$0xf]
        %v3153 = vld [vmem:[#allocation9 + $0x44] sm:$0xf]
        %v3154 = vld [vmem:[#allocation9 + $0x48] sm:$0xf]
        %v3155 = vld [vmem:[#allocation9 + $0x4c] sm:$0xf]
        %v3156 = vld [vmem:[#allocation9 + $0x50] sm:$0xf]
        %v3157 = vld [vmem:[#allocation9 + $0x54] sm:$0xf]
        %v3158 = vld [vmem:[#allocation9 + $0x58] sm:$0xf]
        %v3159 = vld [vmem:[#allocation9 + $0x5c] sm:$0xf]
        %v3160 = vld [vmem:[#allocation9 + $0x60] sm:$0xf]
        %v3161 = vld [vmem:[#allocation9 + $0x64] sm:$0xf]
        %v3162 = vld [vmem:[#allocation9 + $0x68] sm:$0xf]
        %v3163 = vld [vmem:[#allocation9 + $0x6c] sm:$0xf]
        %v3164 = vld [vmem:[#allocation9 + $0x70] sm:$0xf]
        %v3165 = vld [vmem:[#allocation9 + $0x74] sm:$0xf]
        %v3166 = vld [vmem:[#allocation9 + $0x78] sm:$0xf]
        %v3167 = vld [vmem:[#allocation9 + $0x7c] sm:$0xf]
        %v3168 = vld [vmem:[#allocation9 + $0x80] sm:$0xf]
        %v3169 = vld [vmem:[#allocation9 + $0x84] sm:$0xf]
        %v3170 = vld [vmem:[#allocation9 + $0x88] sm:$0xf]
        %v3171 = vld [vmem:[#allocation9 + $0x8c] sm:$0xf]
        %v3172 = vld [vmem:[#allocation9 + $0x90] sm:$0xf]
        %v3173 = vld [vmem:[#allocation9 + $0x94] sm:$0xf]
        %v3174 = vld [vmem:[#allocation9 + $0x98] sm:$0xf]
        %v3175 = vld [vmem:[#allocation9 + $0x9c] sm:$0xf]
        %v3176 = vld [vmem:[#allocation9 + $0xa0] sm:$0xf]
        %v3177 = vld [vmem:[#allocation9 + $0xa4] sm:$0xf]
        %v3178 = vld [vmem:[#allocation9 + $0xa8] sm:$0xf]
        %v3179 = vld [vmem:[#allocation9 + $0xac] sm:$0xf]
        %v3180 = vld [vmem:[#allocation9 + $0xb0] sm:$0xf]
        %v3181 = vld [vmem:[#allocation9 + $0xb4] sm:$0xf]
        %v3182 = vld [vmem:[#allocation9 + $0xb8] sm:$0xf]
        %v3183 = vld [vmem:[#allocation9 + $0xbc] sm:$0xf]
        %v3184 = vld [vmem:[#allocation9 + $0xc0] sm:$0xf]
        %v3185 = vld [vmem:[#allocation9 + $0xc4] sm:$0xf]
        %v3186 = vld [vmem:[#allocation9 + $0xc8] sm:$0xf]
        %v3187 = vld [vmem:[#allocation9 + $0xcc] sm:$0xf]
        %v3188 = vld [vmem:[#allocation9 + $0xd0] sm:$0xf]
        %v3189 = vld [vmem:[#allocation9 + $0xd4] sm:$0xf]
        %v3190 = vld [vmem:[#allocation9 + $0xd8] sm:$0xf]
        %v3191 = vld [vmem:[#allocation9 + $0xdc] sm:$0xf]
        %v3192 = vld [vmem:[#allocation9 + $0xe0] sm:$0xf]
        %v3193 = vld [vmem:[#allocation9 + $0xe4] sm:$0xf]
        %v3194 = vld [vmem:[#allocation9 + $0xe8] sm:$0xf]
        %v3195 = vld [vmem:[#allocation9 + $0xec] sm:$0xf]
        %v3196 = vld [vmem:[#allocation9 + $0xf0] sm:$0xf]
        %v3197 = vld [vmem:[#allocation9 + $0xf4] sm:$0xf]
        %v3198 = vld [vmem:[#allocation9 + $0xf8] sm:$0xf]
        %v3199 = vld [vmem:[#allocation9 + $0xfc] sm:$0xf]
        %v3200 = vld [vmem:[#allocation9 + $0x100] sm:$0xf]
        %v3201 = vld [vmem:[#allocation9 + $0x104] sm:$0xf]
        %v3202 = vld [vmem:[#allocation9 + $0x108] sm:$0xf]
        %v3203 = vld [vmem:[#allocation9 + $0x10c] sm:$0xf]
        %v3204 = vld [vmem:[#allocation9 + $0x110] sm:$0xf]
        %v3205 = vld [vmem:[#allocation9 + $0x114] sm:$0xf]
        %v3206 = vld [vmem:[#allocation9 + $0x118] sm:$0xf]
        %v3207 = vld [vmem:[#allocation9 + $0x11c] sm:$0xf]
        %v3208 = vld [vmem:[#allocation9 + $0x120] sm:$0xf]
        %v3209 = vld [vmem:[#allocation9 + $0x124] sm:$0xf]
        %v3210 = vld [vmem:[#allocation9 + $0x128] sm:$0xf]
        %v3211 = vld [vmem:[#allocation9 + $0x12c] sm:$0xf]
        %v3212 = vld [vmem:[#allocation9 + $0x130] sm:$0xf]
        %v3213 = vld [vmem:[#allocation9 + $0x134] sm:$0xf]
        %v3214 = vld [vmem:[#allocation9 + $0x138] sm:$0xf]
        %v3215 = vld [vmem:[#allocation9 + $0x13c] sm:$0xf]
        %v3216 = vld [vmem:[#allocation9 + $0x140] sm:$0xf]
        %v3217 = vld [vmem:[#allocation9 + $0x144] sm:$0xf]
        %v3218 = vld [vmem:[#allocation9 + $0x148] sm:$0xf]
        %v3219 = vld [vmem:[#allocation9 + $0x14c] sm:$0xf]
        %v3220 = vld [vmem:[#allocation9 + $0x150] sm:$0xf]
        %v3221 = vld [vmem:[#allocation9 + $0x154] sm:$0xf]
        %v3222 = vld [vmem:[#allocation9 + $0x158] sm:$0xf]
        %v3223 = vld [vmem:[#allocation9 + $0x15c] sm:$0xf]
        %v3224 = vld [vmem:[#allocation9 + $0x160] sm:$0xf]
        %v3225 = vld [vmem:[#allocation9 + $0x164] sm:$0xf]
        %v3226 = vld [vmem:[#allocation9 + $0x168] sm:$0xf]
        %v3227 = vld [vmem:[#allocation9 + $0x16c] sm:$0xf]
        %v3228 = vld [vmem:[#allocation9 + $0x170] sm:$0xf]
        %v3229 = vld [vmem:[#allocation9 + $0x174] sm:$0xf]
        %v3230 = vld [vmem:[#allocation9 + $0x178] sm:$0xf]
        %v3231 = vld [vmem:[#allocation9 + $0x17c] sm:$0xf]
        %v3232 = vld [vmem:[#allocation9 + $0x180] sm:$0xf]
        %v3233 = vld [vmem:[#allocation9 + $0x184] sm:$0xf]
        %v3234 = vld [vmem:[#allocation9 + $0x188] sm:$0xf]
        %v3235 = vld [vmem:[#allocation9 + $0x18c] sm:$0xf]
        %v3236 = vld [vmem:[#allocation9 + $0x190] sm:$0xf]
        %v3237 = vld [vmem:[#allocation9 + $0x194] sm:$0xf]
        %v3238 = vld [vmem:[#allocation9 + $0x198] sm:$0xf]
        %v3239 = vld [vmem:[#allocation9 + $0x19c] sm:$0xf]
        %v3240 = vld [vmem:[#allocation9 + $0x1a0] sm:$0xf]
        %v3241 = vld [vmem:[#allocation9 + $0x1a4] sm:$0xf]
        %v3242 = vld [vmem:[#allocation9 + $0x1a8] sm:$0xf]
        %v3243 = vld [vmem:[#allocation9 + $0x1ac] sm:$0xf]
        %v3244 = vld [vmem:[#allocation9 + $0x1b0] sm:$0xf]
        %v3245 = vld [vmem:[#allocation9 + $0x1b4] sm:$0xf]
        %v3246 = vld [vmem:[#allocation9 + $0x1b8] sm:$0xf]
        %v3247 = vld [vmem:[#allocation9 + $0x1bc] sm:$0xf]
        %v3248 = vld [vmem:[#allocation9 + $0x1c0] sm:$0xf]
        %v3249 = vld [vmem:[#allocation9 + $0x1c4] sm:$0xf]
        %v3250 = vld [vmem:[#allocation9 + $0x1c8] sm:$0xf]
        %v3251 = vld [vmem:[#allocation9 + $0x1cc] sm:$0xf]
        %v3252 = vld [vmem:[#allocation9 + $0x1d0] sm:$0xf]
        %v3253 = vld [vmem:[#allocation9 + $0x1d4] sm:$0xf]
        %v3254 = vld [vmem:[#allocation9 + $0x1d8] sm:$0xf]
        %v3255 = vld [vmem:[#allocation9 + $0x1dc] sm:$0xf]
        %v3256 = vld [vmem:[#allocation9 + $0x1e0] sm:$0xf]
        %v3257 = vld [vmem:[#allocation9 + $0x1e4] sm:$0xf]
        %v3258 = vld [vmem:[#allocation9 + $0x1e8] sm:$0xf]
        %v3259 = vld [vmem:[#allocation9 + $0x1ec] sm:$0xf]
        %v3260 = vld [vmem:[#allocation9 + $0x1f0] sm:$0xf]
        %v3261 = vld [vmem:[#allocation9 + $0x1f4] sm:$0xf]
        %v3262 = vld [vmem:[#allocation9 + $0x1f8] sm:$0xf]
        %v3263 = vld [vmem:[#allocation9 + $0x1fc] sm:$0xf]
        %v3264 = vld [vmem:[#allocation9 + $0x200] sm:$0xf]
        %v3265 = vld [vmem:[#allocation9 + $0x204] sm:$0xf]
        %v3266 = vld [vmem:[#allocation9 + $0x208] sm:$0xf]
        %v3267 = vld [vmem:[#allocation9 + $0x20c] sm:$0xf]
        %v3268 = vld [vmem:[#allocation9 + $0x210] sm:$0xf]
        %v3269 = vld [vmem:[#allocation9 + $0x214] sm:$0xf]
        %v3270 = vld [vmem:[#allocation9 + $0x218] sm:$0xf]
        %v3271 = vld [vmem:[#allocation9 + $0x21c] sm:$0xf]
        %v3272 = vld [vmem:[#allocation9 + $0x220] sm:$0xf]
        %v3273 = vld [vmem:[#allocation9 + $0x224] sm:$0xf]
        %v3274 = vld [vmem:[#allocation9 + $0x228] sm:$0xf]
        %v3275 = vld [vmem:[#allocation9 + $0x22c] sm:$0xf]
        %v3276 = vld [vmem:[#allocation9 + $0x230] sm:$0xf]
        %v3277 = vld [vmem:[#allocation9 + $0x234] sm:$0xf]
        %v3278 = vld [vmem:[#allocation9 + $0x238] sm:$0xf]
        %v3279 = vld [vmem:[#allocation9 + $0x23c] sm:$0xf]
        %v3424 = vunpack.c.l.b16 %v3136
        %v3425 = vunpack.c.l.b16 %v3137
        %v3426 = vunpack.c.l.b16 %v3138
        %v3427 = vunpack.c.l.b16 %v3139
        %v3428 = vunpack.c.l.b16 %v3140
        %v3429 = vunpack.c.l.b16 %v3141
        %v3430 = vunpack.c.l.b16 %v3142
        %v3431 = vunpack.c.l.b16 %v3143
        %v3432 = vunpack.c.l.b16 %v3144
        %v3433 = vunpack.c.l.b16 %v3145
        %v3434 = vunpack.c.l.b16 %v3146
        %v3435 = vunpack.c.l.b16 %v3147
        %v3436 = vunpack.c.l.b16 %v3148
        %v3437 = vunpack.c.l.b16 %v3149
        %v3438 = vunpack.c.l.b16 %v3150
        %v3439 = vunpack.c.l.b16 %v3151
        %v3440 = vunpack.c.l.b16 %v3152
        %v3441 = vunpack.c.l.b16 %v3153
        %v3442 = vunpack.c.l.b16 %v3154
        %v3443 = vunpack.c.l.b16 %v3155
        %v3444 = vunpack.c.l.b16 %v3156
        %v3445 = vunpack.c.l.b16 %v3157
        %v3446 = vunpack.c.l.b16 %v3158
        %v3447 = vunpack.c.l.b16 %v3159
        %v3448 = vunpack.c.l.b16 %v3160
        %v3449 = vunpack.c.l.b16 %v3161
        %v3450 = vunpack.c.l.b16 %v3162
        %v3451 = vunpack.c.l.b16 %v3163
        %v3452 = vunpack.c.l.b16 %v3164
        %v3453 = vunpack.c.l.b16 %v3165
        %v3454 = vunpack.c.l.b16 %v3166
        %v3455 = vunpack.c.l.b16 %v3167
        %v3456 = vunpack.c.l.b16 %v3168
        %v3457 = vunpack.c.l.b16 %v3169
        %v3458 = vunpack.c.l.b16 %v3170
        %v3459 = vunpack.c.l.b16 %v3171
        %v3460 = vunpack.c.l.b16 %v3172
        %v3461 = vunpack.c.l.b16 %v3173
        %v3462 = vunpack.c.l.b16 %v3174
        %v3463 = vunpack.c.l.b16 %v3175
        %v3464 = vunpack.c.l.b16 %v3176
        %v3465 = vunpack.c.l.b16 %v3177
        %v3466 = vunpack.c.l.b16 %v3178
        %v3467 = vunpack.c.l.b16 %v3179
        %v3468 = vunpack.c.l.b16 %v3180
        %v3469 = vunpack.c.l.b16 %v3181
        %v3470 = vunpack.c.l.b16 %v3182
        %v3471 = vunpack.c.l.b16 %v3183
        %v3472 = vunpack.c.l.b16 %v3184
        %v3473 = vunpack.c.l.b16 %v3185
        %v3474 = vunpack.c.l.b16 %v3186
        %v3475 = vunpack.c.l.b16 %v3187
        %v3476 = vunpack.c.l.b16 %v3188
        %v3477 = vunpack.c.l.b16 %v3189
        %v3478 = vunpack.c.l.b16 %v3190
        %v3479 = vunpack.c.l.b16 %v3191
        %v3480 = vunpack.c.l.b16 %v3192
        %v3481 = vunpack.c.l.b16 %v3193
        %v3482 = vunpack.c.l.b16 %v3194
        %v3483 = vunpack.c.l.b16 %v3195
        %v3484 = vunpack.c.l.b16 %v3196
        %v3485 = vunpack.c.l.b16 %v3197
        %v3486 = vunpack.c.l.b16 %v3198
        %v3487 = vunpack.c.l.b16 %v3199
        %v3488 = vunpack.c.l.b16 %v3200
        %v3489 = vunpack.c.l.b16 %v3201
        %v3490 = vunpack.c.l.b16 %v3202
        %v3491 = vunpack.c.l.b16 %v3203
        %v3492 = vunpack.c.l.b16 %v3204
        %v3493 = vunpack.c.l.b16 %v3205
        %v3494 = vunpack.c.l.b16 %v3206
        %v3495 = vunpack.c.l.b16 %v3207
        %v3496 = vunpack.c.l.b16 %v3208
        %v3497 = vunpack.c.l.b16 %v3209
        %v3498 = vunpack.c.l.b16 %v3210
        %v3499 = vunpack.c.l.b16 %v3211
        %v3500 = vunpack.c.l.b16 %v3212
        %v3501 = vunpack.c.l.b16 %v3213
        %v3502 = vunpack.c.l.b16 %v3214
        %v3503 = vunpack.c.l.b16 %v3215
        %v3504 = vunpack.c.l.b16 %v3216
        %v3505 = vunpack.c.l.b16 %v3217
        %v3506 = vunpack.c.l.b16 %v3218
        %v3507 = vunpack.c.l.b16 %v3219
        %v3508 = vunpack.c.l.b16 %v3220
        %v3509 = vunpack.c.l.b16 %v3221
        %v3510 = vunpack.c.l.b16 %v3222
        %v3511 = vunpack.c.l.b16 %v3223
        %v3512 = vunpack.c.l.b16 %v3224
        %v3513 = vunpack.c.l.b16 %v3225
        %v3514 = vunpack.c.l.b16 %v3226
        %v3515 = vunpack.c.l.b16 %v3227
        %v3516 = vunpack.c.l.b16 %v3228
        %v3517 = vunpack.c.l.b16 %v3229
        %v3518 = vunpack.c.l.b16 %v3230
        %v3519 = vunpack.c.l.b16 %v3231
        %v3520 = vunpack.c.l.b16 %v3232
        %v3521 = vunpack.c.l.b16 %v3233
        %v3522 = vunpack.c.l.b16 %v3234
        %v3523 = vunpack.c.l.b16 %v3235
        %v3524 = vunpack.c.l.b16 %v3236
        %v3525 = vunpack.c.l.b16 %v3237
        %v3526 = vunpack.c.l.b16 %v3238
        %v3527 = vunpack.c.l.b16 %v3239
        %v3528 = vunpack.c.l.b16 %v3240
        %v3529 = vunpack.c.l.b16 %v3241
        %v3530 = vunpack.c.l.b16 %v3242
        %v3531 = vunpack.c.l.b16 %v3243
        %v3532 = vunpack.c.l.b16 %v3244
        %v3533 = vunpack.c.l.b16 %v3245
        %v3534 = vunpack.c.l.b16 %v3246
        %v3535 = vunpack.c.l.b16 %v3247
        %v3536 = vunpack.c.l.b16 %v3248
        %v3537 = vunpack.c.l.b16 %v3249
        %v3538 = vunpack.c.l.b16 %v3250
        %v3539 = vunpack.c.l.b16 %v3251
        %v3540 = vunpack.c.l.b16 %v3252
        %v3541 = vunpack.c.l.b16 %v3253
        %v3542 = vunpack.c.l.b16 %v3254
        %v3543 = vunpack.c.l.b16 %v3255
        %v3544 = vunpack.c.l.b16 %v3256
        %v3545 = vunpack.c.l.b16 %v3257
        %v3546 = vunpack.c.l.b16 %v3258
        %v3547 = vunpack.c.l.b16 %v3259
        %v3548 = vunpack.c.l.b16 %v3260
        %v3549 = vunpack.c.l.b16 %v3261
        %v3550 = vunpack.c.l.b16 %v3262
        %v3551 = vunpack.c.l.b16 %v3263
        %v3552 = vunpack.c.l.b16 %v3264
        %v3553 = vunpack.c.l.b16 %v3265
        %v3554 = vunpack.c.l.b16 %v3266
        %v3555 = vunpack.c.l.b16 %v3267
        %v3556 = vunpack.c.l.b16 %v3268
        %v3557 = vunpack.c.l.b16 %v3269
        %v3558 = vunpack.c.l.b16 %v3270
        %v3559 = vunpack.c.l.b16 %v3271
        %v3560 = vunpack.c.l.b16 %v3272
        %v3561 = vunpack.c.l.b16 %v3273
        %v3562 = vunpack.c.l.b16 %v3274
        %v3563 = vunpack.c.l.b16 %v3275
        %v3564 = vunpack.c.l.b16 %v3276
        %v3565 = vunpack.c.l.b16 %v3277
        %v3566 = vunpack.c.l.b16 %v3278
        %v3567 = vunpack.c.l.b16 %v3279
        %v3568 = vpack.c.b16 %v3425, %v3424
        %v3569 = vpack.c.b16 %v3427, %v3426
        %v3570 = vpack.c.b16 %v3429, %v3428
        %v3571 = vpack.c.b16 %v3431, %v3430
        %v3572 = vpack.c.b16 %v3433, %v3432
        %v3573 = vpack.c.b16 %v3435, %v3434
        %v3574 = vpack.c.b16 %v3437, %v3436
        %v3575 = vpack.c.b16 %v3439, %v3438
        %v3576 = vpack.c.b16 %v3441, %v3440
        %v3577 = vpack.c.b16 %v3443, %v3442
        %v3578 = vpack.c.b16 %v3445, %v3444
        %v3579 = vpack.c.b16 %v3447, %v3446
        %v3580 = vpack.c.b16 %v3449, %v3448
        %v3581 = vpack.c.b16 %v3451, %v3450
        %v3582 = vpack.c.b16 %v3453, %v3452
        %v3583 = vpack.c.b16 %v3455, %v3454
        %v3584 = vpack.c.b16 %v3457, %v3456
        %v3585 = vpack.c.b16 %v3459, %v3458
        %v3586 = vpack.c.b16 %v3461, %v3460
        %v3587 = vpack.c.b16 %v3463, %v3462
        %v3588 = vpack.c.b16 %v3465, %v3464
        %v3589 = vpack.c.b16 %v3467, %v3466
        %v3590 = vpack.c.b16 %v3469, %v3468
        %v3591 = vpack.c.b16 %v3471, %v3470
        %v3592 = vpack.c.b16 %v3473, %v3472
        %v3593 = vpack.c.b16 %v3475, %v3474
        %v3594 = vpack.c.b16 %v3477, %v3476
        %v3595 = vpack.c.b16 %v3479, %v3478
        %v3596 = vpack.c.b16 %v3481, %v3480
        %v3597 = vpack.c.b16 %v3483, %v3482
        %v3598 = vpack.c.b16 %v3485, %v3484
        %v3599 = vpack.c.b16 %v3487, %v3486
        %v3600 = vpack.c.b16 %v3489, %v3488
        %v3601 = vpack.c.b16 %v3491, %v3490
        %v3602 = vpack.c.b16 %v3493, %v3492
        %v3603 = vpack.c.b16 %v3495, %v3494
        %v3604 = vpack.c.b16 %v3497, %v3496
        %v3605 = vpack.c.b16 %v3499, %v3498
        %v3606 = vpack.c.b16 %v3501, %v3500
        %v3607 = vpack.c.b16 %v3503, %v3502
        %v3608 = vpack.c.b16 %v3505, %v3504
        %v3609 = vpack.c.b16 %v3507, %v3506
        %v3610 = vpack.c.b16 %v3509, %v3508
        %v3611 = vpack.c.b16 %v3511, %v3510
        %v3612 = vpack.c.b16 %v3513, %v3512
        %v3613 = vpack.c.b16 %v3515, %v3514
        %v3614 = vpack.c.b16 %v3517, %v3516
        %v3615 = vpack.c.b16 %v3519, %v3518
        %v3616 = vpack.c.b16 %v3521, %v3520
        %v3617 = vpack.c.b16 %v3523, %v3522
        %v3618 = vpack.c.b16 %v3525, %v3524
        %v3619 = vpack.c.b16 %v3527, %v3526
        %v3620 = vpack.c.b16 %v3529, %v3528
        %v3621 = vpack.c.b16 %v3531, %v3530
        %v3622 = vpack.c.b16 %v3533, %v3532
        %v3623 = vpack.c.b16 %v3535, %v3534
        %v3624 = vpack.c.b16 %v3537, %v3536
        %v3625 = vpack.c.b16 %v3539, %v3538
        %v3626 = vpack.c.b16 %v3541, %v3540
        %v3627 = vpack.c.b16 %v3543, %v3542
        %v3628 = vpack.c.b16 %v3545, %v3544
        %v3629 = vpack.c.b16 %v3547, %v3546
        %v3630 = vpack.c.b16 %v3549, %v3548
        %v3631 = vpack.c.b16 %v3551, %v3550
        %v3632 = vpack.c.b16 %v3553, %v3552
        %v3633 = vpack.c.b16 %v3555, %v3554
        %v3634 = vpack.c.b16 %v3557, %v3556
        %v3635 = vpack.c.b16 %v3559, %v3558
        %v3636 = vpack.c.b16 %v3561, %v3560
        %v3637 = vpack.c.b16 %v3563, %v3562
        %v3638 = vpack.c.b16 %v3565, %v3564
        %v3639 = vpack.c.b16 %v3567, %v3566
        %3712 = vmatprep.subr.bf16.mxu0 0
        %3713 = vmatpush1.bf16.msra.mxu0 %v3568
        %3714 = vmatprep.subr.bf16.mxu0 0
        %3715 = vmatpush1.bf16.msra.mxu0 %v3569
        %3716 = vmatprep.subr.bf16.mxu0 0
        %3717 = vmatpush1.bf16.msra.mxu0 %v3570
        %3718 = vmatprep.subr.bf16.mxu0 0
        %3719 = vmatpush1.bf16.msra.mxu0 %v3571
        %3720 = vmatprep.subr.bf16.mxu0 0
        %3721 = vmatpush1.bf16.msra.mxu0 %v3572
        %3722 = vmatprep.subr.bf16.mxu0 0
        %3723 = vmatpush1.bf16.msra.mxu0 %v3573
        %3724 = vmatprep.subr.bf16.mxu0 0
        %3725 = vmatpush1.bf16.msra.mxu0 %v3574
        %3726 = vmatprep.subr.bf16.mxu0 0
        %3727 = vmatpush1.bf16.msra.mxu0 %v3575
        %3728 = vmatprep.subr.bf16.mxu0 0
        %3729 = vmatpush1.bf16.msra.mxu0 %v3576
        %3730 = vmatprep.subr.bf16.mxu0 0
        %3731 = vmatpush1.bf16.msra.mxu0 %v3577
        %3732 = vmatprep.subr.bf16.mxu0 0
        %3733 = vmatpush1.bf16.msra.mxu0 %v3578
        %3734 = vmatprep.subr.bf16.mxu0 0
        %3735 = vmatpush1.bf16.msra.mxu0 %v3579
        %3736 = vmatprep.subr.bf16.mxu0 0
        %3737 = vmatpush1.bf16.msra.mxu0 %v3580
        %3738 = vmatprep.subr.bf16.mxu0 0
        %3739 = vmatpush1.bf16.msra.mxu0 %v3581
        %3740 = vmatprep.subr.bf16.mxu0 0
        %3741 = vmatpush1.bf16.msra.mxu0 %v3582
        %3742 = vmatprep.subr.bf16.mxu0 0
        %3743 = vmatpush1.bf16.msra.mxu0 %v3583
        %3744 = vmatprep.mubr.bf16.mxu0 %v3102
        %3745 = vmatmul.mubr.bf16.gmra.mrb[0].mxu0 %v3084
        %v3746 = vpop.f32.mrb[0].mxu0
        %v3747 = vadd.f32 0.0, %v3746
        %v3748 = vpop.f32.mrb[0].mxu0
        %v3749 = vpop.f32.mrb[0].mxu0
        %v3750 = vadd.f32 0.0, %v3749
        %v3751 = vpop.f32.mrb[0].mxu0
        %3752 = vmatprep.mubr.bf16.mxu0 %v3103
        %3753 = vmatmul.mubr.bf16.gmra.mrb[0].mxu0 %v3085
        %v3754 = vpop.f32.mrb[0].mxu0
        %v3755 = vadd.f32 0.0, %v3754
        %v3756 = vpop.f32.mrb[0].mxu0
        %v3757 = vpop.f32.mrb[0].mxu0
        %v3758 = vadd.f32 0.0, %v3757
        %v3759 = vpop.f32.mrb[0].mxu0
        %3760 = vmatprep.mubr.bf16.mxu0 %v3102
        %3761 = vmatmul.mubr.bf16.gmra.mrb[0].mxu0 %v3086
        %v3762 = vpop.f32.mrb[0].mxu0
        %v3763 = vadd.f32 0.0, %v3762
        %v3764 = vpop.f32.mrb[0].mxu0
        %v3765 = vpop.f32.mrb[0].mxu0
        %v3766 = vadd.f32 0.0, %v3765
        %v3767 = vpop.f32.mrb[0].mxu0
        %3768 = vmatprep.mubr.bf16.mxu0 %v3104
        %3769 = vmatmul.mubr.bf16.gmra.mrb[0].mxu0 %v3087
        %v3770 = vpop.f32.mrb[0].mxu0
        %v3771 = vadd.f32 0.0, %v3770
        %v3772 = vpop.f32.mrb[0].mxu0
        %v3773 = vpop.f32.mrb[0].mxu0
        %v3774 = vadd.f32 0.0, %v3773
        %v3775 = vpop.f32.mrb[0].mxu0
        %3776 = vmatprep.mubr.bf16.mxu0 %v3105
        %3777 = vmatmul.mubr.bf16.gmra.mrb[0].mxu0 %v3088
        %v3778 = vpop.f32.mrb[0].mxu0
        %v3779 = vadd.f32 0.0, %v3778
        %v3780 = vpop.f32.mrb[0].mxu0
        %v3781 = vpop.f32.mrb[0].mxu0
        %v3782 = vadd.f32 0.0, %v3781
        %v3783 = vpop.f32.mrb[0].mxu0
        %3784 = vmatprep.mubr.bf16.mxu0 %v3106
        %3785 = vmatmul.mubr.bf16.gmra.mrb[0].mxu0 %v3089
        %v3786 = vpop.f32.mrb[0].mxu0
        %v3787 = vadd.f32 0.0, %v3786
        %v3788 = vpop.f32.mrb[0].mxu0
        %v3789 = vpop.f32.mrb[0].mxu0
        %v3790 = vadd.f32 0.0, %v3789
        %v3791 = vpop.f32.mrb[0].mxu0
        %3792 = vmatprep.mubr.bf16.mxu0 %v3107
        %3793 = vmatmul.mubr.bf16.gmra.mrb[0].mxu0 %v3090
        %v3794 = vpop.f32.mrb[0].mxu0
        %v3795 = vadd.f32 0.0, %v3794
        %v3796 = vpop.f32.mrb[0].mxu0
        %v3797 = vpop.f32.mrb[0].mxu0
        %v3798 = vadd.f32 0.0, %v3797
        %v3799 = vpop.f32.mrb[0].mxu0
        %3800 = vmatprep.mubr.bf16.mxu0 %v3108
        %3801 = vmatmul.mubr.bf16.gmra.mrb[0].mxu0 %v3091
        %v3802 = vpop.f32.mrb[0].mxu0
        %v3803 = vadd.f32 0.0, %v3802
        %v3804 = vpop.f32.mrb[0].mxu0
        %v3805 = vpop.f32.mrb[0].mxu0
        %v3806 = vadd.f32 0.0, %v3805
        %v3807 = vpop.f32.mrb[0].mxu0
        %3808 = vmatprep.mubr.bf16.mxu0 %v3109
        %3809 = vmatmul.mubr.bf16.gmra.mrb[0].mxu0 %v3092
        %v3810 = vpop.f32.mrb[0].mxu0
        %v3811 = vadd.f32 0.0, %v3810
        %v3812 = vpop.f32.mrb[0].mxu0
        %v3813 = vpop.f32.mrb[0].mxu0
        %v3814 = vadd.f32 0.0, %v3813
        %v3815 = vpop.f32.mrb[0].mxu0
        %3816 = vmatprep.mubr.bf16.mxu0 %v3110
        %3817 = vmatmul.mubr.bf16.gmra.mrb[0].mxu0 %v3093
        %v3818 = vpop.f32.mrb[0].mxu0
        %v3819 = vadd.f32 0.0, %v3818
        %v3820 = vpop.f32.mrb[0].mxu0
        %v3821 = vpop.f32.mrb[0].mxu0
        %v3822 = vadd.f32 0.0, %v3821
        %v3823 = vpop.f32.mrb[0].mxu0
        %3824 = vmatprep.mubr.bf16.mxu0 %v3111
        %3825 = vmatmul.mubr.bf16.gmra.mrb[0].mxu0 %v3094
        %v3826 = vpop.f32.mrb[0].mxu0
        %v3827 = vadd.f32 0.0, %v3826
        %v3828 = vpop.f32.mrb[0].mxu0
        %v3829 = vpop.f32.mrb[0].mxu0
        %v3830 = vadd.f32 0.0, %v3829
        %v3831 = vpop.f32.mrb[0].mxu0
        %3832 = vmatprep.mubr.bf16.mxu0 %v3112
        %3833 = vmatmul.mubr.bf16.gmra.mrb[0].mxu0 %v3095
        %v3834 = vpop.f32.mrb[0].mxu0
        %v3835 = vadd.f32 0.0, %v3834
        %v3836 = vpop.f32.mrb[0].mxu0
        %v3837 = vpop.f32.mrb[0].mxu0
        %v3838 = vadd.f32 0.0, %v3837
        %v3839 = vpop.f32.mrb[0].mxu0
        %3840 = vmatprep.mubr.bf16.mxu0 %v3113
        %3841 = vmatmul.mubr.bf16.gmra.mrb[0].mxu0 %v3096
        %v3842 = vpop.f32.mrb[0].mxu0
        %v3843 = vadd.f32 0.0, %v3842
        %v3844 = vpop.f32.mrb[0].mxu0
        %v3845 = vpop.f32.mrb[0].mxu0
        %v3846 = vadd.f32 0.0, %v3845
        %v3847 = vpop.f32.mrb[0].mxu0
        %3848 = vmatprep.mubr.bf16.mxu0 %v3114
        %3849 = vmatmul.mubr.bf16.gmra.mrb[0].mxu0 %v3097
        %v3850 = vpop.f32.mrb[0].mxu0
        %v3851 = vadd.f32 0.0, %v3850
        %v3852 = vpop.f32.mrb[0].mxu0
        %v3853 = vpop.f32.mrb[0].mxu0
        %v3854 = vadd.f32 0.0, %v3853
        %v3855 = vpop.f32.mrb[0].mxu0
        %3856 = vmatprep.mubr.bf16.mxu0 %v3115
        %3857 = vmatmul.mubr.bf16.gmra.mrb[0].mxu0 %v3098
        %v3858 = vpop.f32.mrb[0].mxu0
        %v3859 = vadd.f32 0.0, %v3858
        %v3860 = vpop.f32.mrb[0].mxu0
        %v3861 = vpop.f32.mrb[0].mxu0
        %v3862 = vadd.f32 0.0, %v3861
        %v3863 = vpop.f32.mrb[0].mxu0
        %3864 = vmatprep.mubr.bf16.mxu0 %v3116
        %3865 = vmatmul.mubr.bf16.gmra.mrb[0].mxu0 %v3099
        %v3866 = vpop.f32.mrb[0].mxu0
        %v3867 = vadd.f32 0.0, %v3866
        %v3868 = vpop.f32.mrb[0].mxu0
        %v3869 = vpop.f32.mrb[0].mxu0
        %v3870 = vadd.f32 0.0, %v3869
        %v3871 = vpop.f32.mrb[0].mxu0
        %3872 = vdwg.mxu0
        %3873 = vmatprep.subr.bf16.mxu0 0
        %3874 = vmatpush1.bf16.msra.mxu0 %v3584
        %3875 = vmatprep.subr.bf16.mxu0 0
        %3876 = vmatpush1.bf16.msra.mxu0 %v3585
        %3877 = vmatprep.subr.bf16.mxu0 0
        %3878 = vmatpush1.bf16.msra.mxu0 %v3586
        %3879 = vmatprep.subr.bf16.mxu0 0
        %3880 = vmatpush1.bf16.msra.mxu0 %v3587
        %3881 = vmatprep.subr.bf16.mxu0 0
        %3882 = vmatpush1.bf16.msra.mxu0 %v3588
        %3883 = vmatprep.subr.bf16.mxu0 0
        %3884 = vmatpush1.bf16.msra.mxu0 %v3589
        %3885 = vmatprep.subr.bf16.mxu0 0
        %3886 = vmatpush1.bf16.msra.mxu0 %v3590
        %3887 = vmatprep.subr.bf16.mxu0 0
        %3888 = vmatpush1.bf16.msra.mxu0 %v3591
        %3889 = vmatprep.subr.bf16.mxu0 0
        %3890 = vmatpush1.bf16.msra.mxu0 %v3592
        %3891 = vmatprep.subr.bf16.mxu0 0
        %3892 = vmatpush1.bf16.msra.mxu0 %v3593
        %3893 = vmatprep.subr.bf16.mxu0 0
        %3894 = vmatpush1.bf16.msra.mxu0 %v3594
        %3895 = vmatprep.subr.bf16.mxu0 0
        %3896 = vmatpush1.bf16.msra.mxu0 %v3595
        %3897 = vmatprep.subr.bf16.mxu0 0
        %3898 = vmatpush1.bf16.msra.mxu0 %v3596
        %3899 = vmatprep.subr.bf16.mxu0 0
        %3900 = vmatpush1.bf16.msra.mxu0 %v3597
        %3901 = vmatprep.subr.bf16.mxu0 0
        %3902 = vmatpush1.bf16.msra.mxu0 %v3598
        %3903 = vmatprep.subr.bf16.mxu0 0
        %3904 = vmatpush1.bf16.msra.mxu0 %v3599
        %3905 = vmatprep.mubr.bf16.mxu0 %v3085
        %3906 = vmatmul.mubr.bf16.gmra.mrb[0].mxu0 %v3118
        %v3907 = vpop.f32.mrb[0].mxu0
        %v3908 = vadd.f32 %v3747, %v3907
        %v3909 = vpop.f32.mrb[0].mxu0
        %v3910 = vpop.f32.mrb[0].mxu0
        %v3911 = vadd.f32 %v3750, %v3910
        %v3912 = vpop.f32.mrb[0].mxu0
        %3913 = vmatprep.mubr.bf16.mxu0 %v3086
        %3914 = vmatmul.mubr.bf16.gmra.mrb[0].mxu0 %v3119
        %v3915 = vpop.f32.mrb[0].mxu0
        %v3916 = vadd.f32 %v3755, %v3915
        %v3917 = vpop.f32.mrb[0].mxu0
        %v3918 = vpop.f32.mrb[0].mxu0
        %v3919 = vadd.f32 %v3758, %v3918
        %v3920 = vpop.f32.mrb[0].mxu0
        %3921 = vmatprep.mubr.bf16.mxu0 %v3087
        %3922 = vmatmul.mubr.bf16.gmra.mrb[0].mxu0 %v3120
        %v3923 = vpop.f32.mrb[0].mxu0
        %v3924 = vadd.f32 %v3763, %v3923
        %v3925 = vpop.f32.mrb[0].mxu0
        %v3926 = vpop.f32.mrb[0].mxu0
        %v3927 = vadd.f32 %v3766, %v3926
        %v3928 = vpop.f32.mrb[0].mxu0
        %3929 = vmatprep.mubr.bf16.mxu0 %v3088
        %3930 = vmatmul.mubr.bf16.gmra.mrb[0].mxu0 %v3121
        %v3931 = vpop.f32.mrb[0].mxu0
        %v3932 = vadd.f32 %v3771, %v3931
        %v3933 = vpop.f32.mrb[0].mxu0
        %v3934 = vpop.f32.mrb[0].mxu0
        %v3935 = vadd.f32 %v3774, %v3934
        %v3936 = vpop.f32.mrb[0].mxu0
        %3937 = vmatprep.mubr.bf16.mxu0 %v3089
        %3938 = vmatmul.mubr.bf16.gmra.mrb[0].mxu0 %v3122
        %v3939 = vpop.f32.mrb[0].mxu0
        %v3940 = vadd.f32 %v3779, %v3939
        %v3941 = vpop.f32.mrb[0].mxu0
        %v3942 = vpop.f32.mrb[0].mxu0
        %v3943 = vadd.f32 %v3782, %v3942
        %v3944 = vpop.f32.mrb[0].mxu0
        %3945 = vmatprep.mubr.bf16.mxu0 %v3090
        %3946 = vmatmul.mubr.bf16.gmra.mrb[0].mxu0 %v3123
        %v3947 = vpop.f32.mrb[0].mxu0
        %v3948 = vadd.f32 %v3787, %v3947
        %v3949 = vpop.f32.mrb[0].mxu0
        %v3950 = vpop.f32.mrb[0].mxu0
        %v3951 = vadd.f32 %v3790, %v3950
        %v3952 = vpop.f32.mrb[0].mxu0
        %3953 = vmatprep.mubr.bf16.mxu0 %v3091
        %3954 = vmatmul.mubr.bf16.gmra.mrb[0].mxu0 %v3124
        %v3955 = vpop.f32.mrb[0].mxu0
        %v3956 = vadd.f32 %v3795, %v3955
        %v3957 = vpop.f32.mrb[0].mxu0
        %v3958 = vpop.f32.mrb[0].mxu0
        %v3959 = vadd.f32 %v3798, %v3958
        %v3960 = vpop.f32.mrb[0].mxu0
        %3961 = vmatprep.mubr.bf16.mxu0 %v3092
        %3962 = vmatmul.mubr.bf16.gmra.mrb[0].mxu0 %v3125
        %v3963 = vpop.f32.mrb[0].mxu0
        %v3964 = vadd.f32 %v3803, %v3963
        %v3965 = vpop.f32.mrb[0].mxu0
        %v3966 = vpop.f32.mrb[0].mxu0
        %v3967 = vadd.f32 %v3806, %v3966
        %v3968 = vpop.f32.mrb[0].mxu0
        %3969 = vmatprep.mubr.bf16.mxu0 %v3093
        %3970 = vmatmul.mubr.bf16.gmra.mrb[0].mxu0 %v3126
        %v3971 = vpop.f32.mrb[0].mxu0
        %v3972 = vadd.f32 %v3811, %v3971
        %v3973 = vpop.f32.mrb[0].mxu0
        %v3974 = vpop.f32.mrb[0].mxu0
        %v3975 = vadd.f32 %v3814, %v3974
        %v3976 = vpop.f32.mrb[0].mxu0
        %3977 = vmatprep.mubr.bf16.mxu0 %v3094
        %3978 = vmatmul.mubr.bf16.gmra.mrb[0].mxu0 %v3127
        %v3979 = vpop.f32.mrb[0].mxu0
        %v3980 = vadd.f32 %v3819, %v3979
        %v3981 = vpop.f32.mrb[0].mxu0
        %v3982 = vpop.f32.mrb[0].mxu0
        %v3983 = vadd.f32 %v3822, %v3982
        %v3984 = vpop.f32.mrb[0].mxu0
        %3985 = vmatprep.mubr.bf16.mxu0 %v3095
        %3986 = vmatmul.mubr.bf16.gmra.mrb[0].mxu0 %v3128
        %v3987 = vpop.f32.mrb[0].mxu0
        %v3988 = vadd.f32 %v3827, %v3987
        %v3989 = vpop.f32.mrb[0].mxu0
        %v3990 = vpop.f32.mrb[0].mxu0
        %v3991 = vadd.f32 %v3830, %v3990
        %v3992 = vpop.f32.mrb[0].mxu0
        %3993 = vmatprep.mubr.bf16.mxu0 %v3096
        %3994 = vmatmul.mubr.bf16.gmra.mrb[0].mxu0 %v3129
        %v3995 = vpop.f32.mrb[0].mxu0
        %v3996 = vadd.f32 %v3835, %v3995
        %v3997 = vpop.f32.mrb[0].mxu0
        %v3998 = vpop.f32.mrb[0].mxu0
        %v3999 = vadd.f32 %v3838, %v3998
        %v4000 = vpop.f32.mrb[0].mxu0
        %4001 = vmatprep.mubr.bf16.mxu0 %v3097
        %4002 = vmatmul.mubr.bf16.gmra.mrb[0].mxu0 %v3130
        %v4003 = vpop.f32.mrb[0].mxu0
        %v4004 = vadd.f32 %v3843, %v4003
        %v4005 = vpop.f32.mrb[0].mxu0
        %v4006 = vpop.f32.mrb[0].mxu0
        %v4007 = vadd.f32 %v3846, %v4006
        %v4008 = vpop.f32.mrb[0].mxu0
        %4009 = vmatprep.mubr.bf16.mxu0 %v3098
        %4010 = vmatmul.mubr.bf16.gmra.mrb[0].mxu0 %v3131
        %v4011 = vpop.f32.mrb[0].mxu0
        %v4012 = vadd.f32 %v3851, %v4011
        %v4013 = vpop.f32.mrb[0].mxu0
        %v4014 = vpop.f32.mrb[0].mxu0
        %v4015 = vadd.f32 %v3854, %v4014
        %v4016 = vpop.f32.mrb[0].mxu0
        %4017 = vmatprep.mubr.bf16.mxu0 %v3099
        %4018 = vmatmul.mubr.bf16.gmra.mrb[0].mxu0 %v3132
        %v4019 = vpop.f32.mrb[0].mxu0
        %v4020 = vadd.f32 %v3859, %v4019
        %v4021 = vpop.f32.mrb[0].mxu0
        %v4022 = vpop.f32.mrb[0].mxu0
        %v4023 = vadd.f32 %v3862, %v4022
        %v4024 = vpop.f32.mrb[0].mxu0
        %4025 = vmatprep.mubr.bf16.mxu0 %v3100
        %4026 = vmatmul.mubr.bf16.gmra.mrb[0].mxu0 %v3133
        %v4027 = vpop.f32.mrb[0].mxu0
        %v4028 = vadd.f32 %v3867, %v4027
        %v4029 = vpop.f32.mrb[0].mxu0
        %v4030 = vpop.f32.mrb[0].mxu0
        %v4031 = vadd.f32 %v3870, %v4030
        %v4032 = vpop.f32.mrb[0].mxu0
        %4033 = vdwg.mxu0
        %4034 = vmatprep.subr.bf16.mxu0 0
        %4035 = vmatpush1.bf16.msra.mxu0 %v3600
        %4036 = vmatprep.subr.bf16.mxu0 0
        %4037 = vmatpush1.bf16.msra.mxu0 %v3601
        %4038 = vmatprep.subr.bf16.mxu0 0
        %4039 = vmatpush1.bf16.msra.mxu0 %v3602
        %4040 = vmatprep.subr.bf16.mxu0 0
        %4041 = vmatpush1.bf16.msra.mxu0 %v3603
        %4042 = vmatprep.subr.bf16.mxu0 0
        %4043 = vmatpush1.bf16.msra.mxu0 %v3604
        %4044 = vmatprep.subr.bf16.mxu0 0
        %4045 = vmatpush1.bf16.msra.mxu0 %v3605
        %4046 = vmatprep.subr.bf16.mxu0 0
        %4047 = vmatpush1.bf16.msra.mxu0 %v3606
        %4048 = vmatprep.subr.bf16.mxu0 0
        %4049 = vmatpush1.bf16.msra.mxu0 %v3607
        %4050 = vmatprep.subr.bf16.mxu0 0
        %4051 = vmatpush1.bf16.msra.mxu0 %v3608
        %4052 = vmatprep.subr.bf16.mxu0 0
        %4053 = vmatpush1.bf16.msra.mxu0 %v3609
        %4054 = vmatprep.subr.bf16.mxu0 0
        %4055 = vmatpush1.bf16.msra.mxu0 %v3610
        %4056 = vmatprep.subr.bf16.mxu0 0
        %4057 = vmatpush1.bf16.msra.mxu0 %v3611
        %4058 = vmatprep.subr.bf16.mxu0 0
        %4059 = vmatpush1.bf16.msra.mxu0 %v3612
        %4060 = vmatprep.subr.bf16.mxu0 0
        %4061 = vmatpush1.bf16.msra.mxu0 %v3613
        %4062 = vmatprep.subr.bf16.mxu0 0
        %4063 = vmatpush1.bf16.msra.mxu0 %v3614
        %4064 = vmatprep.subr.bf16.mxu0 0
        %4065 = vmatpush1.bf16.msra.mxu0 %v3615
        %4066 = vmatprep.mubr.bf16.mxu0 %v3119
        %4067 = vmatmul.mubr.bf16.gmra.mrb[0].mxu0 %v3103
        %v4068 = vpop.f32.mrb[0].mxu0
        %v4069 = vadd.f32 %v3908, %v4068
        %v4070 = vpop.f32.mrb[0].mxu0
        %v4071 = vpop.f32.mrb[0].mxu0
        %v4072 = vadd.f32 %v3911, %v4071
        %v4073 = vpop.f32.mrb[0].mxu0
        %4074 = vmatprep.mubr.bf16.mxu0 %v3120
        %4075 = vmatmul.mubr.bf16.gmra.mrb[0].mxu0 %v3102
        %v4076 = vpop.f32.mrb[0].mxu0
        %v4077 = vadd.f32 %v3916, %v4076
        %v4078 = vpop.f32.mrb[0].mxu0
        %v4079 = vpop.f32.mrb[0].mxu0
        %v4080 = vadd.f32 %v3919, %v4079
        %v4081 = vpop.f32.mrb[0].mxu0
        %4082 = vmatprep.mubr.bf16.mxu0 %v3121
        %4083 = vmatmul.mubr.bf16.gmra.mrb[0].mxu0 %v3104
        %v4084 = vpop.f32.mrb[0].mxu0
        %v4085 = vadd.f32 %v3924, %v4084
        %v4086 = vpop.f32.mrb[0].mxu0
        %v4087 = vpop.f32.mrb[0].mxu0
        %v4088 = vadd.f32 %v3927, %v4087
        %v4089 = vpop.f32.mrb[0].mxu0
        %4090 = vmatprep.mubr.bf16.mxu0 %v3122
        %4091 = vmatmul.mubr.bf16.gmra.mrb[0].mxu0 %v3105
        %v4092 = vpop.f32.mrb[0].mxu0
        %v4093 = vadd.f32 %v3932, %v4092
        %v4094 = vpop.f32.mrb[0].mxu0
        %v4095 = vpop.f32.mrb[0].mxu0
        %v4096 = vadd.f32 %v3935, %v4095
        %v4097 = vpop.f32.mrb[0].mxu0
        %4098 = vmatprep.mubr.bf16.mxu0 %v3123
        %4099 = vmatmul.mubr.bf16.gmra.mrb[0].mxu0 %v3106
        %v4100 = vpop.f32.mrb[0].mxu0
        %v4101 = vadd.f32 %v3940, %v4100
        %v4102 = vpop.f32.mrb[0].mxu0
        %v4103 = vpop.f32.mrb[0].mxu0
        %v4104 = vadd.f32 %v3943, %v4103
        %v4105 = vpop.f32.mrb[0].mxu0
        %4106 = vmatprep.mubr.bf16.mxu0 %v3124
        %4107 = vmatmul.mubr.bf16.gmra.mrb[0].mxu0 %v3107
        %v4108 = vpop.f32.mrb[0].mxu0
        %v4109 = vadd.f32 %v3948, %v4108
        %v4110 = vpop.f32.mrb[0].mxu0
        %v4111 = vpop.f32.mrb[0].mxu0
        %v4112 = vadd.f32 %v3951, %v4111
        %v4113 = vpop.f32.mrb[0].mxu0
        %4114 = vmatprep.mubr.bf16.mxu0 %v3125
        %4115 = vmatmul.mubr.bf16.gmra.mrb[0].mxu0 %v3108
        %v4116 = vpop.f32.mrb[0].mxu0
        %v4117 = vadd.f32 %v3956, %v4116
        %v4118 = vpop.f32.mrb[0].mxu0
        %v4119 = vpop.f32.mrb[0].mxu0
        %v4120 = vadd.f32 %v3959, %v4119
        %v4121 = vpop.f32.mrb[0].mxu0
        %4122 = vmatprep.mubr.bf16.mxu0 %v3126
        %4123 = vmatmul.mubr.bf16.gmra.mrb[0].mxu0 %v3109
        %v4124 = vpop.f32.mrb[0].mxu0
        %v4125 = vadd.f32 %v3964, %v4124
        %v4126 = vpop.f32.mrb[0].mxu0
        %v4127 = vpop.f32.mrb[0].mxu0
        %v4128 = vadd.f32 %v3967, %v4127
        %v4129 = vpop.f32.mrb[0].mxu0
        %4130 = vmatprep.mubr.bf16.mxu0 %v3127
        %4131 = vmatmul.mubr.bf16.gmra.mrb[0].mxu0 %v3110
        %v4132 = vpop.f32.mrb[0].mxu0
        %v4133 = vadd.f32 %v3972, %v4132
        %v4134 = vpop.f32.mrb[0].mxu0
        %v4135 = vpop.f32.mrb[0].mxu0
        %v4136 = vadd.f32 %v3975, %v4135
        %v4137 = vpop.f32.mrb[0].mxu0
        %4138 = vmatprep.mubr.bf16.mxu0 %v3128
        %4139 = vmatmul.mubr.bf16.gmra.mrb[0].mxu0 %v3111
        %v4140 = vpop.f32.mrb[0].mxu0
        %v4141 = vadd.f32 %v3980, %v4140
        %v4142 = vpop.f32.mrb[0].mxu0
        %v4143 = vpop.f32.mrb[0].mxu0
        %v4144 = vadd.f32 %v3983, %v4143
        %v4145 = vpop.f32.mrb[0].mxu0
        %4146 = vmatprep.mubr.bf16.mxu0 %v3129
        %4147 = vmatmul.mubr.bf16.gmra.mrb[0].mxu0 %v3112
        %v4148 = vpop.f32.mrb[0].mxu0
        %v4149 = vadd.f32 %v3988, %v4148
        %v4150 = vpop.f32.mrb[0].mxu0
        %v4151 = vpop.f32.mrb[0].mxu0
        %v4152 = vadd.f32 %v3991, %v4151
        %v4153 = vpop.f32.mrb[0].mxu0
        %4154 = vmatprep.mubr.bf16.mxu0 %v3130
        %4155 = vmatmul.mubr.bf16.gmra.mrb[0].mxu0 %v3113
        %v4156 = vpop.f32.mrb[0].mxu0
        %v4157 = vadd.f32 %v3996, %v4156
        %v4158 = vpop.f32.mrb[0].mxu0
        %v4159 = vpop.f32.mrb[0].mxu0
        %v4160 = vadd.f32 %v3999, %v4159
        %v4161 = vpop.f32.mrb[0].mxu0
        %4162 = vmatprep.mubr.bf16.mxu0 %v3131
        %4163 = vmatmul.mubr.bf16.gmra.mrb[0].mxu0 %v3114
        %v4164 = vpop.f32.mrb[0].mxu0
        %v4165 = vadd.f32 %v4004, %v4164
        %v4166 = vpop.f32.mrb[0].mxu0
        %v4167 = vpop.f32.mrb[0].mxu0
        %v4168 = vadd.f32 %v4007, %v4167
        %v4169 = vpop.f32.mrb[0].mxu0
        %4170 = vmatprep.mubr.bf16.mxu0 %v3132
        %4171 = vmatmul.mubr.bf16.gmra.mrb[0].mxu0 %v3115
        %v4172 = vpop.f32.mrb[0].mxu0
        %v4173 = vadd.f32 %v4012, %v4172
        %v4174 = vpop.f32.mrb[0].mxu0
        %v4175 = vpop.f32.mrb[0].mxu0
        %v4176 = vadd.f32 %v4015, %v4175
        %v4177 = vpop.f32.mrb[0].mxu0
        %4178 = vmatprep.mubr.bf16.mxu0 %v3133
        %4179 = vmatmul.mubr.bf16.gmra.mrb[0].mxu0 %v3116
        %v4180 = vpop.f32.mrb[0].mxu0
        %v4181 = vadd.f32 %v4020, %v4180
        %v4182 = vpop.f32.mrb[0].mxu0
        %v4183 = vpop.f32.mrb[0].mxu0
        %v4184 = vadd.f32 %v4023, %v4183
        %v4185 = vpop.f32.mrb[0].mxu0
        %4186 = vmatprep.mubr.bf16.mxu0 %v3134
        %4187 = vmatmul.mubr.bf16.gmra.mrb[0].mxu0 %v3117
        %v4188 = vpop.f32.mrb[0].mxu0
        %v4189 = vadd.f32 %v4028, %v4188
        %v4190 = vpop.f32.mrb[0].mxu0
        %v4191 = vpop.f32.mrb[0].mxu0
        %v4192 = vadd.f32 %v4031, %v4191
        %v4193 = vpop.f32.mrb[0].mxu0
        %4194 = vdwg.mxu0
        %4195 = vmatprep.subr.bf16.mxu0 0
        %4196 = vmatpush1.bf16.msra.mxu0 %v3616
        %4197 = vmatprep.subr.bf16.mxu0 0
        %4198 = vmatpush1.bf16.msra.mxu0 %v3617
        %4199 = vmatprep.subr.bf16.mxu0 0
        %4200 = vmatpush1.bf16.msra.mxu0 %v3618
        %4201 = vmatprep.subr.bf16.mxu0 0
        %4202 = vmatpush1.bf16.msra.mxu0 %v3619
        %4203 = vmatprep.subr.bf16.mxu0 0
        %4204 = vmatpush1.bf16.msra.mxu0 %v3620
        %4205 = vmatprep.subr.bf16.mxu0 0
        %4206 = vmatpush1.bf16.msra.mxu0 %v3621
        %4207 = vmatprep.subr.bf16.mxu0 0
        %4208 = vmatpush1.bf16.msra.mxu0 %v3622
        %4209 = vmatprep.subr.bf16.mxu0 0
        %4210 = vmatpush1.bf16.msra.mxu0 %v3623
        %4211 = vmatprep.subr.bf16.mxu0 0
        %4212 = vmatpush1.bf16.msra.mxu0 %v3624
        %4213 = vmatprep.subr.bf16.mxu0 0
        %4214 = vmatpush1.bf16.msra.mxu0 %v3625
        %4215 = vmatprep.subr.bf16.mxu0 0
        %4216 = vmatpush1.bf16.msra.mxu0 %v3626
        %4217 = vmatprep.subr.bf16.mxu0 0
        %4218 = vmatpush1.bf16.msra.mxu0 %v3627
        %4219 = vmatprep.subr.bf16.mxu0 0
        %4220 = vmatpush1.bf16.msra.mxu0 %v3628
        %4221 = vmatprep.subr.bf16.mxu0 0
        %4222 = vmatpush1.bf16.msra.mxu0 %v3629
        %4223 = vmatprep.subr.bf16.mxu0 0
        %4224 = vmatpush1.bf16.msra.mxu0 %v3630
        %4225 = vmatprep.subr.bf16.mxu0 0
        %4226 = vmatpush1.bf16.msra.mxu0 %v3631
        %4227 = vmatprep.mubr.bf16.mxu0 %v3102
        %4228 = vmatmul.mubr.bf16.gmra.mrb[0].mxu0 %v3086
        %v4229 = vpop.f32.mrb[0].mxu0
        %v4230 = vadd.f32 %v4069, %v4229
        %v4231 = vpop.f32.mrb[0].mxu0
        %v4232 = vpop.f32.mrb[0].mxu0
        %v4233 = vadd.f32 %v4072, %v4232
        %v4234 = vpop.f32.mrb[0].mxu0
        %4235 = vmatprep.mubr.bf16.mxu0 %v3104
        %4236 = vmatmul.mubr.bf16.gmra.mrb[0].mxu0 %v3087
        %v4237 = vpop.f32.mrb[0].mxu0
        %v4238 = vadd.f32 %v4077, %v4237
        %v4239 = vpop.f32.mrb[0].mxu0
        %v4240 = vpop.f32.mrb[0].mxu0
        %v4241 = vadd.f32 %v4080, %v4240
        %v4242 = vpop.f32.mrb[0].mxu0
        %4243 = vmatprep.mubr.bf16.mxu0 %v3105
        %4244 = vmatmul.mubr.bf16.gmra.mrb[0].mxu0 %v3088
        %v4245 = vpop.f32.mrb[0].mxu0
        %v4246 = vadd.f32 %v4085, %v4245
        %v4247 = vpop.f32.mrb[0].mxu0
        %v4248 = vpop.f32.mrb[0].mxu0
        %v4249 = vadd.f32 %v4088, %v4248
        %v4250 = vpop.f32.mrb[0].mxu0
        %4251 = vmatprep.mubr.bf16.mxu0 %v3106
        %4252 = vmatmul.mubr.bf16.gmra.mrb[0].mxu0 %v3089
        %v4253 = vpop.f32.mrb[0].mxu0
        %v4254 = vadd.f32 %v4093, %v4253
        %v4255 = vpop.f32.mrb[0].mxu0
        %v4256 = vpop.f32.mrb[0].mxu0
        %v4257 = vadd.f32 %v4096, %v4256
        %v4258 = vpop.f32.mrb[0].mxu0
        %4259 = vmatprep.mubr.bf16.mxu0 %v3107
        %4260 = vmatmul.mubr.bf16.gmra.mrb[0].mxu0 %v3090
        %v4261 = vpop.f32.mrb[0].mxu0
        %v4262 = vadd.f32 %v4101, %v4261
        %v4263 = vpop.f32.mrb[0].mxu0
        %v4264 = vpop.f32.mrb[0].mxu0
        %v4265 = vadd.f32 %v4104, %v4264
        %v4266 = vpop.f32.mrb[0].mxu0
        %4267 = vmatprep.mubr.bf16.mxu0 %v3108
        %4268 = vmatmul.mubr.bf16.gmra.mrb[0].mxu0 %v3091
        %v4269 = vpop.f32.mrb[0].mxu0
        %v4270 = vadd.f32 %v4109, %v4269
        %v4271 = vpop.f32.mrb[0].mxu0
        %v4272 = vpop.f32.mrb[0].mxu0
        %v4273 = vadd.f32 %v4112, %v4272
        %v4274 = vpop.f32.mrb[0].mxu0
        %4275 = vmatprep.mubr.bf16.mxu0 %v3109
        %4276 = vmatmul.mubr.bf16.gmra.mrb[0].mxu0 %v3092
        %v4277 = vpop.f32.mrb[0].mxu0
        %v4278 = vadd.f32 %v4117, %v4277
        %v4279 = vpop.f32.mrb[0].mxu0
        %v4280 = vpop.f32.mrb[0].mxu0
        %v4281 = vadd.f32 %v4120, %v4280
        %v4282 = vpop.f32.mrb[0].mxu0
        %4283 = vmatprep.mubr.bf16.mxu0 %v3110
        %4284 = vmatmul.mubr.bf16.gmra.mrb[0].mxu0 %v3093
        %v4285 = vpop.f32.mrb[0].mxu0
        %v4286 = vadd.f32 %v4125, %v4285
        %v4287 = vpop.f32.mrb[0].mxu0
        %v4288 = vpop.f32.mrb[0].mxu0
        %v4289 = vadd.f32 %v4128, %v4288
        %v4290 = vpop.f32.mrb[0].mxu0
        %4291 = vmatprep.mubr.bf16.mxu0 %v3111
        %4292 = vmatmul.mubr.bf16.gmra.mrb[0].mxu0 %v3094
        %v4293 = vpop.f32.mrb[0].mxu0
        %v4294 = vadd.f32 %v4133, %v4293
        %v4295 = vpop.f32.mrb[0].mxu0
        %v4296 = vpop.f32.mrb[0].mxu0
        %v4297 = vadd.f32 %v4136, %v4296
        %v4298 = vpop.f32.mrb[0].mxu0
        %4299 = vmatprep.mubr.bf16.mxu0 %v3112
        %4300 = vmatmul.mubr.bf16.gmra.mrb[0].mxu0 %v3095
        %v4301 = vpop.f32.mrb[0].mxu0
        %v4302 = vadd.f32 %v4141, %v4301
        %v4303 = vpop.f32.mrb[0].mxu0
        %v4304 = vpop.f32.mrb[0].mxu0
        %v4305 = vadd.f32 %v4144, %v4304
        %v4306 = vpop.f32.mrb[0].mxu0
        %4307 = vmatprep.mubr.bf16.mxu0 %v3113
        %4308 = vmatmul.mubr.bf16.gmra.mrb[0].mxu0 %v3096
        %v4309 = vpop.f32.mrb[0].mxu0
        %v4310 = vadd.f32 %v4149, %v4309
        %v4311 = vpop.f32.mrb[0].mxu0
        %v4312 = vpop.f32.mrb[0].mxu0
        %v4313 = vadd.f32 %v4152, %v4312
        %v4314 = vpop.f32.mrb[0].mxu0
        %4315 = vmatprep.mubr.bf16.mxu0 %v3114
        %4316 = vmatmul.mubr.bf16.gmra.mrb[0].mxu0 %v3097
        %v4317 = vpop.f32.mrb[0].mxu0
        %v4318 = vadd.f32 %v4157, %v4317
        %v4319 = vpop.f32.mrb[0].mxu0
        %v4320 = vpop.f32.mrb[0].mxu0
        %v4321 = vadd.f32 %v4160, %v4320
        %v4322 = vpop.f32.mrb[0].mxu0
        %4323 = vmatprep.mubr.bf16.mxu0 %v3115
        %4324 = vmatmul.mubr.bf16.gmra.mrb[0].mxu0 %v3098
        %v4325 = vpop.f32.mrb[0].mxu0
        %v4326 = vadd.f32 %v4165, %v4325
        %v4327 = vpop.f32.mrb[0].mxu0
        %v4328 = vpop.f32.mrb[0].mxu0
        %v4329 = vadd.f32 %v4168, %v4328
        %v4330 = vpop.f32.mrb[0].mxu0
        %4331 = vmatprep.mubr.bf16.mxu0 %v3116
        %4332 = vmatmul.mubr.bf16.gmra.mrb[0].mxu0 %v3099
        %v4333 = vpop.f32.mrb[0].mxu0
        %v4334 = vadd.f32 %v4173, %v4333
        %v4335 = vpop.f32.mrb[0].mxu0
        %v4336 = vpop.f32.mrb[0].mxu0
        %v4337 = vadd.f32 %v4176, %v4336
        %v4338 = vpop.f32.mrb[0].mxu0
        %4339 = vmatprep.mubr.bf16.mxu0 %v3117
        %4340 = vmatmul.mubr.bf16.gmra.mrb[0].mxu0 %v3100
        %v4341 = vpop.f32.mrb[0].mxu0
        %v4342 = vadd.f32 %v4181, %v4341
        %v4343 = vpop.f32.mrb[0].mxu0
        %v4344 = vpop.f32.mrb[0].mxu0
        %v4345 = vadd.f32 %v4184, %v4344
        %v4346 = vpop.f32.mrb[0].mxu0
        %4347 = vmatprep.mubr.bf16.mxu0 %v3116
        %4348 = vmatmul.mubr.bf16.gmra.mrb[0].mxu0 %v3101
        %v4349 = vpop.f32.mrb[0].mxu0
        %v4350 = vadd.f32 %v4189, %v4349
        %v4351 = vpop.f32.mrb[0].mxu0
        %v4352 = vpop.f32.mrb[0].mxu0
        %v4353 = vadd.f32 %v4192, %v4352
        %v4354 = vpop.f32.mrb[0].mxu0
        %4355 = vdwg.mxu0
        %4356 = vmatprep.subr.bf16.mxu0 0
        %4357 = vmatpush1.bf16.msra.mxu0 %v3632
        %4358 = vmatprep.subr.bf16.mxu0 0
        %4359 = vmatpush1.bf16.msra.mxu0 %v3633
        %4360 = vmatprep.subr.bf16.mxu0 0
        %4361 = vmatpush1.bf16.msra.mxu0 %v3634
        %4362 = vmatprep.subr.bf16.mxu0 0
        %4363 = vmatpush1.bf16.msra.mxu0 %v3635
        %4364 = vmatprep.subr.bf16.mxu0 0
        %4365 = vmatpush1.bf16.msra.mxu0 %v3636
        %4366 = vmatprep.subr.bf16.mxu0 0
        %4367 = vmatpush1.bf16.msra.mxu0 %v3637
        %4368 = vmatprep.subr.bf16.mxu0 0
        %4369 = vmatpush1.bf16.msra.mxu0 %v3638
        %4370 = vmatprep.subr.bf16.mxu0 0
        %4371 = vmatpush1.bf16.msra.mxu0 %v3639
        %4372 = vmatprep.subr.bf16.mxu0 0
        %4373 = vmatpush1.bf16.msra.mxu0 0
        %4374 = vmatprep.subr.bf16.mxu0 0
        %4375 = vmatpush1.bf16.msra.mxu0 0
        %4376 = vmatprep.subr.bf16.mxu0 0
        %4377 = vmatpush1.bf16.msra.mxu0 0
        %4378 = vmatprep.subr.bf16.mxu0 0
        %4379 = vmatpush1.bf16.msra.mxu0 0
        %4380 = vmatprep.subr.bf16.mxu0 0
        %4381 = vmatpush1.bf16.msra.mxu0 0
        %4382 = vmatprep.subr.bf16.mxu0 0
        %4383 = vmatpush1.bf16.msra.mxu0 0
        %4384 = vmatprep.subr.bf16.mxu0 0
        %4385 = vmatpush1.bf16.msra.mxu0 0
        %4386 = vmatprep.subr.bf16.mxu0 0
        %4387 = vmatpush1.bf16.msra.mxu0 0
        %4388 = vmatprep.mubr.bf16.mxu0 0
        %4389 = vmatmul.mubr.bf16.gmra.mrb[0].mxu0 %v3120
        %v4390 = vpop.f32.mrb[0].mxu0
        %v4391 = vadd.f32 %v4230, %v4390
        %v4392 = vpop.f32.mrb[0].mxu0
        %v4393 = vpop.f32.mrb[0].mxu0
        %v4394 = vadd.f32 %v4233, %v4393
        %v4395 = vpop.f32.mrb[0].mxu0
        %4396 = vmatprep.mubr.bf16.mxu0 0
        %4397 = vmatmul.mubr.bf16.gmra.mrb[0].mxu0 %v3121
        %v4398 = vpop.f32.mrb[0].mxu0
        %v4399 = vadd.f32 %v4238, %v4398
        %v4400 = vpop.f32.mrb[0].mxu0
        %v4401 = vpop.f32.mrb[0].mxu0
        %v4402 = vadd.f32 %v4241, %v4401
        %v4403 = vpop.f32.mrb[0].mxu0
        %4404 = vmatprep.mubr.bf16.mxu0 0
        %4405 = vmatmul.mubr.bf16.gmra.mrb[0].mxu0 %v3122
        %v4406 = vpop.f32.mrb[0].mxu0
        %v4407 = vadd.f32 %v4246, %v4406
        %v4408 = vpop.f32.mrb[0].mxu0
        %v4409 = vpop.f32.mrb[0].mxu0
        %v4410 = vadd.f32 %v4249, %v4409
        %v4411 = vpop.f32.mrb[0].mxu0
        %4412 = vmatprep.mubr.bf16.mxu0 0
        %4413 = vmatmul.mubr.bf16.gmra.mrb[0].mxu0 %v3123
        %v4414 = vpop.f32.mrb[0].mxu0
        %v4415 = vadd.f32 %v4254, %v4414
        %v4416 = vpop.f32.mrb[0].mxu0
        %v4417 = vpop.f32.mrb[0].mxu0
        %v4418 = vadd.f32 %v4257, %v4417
        %v4419 = vpop.f32.mrb[0].mxu0
        %4420 = vmatprep.mubr.bf16.mxu0 0
        %4421 = vmatmul.mubr.bf16.gmra.mrb[0].mxu0 %v3124
        %v4422 = vpop.f32.mrb[0].mxu0
        %v4423 = vadd.f32 %v4262, %v4422
        %v4424 = vpop.f32.mrb[0].mxu0
        %v4425 = vpop.f32.mrb[0].mxu0
        %v4426 = vadd.f32 %v4265, %v4425
        %v4427 = vpop.f32.mrb[0].mxu0
        %4428 = vmatprep.mubr.bf16.mxu0 0
        %4429 = vmatmul.mubr.bf16.gmra.mrb[0].mxu0 %v3125
        %v4430 = vpop.f32.mrb[0].mxu0
        %v4431 = vadd.f32 %v4270, %v4430
        %v4432 = vpop.f32.mrb[0].mxu0
        %v4433 = vpop.f32.mrb[0].mxu0
        %v4434 = vadd.f32 %v4273, %v4433
        %v4435 = vpop.f32.mrb[0].mxu0
        %4436 = vmatprep.mubr.bf16.mxu0 0
        %4437 = vmatmul.mubr.bf16.gmra.mrb[0].mxu0 %v3126
        %v4438 = vpop.f32.mrb[0].mxu0
        %v4439 = vadd.f32 %v4278, %v4438
        %v4440 = vpop.f32.mrb[0].mxu0
        %v4441 = vpop.f32.mrb[0].mxu0
        %v4442 = vadd.f32 %v4281, %v4441
        %v4443 = vpop.f32.mrb[0].mxu0
        %4444 = vmatprep.mubr.bf16.mxu0 0
        %4445 = vmatmul.mubr.bf16.gmra.mrb[0].mxu0 %v3127
        %v4446 = vpop.f32.mrb[0].mxu0
        %v4447 = vadd.f32 %v4286, %v4446
        %v4448 = vpop.f32.mrb[0].mxu0
        %v4449 = vpop.f32.mrb[0].mxu0
        %v4450 = vadd.f32 %v4289, %v4449
        %v4451 = vpop.f32.mrb[0].mxu0
        %4452 = vmatprep.mubr.bf16.mxu0 0
        %4453 = vmatmul.mubr.bf16.gmra.mrb[0].mxu0 %v3128
        %v4454 = vpop.f32.mrb[0].mxu0
        %v4455 = vadd.f32 %v4294, %v4454
        %v4456 = vpop.f32.mrb[0].mxu0
        %v4457 = vpop.f32.mrb[0].mxu0
        %v4458 = vadd.f32 %v4297, %v4457
        %v4459 = vpop.f32.mrb[0].mxu0
        %4460 = vmatprep.mubr.bf16.mxu0 0
        %4461 = vmatmul.mubr.bf16.gmra.mrb[0].mxu0 %v3129
        %v4462 = vpop.f32.mrb[0].mxu0
        %v4463 = vadd.f32 %v4302, %v4462
        %v4464 = vpop.f32.mrb[0].mxu0
        %v4465 = vpop.f32.mrb[0].mxu0
        %v4466 = vadd.f32 %v4305, %v4465
        %v4467 = vpop.f32.mrb[0].mxu0
        %4468 = vmatprep.mubr.bf16.mxu0 0
        %4469 = vmatmul.mubr.bf16.gmra.mrb[0].mxu0 %v3130
        %v4470 = vpop.f32.mrb[0].mxu0
        %v4471 = vadd.f32 %v4310, %v4470
        %v4472 = vpop.f32.mrb[0].mxu0
        %v4473 = vpop.f32.mrb[0].mxu0
        %v4474 = vadd.f32 %v4313, %v4473
        %v4475 = vpop.f32.mrb[0].mxu0
        %4476 = vmatprep.mubr.bf16.mxu0 0
        %4477 = vmatmul.mubr.bf16.gmra.mrb[0].mxu0 %v3131
        %v4478 = vpop.f32.mrb[0].mxu0
        %v4479 = vadd.f32 %v4318, %v4478
        %v4480 = vpop.f32.mrb[0].mxu0
        %v4481 = vpop.f32.mrb[0].mxu0
        %v4482 = vadd.f32 %v4321, %v4481
        %v4483 = vpop.f32.mrb[0].mxu0
        %4484 = vmatprep.mubr.bf16.mxu0 0
        %4485 = vmatmul.mubr.bf16.gmra.mrb[0].mxu0 %v3132
        %v4486 = vpop.f32.mrb[0].mxu0
        %v4487 = vadd.f32 %v4326, %v4486
        %v4488 = vpop.f32.mrb[0].mxu0
        %v4489 = vpop.f32.mrb[0].mxu0
        %v4490 = vadd.f32 %v4329, %v4489
        %v4491 = vpop.f32.mrb[0].mxu0
        %4492 = vmatprep.mubr.bf16.mxu0 0
        %4493 = vmatmul.mubr.bf16.gmra.mrb[0].mxu0 %v3133
        %v4494 = vpop.f32.mrb[0].mxu0
        %v4495 = vadd.f32 %v4334, %v4494
        %v4496 = vpop.f32.mrb[0].mxu0
        %v4497 = vpop.f32.mrb[0].mxu0
        %v4498 = vadd.f32 %v4337, %v4497
        %v4499 = vpop.f32.mrb[0].mxu0
        %4500 = vmatprep.mubr.bf16.mxu0 0
        %4501 = vmatmul.mubr.bf16.gmra.mrb[0].mxu0 %v3134
        %v4502 = vpop.f32.mrb[0].mxu0
        %v4503 = vadd.f32 %v4342, %v4502
        %v4504 = vpop.f32.mrb[0].mxu0
        %v4505 = vpop.f32.mrb[0].mxu0
        %v4506 = vadd.f32 %v4345, %v4505
        %v4507 = vpop.f32.mrb[0].mxu0
        %4508 = vmatprep.mubr.bf16.mxu0 0
        %4509 = vmatmul.mubr.bf16.gmra.mrb[0].mxu0 %v3135
        %v4510 = vpop.f32.mrb[0].mxu0
        %v4511 = vadd.f32 %v4350, %v4510
        %v4512 = vpop.f32.mrb[0].mxu0
        %v4513 = vpop.f32.mrb[0].mxu0
        %v4514 = vadd.f32 %v4353, %v4513
        %v4515 = vpop.f32.mrb[0].mxu0
        %4516 = vdwg.mxu0
        %v4517 = vadd.f32 %v4391, %v4394
        %v4518 = vadd.f32 %v4517, %v4399
        %v4519 = vadd.f32 %v4518, %v4402
        %v4520 = vadd.f32 %v4519, %v4407
        %v4521 = vadd.f32 %v4520, %v4410
        %v4522 = vadd.f32 %v4521, %v4415
        %v4523 = vadd.f32 %v4522, %v4418
        %v4524 = vadd.f32 %v4523, %v4423
        %v4525 = vadd.f32 %v4524, %v4426
        %v4526 = vadd.f32 %v4525, %v4431
        %v4527 = vadd.f32 %v4526, %v4434
        %v4528 = vadd.f32 %v4527, %v4439
        %v4529 = vadd.f32 %v4528, %v4442
        %v4530 = vadd.f32 %v4529, %v4447
        %v4531 = vadd.f32 %v4530, %v4450
        %v4532 = vadd.f32 %v4531, %v4455
        %v4533 = vadd.f32 %v4532, %v4458
        %v4534 = vadd.f32 %v4533, %v4463
        %v4535 = vadd.f32 %v4534, %v4466
        %v4536 = vadd.f32 %v4535, %v4471
        %v4537 = vadd.f32 %v4536, %v4474
        %v4538 = vadd.f32 %v4537, %v4479
        %v4539 = vadd.f32 %v4538, %v4482
        %v4540 = vadd.f32 %v4539, %v4487
        %v4541 = vadd.f32 %v4540, %v4490
        %v4542 = vadd.f32 %v4541, %v4495
        %v4543 = vadd.f32 %v4542, %v4498
        %v4544 = vadd.f32 %v4543, %v4503
        %v4545 = vadd.f32 %v4544, %v4506
        %v4546 = vadd.f32 %v4545, %v4511
        %v4547 = vadd.f32 %v4546, %v4514
        %v4548 = vrot.slane %v4547, 4
        %v4549 = vadd.f32 %v4547, %v4548
        %v4550 = vrot.slane %v4549, 2
        %v4551 = vadd.f32 %v4549, %v4550
        %v4552 = vrot.slane %v4551, 1
        %v4553 = vadd.f32 %v4551, %v4552
        %v4554 = vmul.f32 %v4553, 0.00390625
        %v4555 = vsub.f32 %v4391, %v4554
        %v4556 = vsub.f32 %v4394, %v4554
        %v4557 = vsub.f32 %v4399, %v4554
        %v4558 = vsub.f32 %v4402, %v4554
        %v4559 = vsub.f32 %v4407, %v4554
        %v4560 = vsub.f32 %v4410, %v4554
        %v4561 = vsub.f32 %v4415, %v4554
        %v4562 = vsub.f32 %v4418, %v4554
        %v4563 = vsub.f32 %v4423, %v4554
        %v4564 = vsub.f32 %v4426, %v4554
        %v4565 = vsub.f32 %v4431, %v4554
        %v4566 = vsub.f32 %v4434, %v4554
        %v4567 = vsub.f32 %v4439, %v4554
        %v4568 = vsub.f32 %v4442, %v4554
        %v4569 = vsub.f32 %v4447, %v4554
        %v4570 = vsub.f32 %v4450, %v4554
        %v4571 = vsub.f32 %v4455, %v4554
        %v4572 = vsub.f32 %v4458, %v4554
        %v4573 = vsub.f32 %v4463, %v4554
        %v4574 = vsub.f32 %v4466, %v4554
        %v4575 = vsub.f32 %v4471, %v4554
        %v4576 = vsub.f32 %v4474, %v4554
        %v4577 = vsub.f32 %v4479, %v4554
        %v4578 = vsub.f32 %v4482, %v4554
        %v4579 = vsub.f32 %v4487, %v4554
        %v4580 = vsub.f32 %v4490, %v4554
        %v4581 = vsub.f32 %v4495, %v4554
        %v4582 = vsub.f32 %v4498, %v4554
        %v4583 = vsub.f32 %v4503, %v4554
        %v4584 = vsub.f32 %v4506, %v4554
        %v4585 = vsub.f32 %v4511, %v4554
        %v4586 = vsub.f32 %v4514, %v4554
        %v4587 = vmul.f32 %v4555, %v4555
        %v4588 = vmul.f32 %v4556, %v4556
        %v4589 = vmul.f32 %v4557, %v4557
        %v4590 = vmul.f32 %v4558, %v4558
        %v4591 = vmul.f32 %v4559, %v4559
        %v4592 = vmul.f32 %v4560, %v4560
        %v4593 = vmul.f32 %v4561, %v4561
        %v4594 = vmul.f32 %v4562, %v4562
        %v4595 = vmul.f32 %v4563, %v4563
        %v4596 = vmul.f32 %v4564, %v4564
        %v4597 = vmul.f32 %v4565, %v4565
        %v4598 = vmul.f32 %v4566, %v4566
        %v4599 = vmul.f32 %v4567, %v4567
        %v4600 = vmul.f32 %v4568, %v4568
        %v4601 = vmul.f32 %v4569, %v4569
        %v4602 = vmul.f32 %v4570, %v4570
        %v4603 = vmul.f32 %v4571, %v4571
        %v4604 = vmul.f32 %v4572, %v4572
        %v4605 = vmul.f32 %v4573, %v4573
        %v4606 = vmul.f32 %v4574, %v4574
        %v4607 = vmul.f32 %v4575, %v4575
        %v4608 = vmul.f32 %v4576, %v4576
        %v4609 = vmul.f32 %v4577, %v4577
        %v4610 = vmul.f32 %v4578, %v4578
        %v4611 = vmul.f32 %v4579, %v4579
        %v4612 = vmul.f32 %v4580, %v4580
        %v4613 = vmul.f32 %v4581, %v4581
        %v4614 = vmul.f32 %v4582, %v4582
        %v4615 = vmul.f32 %v4583, %v4583
        %v4616 = vmul.f32 %v4584, %v4584
        %v4617 = vmul.f32 %v4585, %v4585
        %v4618 = vmul.f32 %v4586, %v4586
        %v4619 = vadd.f32 %v4587, %v4588
        %v4620 = vadd.f32 %v4619, %v4589
        %v4621 = vadd.f32 %v4620, %v4590
        %v4622 = vadd.f32 %v4621, %v4591
        %v4623 = vadd.f32 %v4622, %v4592
        %v4624 = vadd.f32 %v4623, %v4593
        %v4625 = vadd.f32 %v4624, %v4594
        %v4626 = vadd.f32 %v4625, %v4595
        %v4627 = vadd.f32 %v4626, %v4596
        %v4628 = vadd.f32 %v4627, %v4597
        %v4629 = vadd.f32 %v4628, %v4598
        %v4630 = vadd.f32 %v4629, %v4599
        %v4631 = vadd.f32 %v4630, %v4600
        %v4632 = vadd.f32 %v4631, %v4601
        %v4633 = vadd.f32 %v4632, %v4602
        %v4634 = vadd.f32 %v4633, %v4603
        %v4635 = vadd.f32 %v4634, %v4604
        %v4636 = vadd.f32 %v4635, %v4605
        %v4637 = vadd.f32 %v4636, %v4606
        %v4638 = vadd.f32 %v4637, %v4607
        %v4639 = vadd.f32 %v4638, %v4608
        %v4640 = vadd.f32 %v4639, %v4609
        %v4641 = vadd.f32 %v4640, %v4610
        %v4642 = vadd.f32 %v4641, %v4611
        %v4643 = vadd.f32 %v4642, %v4612
        %v4644 = vadd.f32 %v4643, %v4613
        %v4645 = vadd.f32 %v4644, %v4614
        %v4646 = vadd.f32 %v4645, %v4615
        %v4647 = vadd.f32 %v4646, %v4616
        %v4648 = vadd.f32 %v4647, %v4617
        %v4649 = vadd.f32 %v4648, %v4618
        %v4650 = vrot.slane %v4649, 4
        %v4651 = vadd.f32 %v4649, %v4650
        %v4652 = vrot.slane %v4651, 2
        %v4653 = vadd.f32 %v4651, %v4652
        %v4654 = vrot.slane %v4653, 1
        %v4655 = vadd.f32 %v4653, %v4654
        %v4656 = vmul.f32 %v4655, 0.00390625
        %v4657 = vadd.f32 %v4656, 1e-05
        %v4658 = vrsqrt.pop %v4657
        %v4659 = vmul.f32 %v4555, %v4658
        %v4660 = vmul.f32 %v4556, %v4658
        %v4661 = vmul.f32 %v4557, %v4658
        %v4662 = vmul.f32 %v4558, %v4658
        %v4663 = vmul.f32 %v4559, %v4658
        %v4664 = vmul.f32 %v4560, %v4658
        %v4665 = vmul.f32 %v4561, %v4658
        %v4666 = vmul.f32 %v4562, %v4658
        %v4667 = vmul.f32 %v4563, %v4658
        %v4668 = vmul.f32 %v4564, %v4658
        %v4669 = vmul.f32 %v4565, %v4658
        %v4670 = vmul.f32 %v4566, %v4658
        %v4671 = vmul.f32 %v4567, %v4658
        %v4672 = vmul.f32 %v4568, %v4658
        %v4673 = vmul.f32 %v4569, %v4658
        %v4674 = vmul.f32 %v4570, %v4658
        %v4675 = vmul.f32 %v4571, %v4658
        %v4676 = vmul.f32 %v4572, %v4658
        %v4677 = vmul.f32 %v4573, %v4658
        %v4678 = vmul.f32 %v4574, %v4658
        %v4679 = vmul.f32 %v4575, %v4658
        %v4680 = vmul.f32 %v4576, %v4658
        %v4681 = vmul.f32 %v4577, %v4658
        %v4682 = vmul.f32 %v4578, %v4658
        %v4683 = vmul.f32 %v4579, %v4658
        %v4684 = vmul.f32 %v4580, %v4658
        %v4685 = vmul.f32 %v4581, %v4658
        %v4686 = vmul.f32 %v4582, %v4658
        %v4687 = vmul.f32 %v4583, %v4658
        %v4688 = vmul.f32 %v4584, %v4658
        %v4689 = vmul.f32 %v4585, %v4658
        %v4690 = vmul.f32 %v4586, %v4658
        %s4691 = sld [smem:[#allocation2 + $0x1]]
        %v4692 = vstv %s4691
        %v4693 = vmul.f32 %v4692, %v4659
        %v4694 = vmul.f32 %v4692, %v4660
        %v4695 = vmul.f32 %v4692, %v4661
        %v4696 = vmul.f32 %v4692, %v4662
        %v4697 = vmul.f32 %v4692, %v4663
        %v4698 = vmul.f32 %v4692, %v4664
        %v4699 = vmul.f32 %v4692, %v4665
        %v4700 = vmul.f32 %v4692, %v4666
        %v4701 = vmul.f32 %v4692, %v4667
        %v4702 = vmul.f32 %v4692, %v4668
        %v4703 = vmul.f32 %v4692, %v4669
        %v4704 = vmul.f32 %v4692, %v4670
        %v4705 = vmul.f32 %v4692, %v4671
        %v4706 = vmul.f32 %v4692, %v4672
        %v4707 = vmul.f32 %v4692, %v4673
        %v4708 = vmul.f32 %v4692, %v4674
        %v4709 = vmul.f32 %v4692, %v4675
        %v4710 = vmul.f32 %v4692, %v4676
        %v4711 = vmul.f32 %v4692, %v4677
        %v4712 = vmul.f32 %v4692, %v4678
        %v4713 = vmul.f32 %v4692, %v4679
        %v4714 = vmul.f32 %v4692, %v4680
        %v4715 = vmul.f32 %v4692, %v4681
        %v4716 = vmul.f32 %v4692, %v4682
        %v4717 = vmul.f32 %v4692, %v4683
        %v4718 = vmul.f32 %v4692, %v4684
        %v4719 = vmul.f32 %v4692, %v4685
        %v4720 = vmul.f32 %v4692, %v4686
        %v4721 = vmul.f32 %v4692, %v4687
        %v4722 = vmul.f32 %v4692, %v4688
        %v4723 = vmul.f32 %v4692, %v4689
        %v4724 = vmul.f32 %v4692, %v4690
        %v4725 = vadd.f32 %v2518, %v4693
        %v4726 = vadd.f32 %v2519, %v4694
        %v4727 = vadd.f32 %v2520, %v4695
        %v4728 = vadd.f32 %v2521, %v4696
        %v4729 = vadd.f32 %v2522, %v4697
        %v4730 = vadd.f32 %v2523, %v4698
        %v4731 = vadd.f32 %v2524, %v4699
        %v4732 = vadd.f32 %v2525, %v4700
        %v4733 = vadd.f32 %v2526, %v4701
        %v4734 = vadd.f32 %v2527, %v4702
        %v4735 = vadd.f32 %v2528, %v4703
        %v4736 = vadd.f32 %v2529, %v4704
        %v4737 = vadd.f32 %v2530, %v4705
        %v4738 = vadd.f32 %v2531, %v4706
        %v4739 = vadd.f32 %v2532, %v4707
        %v4740 = vadd.f32 %v2533, %v4708
        %v4741 = vadd.f32 %v2534, %v4709
        %v4742 = vadd.f32 %v2535, %v4710
        %v4743 = vadd.f32 %v2536, %v4711
        %v4744 = vadd.f32 %v2537, %v4712
        %v4745 = vadd.f32 %v2538, %v4713
        %v4746 = vadd.f32 %v2539, %v4714
        %v4747 = vadd.f32 %v2540, %v4715
        %v4748 = vadd.f32 %v2541, %v4716
        %v4749 = vadd.f32 %v2542, %v4717
        %v4750 = vadd.f32 %v2543, %v4718
        %v4751 = vadd.f32 %v2544, %v4719
        %v4752 = vadd.f32 %v2545, %v4720
        %v4753 = vadd.f32 %v2546, %v4721
        %v4754 = vadd.f32 %v2547, %v4722
        %v4755 = vadd.f32 %v2548, %v4723
        %v4756 = vadd.f32 %v2549, %v4724
        %v4757 = vadd.f32 %v2360, %v2364
        %v4758 = vadd.f32 %v4757, %v2370
        %v4759 = vadd.f32 %v4758, %v2374
        %v4760 = vadd.f32 %v4759, %v2380
        %v4761 = vadd.f32 %v4760, %v2384
        %v4762 = vadd.f32 %v4761, %v2390
        %v4763 = vadd.f32 %v4762, %v2394
        %v4764 = vadd.f32 %v4763, %v2400
        %v4765 = vadd.f32 %v4764, %v2404
        %v4766 = vadd.f32 %v4765, %v2410
        %v4767 = vadd.f32 %v4766, %v2414
        %v4768 = vadd.f32 %v4767, %v2420
        %v4769 = vadd.f32 %v4768, %v2424
        %v4770 = vadd.f32 %v4769, %v2430
        %v4771 = vadd.f32 %v4770, %v2434
        %v4772 = vadd.f32 %v4771, %v2440
        %v4773 = vadd.f32 %v4772, %v2444
        %v4774 = vadd.f32 %v4773, %v2450
        %v4775 = vadd.f32 %v4774, %v2454
        %v4776 = vadd.f32 %v4775, %v2460
        %v4777 = vadd.f32 %v4776, %v2464
        %v4778 = vadd.f32 %v4777, %v2470
        %v4779 = vadd.f32 %v4778, %v2474
        %v4780 = vadd.f32 %v4779, %v2480
        %v4781 = vadd.f32 %v4780, %v2484
        %v4782 = vadd.f32 %v4781, %v2490
        %v4783 = vadd.f32 %v4782, %v2494
        %v4784 = vadd.f32 %v4783, %v2500
        %v4785 = vadd.f32 %v4784, %v2504
        %v4786 = vadd.f32 %v4785, %v2510
        %v4787 = vadd.f32 %v4786, %v2514
        %v4788 = vrot.slane %v4787, 4
        %v4789 = vadd.f32 %v4787, %v4788
        %v4790 = vrot.slane %v4789, 2
        %v4791 = vadd.f32 %v4789, %v4790
        %v4792 = vrot.slane %v4791, 1
        %v4793 = vadd.f32 %v4791, %v4792
        %v4794 = vmul.f32 %v4793, 0.00390625
        %v4795 = vsub.f32 %v2360, %v4794
        %v4796 = vsub.f32 %v2364, %v4794
        %v4797 = vsub.f32 %v2370, %v4794
        %v4798 = vsub.f32 %v2374, %v4794
        %v4799 = vsub.f32 %v2380, %v4794
        %v4800 = vsub.f32 %v2384, %v4794
        %v4801 = vsub.f32 %v2390, %v4794
        %v4802 = vsub.f32 %v2394, %v4794
        %v4803 = vsub.f32 %v2400, %v4794
        %v4804 = vsub.f32 %v2404, %v4794
        %v4805 = vsub.f32 %v2410, %v4794
        %v4806 = vsub.f32 %v2414, %v4794
        %v4807 = vsub.f32 %v2420, %v4794
        %v4808 = vsub.f32 %v2424, %v4794
        %v4809 = vsub.f32 %v2430, %v4794
        %v4810 = vsub.f32 %v2434, %v4794
        %v4811 = vsub.f32 %v2440, %v4794
        %v4812 = vsub.f32 %v2444, %v4794
        %v4813 = vsub.f32 %v2450, %v4794
        %v4814 = vsub.f32 %v2454, %v4794
        %v4815 = vsub.f32 %v2460, %v4794
        %v4816 = vsub.f32 %v2464, %v4794
        %v4817 = vsub.f32 %v2470, %v4794
        %v4818 = vsub.f32 %v2474, %v4794
        %v4819 = vsub.f32 %v2480, %v4794
        %v4820 = vsub.f32 %v2484, %v4794
        %v4821 = vsub.f32 %v2490, %v4794
        %v4822 = vsub.f32 %v2494, %v4794
        %v4823 = vsub.f32 %v2500, %v4794
        %v4824 = vsub.f32 %v2504, %v4794
        %v4825 = vsub.f32 %v2510, %v4794
        %v4826 = vsub.f32 %v2514, %v4794
        %v4827 = vmul.f32 %v4795, %v4795
        %v4828 = vmul.f32 %v4796, %v4796
        %v4829 = vmul.f32 %v4797, %v4797
        %v4830 = vmul.f32 %v4798, %v4798
        %v4831 = vmul.f32 %v4799, %v4799
        %v4832 = vmul.f32 %v4800, %v4800
        %v4833 = vmul.f32 %v4801, %v4801
        %v4834 = vmul.f32 %v4802, %v4802
        %v4835 = vmul.f32 %v4803, %v4803
        %v4836 = vmul.f32 %v4804, %v4804
        %v4837 = vmul.f32 %v4805, %v4805
        %v4838 = vmul.f32 %v4806, %v4806
        %v4839 = vmul.f32 %v4807, %v4807
        %v4840 = vmul.f32 %v4808, %v4808
        %v4841 = vmul.f32 %v4809, %v4809
        %v4842 = vmul.f32 %v4810, %v4810
        %v4843 = vmul.f32 %v4811, %v4811
        %v4844 = vmul.f32 %v4812, %v4812
        %v4845 = vmul.f32 %v4813, %v4813
        %v4846 = vmul.f32 %v4814, %v4814
        %v4847 = vmul.f32 %v4815, %v4815
        %v4848 = vmul.f32 %v4816, %v4816
        %v4849 = vmul.f32 %v4817, %v4817
        %v4850 = vmul.f32 %v4818, %v4818
        %v4851 = vmul.f32 %v4819, %v4819
        %v4852 = vmul.f32 %v4820, %v4820
        %v4853 = vmul.f32 %v4821, %v4821
        %v4854 = vmul.f32 %v4822, %v4822
        %v4855 = vmul.f32 %v4823, %v4823
        %v4856 = vmul.f32 %v4824, %v4824
        %v4857 = vmul.f32 %v4825, %v4825
        %v4858 = vmul.f32 %v4826, %v4826
        %v4859 = vadd.f32 %v4827, %v4828
        %v4860 = vadd.f32 %v4859, %v4829
        %v4861 = vadd.f32 %v4860, %v4830
        %v4862 = vadd.f32 %v4861, %v4831
        %v4863 = vadd.f32 %v4862, %v4832
        %v4864 = vadd.f32 %v4863, %v4833
        %v4865 = vadd.f32 %v4864, %v4834
        %v4866 = vadd.f32 %v4865, %v4835
        %v4867 = vadd.f32 %v4866, %v4836
        %v4868 = vadd.f32 %v4867, %v4837
        %v4869 = vadd.f32 %v4868, %v4838
        %v4870 = vadd.f32 %v4869, %v4839
        %v4871 = vadd.f32 %v4870, %v4840
        %v4872 = vadd.f32 %v4871, %v4841
        %v4873 = vadd.f32 %v4872, %v4842
        %v4874 = vadd.f32 %v4873, %v4843
        %v4875 = vadd.f32 %v4874, %v4844
        %v4876 = vadd.f32 %v4875, %v4845
        %v4877 = vadd.f32 %v4876, %v4846
        %v4878 = vadd.f32 %v4877, %v4847
        %v4879 = vadd.f32 %v4878, %v4848
        %v4880 = vadd.f32 %v4879, %v4849
        %v4881 = vadd.f32 %v4880, %v4850
        %v4882 = vadd.f32 %v4881, %v4851
        %v4883 = vadd.f32 %v4882, %v4852
        %v4884 = vadd.f32 %v4883, %v4853
        %v4885 = vadd.f32 %v4884, %v4854
        %v4886 = vadd.f32 %v4885, %v4855
        %v4887 = vadd.f32 %v4886, %v4856
        %v4888 = vadd.f32 %v4887, %v4857
        %v4889 = vadd.f32 %v4888, %v4858
        %v4890 = vrot.slane %v4889, 4
        %v4891 = vadd.f32 %v4889, %v4890
        %v4892 = vrot.slane %v4891, 2
        %v4893 = vadd.f32 %v4891, %v4892
        %v4894 = vrot.slane %v4893, 1
        %v4895 = vadd.f32 %v4893, %v4894
        %v4896 = vmul.f32 %v4895, 0.00390625
        %v4897 = vadd.f32 %v4896, 1e-05
        %v4898 = vrsqrt.pop %v4897
        %v4899 = vmul.f32 %v4795, %v4898
        %v4900 = vmul.f32 %v4796, %v4898
        %v4901 = vmul.f32 %v4797, %v4898
        %v4902 = vmul.f32 %v4798, %v4898
        %v4903 = vmul.f32 %v4799, %v4898
        %v4904 = vmul.f32 %v4800, %v4898
        %v4905 = vmul.f32 %v4801, %v4898
        %v4906 = vmul.f32 %v4802, %v4898
        %v4907 = vmul.f32 %v4803, %v4898
        %v4908 = vmul.f32 %v4804, %v4898
        %v4909 = vmul.f32 %v4805, %v4898
        %v4910 = vmul.f32 %v4806, %v4898
        %v4911 = vmul.f32 %v4807, %v4898
        %v4912 = vmul.f32 %v4808, %v4898
        %v4913 = vmul.f32 %v4809, %v4898
        %v4914 = vmul.f32 %v4810, %v4898
        %v4915 = vmul.f32 %v4811, %v4898
        %v4916 = vmul.f32 %v4812, %v4898
        %v4917 = vmul.f32 %v4813, %v4898
        %v4918 = vmul.f32 %v4814, %v4898
        %v4919 = vmul.f32 %v4815, %v4898
        %v4920 = vmul.f32 %v4816, %v4898
        %v4921 = vmul.f32 %v4817, %v4898
        %v4922 = vmul.f32 %v4818, %v4898
        %v4923 = vmul.f32 %v4819, %v4898
        %v4924 = vmul.f32 %v4820, %v4898
        %v4925 = vmul.f32 %v4821, %v4898
        %v4926 = vmul.f32 %v4822, %v4898
        %v4927 = vmul.f32 %v4823, %v4898
        %v4928 = vmul.f32 %v4824, %v4898
        %v4929 = vmul.f32 %v4825, %v4898
        %v4930 = vmul.f32 %v4826, %v4898
        %v4931 = vmax.f32 %v4899, 0.0
        %v4932 = vmax.f32 %v4900, 0.0
        %v4933 = vmax.f32 %v4901, 0.0
        %v4934 = vmax.f32 %v4902, 0.0
        %v4935 = vmax.f32 %v4903, 0.0
        %v4936 = vmax.f32 %v4904, 0.0
        %v4937 = vmax.f32 %v4905, 0.0
        %v4938 = vmax.f32 %v4906, 0.0
        %v4939 = vmax.f32 %v4907, 0.0
        %v4940 = vmax.f32 %v4908, 0.0
        %v4941 = vmax.f32 %v4909, 0.0
        %v4942 = vmax.f32 %v4910, 0.0
        %v4943 = vmax.f32 %v4911, 0.0
        %v4944 = vmax.f32 %v4912, 0.0
        %v4945 = vmax.f32 %v4913, 0.0
        %v4946 = vmax.f32 %v4914, 0.0
        %v4947 = vmax.f32 %v4915, 0.0
        %v4948 = vmax.f32 %v4916, 0.0
        %v4949 = vmax.f32 %v4917, 0.0
        %v4950 = vmax.f32 %v4918, 0.0
        %v4951 = vmax.f32 %v4919, 0.0
        %v4952 = vmax.f32 %v4920, 0.0
        %v4953 = vmax.f32 %v4921, 0.0
        %v4954 = vmax.f32 %v4922, 0.0
        %v4955 = vmax.f32 %v4923, 0.0
        %v4956 = vmax.f32 %v4924, 0.0
        %v4957 = vmax.f32 %v4925, 0.0
        %v4958 = vmax.f32 %v4926, 0.0
        %v4959 = vmax.f32 %v4927, 0.0
        %v4960 = vmax.f32 %v4928, 0.0
        %v4961 = vmax.f32 %v4929, 0.0
        %v4962 = vmax.f32 %v4930, 0.0
        %v4963 = vrot.slane %v4933, 7
        %v4964 = vrot.slane %v4934, 7
        %v4965 = vrot.slane %v4931, 7
        %v4966 = vrot.slane %v4932, 7
        %v4967 = vrot.slane %v4935, 7
        %v4968 = vrot.slane %v4936, 7
        %v4969 = vrot.slane %v4937, 7
        %v4970 = vrot.slane %v4938, 7
        %v4971 = vrot.slane %v4939, 7
        %v4972 = vrot.slane %v4940, 7
        %v4973 = vrot.slane %v4941, 7
        %v4974 = vrot.slane %v4942, 7
        %v4975 = vrot.slane %v4943, 7
        %v4976 = vrot.slane %v4944, 7
        %v4977 = vrot.slane %v4945, 7
        %v4978 = vrot.slane %v4946, 7
        %v4979 = vrot.slane %v4947, 7
        %v4980 = vrot.slane %v4948, 7
        %v4981 = vrot.slane %v4949, 7
        %v4982 = vrot.slane %v4950, 7
        %v4983 = vrot.slane %v4951, 7
        %v4984 = vrot.slane %v4952, 7
        %v4985 = vrot.slane %v4953, 7
        %v4986 = vrot.slane %v4954, 7
        %v4987 = vrot.slane %v4955, 7
        %v4988 = vrot.slane %v4956, 7
        %v4989 = vrot.slane %v4957, 7
        %v4990 = vrot.slane %v4958, 7
        %v4991 = vrot.slane %v4959, 7
        %v4992 = vrot.slane %v4960, 7
        %v4993 = vrot.slane %v4961, 7
        %v4994 = vrot.slane %v4962, 7
        %v4995 = vsel %vm329, %v4991, %v4992
        %v4996 = vsel %vm329, %v4994, %v4991
        %v4997 = vsel %vm329, %v4993, %v4994
        %v4998 = vsel %vm329, %v4992, %v4993
        %v4999 = vsel %vm329, %v4990, %v4991
        %v5000 = vsel %vm329, %v4989, %v4990
        %v5001 = vsel %vm329, %v4988, %v4989
        %v5002 = vsel %vm329, %v4987, %v4988
        %v5003 = vsel %vm329, %v4986, %v4987
        %v5004 = vsel %vm329, %v4985, %v4986
        %v5005 = vsel %vm329, %v4984, %v4985
        %v5006 = vsel %vm329, %v4983, %v4984
        %v5007 = vsel %vm329, %v4982, %v4983
        %v5008 = vsel %vm329, %v4981, %v4982
        %v5009 = vsel %vm329, %v4980, %v4981
        %v5010 = vsel %vm329, %v4979, %v4980
        %v5011 = vsel %vm329, %v4978, %v4979
        %v5012 = vsel %vm329, %v4977, %v4978
        %v5013 = vsel %vm329, %v4976, %v4977
        %v5014 = vsel %vm329, %v4975, %v4976
        %v5015 = vsel %vm329, %v4974, %v4975
        %v5016 = vsel %vm329, %v4973, %v4974
        %v5017 = vsel %vm329, %v4972, %v4973
        %v5018 = vsel %vm329, %v4971, %v4972
        %v5019 = vsel %vm329, %v4970, %v4971
        %v5020 = vsel %vm329, %v4969, %v4970
        %v5021 = vsel %vm329, %v4968, %v4969
        %v5022 = vsel %vm329, %v4967, %v4968
        %v5023 = vsel %vm329, %v4964, %v4967
        %v5024 = vsel %vm329, %v4963, %v4964
        %v5025 = vsel %vm329, %v4966, %v4963
        %v5026 = vsel %vm329, %v4965, %v4966
        %v5027 = vsel %vm329, %v4964, %v4965
        %v5028 = vsel %vm329, %v4992, %v4963
        %v5029 = vrot.slane %v4933, 1
        %v5030 = vrot.slane %v4934, 1
        %v5031 = vrot.slane %v4931, 1
        %v5032 = vrot.slane %v4932, 1
        %v5033 = vrot.slane %v4935, 1
        %v5034 = vrot.slane %v4936, 1
        %v5035 = vrot.slane %v4937, 1
        %v5036 = vrot.slane %v4938, 1
        %v5037 = vrot.slane %v4939, 1
        %v5038 = vrot.slane %v4940, 1
        %v5039 = vrot.slane %v4941, 1
        %v5040 = vrot.slane %v4942, 1
        %v5041 = vrot.slane %v4943, 1
        %v5042 = vrot.slane %v4944, 1
        %v5043 = vrot.slane %v4945, 1
        %v5044 = vrot.slane %v4946, 1
        %v5045 = vrot.slane %v4947, 1
        %v5046 = vrot.slane %v4948, 1
        %v5047 = vrot.slane %v4949, 1
        %v5048 = vrot.slane %v4950, 1
        %v5049 = vrot.slane %v4951, 1
        %v5050 = vrot.slane %v4952, 1
        %v5051 = vrot.slane %v4953, 1
        %v5052 = vrot.slane %v4954, 1
        %v5053 = vrot.slane %v4955, 1
        %v5054 = vrot.slane %v4956, 1
        %v5055 = vrot.slane %v4957, 1
        %v5056 = vrot.slane %v4958, 1
        %v5057 = vrot.slane %v4959, 1
        %v5058 = vrot.slane %v4960, 1
        %v5059 = vrot.slane %v4961, 1
        %v5060 = vrot.slane %v4962, 1
        %v5061 = vsel %vm396, %v5057, %v5058
        %v5062 = vsel %vm396, %v5060, %v5057
        %v5063 = vsel %vm396, %v5059, %v5060
        %v5064 = vsel %vm396, %v5058, %v5059
        %v5065 = vsel %vm396, %v5056, %v5057
        %v5066 = vsel %vm396, %v5055, %v5056
        %v5067 = vsel %vm396, %v5054, %v5055
        %v5068 = vsel %vm396, %v5053, %v5054
        %v5069 = vsel %vm396, %v5052, %v5053
        %v5070 = vsel %vm396, %v5051, %v5052
        %v5071 = vsel %vm396, %v5050, %v5051
        %v5072 = vsel %vm396, %v5049, %v5050
        %v5073 = vsel %vm396, %v5048, %v5049
        %v5074 = vsel %vm396, %v5047, %v5048
        %v5075 = vsel %vm396, %v5046, %v5047
        %v5076 = vsel %vm396, %v5045, %v5046
        %v5077 = vsel %vm396, %v5044, %v5045
        %v5078 = vsel %vm396, %v5043, %v5044
        %v5079 = vsel %vm396, %v5042, %v5043
        %v5080 = vsel %vm396, %v5041, %v5042
        %v5081 = vsel %vm396, %v5040, %v5041
        %v5082 = vsel %vm396, %v5039, %v5040
        %v5083 = vsel %vm396, %v5038, %v5039
        %v5084 = vsel %vm396, %v5037, %v5038
        %v5085 = vsel %vm396, %v5036, %v5037
        %v5086 = vsel %vm396, %v5035, %v5036
        %v5087 = vsel %vm396, %v5034, %v5035
        %v5088 = vsel %vm396, %v5033, %v5034
        %v5089 = vsel %vm396, %v5030, %v5033
        %v5090 = vsel %vm396, %v5029, %v5030
        %v5091 = vsel %vm396, %v5032, %v5029
        %v5092 = vsel %vm396, %v5031, %v5032
        %v5093 = vsel %vm396, %v5030, %v5031
        %v5094 = vsel %vm396, %v5058, %v5029
        %v5095 = vlaneseq
        %v5096 = vshrl.u32 %v5095, 7
        %v5097 = vsub.s32 1, %v5096
        %v5098 = vrot.slane %v4933, %v5097
        %v5099 = vlaneseq
        %v5100 = vshrl.u32 %v5099, 7
        %v5101 = vsub.s32 1, %v5100
        %v5102 = vrot.slane %v4931, %v5101
        %v5103 = vlaneseq
        %v5104 = vshrl.u32 %v5103, 7
        %v5105 = vsub.s32 1, %v5104
        %v5106 = vrot.slane %v4935, %v5105
        %v5107 = vlaneseq
        %v5108 = vshrl.u32 %v5107, 7
        %v5109 = vsub.s32 1, %v5108
        %v5110 = vrot.slane %v4937, %v5109
        %v5111 = vlaneseq
        %v5112 = vshrl.u32 %v5111, 7
        %v5113 = vsub.s32 1, %v5112
        %v5114 = vrot.slane %v4939, %v5113
        %v5115 = vlaneseq
        %v5116 = vshrl.u32 %v5115, 7
        %v5117 = vsub.s32 1, %v5116
        %v5118 = vrot.slane %v4941, %v5117
        %v5119 = vlaneseq
        %v5120 = vshrl.u32 %v5119, 7
        %v5121 = vsub.s32 1, %v5120
        %v5122 = vrot.slane %v4943, %v5121
        %v5123 = vlaneseq
        %v5124 = vshrl.u32 %v5123, 7
        %v5125 = vsub.s32 1, %v5124
        %v5126 = vrot.slane %v4945, %v5125
        %v5127 = vlaneseq
        %v5128 = vshrl.u32 %v5127, 7
        %v5129 = vsub.s32 1, %v5128
        %v5130 = vrot.slane %v4947, %v5129
        %v5131 = vlaneseq
        %v5132 = vshrl.u32 %v5131, 7
        %v5133 = vsub.s32 1, %v5132
        %v5134 = vrot.slane %v4949, %v5133
        %v5135 = vlaneseq
        %v5136 = vshrl.u32 %v5135, 7
        %v5137 = vsub.s32 1, %v5136
        %v5138 = vrot.slane %v4951, %v5137
        %v5139 = vlaneseq
        %v5140 = vshrl.u32 %v5139, 7
        %v5141 = vsub.s32 1, %v5140
        %v5142 = vrot.slane %v4953, %v5141
        %v5143 = vlaneseq
        %v5144 = vshrl.u32 %v5143, 7
        %v5145 = vsub.s32 1, %v5144
        %v5146 = vrot.slane %v4955, %v5145
        %v5147 = vlaneseq
        %v5148 = vshrl.u32 %v5147, 7
        %v5149 = vsub.s32 1, %v5148
        %v5150 = vrot.slane %v4957, %v5149
        %v5151 = vlaneseq
        %v5152 = vshrl.u32 %v5151, 7
        %v5153 = vsub.s32 1, %v5152
        %v5154 = vrot.slane %v4959, %v5153
        %v5155 = vlaneseq
        %v5156 = vshrl.u32 %v5155, 7
        %v5157 = vsub.s32 1, %v5156
        %v5158 = vrot.slane %v4961, %v5157
        %v5159 = vsel %vm433, %v5098, %v5028
        %v5160 = vsel %vm434, %v5098, %v5024
        %v5161 = vsel %vm433, %v5102, %v5027
        %v5162 = vsel %vm434, %v5102, %v5026
        %v5163 = vsel %vm433, %v5098, %v5025
        %v5164 = vsel %vm433, %v5106, %v5023
        %v5165 = vsel %vm434, %v5106, %v5022
        %v5166 = vsel %vm433, %v5110, %v5021
        %v5167 = vsel %vm434, %v5110, %v5020
        %v5168 = vsel %vm433, %v5114, %v5019
        %v5169 = vsel %vm434, %v5114, %v5018
        %v5170 = vsel %vm433, %v5118, %v5017
        %v5171 = vsel %vm434, %v5118, %v5016
        %v5172 = vsel %vm433, %v5122, %v5015
        %v5173 = vsel %vm434, %v5122, %v5014
        %v5174 = vsel %vm433, %v5126, %v5013
        %v5175 = vsel %vm434, %v5126, %v5012
        %v5176 = vsel %vm433, %v5130, %v5011
        %v5177 = vsel %vm434, %v5130, %v5010
        %v5178 = vsel %vm433, %v5134, %v5009
        %v5179 = vsel %vm434, %v5134, %v5008
        %v5180 = vsel %vm433, %v5138, %v5007
        %v5181 = vsel %vm434, %v5138, %v5006
        %v5182 = vsel %vm433, %v5142, %v5005
        %v5183 = vsel %vm434, %v5142, %v5004
        %v5184 = vsel %vm433, %v5146, %v5003
        %v5185 = vsel %vm434, %v5146, %v5002
        %v5186 = vsel %vm433, %v5150, %v5001
        %v5187 = vsel %vm434, %v5150, %v5000
        %v5188 = vsel %vm433, %v5154, %v4999
        %v5189 = vsel %vm434, %v5154, %v4995
        %v5190 = vsel %vm433, %v5158, %v4998
        %v5191 = vsel %vm434, %v5158, %v4997
        %v5192 = vsel %vm433, %v5154, %v4996
        %v5193 = vlaneseq
        %v5194 = vshrl.u32 %v5193, 7
        %v5195 = vsub.s32 6, %v5194
        %v5196 = vrot.slane %v4934, %v5195
        %v5197 = vlaneseq
        %v5198 = vshrl.u32 %v5197, 7
        %v5199 = vsub.s32 6, %v5198
        %v5200 = vrot.slane %v4932, %v5199
        %v5201 = vlaneseq
        %v5202 = vshrl.u32 %v5201, 7
        %v5203 = vsub.s32 6, %v5202
        %v5204 = vrot.slane %v4936, %v5203
        %v5205 = vlaneseq
        %v5206 = vshrl.u32 %v5205, 7
        %v5207 = vsub.s32 6, %v5206
        %v5208 = vrot.slane %v4938, %v5207
        %v5209 = vlaneseq
        %v5210 = vshrl.u32 %v5209, 7
        %v5211 = vsub.s32 6, %v5210
        %v5212 = vrot.slane %v4940, %v5211
        %v5213 = vlaneseq
        %v5214 = vshrl.u32 %v5213, 7
        %v5215 = vsub.s32 6, %v5214
        %v5216 = vrot.slane %v4942, %v5215
        %v5217 = vlaneseq
        %v5218 = vshrl.u32 %v5217, 7
        %v5219 = vsub.s32 6, %v5218
        %v5220 = vrot.slane %v4944, %v5219
        %v5221 = vlaneseq
        %v5222 = vshrl.u32 %v5221, 7
        %v5223 = vsub.s32 6, %v5222
        %v5224 = vrot.slane %v4946, %v5223
        %v5225 = vlaneseq
        %v5226 = vshrl.u32 %v5225, 7
        %v5227 = vsub.s32 6, %v5226
        %v5228 = vrot.slane %v4948, %v5227
        %v5229 = vlaneseq
        %v5230 = vshrl.u32 %v5229, 7
        %v5231 = vsub.s32 6, %v5230
        %v5232 = vrot.slane %v4950, %v5231
        %v5233 = vlaneseq
        %v5234 = vshrl.u32 %v5233, 7
        %v5235 = vsub.s32 6, %v5234
        %v5236 = vrot.slane %v4952, %v5235
        %v5237 = vlaneseq
        %v5238 = vshrl.u32 %v5237, 7
        %v5239 = vsub.s32 6, %v5238
        %v5240 = vrot.slane %v4954, %v5239
        %v5241 = vlaneseq
        %v5242 = vshrl.u32 %v5241, 7
        %v5243 = vsub.s32 6, %v5242
        %v5244 = vrot.slane %v4956, %v5243
        %v5245 = vlaneseq
        %v5246 = vshrl.u32 %v5245, 7
        %v5247 = vsub.s32 6, %v5246
        %v5248 = vrot.slane %v4958, %v5247
        %v5249 = vlaneseq
        %v5250 = vshrl.u32 %v5249, 7
        %v5251 = vsub.s32 6, %v5250
        %v5252 = vrot.slane %v4960, %v5251
        %v5253 = vlaneseq
        %v5254 = vshrl.u32 %v5253, 7
        %v5255 = vsub.s32 6, %v5254
        %v5256 = vrot.slane %v4962, %v5255
        %v5257 = vsel %vm535, %v5196, %v5090
        %v5258 = vsel %vm536, %v5196, %v5093
        %v5259 = vsel %vm535, %v5200, %v5092
        %v5260 = vsel %vm536, %v5200, %v5091
        %v5261 = vsel %vm536, %v5196, %v5089
        %v5262 = vsel %vm535, %v5204, %v5088
        %v5263 = vsel %vm536, %v5204, %v5087
        %v5264 = vsel %vm535, %v5208, %v5086
        %v5265 = vsel %vm536, %v5208, %v5085
        %v5266 = vsel %vm535, %v5212, %v5084
        %v5267 = vsel %vm536, %v5212, %v5083
        %v5268 = vsel %vm535, %v5216, %v5082
        %v5269 = vsel %vm536, %v5216, %v5081
        %v5270 = vsel %vm535, %v5220, %v5080
        %v5271 = vsel %vm536, %v5220, %v5079
        %v5272 = vsel %vm535, %v5224, %v5078
        %v5273 = vsel %vm536, %v5224, %v5077
        %v5274 = vsel %vm535, %v5228, %v5076
        %v5275 = vsel %vm536, %v5228, %v5075
        %v5276 = vsel %vm535, %v5232, %v5074
        %v5277 = vsel %vm536, %v5232, %v5073
        %v5278 = vsel %vm535, %v5236, %v5072
        %v5279 = vsel %vm536, %v5236, %v5071
        %v5280 = vsel %vm535, %v5240, %v5070
        %v5281 = vsel %vm536, %v5240, %v5069
        %v5282 = vsel %vm535, %v5244, %v5068
        %v5283 = vsel %vm536, %v5244, %v5067
        %v5284 = vsel %vm535, %v5248, %v5066
        %v5285 = vsel %vm536, %v5248, %v5065
        %v5286 = vsel %vm535, %v5252, %v5061
        %v5287 = vsel %vm536, %v5252, %v5064
        %v5288 = vsel %vm535, %v5256, %v5063
        %v5289 = vsel %vm536, %v5256, %v5062
        %v5290 = vsel %vm536, %v5252, %v5094
        %v5291 = vpack.c.bf16 %v5160, %v5159
        %v5292 = vpack.c.bf16 %v5162, %v5161
        %v5293 = vpack.c.bf16 %v5160, %v5163
        %v5294 = vpack.c.bf16 %v5165, %v5164
        %v5295 = vpack.c.bf16 %v5167, %v5166
        %v5296 = vpack.c.bf16 %v5169, %v5168
        %v5297 = vpack.c.bf16 %v5171, %v5170
        %v5298 = vpack.c.bf16 %v5173, %v5172
        %v5299 = vpack.c.bf16 %v5175, %v5174
        %v5300 = vpack.c.bf16 %v5177, %v5176
        %v5301 = vpack.c.bf16 %v5179, %v5178
        %v5302 = vpack.c.bf16 %v5181, %v5180
        %v5303 = vpack.c.bf16 %v5183, %v5182
        %v5304 = vpack.c.bf16 %v5185, %v5184
        %v5305 = vpack.c.bf16 %v5187, %v5186
        %v5306 = vpack.c.bf16 %v5189, %v5188
        %v5307 = vpack.c.bf16 %v5191, %v5190
        %v5308 = vpack.c.bf16 %v5189, %v5192
        %v5309 = vpack.c.bf16 %v4934, %v4933
        %v5310 = vpack.c.bf16 %v4932, %v4931
        %v5311 = vpack.c.bf16 %v4936, %v4935
        %v5312 = vpack.c.bf16 %v4938, %v4937
        %v5313 = vpack.c.bf16 %v4940, %v4939
        %v5314 = vpack.c.bf16 %v4942, %v4941
        %v5315 = vpack.c.bf16 %v4944, %v4943
        %v5316 = vpack.c.bf16 %v4946, %v4945
        %v5317 = vpack.c.bf16 %v4948, %v4947
        %v5318 = vpack.c.bf16 %v4950, %v4949
        %v5319 = vpack.c.bf16 %v4952, %v4951
        %v5320 = vpack.c.bf16 %v4954, %v4953
        %v5321 = vpack.c.bf16 %v4956, %v4955
        %v5322 = vpack.c.bf16 %v4958, %v4957
        %v5323 = vpack.c.bf16 %v4960, %v4959
        %v5324 = vpack.c.bf16 %v4962, %v4961
        %v5325 = vpack.c.bf16 %v5258, %v5257
        %v5326 = vpack.c.bf16 %v5260, %v5259
        %v5327 = vpack.c.bf16 %v5261, %v5257
        %v5328 = vpack.c.bf16 %v5263, %v5262
        %v5329 = vpack.c.bf16 %v5265, %v5264
        %v5330 = vpack.c.bf16 %v5267, %v5266
        %v5331 = vpack.c.bf16 %v5269, %v5268
        %v5332 = vpack.c.bf16 %v5271, %v5270
        %v5333 = vpack.c.bf16 %v5273, %v5272
        %v5334 = vpack.c.bf16 %v5275, %v5274
        %v5335 = vpack.c.bf16 %v5277, %v5276
        %v5336 = vpack.c.bf16 %v5279, %v5278
        %v5337 = vpack.c.bf16 %v5281, %v5280
        %v5338 = vpack.c.bf16 %v5283, %v5282
        %v5339 = vpack.c.bf16 %v5285, %v5284
        %v5340 = vpack.c.bf16 %v5287, %v5286
        %v5341 = vpack.c.bf16 %v5289, %v5288
        %v5342 = vpack.c.bf16 %v5290, %v5286
        %s5343 = scalar_lea.vmem [#allocation9], 576
        %v5344 = vld [vmem:[%s5343] sm:$0xf]
        %v5345 = vld [vmem:[%s5343 + $0x4] sm:$0xf]
        %v5346 = vld [vmem:[%s5343 + $0x8] sm:$0xf]
        %v5347 = vld [vmem:[%s5343 + $0xc] sm:$0xf]
        %v5348 = vld [vmem:[%s5343 + $0x10] sm:$0xf]
        %v5349 = vld [vmem:[%s5343 + $0x14] sm:$0xf]
        %v5350 = vld [vmem:[%s5343 + $0x18] sm:$0xf]
        %v5351 = vld [vmem:[%s5343 + $0x1c] sm:$0xf]
        %v5352 = vld [vmem:[%s5343 + $0x20] sm:$0xf]
        %v5353 = vld [vmem:[%s5343 + $0x24] sm:$0xf]
        %v5354 = vld [vmem:[%s5343 + $0x28] sm:$0xf]
        %v5355 = vld [vmem:[%s5343 + $0x2c] sm:$0xf]
        %v5356 = vld [vmem:[%s5343 + $0x30] sm:$0xf]
        %v5357 = vld [vmem:[%s5343 + $0x34] sm:$0xf]
        %v5358 = vld [vmem:[%s5343 + $0x38] sm:$0xf]
        %v5359 = vld [vmem:[%s5343 + $0x3c] sm:$0xf]
        %v5360 = vld [vmem:[%s5343 + $0x40] sm:$0xf]
        %v5361 = vld [vmem:[%s5343 + $0x44] sm:$0xf]
        %v5362 = vld [vmem:[%s5343 + $0x48] sm:$0xf]
        %v5363 = vld [vmem:[%s5343 + $0x4c] sm:$0xf]
        %v5364 = vld [vmem:[%s5343 + $0x50] sm:$0xf]
        %v5365 = vld [vmem:[%s5343 + $0x54] sm:$0xf]
        %v5366 = vld [vmem:[%s5343 + $0x58] sm:$0xf]
        %v5367 = vld [vmem:[%s5343 + $0x5c] sm:$0xf]
        %v5368 = vld [vmem:[%s5343 + $0x60] sm:$0xf]
        %v5369 = vld [vmem:[%s5343 + $0x64] sm:$0xf]
        %v5370 = vld [vmem:[%s5343 + $0x68] sm:$0xf]
        %v5371 = vld [vmem:[%s5343 + $0x6c] sm:$0xf]
        %v5372 = vld [vmem:[%s5343 + $0x70] sm:$0xf]
        %v5373 = vld [vmem:[%s5343 + $0x74] sm:$0xf]
        %v5374 = vld [vmem:[%s5343 + $0x78] sm:$0xf]
        %v5375 = vld [vmem:[%s5343 + $0x7c] sm:$0xf]
        %v5376 = vld [vmem:[%s5343 + $0x80] sm:$0xf]
        %v5377 = vld [vmem:[%s5343 + $0x84] sm:$0xf]
        %v5378 = vld [vmem:[%s5343 + $0x88] sm:$0xf]
        %v5379 = vld [vmem:[%s5343 + $0x8c] sm:$0xf]
        %v5380 = vld [vmem:[%s5343 + $0x90] sm:$0xf]
        %v5381 = vld [vmem:[%s5343 + $0x94] sm:$0xf]
        %v5382 = vld [vmem:[%s5343 + $0x98] sm:$0xf]
        %v5383 = vld [vmem:[%s5343 + $0x9c] sm:$0xf]
        %v5384 = vld [vmem:[%s5343 + $0xa0] sm:$0xf]
        %v5385 = vld [vmem:[%s5343 + $0xa4] sm:$0xf]
        %v5386 = vld [vmem:[%s5343 + $0xa8] sm:$0xf]
        %v5387 = vld [vmem:[%s5343 + $0xac] sm:$0xf]
        %v5388 = vld [vmem:[%s5343 + $0xb0] sm:$0xf]
        %v5389 = vld [vmem:[%s5343 + $0xb4] sm:$0xf]
        %v5390 = vld [vmem:[%s5343 + $0xb8] sm:$0xf]
        %v5391 = vld [vmem:[%s5343 + $0xbc] sm:$0xf]
        %v5392 = vld [vmem:[%s5343 + $0xc0] sm:$0xf]
        %v5393 = vld [vmem:[%s5343 + $0xc4] sm:$0xf]
        %v5394 = vld [vmem:[%s5343 + $0xc8] sm:$0xf]
        %v5395 = vld [vmem:[%s5343 + $0xcc] sm:$0xf]
        %v5396 = vld [vmem:[%s5343 + $0xd0] sm:$0xf]
        %v5397 = vld [vmem:[%s5343 + $0xd4] sm:$0xf]
        %v5398 = vld [vmem:[%s5343 + $0xd8] sm:$0xf]
        %v5399 = vld [vmem:[%s5343 + $0xdc] sm:$0xf]
        %v5400 = vld [vmem:[%s5343 + $0xe0] sm:$0xf]
        %v5401 = vld [vmem:[%s5343 + $0xe4] sm:$0xf]
        %v5402 = vld [vmem:[%s5343 + $0xe8] sm:$0xf]
        %v5403 = vld [vmem:[%s5343 + $0xec] sm:$0xf]
        %v5404 = vld [vmem:[%s5343 + $0xf0] sm:$0xf]
        %v5405 = vld [vmem:[%s5343 + $0xf4] sm:$0xf]
        %v5406 = vld [vmem:[%s5343 + $0xf8] sm:$0xf]
        %v5407 = vld [vmem:[%s5343 + $0xfc] sm:$0xf]
        %v5408 = vld [vmem:[%s5343 + $0x100] sm:$0xf]
        %v5409 = vld [vmem:[%s5343 + $0x104] sm:$0xf]
        %v5410 = vld [vmem:[%s5343 + $0x108] sm:$0xf]
        %v5411 = vld [vmem:[%s5343 + $0x10c] sm:$0xf]
        %v5412 = vld [vmem:[%s5343 + $0x110] sm:$0xf]
        %v5413 = vld [vmem:[%s5343 + $0x114] sm:$0xf]
        %v5414 = vld [vmem:[%s5343 + $0x118] sm:$0xf]
        %v5415 = vld [vmem:[%s5343 + $0x11c] sm:$0xf]
        %v5416 = vld [vmem:[%s5343 + $0x120] sm:$0xf]
        %v5417 = vld [vmem:[%s5343 + $0x124] sm:$0xf]
        %v5418 = vld [vmem:[%s5343 + $0x128] sm:$0xf]
        %v5419 = vld [vmem:[%s5343 + $0x12c] sm:$0xf]
        %v5420 = vld [vmem:[%s5343 + $0x130] sm:$0xf]
        %v5421 = vld [vmem:[%s5343 + $0x134] sm:$0xf]
        %v5422 = vld [vmem:[%s5343 + $0x138] sm:$0xf]
        %v5423 = vld [vmem:[%s5343 + $0x13c] sm:$0xf]
        %v5424 = vld [vmem:[%s5343 + $0x140] sm:$0xf]
        %v5425 = vld [vmem:[%s5343 + $0x144] sm:$0xf]
        %v5426 = vld [vmem:[%s5343 + $0x148] sm:$0xf]
        %v5427 = vld [vmem:[%s5343 + $0x14c] sm:$0xf]
        %v5428 = vld [vmem:[%s5343 + $0x150] sm:$0xf]
        %v5429 = vld [vmem:[%s5343 + $0x154] sm:$0xf]
        %v5430 = vld [vmem:[%s5343 + $0x158] sm:$0xf]
        %v5431 = vld [vmem:[%s5343 + $0x15c] sm:$0xf]
        %v5432 = vld [vmem:[%s5343 + $0x160] sm:$0xf]
        %v5433 = vld [vmem:[%s5343 + $0x164] sm:$0xf]
        %v5434 = vld [vmem:[%s5343 + $0x168] sm:$0xf]
        %v5435 = vld [vmem:[%s5343 + $0x16c] sm:$0xf]
        %v5436 = vld [vmem:[%s5343 + $0x170] sm:$0xf]
        %v5437 = vld [vmem:[%s5343 + $0x174] sm:$0xf]
        %v5438 = vld [vmem:[%s5343 + $0x178] sm:$0xf]
        %v5439 = vld [vmem:[%s5343 + $0x17c] sm:$0xf]
        %v5440 = vld [vmem:[%s5343 + $0x180] sm:$0xf]
        %v5441 = vld [vmem:[%s5343 + $0x184] sm:$0xf]
        %v5442 = vld [vmem:[%s5343 + $0x188] sm:$0xf]
        %v5443 = vld [vmem:[%s5343 + $0x18c] sm:$0xf]
        %v5444 = vld [vmem:[%s5343 + $0x190] sm:$0xf]
        %v5445 = vld [vmem:[%s5343 + $0x194] sm:$0xf]
        %v5446 = vld [vmem:[%s5343 + $0x198] sm:$0xf]
        %v5447 = vld [vmem:[%s5343 + $0x19c] sm:$0xf]
        %v5448 = vld [vmem:[%s5343 + $0x1a0] sm:$0xf]
        %v5449 = vld [vmem:[%s5343 + $0x1a4] sm:$0xf]
        %v5450 = vld [vmem:[%s5343 + $0x1a8] sm:$0xf]
        %v5451 = vld [vmem:[%s5343 + $0x1ac] sm:$0xf]
        %v5452 = vld [vmem:[%s5343 + $0x1b0] sm:$0xf]
        %v5453 = vld [vmem:[%s5343 + $0x1b4] sm:$0xf]
        %v5454 = vld [vmem:[%s5343 + $0x1b8] sm:$0xf]
        %v5455 = vld [vmem:[%s5343 + $0x1bc] sm:$0xf]
        %v5456 = vld [vmem:[%s5343 + $0x1c0] sm:$0xf]
        %v5457 = vld [vmem:[%s5343 + $0x1c4] sm:$0xf]
        %v5458 = vld [vmem:[%s5343 + $0x1c8] sm:$0xf]
        %v5459 = vld [vmem:[%s5343 + $0x1cc] sm:$0xf]
        %v5460 = vld [vmem:[%s5343 + $0x1d0] sm:$0xf]
        %v5461 = vld [vmem:[%s5343 + $0x1d4] sm:$0xf]
        %v5462 = vld [vmem:[%s5343 + $0x1d8] sm:$0xf]
        %v5463 = vld [vmem:[%s5343 + $0x1dc] sm:$0xf]
        %v5464 = vld [vmem:[%s5343 + $0x1e0] sm:$0xf]
        %v5465 = vld [vmem:[%s5343 + $0x1e4] sm:$0xf]
        %v5466 = vld [vmem:[%s5343 + $0x1e8] sm:$0xf]
        %v5467 = vld [vmem:[%s5343 + $0x1ec] sm:$0xf]
        %v5468 = vld [vmem:[%s5343 + $0x1f0] sm:$0xf]
        %v5469 = vld [vmem:[%s5343 + $0x1f4] sm:$0xf]
        %v5470 = vld [vmem:[%s5343 + $0x1f8] sm:$0xf]
        %v5471 = vld [vmem:[%s5343 + $0x1fc] sm:$0xf]
        %v5472 = vld [vmem:[%s5343 + $0x200] sm:$0xf]
        %v5473 = vld [vmem:[%s5343 + $0x204] sm:$0xf]
        %v5474 = vld [vmem:[%s5343 + $0x208] sm:$0xf]
        %v5475 = vld [vmem:[%s5343 + $0x20c] sm:$0xf]
        %v5476 = vld [vmem:[%s5343 + $0x210] sm:$0xf]
        %v5477 = vld [vmem:[%s5343 + $0x214] sm:$0xf]
        %v5478 = vld [vmem:[%s5343 + $0x218] sm:$0xf]
        %v5479 = vld [vmem:[%s5343 + $0x21c] sm:$0xf]
        %v5480 = vld [vmem:[%s5343 + $0x220] sm:$0xf]
        %v5481 = vld [vmem:[%s5343 + $0x224] sm:$0xf]
        %v5482 = vld [vmem:[%s5343 + $0x228] sm:$0xf]
        %v5483 = vld [vmem:[%s5343 + $0x22c] sm:$0xf]
        %v5484 = vld [vmem:[%s5343 + $0x230] sm:$0xf]
        %v5485 = vld [vmem:[%s5343 + $0x234] sm:$0xf]
        %v5486 = vld [vmem:[%s5343 + $0x238] sm:$0xf]
        %v5487 = vld [vmem:[%s5343 + $0x23c] sm:$0xf]
        %v5632 = vunpack.c.l.b16 %v5344
        %v5633 = vunpack.c.l.b16 %v5345
        %v5634 = vunpack.c.l.b16 %v5346
        %v5635 = vunpack.c.l.b16 %v5347
        %v5636 = vunpack.c.l.b16 %v5348
        %v5637 = vunpack.c.l.b16 %v5349
        %v5638 = vunpack.c.l.b16 %v5350
        %v5639 = vunpack.c.l.b16 %v5351
        %v5640 = vunpack.c.l.b16 %v5352
        %v5641 = vunpack.c.l.b16 %v5353
        %v5642 = vunpack.c.l.b16 %v5354
        %v5643 = vunpack.c.l.b16 %v5355
        %v5644 = vunpack.c.l.b16 %v5356
        %v5645 = vunpack.c.l.b16 %v5357
        %v5646 = vunpack.c.l.b16 %v5358
        %v5647 = vunpack.c.l.b16 %v5359
        %v5648 = vunpack.c.l.b16 %v5360
        %v5649 = vunpack.c.l.b16 %v5361
        %v5650 = vunpack.c.l.b16 %v5362
        %v5651 = vunpack.c.l.b16 %v5363
        %v5652 = vunpack.c.l.b16 %v5364
        %v5653 = vunpack.c.l.b16 %v5365
        %v5654 = vunpack.c.l.b16 %v5366
        %v5655 = vunpack.c.l.b16 %v5367
        %v5656 = vunpack.c.l.b16 %v5368
        %v5657 = vunpack.c.l.b16 %v5369
        %v5658 = vunpack.c.l.b16 %v5370
        %v5659 = vunpack.c.l.b16 %v5371
        %v5660 = vunpack.c.l.b16 %v5372
        %v5661 = vunpack.c.l.b16 %v5373
        %v5662 = vunpack.c.l.b16 %v5374
        %v5663 = vunpack.c.l.b16 %v5375
        %v5664 = vunpack.c.l.b16 %v5376
        %v5665 = vunpack.c.l.b16 %v5377
        %v5666 = vunpack.c.l.b16 %v5378
        %v5667 = vunpack.c.l.b16 %v5379
        %v5668 = vunpack.c.l.b16 %v5380
        %v5669 = vunpack.c.l.b16 %v5381
        %v5670 = vunpack.c.l.b16 %v5382
        %v5671 = vunpack.c.l.b16 %v5383
        %v5672 = vunpack.c.l.b16 %v5384
        %v5673 = vunpack.c.l.b16 %v5385
        %v5674 = vunpack.c.l.b16 %v5386
        %v5675 = vunpack.c.l.b16 %v5387
        %v5676 = vunpack.c.l.b16 %v5388
        %v5677 = vunpack.c.l.b16 %v5389
        %v5678 = vunpack.c.l.b16 %v5390
        %v5679 = vunpack.c.l.b16 %v5391
        %v5680 = vunpack.c.l.b16 %v5392
        %v5681 = vunpack.c.l.b16 %v5393
        %v5682 = vunpack.c.l.b16 %v5394
        %v5683 = vunpack.c.l.b16 %v5395
        %v5684 = vunpack.c.l.b16 %v5396
        %v5685 = vunpack.c.l.b16 %v5397
        %v5686 = vunpack.c.l.b16 %v5398
        %v5687 = vunpack.c.l.b16 %v5399
        %v5688 = vunpack.c.l.b16 %v5400
        %v5689 = vunpack.c.l.b16 %v5401
        %v5690 = vunpack.c.l.b16 %v5402
        %v5691 = vunpack.c.l.b16 %v5403
        %v5692 = vunpack.c.l.b16 %v5404
        %v5693 = vunpack.c.l.b16 %v5405
        %v5694 = vunpack.c.l.b16 %v5406
        %v5695 = vunpack.c.l.b16 %v5407
        %v5696 = vunpack.c.l.b16 %v5408
        %v5697 = vunpack.c.l.b16 %v5409
        %v5698 = vunpack.c.l.b16 %v5410
        %v5699 = vunpack.c.l.b16 %v5411
        %v5700 = vunpack.c.l.b16 %v5412
        %v5701 = vunpack.c.l.b16 %v5413
        %v5702 = vunpack.c.l.b16 %v5414
        %v5703 = vunpack.c.l.b16 %v5415
        %v5704 = vunpack.c.l.b16 %v5416
        %v5705 = vunpack.c.l.b16 %v5417
        %v5706 = vunpack.c.l.b16 %v5418
        %v5707 = vunpack.c.l.b16 %v5419
        %v5708 = vunpack.c.l.b16 %v5420
        %v5709 = vunpack.c.l.b16 %v5421
        %v5710 = vunpack.c.l.b16 %v5422
        %v5711 = vunpack.c.l.b16 %v5423
        %v5712 = vunpack.c.l.b16 %v5424
        %v5713 = vunpack.c.l.b16 %v5425
        %v5714 = vunpack.c.l.b16 %v5426
        %v5715 = vunpack.c.l.b16 %v5427
        %v5716 = vunpack.c.l.b16 %v5428
        %v5717 = vunpack.c.l.b16 %v5429
        %v5718 = vunpack.c.l.b16 %v5430
        %v5719 = vunpack.c.l.b16 %v5431
        %v5720 = vunpack.c.l.b16 %v5432
        %v5721 = vunpack.c.l.b16 %v5433
        %v5722 = vunpack.c.l.b16 %v5434
        %v5723 = vunpack.c.l.b16 %v5435
        %v5724 = vunpack.c.l.b16 %v5436
        %v5725 = vunpack.c.l.b16 %v5437
        %v5726 = vunpack.c.l.b16 %v5438
        %v5727 = vunpack.c.l.b16 %v5439
        %v5728 = vunpack.c.l.b16 %v5440
        %v5729 = vunpack.c.l.b16 %v5441
        %v5730 = vunpack.c.l.b16 %v5442
        %v5731 = vunpack.c.l.b16 %v5443
        %v5732 = vunpack.c.l.b16 %v5444
        %v5733 = vunpack.c.l.b16 %v5445
        %v5734 = vunpack.c.l.b16 %v5446
        %v5735 = vunpack.c.l.b16 %v5447
        %v5736 = vunpack.c.l.b16 %v5448
        %v5737 = vunpack.c.l.b16 %v5449
        %v5738 = vunpack.c.l.b16 %v5450
        %v5739 = vunpack.c.l.b16 %v5451
        %v5740 = vunpack.c.l.b16 %v5452
        %v5741 = vunpack.c.l.b16 %v5453
        %v5742 = vunpack.c.l.b16 %v5454
        %v5743 = vunpack.c.l.b16 %v5455
        %v5744 = vunpack.c.l.b16 %v5456
        %v5745 = vunpack.c.l.b16 %v5457
        %v5746 = vunpack.c.l.b16 %v5458
        %v5747 = vunpack.c.l.b16 %v5459
        %v5748 = vunpack.c.l.b16 %v5460
        %v5749 = vunpack.c.l.b16 %v5461
        %v5750 = vunpack.c.l.b16 %v5462
        %v5751 = vunpack.c.l.b16 %v5463
        %v5752 = vunpack.c.l.b16 %v5464
        %v5753 = vunpack.c.l.b16 %v5465
        %v5754 = vunpack.c.l.b16 %v5466
        %v5755 = vunpack.c.l.b16 %v5467
        %v5756 = vunpack.c.l.b16 %v5468
        %v5757 = vunpack.c.l.b16 %v5469
        %v5758 = vunpack.c.l.b16 %v5470
        %v5759 = vunpack.c.l.b16 %v5471
        %v5760 = vunpack.c.l.b16 %v5472
        %v5761 = vunpack.c.l.b16 %v5473
        %v5762 = vunpack.c.l.b16 %v5474
        %v5763 = vunpack.c.l.b16 %v5475
        %v5764 = vunpack.c.l.b16 %v5476
        %v5765 = vunpack.c.l.b16 %v5477
        %v5766 = vunpack.c.l.b16 %v5478
        %v5767 = vunpack.c.l.b16 %v5479
        %v5768 = vunpack.c.l.b16 %v5480
        %v5769 = vunpack.c.l.b16 %v5481
        %v5770 = vunpack.c.l.b16 %v5482
        %v5771 = vunpack.c.l.b16 %v5483
        %v5772 = vunpack.c.l.b16 %v5484
        %v5773 = vunpack.c.l.b16 %v5485
        %v5774 = vunpack.c.l.b16 %v5486
        %v5775 = vunpack.c.l.b16 %v5487
        %v5776 = vpack.c.b16 %v5633, %v5632
        %v5777 = vpack.c.b16 %v5635, %v5634
        %v5778 = vpack.c.b16 %v5637, %v5636
        %v5779 = vpack.c.b16 %v5639, %v5638
        %v5780 = vpack.c.b16 %v5641, %v5640
        %v5781 = vpack.c.b16 %v5643, %v5642
        %v5782 = vpack.c.b16 %v5645, %v5644
        %v5783 = vpack.c.b16 %v5647, %v5646
        %v5784 = vpack.c.b16 %v5649, %v5648
        %v5785 = vpack.c.b16 %v5651, %v5650
        %v5786 = vpack.c.b16 %v5653, %v5652
        %v5787 = vpack.c.b16 %v5655, %v5654
        %v5788 = vpack.c.b16 %v5657, %v5656
        %v5789 = vpack.c.b16 %v5659, %v5658
        %v5790 = vpack.c.b16 %v5661, %v5660
        %v5791 = vpack.c.b16 %v5663, %v5662
        %v5792 = vpack.c.b16 %v5665, %v5664
        %v5793 = vpack.c.b16 %v5667, %v5666
        %v5794 = vpack.c.b16 %v5669, %v5668
        %v5795 = vpack.c.b16 %v5671, %v5670
        %v5796 = vpack.c.b16 %v5673, %v5672
        %v5797 = vpack.c.b16 %v5675, %v5674
        %v5798 = vpack.c.b16 %v5677, %v5676
        %v5799 = vpack.c.b16 %v5679, %v5678
        %v5800 = vpack.c.b16 %v5681, %v5680
        %v5801 = vpack.c.b16 %v5683, %v5682
        %v5802 = vpack.c.b16 %v5685, %v5684
        %v5803 = vpack.c.b16 %v5687, %v5686
        %v5804 = vpack.c.b16 %v5689, %v5688
        %v5805 = vpack.c.b16 %v5691, %v5690
        %v5806 = vpack.c.b16 %v5693, %v5692
        %v5807 = vpack.c.b16 %v5695, %v5694
        %v5808 = vpack.c.b16 %v5697, %v5696
        %v5809 = vpack.c.b16 %v5699, %v5698
        %v5810 = vpack.c.b16 %v5701, %v5700
        %v5811 = vpack.c.b16 %v5703, %v5702
        %v5812 = vpack.c.b16 %v5705, %v5704
        %v5813 = vpack.c.b16 %v5707, %v5706
        %v5814 = vpack.c.b16 %v5709, %v5708
        %v5815 = vpack.c.b16 %v5711, %v5710
        %v5816 = vpack.c.b16 %v5713, %v5712
        %v5817 = vpack.c.b16 %v5715, %v5714
        %v5818 = vpack.c.b16 %v5717, %v5716
        %v5819 = vpack.c.b16 %v5719, %v5718
        %v5820 = vpack.c.b16 %v5721, %v5720
        %v5821 = vpack.c.b16 %v5723, %v5722
        %v5822 = vpack.c.b16 %v5725, %v5724
        %v5823 = vpack.c.b16 %v5727, %v5726
        %v5824 = vpack.c.b16 %v5729, %v5728
        %v5825 = vpack.c.b16 %v5731, %v5730
        %v5826 = vpack.c.b16 %v5733, %v5732
        %v5827 = vpack.c.b16 %v5735, %v5734
        %v5828 = vpack.c.b16 %v5737, %v5736
        %v5829 = vpack.c.b16 %v5739, %v5738
        %v5830 = vpack.c.b16 %v5741, %v5740
        %v5831 = vpack.c.b16 %v5743, %v5742
        %v5832 = vpack.c.b16 %v5745, %v5744
        %v5833 = vpack.c.b16 %v5747, %v5746
        %v5834 = vpack.c.b16 %v5749, %v5748
        %v5835 = vpack.c.b16 %v5751, %v5750
        %v5836 = vpack.c.b16 %v5753, %v5752
        %v5837 = vpack.c.b16 %v5755, %v5754
        %v5838 = vpack.c.b16 %v5757, %v5756
        %v5839 = vpack.c.b16 %v5759, %v5758
        %v5840 = vpack.c.b16 %v5761, %v5760
        %v5841 = vpack.c.b16 %v5763, %v5762
        %v5842 = vpack.c.b16 %v5765, %v5764
        %v5843 = vpack.c.b16 %v5767, %v5766
        %v5844 = vpack.c.b16 %v5769, %v5768
        %v5845 = vpack.c.b16 %v5771, %v5770
        %v5846 = vpack.c.b16 %v5773, %v5772
        %v5847 = vpack.c.b16 %v5775, %v5774
        %5920 = vmatprep.subr.bf16.mxu0 0
        %5921 = vmatpush1.bf16.msra.mxu0 %v5776
        %5922 = vmatprep.subr.bf16.mxu0 0
        %5923 = vmatpush1.bf16.msra.mxu0 %v5777
        %5924 = vmatprep.subr.bf16.mxu0 0
        %5925 = vmatpush1.bf16.msra.mxu0 %v5778
        %5926 = vmatprep.subr.bf16.mxu0 0
        %5927 = vmatpush1.bf16.msra.mxu0 %v5779
        %5928 = vmatprep.subr.bf16.mxu0 0
        %5929 = vmatpush1.bf16.msra.mxu0 %v5780
        %5930 = vmatprep.subr.bf16.mxu0 0
        %5931 = vmatpush1.bf16.msra.mxu0 %v5781
        %5932 = vmatprep.subr.bf16.mxu0 0
        %5933 = vmatpush1.bf16.msra.mxu0 %v5782
        %5934 = vmatprep.subr.bf16.mxu0 0
        %5935 = vmatpush1.bf16.msra.mxu0 %v5783
        %5936 = vmatprep.subr.bf16.mxu0 0
        %5937 = vmatpush1.bf16.msra.mxu0 %v5784
        %5938 = vmatprep.subr.bf16.mxu0 0
        %5939 = vmatpush1.bf16.msra.mxu0 %v5785
        %5940 = vmatprep.subr.bf16.mxu0 0
        %5941 = vmatpush1.bf16.msra.mxu0 %v5786
        %5942 = vmatprep.subr.bf16.mxu0 0
        %5943 = vmatpush1.bf16.msra.mxu0 %v5787
        %5944 = vmatprep.subr.bf16.mxu0 0
        %5945 = vmatpush1.bf16.msra.mxu0 %v5788
        %5946 = vmatprep.subr.bf16.mxu0 0
        %5947 = vmatpush1.bf16.msra.mxu0 %v5789
        %5948 = vmatprep.subr.bf16.mxu0 0
        %5949 = vmatpush1.bf16.msra.mxu0 %v5790
        %5950 = vmatprep.subr.bf16.mxu0 0
        %5951 = vmatpush1.bf16.msra.mxu0 %v5791
        %5952 = vmatprep.mubr.bf16.mxu0 %v5309
        %5953 = vmatmul.mubr.bf16.gmra.mrb[0].mxu0 %v5291
        %v5954 = vpop.f32.mrb[0].mxu0
        %v5955 = vadd.f32 0.0, %v5954
        %v5956 = vpop.f32.mrb[0].mxu0
        %v5957 = vpop.f32.mrb[0].mxu0
        %v5958 = vadd.f32 0.0, %v5957
        %v5959 = vpop.f32.mrb[0].mxu0
        %5960 = vmatprep.mubr.bf16.mxu0 %v5310
        %5961 = vmatmul.mubr.bf16.gmra.mrb[0].mxu0 %v5292
        %v5962 = vpop.f32.mrb[0].mxu0
        %v5963 = vadd.f32 0.0, %v5962
        %v5964 = vpop.f32.mrb[0].mxu0
        %v5965 = vpop.f32.mrb[0].mxu0
        %v5966 = vadd.f32 0.0, %v5965
        %v5967 = vpop.f32.mrb[0].mxu0
        %5968 = vmatprep.mubr.bf16.mxu0 %v5309
        %5969 = vmatmul.mubr.bf16.gmra.mrb[0].mxu0 %v5293
        %v5970 = vpop.f32.mrb[0].mxu0
        %v5971 = vadd.f32 0.0, %v5970
        %v5972 = vpop.f32.mrb[0].mxu0
        %v5973 = vpop.f32.mrb[0].mxu0
        %v5974 = vadd.f32 0.0, %v5973
        %v5975 = vpop.f32.mrb[0].mxu0
        %5976 = vmatprep.mubr.bf16.mxu0 %v5311
        %5977 = vmatmul.mubr.bf16.gmra.mrb[0].mxu0 %v5294
        %v5978 = vpop.f32.mrb[0].mxu0
        %v5979 = vadd.f32 0.0, %v5978
        %v5980 = vpop.f32.mrb[0].mxu0
        %v5981 = vpop.f32.mrb[0].mxu0
        %v5982 = vadd.f32 0.0, %v5981
        %v5983 = vpop.f32.mrb[0].mxu0
        %5984 = vmatprep.mubr.bf16.mxu0 %v5312
        %5985 = vmatmul.mubr.bf16.gmra.mrb[0].mxu0 %v5295
        %v5986 = vpop.f32.mrb[0].mxu0
        %v5987 = vadd.f32 0.0, %v5986
        %v5988 = vpop.f32.mrb[0].mxu0
        %v5989 = vpop.f32.mrb[0].mxu0
        %v5990 = vadd.f32 0.0, %v5989
        %v5991 = vpop.f32.mrb[0].mxu0
        %5992 = vmatprep.mubr.bf16.mxu0 %v5313
        %5993 = vmatmul.mubr.bf16.gmra.mrb[0].mxu0 %v5296
        %v5994 = vpop.f32.mrb[0].mxu0
        %v5995 = vadd.f32 0.0, %v5994
        %v5996 = vpop.f32.mrb[0].mxu0
        %v5997 = vpop.f32.mrb[0].mxu0
        %v5998 = vadd.f32 0.0, %v5997
        %v5999 = vpop.f32.mrb[0].mxu0
        %6000 = vmatprep.mubr.bf16.mxu0 %v5314
        %6001 = vmatmul.mubr.bf16.gmra.mrb[0].mxu0 %v5297
        %v6002 = vpop.f32.mrb[0].mxu0
        %v6003 = vadd.f32 0.0, %v6002
        %v6004 = vpop.f32.mrb[0].mxu0
        %v6005 = vpop.f32.mrb[0].mxu0
        %v6006 = vadd.f32 0.0, %v6005
        %v6007 = vpop.f32.mrb[0].mxu0
        %6008 = vmatprep.mubr.bf16.mxu0 %v5315
        %6009 = vmatmul.mubr.bf16.gmra.mrb[0].mxu0 %v5298
        %v6010 = vpop.f32.mrb[0].mxu0
        %v6011 = vadd.f32 0.0, %v6010
        %v6012 = vpop.f32.mrb[0].mxu0
        %v6013 = vpop.f32.mrb[0].mxu0
        %v6014 = vadd.f32 0.0, %v6013
        %v6015 = vpop.f32.mrb[0].mxu0
        %6016 = vmatprep.mubr.bf16.mxu0 %v5316
        %6017 = vmatmul.mubr.bf16.gmra.mrb[0].mxu0 %v5299
        %v6018 = vpop.f32.mrb[0].mxu0
        %v6019 = vadd.f32 0.0, %v6018
        %v6020 = vpop.f32.mrb[0].mxu0
        %v6021 = vpop.f32.mrb[0].mxu0
        %v6022 = vadd.f32 0.0, %v6021
        %v6023 = vpop.f32.mrb[0].mxu0
        %6024 = vmatprep.mubr.bf16.mxu0 %v5317
        %6025 = vmatmul.mubr.bf16.gmra.mrb[0].mxu0 %v5300
        %v6026 = vpop.f32.mrb[0].mxu0
        %v6027 = vadd.f32 0.0, %v6026
        %v6028 = vpop.f32.mrb[0].mxu0
        %v6029 = vpop.f32.mrb[0].mxu0
        %v6030 = vadd.f32 0.0, %v6029
        %v6031 = vpop.f32.mrb[0].mxu0
        %6032 = vmatprep.mubr.bf16.mxu0 %v5318
        %6033 = vmatmul.mubr.bf16.gmra.mrb[0].mxu0 %v5301
        %v6034 = vpop.f32.mrb[0].mxu0
        %v6035 = vadd.f32 0.0, %v6034
        %v6036 = vpop.f32.mrb[0].mxu0
        %v6037 = vpop.f32.mrb[0].mxu0
        %v6038 = vadd.f32 0.0, %v6037
        %v6039 = vpop.f32.mrb[0].mxu0
        %6040 = vmatprep.mubr.bf16.mxu0 %v5319
        %6041 = vmatmul.mubr.bf16.gmra.mrb[0].mxu0 %v5302
        %v6042 = vpop.f32.mrb[0].mxu0
        %v6043 = vadd.f32 0.0, %v6042
        %v6044 = vpop.f32.mrb[0].mxu0
        %v6045 = vpop.f32.mrb[0].mxu0
        %v6046 = vadd.f32 0.0, %v6045
        %v6047 = vpop.f32.mrb[0].mxu0
        %6048 = vmatprep.mubr.bf16.mxu0 %v5320
        %6049 = vmatmul.mubr.bf16.gmra.mrb[0].mxu0 %v5303
        %v6050 = vpop.f32.mrb[0].mxu0
        %v6051 = vadd.f32 0.0, %v6050
        %v6052 = vpop.f32.mrb[0].mxu0
        %v6053 = vpop.f32.mrb[0].mxu0
        %v6054 = vadd.f32 0.0, %v6053
        %v6055 = vpop.f32.mrb[0].mxu0
        %6056 = vmatprep.mubr.bf16.mxu0 %v5321
        %6057 = vmatmul.mubr.bf16.gmra.mrb[0].mxu0 %v5304
        %v6058 = vpop.f32.mrb[0].mxu0
        %v6059 = vadd.f32 0.0, %v6058
        %v6060 = vpop.f32.mrb[0].mxu0
        %v6061 = vpop.f32.mrb[0].mxu0
        %v6062 = vadd.f32 0.0, %v6061
        %v6063 = vpop.f32.mrb[0].mxu0
        %6064 = vmatprep.mubr.bf16.mxu0 %v5322
        %6065 = vmatmul.mubr.bf16.gmra.mrb[0].mxu0 %v5305
        %v6066 = vpop.f32.mrb[0].mxu0
        %v6067 = vadd.f32 0.0, %v6066
        %v6068 = vpop.f32.mrb[0].mxu0
        %v6069 = vpop.f32.mrb[0].mxu0
        %v6070 = vadd.f32 0.0, %v6069
        %v6071 = vpop.f32.mrb[0].mxu0
        %6072 = vmatprep.mubr.bf16.mxu0 %v5323
        %6073 = vmatmul.mubr.bf16.gmra.mrb[0].mxu0 %v5306
        %v6074 = vpop.f32.mrb[0].mxu0
        %v6075 = vadd.f32 0.0, %v6074
        %v6076 = vpop.f32.mrb[0].mxu0
        %v6077 = vpop.f32.mrb[0].mxu0
        %v6078 = vadd.f32 0.0, %v6077
        %v6079 = vpop.f32.mrb[0].mxu0
        %6080 = vdwg.mxu0
        %6081 = vmatprep.subr.bf16.mxu0 0
        %6082 = vmatpush1.bf16.msra.mxu0 %v5792
        %6083 = vmatprep.subr.bf16.mxu0 0
        %6084 = vmatpush1.bf16.msra.mxu0 %v5793
        %6085 = vmatprep.subr.bf16.mxu0 0
        %6086 = vmatpush1.bf16.msra.mxu0 %v5794
        %6087 = vmatprep.subr.bf16.mxu0 0
        %6088 = vmatpush1.bf16.msra.mxu0 %v5795
        %6089 = vmatprep.subr.bf16.mxu0 0
        %6090 = vmatpush1.bf16.msra.mxu0 %v5796
        %6091 = vmatprep.subr.bf16.mxu0 0
        %6092 = vmatpush1.bf16.msra.mxu0 %v5797
        %6093 = vmatprep.subr.bf16.mxu0 0
        %6094 = vmatpush1.bf16.msra.mxu0 %v5798
        %6095 = vmatprep.subr.bf16.mxu0 0
        %6096 = vmatpush1.bf16.msra.mxu0 %v5799
        %6097 = vmatprep.subr.bf16.mxu0 0
        %6098 = vmatpush1.bf16.msra.mxu0 %v5800
        %6099 = vmatprep.subr.bf16.mxu0 0
        %6100 = vmatpush1.bf16.msra.mxu0 %v5801
        %6101 = vmatprep.subr.bf16.mxu0 0
        %6102 = vmatpush1.bf16.msra.mxu0 %v5802
        %6103 = vmatprep.subr.bf16.mxu0 0
        %6104 = vmatpush1.bf16.msra.mxu0 %v5803
        %6105 = vmatprep.subr.bf16.mxu0 0
        %6106 = vmatpush1.bf16.msra.mxu0 %v5804
        %6107 = vmatprep.subr.bf16.mxu0 0
        %6108 = vmatpush1.bf16.msra.mxu0 %v5805
        %6109 = vmatprep.subr.bf16.mxu0 0
        %6110 = vmatpush1.bf16.msra.mxu0 %v5806
        %6111 = vmatprep.subr.bf16.mxu0 0
        %6112 = vmatpush1.bf16.msra.mxu0 %v5807
        %6113 = vmatprep.mubr.bf16.mxu0 %v5292
        %6114 = vmatmul.mubr.bf16.gmra.mrb[0].mxu0 %v5325
        %v6115 = vpop.f32.mrb[0].mxu0
        %v6116 = vadd.f32 %v5955, %v6115
        %v6117 = vpop.f32.mrb[0].mxu0
        %v6118 = vpop.f32.mrb[0].mxu0
        %v6119 = vadd.f32 %v5958, %v6118
        %v6120 = vpop.f32.mrb[0].mxu0
        %6121 = vmatprep.mubr.bf16.mxu0 %v5293
        %6122 = vmatmul.mubr.bf16.gmra.mrb[0].mxu0 %v5326
        %v6123 = vpop.f32.mrb[0].mxu0
        %v6124 = vadd.f32 %v5963, %v6123
        %v6125 = vpop.f32.mrb[0].mxu0
        %v6126 = vpop.f32.mrb[0].mxu0
        %v6127 = vadd.f32 %v5966, %v6126
        %v6128 = vpop.f32.mrb[0].mxu0
        %6129 = vmatprep.mubr.bf16.mxu0 %v5294
        %6130 = vmatmul.mubr.bf16.gmra.mrb[0].mxu0 %v5327
        %v6131 = vpop.f32.mrb[0].mxu0
        %v6132 = vadd.f32 %v5971, %v6131
        %v6133 = vpop.f32.mrb[0].mxu0
        %v6134 = vpop.f32.mrb[0].mxu0
        %v6135 = vadd.f32 %v5974, %v6134
        %v6136 = vpop.f32.mrb[0].mxu0
        %6137 = vmatprep.mubr.bf16.mxu0 %v5295
        %6138 = vmatmul.mubr.bf16.gmra.mrb[0].mxu0 %v5328
        %v6139 = vpop.f32.mrb[0].mxu0
        %v6140 = vadd.f32 %v5979, %v6139
        %v6141 = vpop.f32.mrb[0].mxu0
        %v6142 = vpop.f32.mrb[0].mxu0
        %v6143 = vadd.f32 %v5982, %v6142
        %v6144 = vpop.f32.mrb[0].mxu0
        %6145 = vmatprep.mubr.bf16.mxu0 %v5296
        %6146 = vmatmul.mubr.bf16.gmra.mrb[0].mxu0 %v5329
        %v6147 = vpop.f32.mrb[0].mxu0
        %v6148 = vadd.f32 %v5987, %v6147
        %v6149 = vpop.f32.mrb[0].mxu0
        %v6150 = vpop.f32.mrb[0].mxu0
        %v6151 = vadd.f32 %v5990, %v6150
        %v6152 = vpop.f32.mrb[0].mxu0
        %6153 = vmatprep.mubr.bf16.mxu0 %v5297
        %6154 = vmatmul.mubr.bf16.gmra.mrb[0].mxu0 %v5330
        %v6155 = vpop.f32.mrb[0].mxu0
        %v6156 = vadd.f32 %v5995, %v6155
        %v6157 = vpop.f32.mrb[0].mxu0
        %v6158 = vpop.f32.mrb[0].mxu0
        %v6159 = vadd.f32 %v5998, %v6158
        %v6160 = vpop.f32.mrb[0].mxu0
        %6161 = vmatprep.mubr.bf16.mxu0 %v5298
        %6162 = vmatmul.mubr.bf16.gmra.mrb[0].mxu0 %v5331
        %v6163 = vpop.f32.mrb[0].mxu0
        %v6164 = vadd.f32 %v6003, %v6163
        %v6165 = vpop.f32.mrb[0].mxu0
        %v6166 = vpop.f32.mrb[0].mxu0
        %v6167 = vadd.f32 %v6006, %v6166
        %v6168 = vpop.f32.mrb[0].mxu0
        %6169 = vmatprep.mubr.bf16.mxu0 %v5299
        %6170 = vmatmul.mubr.bf16.gmra.mrb[0].mxu0 %v5332
        %v6171 = vpop.f32.mrb[0].mxu0
        %v6172 = vadd.f32 %v6011, %v6171
        %v6173 = vpop.f32.mrb[0].mxu0
        %v6174 = vpop.f32.mrb[0].mxu0
        %v6175 = vadd.f32 %v6014, %v6174
        %v6176 = vpop.f32.mrb[0].mxu0
        %6177 = vmatprep.mubr.bf16.mxu0 %v5300
        %6178 = vmatmul.mubr.bf16.gmra.mrb[0].mxu0 %v5333
        %v6179 = vpop.f32.mrb[0].mxu0
        %v6180 = vadd.f32 %v6019, %v6179
        %v6181 = vpop.f32.mrb[0].mxu0
        %v6182 = vpop.f32.mrb[0].mxu0
        %v6183 = vadd.f32 %v6022, %v6182
        %v6184 = vpop.f32.mrb[0].mxu0
        %6185 = vmatprep.mubr.bf16.mxu0 %v5301
        %6186 = vmatmul.mubr.bf16.gmra.mrb[0].mxu0 %v5334
        %v6187 = vpop.f32.mrb[0].mxu0
        %v6188 = vadd.f32 %v6027, %v6187
        %v6189 = vpop.f32.mrb[0].mxu0
        %v6190 = vpop.f32.mrb[0].mxu0
        %v6191 = vadd.f32 %v6030, %v6190
        %v6192 = vpop.f32.mrb[0].mxu0
        %6193 = vmatprep.mubr.bf16.mxu0 %v5302
        %6194 = vmatmul.mubr.bf16.gmra.mrb[0].mxu0 %v5335
        %v6195 = vpop.f32.mrb[0].mxu0
        %v6196 = vadd.f32 %v6035, %v6195
        %v6197 = vpop.f32.mrb[0].mxu0
        %v6198 = vpop.f32.mrb[0].mxu0
        %v6199 = vadd.f32 %v6038, %v6198
        %v6200 = vpop.f32.mrb[0].mxu0
        %6201 = vmatprep.mubr.bf16.mxu0 %v5303
        %6202 = vmatmul.mubr.bf16.gmra.mrb[0].mxu0 %v5336
        %v6203 = vpop.f32.mrb[0].mxu0
        %v6204 = vadd.f32 %v6043, %v6203
        %v6205 = vpop.f32.mrb[0].mxu0
        %v6206 = vpop.f32.mrb[0].mxu0
        %v6207 = vadd.f32 %v6046, %v6206
        %v6208 = vpop.f32.mrb[0].mxu0
        %6209 = vmatprep.mubr.bf16.mxu0 %v5304
        %6210 = vmatmul.mubr.bf16.gmra.mrb[0].mxu0 %v5337
        %v6211 = vpop.f32.mrb[0].mxu0
        %v6212 = vadd.f32 %v6051, %v6211
        %v6213 = vpop.f32.mrb[0].mxu0
        %v6214 = vpop.f32.mrb[0].mxu0
        %v6215 = vadd.f32 %v6054, %v6214
        %v6216 = vpop.f32.mrb[0].mxu0
        %6217 = vmatprep.mubr.bf16.mxu0 %v5305
        %6218 = vmatmul.mubr.bf16.gmra.mrb[0].mxu0 %v5338
        %v6219 = vpop.f32.mrb[0].mxu0
        %v6220 = vadd.f32 %v6059, %v6219
        %v6221 = vpop.f32.mrb[0].mxu0
        %v6222 = vpop.f32.mrb[0].mxu0
        %v6223 = vadd.f32 %v6062, %v6222
        %v6224 = vpop.f32.mrb[0].mxu0
        %6225 = vmatprep.mubr.bf16.mxu0 %v5306
        %6226 = vmatmul.mubr.bf16.gmra.mrb[0].mxu0 %v5339
        %v6227 = vpop.f32.mrb[0].mxu0
        %v6228 = vadd.f32 %v6067, %v6227
        %v6229 = vpop.f32.mrb[0].mxu0
        %v6230 = vpop.f32.mrb[0].mxu0
        %v6231 = vadd.f32 %v6070, %v6230
        %v6232 = vpop.f32.mrb[0].mxu0
        %6233 = vmatprep.mubr.bf16.mxu0 %v5307
        %6234 = vmatmul.mubr.bf16.gmra.mrb[0].mxu0 %v5340
        %v6235 = vpop.f32.mrb[0].mxu0
        %v6236 = vadd.f32 %v6075, %v6235
        %v6237 = vpop.f32.mrb[0].mxu0
        %v6238 = vpop.f32.mrb[0].mxu0
        %v6239 = vadd.f32 %v6078, %v6238
        %v6240 = vpop.f32.mrb[0].mxu0
        %6241 = vdwg.mxu0
        %6242 = vmatprep.subr.bf16.mxu0 0
        %6243 = vmatpush1.bf16.msra.mxu0 %v5808
        %6244 = vmatprep.subr.bf16.mxu0 0
        %6245 = vmatpush1.bf16.msra.mxu0 %v5809
        %6246 = vmatprep.subr.bf16.mxu0 0
        %6247 = vmatpush1.bf16.msra.mxu0 %v5810
        %6248 = vmatprep.subr.bf16.mxu0 0
        %6249 = vmatpush1.bf16.msra.mxu0 %v5811
        %6250 = vmatprep.subr.bf16.mxu0 0
        %6251 = vmatpush1.bf16.msra.mxu0 %v5812
        %6252 = vmatprep.subr.bf16.mxu0 0
        %6253 = vmatpush1.bf16.msra.mxu0 %v5813
        %6254 = vmatprep.subr.bf16.mxu0 0
        %6255 = vmatpush1.bf16.msra.mxu0 %v5814
        %6256 = vmatprep.subr.bf16.mxu0 0
        %6257 = vmatpush1.bf16.msra.mxu0 %v5815
        %6258 = vmatprep.subr.bf16.mxu0 0
        %6259 = vmatpush1.bf16.msra.mxu0 %v5816
        %6260 = vmatprep.subr.bf16.mxu0 0
        %6261 = vmatpush1.bf16.msra.mxu0 %v5817
        %6262 = vmatprep.subr.bf16.mxu0 0
        %6263 = vmatpush1.bf16.msra.mxu0 %v5818
        %6264 = vmatprep.subr.bf16.mxu0 0
        %6265 = vmatpush1.bf16.msra.mxu0 %v5819
        %6266 = vmatprep.subr.bf16.mxu0 0
        %6267 = vmatpush1.bf16.msra.mxu0 %v5820
        %6268 = vmatprep.subr.bf16.mxu0 0
        %6269 = vmatpush1.bf16.msra.mxu0 %v5821
        %6270 = vmatprep.subr.bf16.mxu0 0
        %6271 = vmatpush1.bf16.msra.mxu0 %v5822
        %6272 = vmatprep.subr.bf16.mxu0 0
        %6273 = vmatpush1.bf16.msra.mxu0 %v5823
        %6274 = vmatprep.mubr.bf16.mxu0 %v5326
        %6275 = vmatmul.mubr.bf16.gmra.mrb[0].mxu0 %v5310
        %v6276 = vpop.f32.mrb[0].mxu0
        %v6277 = vadd.f32 %v6116, %v6276
        %v6278 = vpop.f32.mrb[0].mxu0
        %v6279 = vpop.f32.mrb[0].mxu0
        %v6280 = vadd.f32 %v6119, %v6279
        %v6281 = vpop.f32.mrb[0].mxu0
        %6282 = vmatprep.mubr.bf16.mxu0 %v5327
        %6283 = vmatmul.mubr.bf16.gmra.mrb[0].mxu0 %v5309
        %v6284 = vpop.f32.mrb[0].mxu0
        %v6285 = vadd.f32 %v6124, %v6284
        %v6286 = vpop.f32.mrb[0].mxu0
        %v6287 = vpop.f32.mrb[0].mxu0
        %v6288 = vadd.f32 %v6127, %v6287
        %v6289 = vpop.f32.mrb[0].mxu0
        %6290 = vmatprep.mubr.bf16.mxu0 %v5328
        %6291 = vmatmul.mubr.bf16.gmra.mrb[0].mxu0 %v5311
        %v6292 = vpop.f32.mrb[0].mxu0
        %v6293 = vadd.f32 %v6132, %v6292
        %v6294 = vpop.f32.mrb[0].mxu0
        %v6295 = vpop.f32.mrb[0].mxu0
        %v6296 = vadd.f32 %v6135, %v6295
        %v6297 = vpop.f32.mrb[0].mxu0
        %6298 = vmatprep.mubr.bf16.mxu0 %v5329
        %6299 = vmatmul.mubr.bf16.gmra.mrb[0].mxu0 %v5312
        %v6300 = vpop.f32.mrb[0].mxu0
        %v6301 = vadd.f32 %v6140, %v6300
        %v6302 = vpop.f32.mrb[0].mxu0
        %v6303 = vpop.f32.mrb[0].mxu0
        %v6304 = vadd.f32 %v6143, %v6303
        %v6305 = vpop.f32.mrb[0].mxu0
        %6306 = vmatprep.mubr.bf16.mxu0 %v5330
        %6307 = vmatmul.mubr.bf16.gmra.mrb[0].mxu0 %v5313
        %v6308 = vpop.f32.mrb[0].mxu0
        %v6309 = vadd.f32 %v6148, %v6308
        %v6310 = vpop.f32.mrb[0].mxu0
        %v6311 = vpop.f32.mrb[0].mxu0
        %v6312 = vadd.f32 %v6151, %v6311
        %v6313 = vpop.f32.mrb[0].mxu0
        %6314 = vmatprep.mubr.bf16.mxu0 %v5331
        %6315 = vmatmul.mubr.bf16.gmra.mrb[0].mxu0 %v5314
        %v6316 = vpop.f32.mrb[0].mxu0
        %v6317 = vadd.f32 %v6156, %v6316
        %v6318 = vpop.f32.mrb[0].mxu0
        %v6319 = vpop.f32.mrb[0].mxu0
        %v6320 = vadd.f32 %v6159, %v6319
        %v6321 = vpop.f32.mrb[0].mxu0
        %6322 = vmatprep.mubr.bf16.mxu0 %v5332
        %6323 = vmatmul.mubr.bf16.gmra.mrb[0].mxu0 %v5315
        %v6324 = vpop.f32.mrb[0].mxu0
        %v6325 = vadd.f32 %v6164, %v6324
        %v6326 = vpop.f32.mrb[0].mxu0
        %v6327 = vpop.f32.mrb[0].mxu0
        %v6328 = vadd.f32 %v6167, %v6327
        %v6329 = vpop.f32.mrb[0].mxu0
        %6330 = vmatprep.mubr.bf16.mxu0 %v5333
        %6331 = vmatmul.mubr.bf16.gmra.mrb[0].mxu0 %v5316
        %v6332 = vpop.f32.mrb[0].mxu0
        %v6333 = vadd.f32 %v6172, %v6332
        %v6334 = vpop.f32.mrb[0].mxu0
        %v6335 = vpop.f32.mrb[0].mxu0
        %v6336 = vadd.f32 %v6175, %v6335
        %v6337 = vpop.f32.mrb[0].mxu0
        %6338 = vmatprep.mubr.bf16.mxu0 %v5334
        %6339 = vmatmul.mubr.bf16.gmra.mrb[0].mxu0 %v5317
        %v6340 = vpop.f32.mrb[0].mxu0
        %v6341 = vadd.f32 %v6180, %v6340
        %v6342 = vpop.f32.mrb[0].mxu0
        %v6343 = vpop.f32.mrb[0].mxu0
        %v6344 = vadd.f32 %v6183, %v6343
        %v6345 = vpop.f32.mrb[0].mxu0
        %6346 = vmatprep.mubr.bf16.mxu0 %v5335
        %6347 = vmatmul.mubr.bf16.gmra.mrb[0].mxu0 %v5318
        %v6348 = vpop.f32.mrb[0].mxu0
        %v6349 = vadd.f32 %v6188, %v6348
        %v6350 = vpop.f32.mrb[0].mxu0
        %v6351 = vpop.f32.mrb[0].mxu0
        %v6352 = vadd.f32 %v6191, %v6351
        %v6353 = vpop.f32.mrb[0].mxu0
        %6354 = vmatprep.mubr.bf16.mxu0 %v5336
        %6355 = vmatmul.mubr.bf16.gmra.mrb[0].mxu0 %v5319
        %v6356 = vpop.f32.mrb[0].mxu0
        %v6357 = vadd.f32 %v6196, %v6356
        %v6358 = vpop.f32.mrb[0].mxu0
        %v6359 = vpop.f32.mrb[0].mxu0
        %v6360 = vadd.f32 %v6199, %v6359
        %v6361 = vpop.f32.mrb[0].mxu0
        %6362 = vmatprep.mubr.bf16.mxu0 %v5337
        %6363 = vmatmul.mubr.bf16.gmra.mrb[0].mxu0 %v5320
        %v6364 = vpop.f32.mrb[0].mxu0
        %v6365 = vadd.f32 %v6204, %v6364
        %v6366 = vpop.f32.mrb[0].mxu0
        %v6367 = vpop.f32.mrb[0].mxu0
        %v6368 = vadd.f32 %v6207, %v6367
        %v6369 = vpop.f32.mrb[0].mxu0
        %6370 = vmatprep.mubr.bf16.mxu0 %v5338
        %6371 = vmatmul.mubr.bf16.gmra.mrb[0].mxu0 %v5321
        %v6372 = vpop.f32.mrb[0].mxu0
        %v6373 = vadd.f32 %v6212, %v6372
        %v6374 = vpop.f32.mrb[0].mxu0
        %v6375 = vpop.f32.mrb[0].mxu0
        %v6376 = vadd.f32 %v6215, %v6375
        %v6377 = vpop.f32.mrb[0].mxu0
        %6378 = vmatprep.mubr.bf16.mxu0 %v5339
        %6379 = vmatmul.mubr.bf16.gmra.mrb[0].mxu0 %v5322
        %v6380 = vpop.f32.mrb[0].mxu0
        %v6381 = vadd.f32 %v6220, %v6380
        %v6382 = vpop.f32.mrb[0].mxu0
        %v6383 = vpop.f32.mrb[0].mxu0
        %v6384 = vadd.f32 %v6223, %v6383
        %v6385 = vpop.f32.mrb[0].mxu0
        %6386 = vmatprep.mubr.bf16.mxu0 %v5340
        %6387 = vmatmul.mubr.bf16.gmra.mrb[0].mxu0 %v5323
        %v6388 = vpop.f32.mrb[0].mxu0
        %v6389 = vadd.f32 %v6228, %v6388
        %v6390 = vpop.f32.mrb[0].mxu0
        %v6391 = vpop.f32.mrb[0].mxu0
        %v6392 = vadd.f32 %v6231, %v6391
        %v6393 = vpop.f32.mrb[0].mxu0
        %6394 = vmatprep.mubr.bf16.mxu0 %v5341
        %6395 = vmatmul.mubr.bf16.gmra.mrb[0].mxu0 %v5324
        %v6396 = vpop.f32.mrb[0].mxu0
        %v6397 = vadd.f32 %v6236, %v6396
        %v6398 = vpop.f32.mrb[0].mxu0
        %v6399 = vpop.f32.mrb[0].mxu0
        %v6400 = vadd.f32 %v6239, %v6399
        %v6401 = vpop.f32.mrb[0].mxu0
        %6402 = vdwg.mxu0
        %6403 = vmatprep.subr.bf16.mxu0 0
        %6404 = vmatpush1.bf16.msra.mxu0 %v5824
        %6405 = vmatprep.subr.bf16.mxu0 0
        %6406 = vmatpush1.bf16.msra.mxu0 %v5825
        %6407 = vmatprep.subr.bf16.mxu0 0
        %6408 = vmatpush1.bf16.msra.mxu0 %v5826
        %6409 = vmatprep.subr.bf16.mxu0 0
        %6410 = vmatpush1.bf16.msra.mxu0 %v5827
        %6411 = vmatprep.subr.bf16.mxu0 0
        %6412 = vmatpush1.bf16.msra.mxu0 %v5828
        %6413 = vmatprep.subr.bf16.mxu0 0
        %6414 = vmatpush1.bf16.msra.mxu0 %v5829
        %6415 = vmatprep.subr.bf16.mxu0 0
        %6416 = vmatpush1.bf16.msra.mxu0 %v5830
        %6417 = vmatprep.subr.bf16.mxu0 0
        %6418 = vmatpush1.bf16.msra.mxu0 %v5831
        %6419 = vmatprep.subr.bf16.mxu0 0
        %6420 = vmatpush1.bf16.msra.mxu0 %v5832
        %6421 = vmatprep.subr.bf16.mxu0 0
        %6422 = vmatpush1.bf16.msra.mxu0 %v5833
        %6423 = vmatprep.subr.bf16.mxu0 0
        %6424 = vmatpush1.bf16.msra.mxu0 %v5834
        %6425 = vmatprep.subr.bf16.mxu0 0
        %6426 = vmatpush1.bf16.msra.mxu0 %v5835
        %6427 = vmatprep.subr.bf16.mxu0 0
        %6428 = vmatpush1.bf16.msra.mxu0 %v5836
        %6429 = vmatprep.subr.bf16.mxu0 0
        %6430 = vmatpush1.bf16.msra.mxu0 %v5837
        %6431 = vmatprep.subr.bf16.mxu0 0
        %6432 = vmatpush1.bf16.msra.mxu0 %v5838
        %6433 = vmatprep.subr.bf16.mxu0 0
        %6434 = vmatpush1.bf16.msra.mxu0 %v5839
        %6435 = vmatprep.mubr.bf16.mxu0 %v5309
        %6436 = vmatmul.mubr.bf16.gmra.mrb[0].mxu0 %v5293
        %v6437 = vpop.f32.mrb[0].mxu0
        %v6438 = vadd.f32 %v6277, %v6437
        %v6439 = vpop.f32.mrb[0].mxu0
        %v6440 = vpop.f32.mrb[0].mxu0
        %v6441 = vadd.f32 %v6280, %v6440
        %v6442 = vpop.f32.mrb[0].mxu0
        %6443 = vmatprep.mubr.bf16.mxu0 %v5311
        %6444 = vmatmul.mubr.bf16.gmra.mrb[0].mxu0 %v5294
        %v6445 = vpop.f32.mrb[0].mxu0
        %v6446 = vadd.f32 %v6285, %v6445
        %v6447 = vpop.f32.mrb[0].mxu0
        %v6448 = vpop.f32.mrb[0].mxu0
        %v6449 = vadd.f32 %v6288, %v6448
        %v6450 = vpop.f32.mrb[0].mxu0
        %6451 = vmatprep.mubr.bf16.mxu0 %v5312
        %6452 = vmatmul.mubr.bf16.gmra.mrb[0].mxu0 %v5295
        %v6453 = vpop.f32.mrb[0].mxu0
        %v6454 = vadd.f32 %v6293, %v6453
        %v6455 = vpop.f32.mrb[0].mxu0
        %v6456 = vpop.f32.mrb[0].mxu0
        %v6457 = vadd.f32 %v6296, %v6456
        %v6458 = vpop.f32.mrb[0].mxu0
        %6459 = vmatprep.mubr.bf16.mxu0 %v5313
        %6460 = vmatmul.mubr.bf16.gmra.mrb[0].mxu0 %v5296
        %v6461 = vpop.f32.mrb[0].mxu0
        %v6462 = vadd.f32 %v6301, %v6461
        %v6463 = vpop.f32.mrb[0].mxu0
        %v6464 = vpop.f32.mrb[0].mxu0
        %v6465 = vadd.f32 %v6304, %v6464
        %v6466 = vpop.f32.mrb[0].mxu0
        %6467 = vmatprep.mubr.bf16.mxu0 %v5314
        %6468 = vmatmul.mubr.bf16.gmra.mrb[0].mxu0 %v5297
        %v6469 = vpop.f32.mrb[0].mxu0
        %v6470 = vadd.f32 %v6309, %v6469
        %v6471 = vpop.f32.mrb[0].mxu0
        %v6472 = vpop.f32.mrb[0].mxu0
        %v6473 = vadd.f32 %v6312, %v6472
        %v6474 = vpop.f32.mrb[0].mxu0
        %6475 = vmatprep.mubr.bf16.mxu0 %v5315
        %6476 = vmatmul.mubr.bf16.gmra.mrb[0].mxu0 %v5298
        %v6477 = vpop.f32.mrb[0].mxu0
        %v6478 = vadd.f32 %v6317, %v6477
        %v6479 = vpop.f32.mrb[0].mxu0
        %v6480 = vpop.f32.mrb[0].mxu0
        %v6481 = vadd.f32 %v6320, %v6480
        %v6482 = vpop.f32.mrb[0].mxu0
        %6483 = vmatprep.mubr.bf16.mxu0 %v5316
        %6484 = vmatmul.mubr.bf16.gmra.mrb[0].mxu0 %v5299
        %v6485 = vpop.f32.mrb[0].mxu0
        %v6486 = vadd.f32 %v6325, %v6485
        %v6487 = vpop.f32.mrb[0].mxu0
        %v6488 = vpop.f32.mrb[0].mxu0
        %v6489 = vadd.f32 %v6328, %v6488
        %v6490 = vpop.f32.mrb[0].mxu0
        %6491 = vmatprep.mubr.bf16.mxu0 %v5317
        %6492 = vmatmul.mubr.bf16.gmra.mrb[0].mxu0 %v5300
        %v6493 = vpop.f32.mrb[0].mxu0
        %v6494 = vadd.f32 %v6333, %v6493
        %v6495 = vpop.f32.mrb[0].mxu0
        %v6496 = vpop.f32.mrb[0].mxu0
        %v6497 = vadd.f32 %v6336, %v6496
        %v6498 = vpop.f32.mrb[0].mxu0
        %6499 = vmatprep.mubr.bf16.mxu0 %v5318
        %6500 = vmatmul.mubr.bf16.gmra.mrb[0].mxu0 %v5301
        %v6501 = vpop.f32.mrb[0].mxu0
        %v6502 = vadd.f32 %v6341, %v6501
        %v6503 = vpop.f32.mrb[0].mxu0
        %v6504 = vpop.f32.mrb[0].mxu0
        %v6505 = vadd.f32 %v6344, %v6504
        %v6506 = vpop.f32.mrb[0].mxu0
        %6507 = vmatprep.mubr.bf16.mxu0 %v5319
        %6508 = vmatmul.mubr.bf16.gmra.mrb[0].mxu0 %v5302
        %v6509 = vpop.f32.mrb[0].mxu0
        %v6510 = vadd.f32 %v6349, %v6509
        %v6511 = vpop.f32.mrb[0].mxu0
        %v6512 = vpop.f32.mrb[0].mxu0
        %v6513 = vadd.f32 %v6352, %v6512
        %v6514 = vpop.f32.mrb[0].mxu0
        %6515 = vmatprep.mubr.bf16.mxu0 %v5320
        %6516 = vmatmul.mubr.bf16.gmra.mrb[0].mxu0 %v5303
        %v6517 = vpop.f32.mrb[0].mxu0
        %v6518 = vadd.f32 %v6357, %v6517
        %v6519 = vpop.f32.mrb[0].mxu0
        %v6520 = vpop.f32.mrb[0].mxu0
        %v6521 = vadd.f32 %v6360, %v6520
        %v6522 = vpop.f32.mrb[0].mxu0
        %6523 = vmatprep.mubr.bf16.mxu0 %v5321
        %6524 = vmatmul.mubr.bf16.gmra.mrb[0].mxu0 %v5304
        %v6525 = vpop.f32.mrb[0].mxu0
        %v6526 = vadd.f32 %v6365, %v6525
        %v6527 = vpop.f32.mrb[0].mxu0
        %v6528 = vpop.f32.mrb[0].mxu0
        %v6529 = vadd.f32 %v6368, %v6528
        %v6530 = vpop.f32.mrb[0].mxu0
        %6531 = vmatprep.mubr.bf16.mxu0 %v5322
        %6532 = vmatmul.mubr.bf16.gmra.mrb[0].mxu0 %v5305
        %v6533 = vpop.f32.mrb[0].mxu0
        %v6534 = vadd.f32 %v6373, %v6533
        %v6535 = vpop.f32.mrb[0].mxu0
        %v6536 = vpop.f32.mrb[0].mxu0
        %v6537 = vadd.f32 %v6376, %v6536
        %v6538 = vpop.f32.mrb[0].mxu0
        %6539 = vmatprep.mubr.bf16.mxu0 %v5323
        %6540 = vmatmul.mubr.bf16.gmra.mrb[0].mxu0 %v5306
        %v6541 = vpop.f32.mrb[0].mxu0
        %v6542 = vadd.f32 %v6381, %v6541
        %v6543 = vpop.f32.mrb[0].mxu0
        %v6544 = vpop.f32.mrb[0].mxu0
        %v6545 = vadd.f32 %v6384, %v6544
        %v6546 = vpop.f32.mrb[0].mxu0
        %6547 = vmatprep.mubr.bf16.mxu0 %v5324
        %6548 = vmatmul.mubr.bf16.gmra.mrb[0].mxu0 %v5307
        %v6549 = vpop.f32.mrb[0].mxu0
        %v6550 = vadd.f32 %v6389, %v6549
        %v6551 = vpop.f32.mrb[0].mxu0
        %v6552 = vpop.f32.mrb[0].mxu0
        %v6553 = vadd.f32 %v6392, %v6552
        %v6554 = vpop.f32.mrb[0].mxu0
        %6555 = vmatprep.mubr.bf16.mxu0 %v5323
        %6556 = vmatmul.mubr.bf16.gmra.mrb[0].mxu0 %v5308
        %v6557 = vpop.f32.mrb[0].mxu0
        %v6558 = vadd.f32 %v6397, %v6557
        %v6559 = vpop.f32.mrb[0].mxu0
        %v6560 = vpop.f32.mrb[0].mxu0
        %v6561 = vadd.f32 %v6400, %v6560
        %v6562 = vpop.f32.mrb[0].mxu0
        %6563 = vdwg.mxu0
        %6564 = vmatprep.subr.bf16.mxu0 0
        %6565 = vmatpush1.bf16.msra.mxu0 %v5840
        %6566 = vmatprep.subr.bf16.mxu0 0
        %6567 = vmatpush1.bf16.msra.mxu0 %v5841
        %6568 = vmatprep.subr.bf16.mxu0 0
        %6569 = vmatpush1.bf16.msra.mxu0 %v5842
        %6570 = vmatprep.subr.bf16.mxu0 0
        %6571 = vmatpush1.bf16.msra.mxu0 %v5843
        %6572 = vmatprep.subr.bf16.mxu0 0
        %6573 = vmatpush1.bf16.msra.mxu0 %v5844
        %6574 = vmatprep.subr.bf16.mxu0 0
        %6575 = vmatpush1.bf16.msra.mxu0 %v5845
        %6576 = vmatprep.subr.bf16.mxu0 0
        %6577 = vmatpush1.bf16.msra.mxu0 %v5846
        %6578 = vmatprep.subr.bf16.mxu0 0
        %6579 = vmatpush1.bf16.msra.mxu0 %v5847
        %6580 = vmatprep.subr.bf16.mxu0 0
        %6581 = vmatpush1.bf16.msra.mxu0 0
        %6582 = vmatprep.subr.bf16.mxu0 0
        %6583 = vmatpush1.bf16.msra.mxu0 0
        %6584 = vmatprep.subr.bf16.mxu0 0
        %6585 = vmatpush1.bf16.msra.mxu0 0
        %6586 = vmatprep.subr.bf16.mxu0 0
        %6587 = vmatpush1.bf16.msra.mxu0 0
        %6588 = vmatprep.subr.bf16.mxu0 0
        %6589 = vmatpush1.bf16.msra.mxu0 0
        %6590 = vmatprep.subr.bf16.mxu0 0
        %6591 = vmatpush1.bf16.msra.mxu0 0
        %6592 = vmatprep.subr.bf16.mxu0 0
        %6593 = vmatpush1.bf16.msra.mxu0 0
        %6594 = vmatprep.subr.bf16.mxu0 0
        %6595 = vmatpush1.bf16.msra.mxu0 0
        %6596 = vmatprep.mubr.bf16.mxu0 0
        %6597 = vmatmul.mubr.bf16.gmra.mrb[0].mxu0 %v5327
        %v6598 = vpop.f32.mrb[0].mxu0
        %v6599 = vadd.f32 %v6438, %v6598
        %v6600 = vpop.f32.mrb[0].mxu0
        %v6601 = vpop.f32.mrb[0].mxu0
        %v6602 = vadd.f32 %v6441, %v6601
        %v6603 = vpop.f32.mrb[0].mxu0
        %6604 = vmatprep.mubr.bf16.mxu0 0
        %6605 = vmatmul.mubr.bf16.gmra.mrb[0].mxu0 %v5328
        %v6606 = vpop.f32.mrb[0].mxu0
        %v6607 = vadd.f32 %v6446, %v6606
        %v6608 = vpop.f32.mrb[0].mxu0
        %v6609 = vpop.f32.mrb[0].mxu0
        %v6610 = vadd.f32 %v6449, %v6609
        %v6611 = vpop.f32.mrb[0].mxu0
        %6612 = vmatprep.mubr.bf16.mxu0 0
        %6613 = vmatmul.mubr.bf16.gmra.mrb[0].mxu0 %v5329
        %v6614 = vpop.f32.mrb[0].mxu0
        %v6615 = vadd.f32 %v6454, %v6614
        %v6616 = vpop.f32.mrb[0].mxu0
        %v6617 = vpop.f32.mrb[0].mxu0
        %v6618 = vadd.f32 %v6457, %v6617
        %v6619 = vpop.f32.mrb[0].mxu0
        %6620 = vmatprep.mubr.bf16.mxu0 0
        %6621 = vmatmul.mubr.bf16.gmra.mrb[0].mxu0 %v5330
        %v6622 = vpop.f32.mrb[0].mxu0
        %v6623 = vadd.f32 %v6462, %v6622
        %v6624 = vpop.f32.mrb[0].mxu0
        %v6625 = vpop.f32.mrb[0].mxu0
        %v6626 = vadd.f32 %v6465, %v6625
        %v6627 = vpop.f32.mrb[0].mxu0
        %6628 = vmatprep.mubr.bf16.mxu0 0
        %6629 = vmatmul.mubr.bf16.gmra.mrb[0].mxu0 %v5331
        %v6630 = vpop.f32.mrb[0].mxu0
        %v6631 = vadd.f32 %v6470, %v6630
        %v6632 = vpop.f32.mrb[0].mxu0
        %v6633 = vpop.f32.mrb[0].mxu0
        %v6634 = vadd.f32 %v6473, %v6633
        %v6635 = vpop.f32.mrb[0].mxu0
        %6636 = vmatprep.mubr.bf16.mxu0 0
        %6637 = vmatmul.mubr.bf16.gmra.mrb[0].mxu0 %v5332
        %v6638 = vpop.f32.mrb[0].mxu0
        %v6639 = vadd.f32 %v6478, %v6638
        %v6640 = vpop.f32.mrb[0].mxu0
        %v6641 = vpop.f32.mrb[0].mxu0
        %v6642 = vadd.f32 %v6481, %v6641
        %v6643 = vpop.f32.mrb[0].mxu0
        %6644 = vmatprep.mubr.bf16.mxu0 0
        %6645 = vmatmul.mubr.bf16.gmra.mrb[0].mxu0 %v5333
        %v6646 = vpop.f32.mrb[0].mxu0
        %v6647 = vadd.f32 %v6486, %v6646
        %v6648 = vpop.f32.mrb[0].mxu0
        %v6649 = vpop.f32.mrb[0].mxu0
        %v6650 = vadd.f32 %v6489, %v6649
        %v6651 = vpop.f32.mrb[0].mxu0
        %6652 = vmatprep.mubr.bf16.mxu0 0
        %6653 = vmatmul.mubr.bf16.gmra.mrb[0].mxu0 %v5334
        %v6654 = vpop.f32.mrb[0].mxu0
        %v6655 = vadd.f32 %v6494, %v6654
        %v6656 = vpop.f32.mrb[0].mxu0
        %v6657 = vpop.f32.mrb[0].mxu0
        %v6658 = vadd.f32 %v6497, %v6657
        %v6659 = vpop.f32.mrb[0].mxu0
        %6660 = vmatprep.mubr.bf16.mxu0 0
        %6661 = vmatmul.mubr.bf16.gmra.mrb[0].mxu0 %v5335
        %v6662 = vpop.f32.mrb[0].mxu0
        %v6663 = vadd.f32 %v6502, %v6662
        %v6664 = vpop.f32.mrb[0].mxu0
        %v6665 = vpop.f32.mrb[0].mxu0
        %v6666 = vadd.f32 %v6505, %v6665
        %v6667 = vpop.f32.mrb[0].mxu0
        %6668 = vmatprep.mubr.bf16.mxu0 0
        %6669 = vmatmul.mubr.bf16.gmra.mrb[0].mxu0 %v5336
        %v6670 = vpop.f32.mrb[0].mxu0
        %v6671 = vadd.f32 %v6510, %v6670
        %v6672 = vpop.f32.mrb[0].mxu0
        %v6673 = vpop.f32.mrb[0].mxu0
        %v6674 = vadd.f32 %v6513, %v6673
        %v6675 = vpop.f32.mrb[0].mxu0
        %6676 = vmatprep.mubr.bf16.mxu0 0
        %6677 = vmatmul.mubr.bf16.gmra.mrb[0].mxu0 %v5337
        %v6678 = vpop.f32.mrb[0].mxu0
        %v6679 = vadd.f32 %v6518, %v6678
        %v6680 = vpop.f32.mrb[0].mxu0
        %v6681 = vpop.f32.mrb[0].mxu0
        %v6682 = vadd.f32 %v6521, %v6681
        %v6683 = vpop.f32.mrb[0].mxu0
        %6684 = vmatprep.mubr.bf16.mxu0 0
        %6685 = vmatmul.mubr.bf16.gmra.mrb[0].mxu0 %v5338
        %v6686 = vpop.f32.mrb[0].mxu0
        %v6687 = vadd.f32 %v6526, %v6686
        %v6688 = vpop.f32.mrb[0].mxu0
        %v6689 = vpop.f32.mrb[0].mxu0
        %v6690 = vadd.f32 %v6529, %v6689
        %v6691 = vpop.f32.mrb[0].mxu0
        %6692 = vmatprep.mubr.bf16.mxu0 0
        %6693 = vmatmul.mubr.bf16.gmra.mrb[0].mxu0 %v5339
        %v6694 = vpop.f32.mrb[0].mxu0
        %v6695 = vadd.f32 %v6534, %v6694
        %v6696 = vpop.f32.mrb[0].mxu0
        %v6697 = vpop.f32.mrb[0].mxu0
        %v6698 = vadd.f32 %v6537, %v6697
        %v6699 = vpop.f32.mrb[0].mxu0
        %6700 = vmatprep.mubr.bf16.mxu0 0
        %6701 = vmatmul.mubr.bf16.gmra.mrb[0].mxu0 %v5340
        %v6702 = vpop.f32.mrb[0].mxu0
        %v6703 = vadd.f32 %v6542, %v6702
        %v6704 = vpop.f32.mrb[0].mxu0
        %v6705 = vpop.f32.mrb[0].mxu0
        %v6706 = vadd.f32 %v6545, %v6705
        %v6707 = vpop.f32.mrb[0].mxu0
        %6708 = vmatprep.mubr.bf16.mxu0 0
        %6709 = vmatmul.mubr.bf16.gmra.mrb[0].mxu0 %v5341
        %v6710 = vpop.f32.mrb[0].mxu0
        %v6711 = vadd.f32 %v6550, %v6710
        %v6712 = vpop.f32.mrb[0].mxu0
        %v6713 = vpop.f32.mrb[0].mxu0
        %v6714 = vadd.f32 %v6553, %v6713
        %v6715 = vpop.f32.mrb[0].mxu0
        %6716 = vmatprep.mubr.bf16.mxu0 0
        %6717 = vmatmul.mubr.bf16.gmra.mrb[0].mxu0 %v5342
        %v6718 = vpop.f32.mrb[0].mxu0
        %v6719 = vadd.f32 %v6558, %v6718
        %v6720 = vpop.f32.mrb[0].mxu0
        %v6721 = vpop.f32.mrb[0].mxu0
        %v6722 = vadd.f32 %v6561, %v6721
        %v6723 = vpop.f32.mrb[0].mxu0
        %6724 = vdwg.mxu0
        %v6725 = vadd.f32 %v6599, %v6602
        %v6726 = vadd.f32 %v6725, %v6607
        %v6727 = vadd.f32 %v6726, %v6610
        %v6728 = vadd.f32 %v6727, %v6615
        %v6729 = vadd.f32 %v6728, %v6618
        %v6730 = vadd.f32 %v6729, %v6623
        %v6731 = vadd.f32 %v6730, %v6626
        %v6732 = vadd.f32 %v6731, %v6631
        %v6733 = vadd.f32 %v6732, %v6634
        %v6734 = vadd.f32 %v6733, %v6639
        %v6735 = vadd.f32 %v6734, %v6642
        %v6736 = vadd.f32 %v6735, %v6647
        %v6737 = vadd.f32 %v6736, %v6650
        %v6738 = vadd.f32 %v6737, %v6655
        %v6739 = vadd.f32 %v6738, %v6658
        %v6740 = vadd.f32 %v6739, %v6663
        %v6741 = vadd.f32 %v6740, %v6666
        %v6742 = vadd.f32 %v6741, %v6671
        %v6743 = vadd.f32 %v6742, %v6674
        %v6744 = vadd.f32 %v6743, %v6679
        %v6745 = vadd.f32 %v6744, %v6682
        %v6746 = vadd.f32 %v6745, %v6687
        %v6747 = vadd.f32 %v6746, %v6690
        %v6748 = vadd.f32 %v6747, %v6695
        %v6749 = vadd.f32 %v6748, %v6698
        %v6750 = vadd.f32 %v6749, %v6703
        %v6751 = vadd.f32 %v6750, %v6706
        %v6752 = vadd.f32 %v6751, %v6711
        %v6753 = vadd.f32 %v6752, %v6714
        %v6754 = vadd.f32 %v6753, %v6719
        %v6755 = vadd.f32 %v6754, %v6722
        %v6756 = vrot.slane %v6755, 4
        %v6757 = vadd.f32 %v6755, %v6756
        %v6758 = vrot.slane %v6757, 2
        %v6759 = vadd.f32 %v6757, %v6758
        %v6760 = vrot.slane %v6759, 1
        %v6761 = vadd.f32 %v6759, %v6760
        %v6762 = vmul.f32 %v6761, 0.00390625
        %v6763 = vsub.f32 %v6599, %v6762
        %v6764 = vsub.f32 %v6602, %v6762
        %v6765 = vsub.f32 %v6607, %v6762
        %v6766 = vsub.f32 %v6610, %v6762
        %v6767 = vsub.f32 %v6615, %v6762
        %v6768 = vsub.f32 %v6618, %v6762
        %v6769 = vsub.f32 %v6623, %v6762
        %v6770 = vsub.f32 %v6626, %v6762
        %v6771 = vsub.f32 %v6631, %v6762
        %v6772 = vsub.f32 %v6634, %v6762
        %v6773 = vsub.f32 %v6639, %v6762
        %v6774 = vsub.f32 %v6642, %v6762
        %v6775 = vsub.f32 %v6647, %v6762
        %v6776 = vsub.f32 %v6650, %v6762
        %v6777 = vsub.f32 %v6655, %v6762
        %v6778 = vsub.f32 %v6658, %v6762
        %v6779 = vsub.f32 %v6663, %v6762
        %v6780 = vsub.f32 %v6666, %v6762
        %v6781 = vsub.f32 %v6671, %v6762
        %v6782 = vsub.f32 %v6674, %v6762
        %v6783 = vsub.f32 %v6679, %v6762
        %v6784 = vsub.f32 %v6682, %v6762
        %v6785 = vsub.f32 %v6687, %v6762
        %v6786 = vsub.f32 %v6690, %v6762
        %v6787 = vsub.f32 %v6695, %v6762
        %v6788 = vsub.f32 %v6698, %v6762
        %v6789 = vsub.f32 %v6703, %v6762
        %v6790 = vsub.f32 %v6706, %v6762
        %v6791 = vsub.f32 %v6711, %v6762
        %v6792 = vsub.f32 %v6714, %v6762
        %v6793 = vsub.f32 %v6719, %v6762
        %v6794 = vsub.f32 %v6722, %v6762
        %v6795 = vmul.f32 %v6763, %v6763
        %v6796 = vmul.f32 %v6764, %v6764
        %v6797 = vmul.f32 %v6765, %v6765
        %v6798 = vmul.f32 %v6766, %v6766
        %v6799 = vmul.f32 %v6767, %v6767
        %v6800 = vmul.f32 %v6768, %v6768
        %v6801 = vmul.f32 %v6769, %v6769
        %v6802 = vmul.f32 %v6770, %v6770
        %v6803 = vmul.f32 %v6771, %v6771
        %v6804 = vmul.f32 %v6772, %v6772
        %v6805 = vmul.f32 %v6773, %v6773
        %v6806 = vmul.f32 %v6774, %v6774
        %v6807 = vmul.f32 %v6775, %v6775
        %v6808 = vmul.f32 %v6776, %v6776
        %v6809 = vmul.f32 %v6777, %v6777
        %v6810 = vmul.f32 %v6778, %v6778
        %v6811 = vmul.f32 %v6779, %v6779
        %v6812 = vmul.f32 %v6780, %v6780
        %v6813 = vmul.f32 %v6781, %v6781
        %v6814 = vmul.f32 %v6782, %v6782
        %v6815 = vmul.f32 %v6783, %v6783
        %v6816 = vmul.f32 %v6784, %v6784
        %v6817 = vmul.f32 %v6785, %v6785
        %v6818 = vmul.f32 %v6786, %v6786
        %v6819 = vmul.f32 %v6787, %v6787
        %v6820 = vmul.f32 %v6788, %v6788
        %v6821 = vmul.f32 %v6789, %v6789
        %v6822 = vmul.f32 %v6790, %v6790
        %v6823 = vmul.f32 %v6791, %v6791
        %v6824 = vmul.f32 %v6792, %v6792
        %v6825 = vmul.f32 %v6793, %v6793
        %v6826 = vmul.f32 %v6794, %v6794
        %v6827 = vadd.f32 %v6795, %v6796
        %v6828 = vadd.f32 %v6827, %v6797
        %v6829 = vadd.f32 %v6828, %v6798
        %v6830 = vadd.f32 %v6829, %v6799
        %v6831 = vadd.f32 %v6830, %v6800
        %v6832 = vadd.f32 %v6831, %v6801
        %v6833 = vadd.f32 %v6832, %v6802
        %v6834 = vadd.f32 %v6833, %v6803
        %v6835 = vadd.f32 %v6834, %v6804
        %v6836 = vadd.f32 %v6835, %v6805
        %v6837 = vadd.f32 %v6836, %v6806
        %v6838 = vadd.f32 %v6837, %v6807
        %v6839 = vadd.f32 %v6838, %v6808
        %v6840 = vadd.f32 %v6839, %v6809
        %v6841 = vadd.f32 %v6840, %v6810
        %v6842 = vadd.f32 %v6841, %v6811
        %v6843 = vadd.f32 %v6842, %v6812
        %v6844 = vadd.f32 %v6843, %v6813
        %v6845 = vadd.f32 %v6844, %v6814
        %v6846 = vadd.f32 %v6845, %v6815
        %v6847 = vadd.f32 %v6846, %v6816
        %v6848 = vadd.f32 %v6847, %v6817
        %v6849 = vadd.f32 %v6848, %v6818
        %v6850 = vadd.f32 %v6849, %v6819
        %v6851 = vadd.f32 %v6850, %v6820
        %v6852 = vadd.f32 %v6851, %v6821
        %v6853 = vadd.f32 %v6852, %v6822
        %v6854 = vadd.f32 %v6853, %v6823
        %v6855 = vadd.f32 %v6854, %v6824
        %v6856 = vadd.f32 %v6855, %v6825
        %v6857 = vadd.f32 %v6856, %v6826
        %v6858 = vrot.slane %v6857, 4
        %v6859 = vadd.f32 %v6857, %v6858
        %v6860 = vrot.slane %v6859, 2
        %v6861 = vadd.f32 %v6859, %v6860
        %v6862 = vrot.slane %v6861, 1
        %v6863 = vadd.f32 %v6861, %v6862
        %v6864 = vmul.f32 %v6863, 0.00390625
        %v6865 = vadd.f32 %v6864, 1e-05
        %v6866 = vrsqrt.pop %v6865
        %v6867 = vmul.f32 %v6763, %v6866
        %v6868 = vmul.f32 %v6764, %v6866
        %v6869 = vmul.f32 %v6765, %v6866
        %v6870 = vmul.f32 %v6766, %v6866
        %v6871 = vmul.f32 %v6767, %v6866
        %v6872 = vmul.f32 %v6768, %v6866
        %v6873 = vmul.f32 %v6769, %v6866
        %v6874 = vmul.f32 %v6770, %v6866
        %v6875 = vmul.f32 %v6771, %v6866
        %v6876 = vmul.f32 %v6772, %v6866
        %v6877 = vmul.f32 %v6773, %v6866
        %v6878 = vmul.f32 %v6774, %v6866
        %v6879 = vmul.f32 %v6775, %v6866
        %v6880 = vmul.f32 %v6776, %v6866
        %v6881 = vmul.f32 %v6777, %v6866
        %v6882 = vmul.f32 %v6778, %v6866
        %v6883 = vmul.f32 %v6779, %v6866
        %v6884 = vmul.f32 %v6780, %v6866
        %v6885 = vmul.f32 %v6781, %v6866
        %v6886 = vmul.f32 %v6782, %v6866
        %v6887 = vmul.f32 %v6783, %v6866
        %v6888 = vmul.f32 %v6784, %v6866
        %v6889 = vmul.f32 %v6785, %v6866
        %v6890 = vmul.f32 %v6786, %v6866
        %v6891 = vmul.f32 %v6787, %v6866
        %v6892 = vmul.f32 %v6788, %v6866
        %v6893 = vmul.f32 %v6789, %v6866
        %v6894 = vmul.f32 %v6790, %v6866
        %v6895 = vmul.f32 %v6791, %v6866
        %v6896 = vmul.f32 %v6792, %v6866
        %v6897 = vmul.f32 %v6793, %v6866
        %v6898 = vmul.f32 %v6794, %v6866
        %s6899 = sld [smem:[#allocation2 + $0x2]]
        %v6900 = vstv %s6899
        %v6901 = vmul.f32 %v6900, %v6867
        %v6902 = vmul.f32 %v6900, %v6868
        %v6903 = vmul.f32 %v6900, %v6869
        %v6904 = vmul.f32 %v6900, %v6870
        %v6905 = vmul.f32 %v6900, %v6871
        %v6906 = vmul.f32 %v6900, %v6872
        %v6907 = vmul.f32 %v6900, %v6873
        %v6908 = vmul.f32 %v6900, %v6874
        %v6909 = vmul.f32 %v6900, %v6875
        %v6910 = vmul.f32 %v6900, %v6876
        %v6911 = vmul.f32 %v6900, %v6877
        %v6912 = vmul.f32 %v6900, %v6878
        %v6913 = vmul.f32 %v6900, %v6879
        %v6914 = vmul.f32 %v6900, %v6880
        %v6915 = vmul.f32 %v6900, %v6881
        %v6916 = vmul.f32 %v6900, %v6882
        %v6917 = vmul.f32 %v6900, %v6883
        %v6918 = vmul.f32 %v6900, %v6884
        %v6919 = vmul.f32 %v6900, %v6885
        %v6920 = vmul.f32 %v6900, %v6886
        %v6921 = vmul.f32 %v6900, %v6887
        %v6922 = vmul.f32 %v6900, %v6888
        %v6923 = vmul.f32 %v6900, %v6889
        %v6924 = vmul.f32 %v6900, %v6890
        %v6925 = vmul.f32 %v6900, %v6891
        %v6926 = vmul.f32 %v6900, %v6892
        %v6927 = vmul.f32 %v6900, %v6893
        %v6928 = vmul.f32 %v6900, %v6894
        %v6929 = vmul.f32 %v6900, %v6895
        %v6930 = vmul.f32 %v6900, %v6896
        %v6931 = vmul.f32 %v6900, %v6897
        %v6932 = vmul.f32 %v6900, %v6898
        %v6933 = vadd.f32 %v4725, %v6901
        %v6934 = vadd.f32 %v4726, %v6902
        %v6935 = vadd.f32 %v4727, %v6903
        %v6936 = vadd.f32 %v4728, %v6904
        %v6937 = vadd.f32 %v4729, %v6905
        %v6938 = vadd.f32 %v4730, %v6906
        %v6939 = vadd.f32 %v4731, %v6907
        %v6940 = vadd.f32 %v4732, %v6908
        %v6941 = vadd.f32 %v4733, %v6909
        %v6942 = vadd.f32 %v4734, %v6910
        %v6943 = vadd.f32 %v4735, %v6911
        %v6944 = vadd.f32 %v4736, %v6912
        %v6945 = vadd.f32 %v4737, %v6913
        %v6946 = vadd.f32 %v4738, %v6914
        %v6947 = vadd.f32 %v4739, %v6915
        %v6948 = vadd.f32 %v4740, %v6916
        %v6949 = vadd.f32 %v4741, %v6917
        %v6950 = vadd.f32 %v4742, %v6918
        %v6951 = vadd.f32 %v4743, %v6919
        %v6952 = vadd.f32 %v4744, %v6920
        %v6953 = vadd.f32 %v4745, %v6921
        %v6954 = vadd.f32 %v4746, %v6922
        %v6955 = vadd.f32 %v4747, %v6923
        %v6956 = vadd.f32 %v4748, %v6924
        %v6957 = vadd.f32 %v4749, %v6925
        %v6958 = vadd.f32 %v4750, %v6926
        %v6959 = vadd.f32 %v4751, %v6927
        %v6960 = vadd.f32 %v4752, %v6928
        %v6961 = vadd.f32 %v4753, %v6929
        %v6962 = vadd.f32 %v4754, %v6930
        %v6963 = vadd.f32 %v4755, %v6931
        %v6964 = vadd.f32 %v4756, %v6932
        %6965 = vst [vmem:[%s256] sm:$0xff] %v6933
        %6966 = vst [vmem:[%s256 + $0x8] sm:$0xff] %v6934
        %6967 = vst [vmem:[%s256 + $0x10] sm:$0xff] %v6935
        %6968 = vst [vmem:[%s256 + $0x18] sm:$0xff] %v6936
        %6969 = vst [vmem:[%s256 + $0x20] sm:$0xff] %v6937
        %6970 = vst [vmem:[%s256 + $0x28] sm:$0xff] %v6938
        %6971 = vst [vmem:[%s256 + $0x30] sm:$0xff] %v6939
        %6972 = vst [vmem:[%s256 + $0x38] sm:$0xff] %v6940
        %6973 = vst [vmem:[%s256 + $0x40] sm:$0xff] %v6941
        %6974 = vst [vmem:[%s256 + $0x48] sm:$0xff] %v6942
        %6975 = vst [vmem:[%s256 + $0x50] sm:$0xff] %v6943
        %6976 = vst [vmem:[%s256 + $0x58] sm:$0xff] %v6944
        %6977 = vst [vmem:[%s256 + $0x60] sm:$0xff] %v6945
        %6978 = vst [vmem:[%s256 + $0x68] sm:$0xff] %v6946
        %6979 = vst [vmem:[%s256 + $0x70] sm:$0xff] %v6947
        %6980 = vst [vmem:[%s256 + $0x78] sm:$0xff] %v6948
        %6981 = vst [vmem:[%s256 + $0x80] sm:$0xff] %v6949
        %6982 = vst [vmem:[%s256 + $0x88] sm:$0xff] %v6950
        %6983 = vst [vmem:[%s256 + $0x90] sm:$0xff] %v6951
        %6984 = vst [vmem:[%s256 + $0x98] sm:$0xff] %v6952
        %6985 = vst [vmem:[%s256 + $0xa0] sm:$0xff] %v6953
        %6986 = vst [vmem:[%s256 + $0xa8] sm:$0xff] %v6954
        %6987 = vst [vmem:[%s256 + $0xb0] sm:$0xff] %v6955
        %6988 = vst [vmem:[%s256 + $0xb8] sm:$0xff] %v6956
        %6989 = vst [vmem:[%s256 + $0xc0] sm:$0xff] %v6957
        %6990 = vst [vmem:[%s256 + $0xc8] sm:$0xff] %v6958
        %6991 = vst [vmem:[%s256 + $0xd0] sm:$0xff] %v6959
        %6992 = vst [vmem:[%s256 + $0xd8] sm:$0xff] %v6960
        %6993 = vst [vmem:[%s256 + $0xe0] sm:$0xff] %v6961
        %6994 = vst [vmem:[%s256 + $0xe8] sm:$0xff] %v6962
        %6995 = vst [vmem:[%s256 + $0xf0] sm:$0xff] %v6963
        %6996 = vst [vmem:[%s256 + $0xf8] sm:$0xff] %v6964
        %s6997 = sand.u32 %s120, 1
        %s6998 = scalar_lea.sflag [#allocation4], %s6997
        %s6999 = sand.u32 %s120, 1
        %s7000 = smul.addr %s6999, 256
        %s7001 = scalar_lea.vmem [#allocation10], %s7000
        // Predicated region
        $region53: #{tpu_custom_call.1} parent=35 // pred_check
          %p7002 = pneg %p130
        $region54: #{tpu_custom_call.1} parent=35 // pred_check_branch
          %7004 = sbr.rel (%p7002) target = $region56
        $region55: #{tpu_custom_call.1} parent=35 // pred_region
          %s7006 = ssub.s32 4096, 4096
          %7007 = vsyncadd %s6998, %s7006
          %s7008 = smul.addr %s23, 32
          %s7009 = smul.addr %s7008, 128
          %s7010 = scalar_lea.hbm %s4, %s7009
          %s7011 = sshll.u32 %s7001, 4
          %s7012 = int_to_ptr.vmem [resolvable:$true] %s7011
          %7017 = dma.vmem_to_hbm [thread:$0]  %s7012, 4096, %s7010, %s6998, 128, 128, 8
        $region56: #{tpu_custom_call.1} parent=35 // pred_fallthru
          _
      $region36: #{tpu_custom_call.1} parent=5 // pred_fallthru
        _
      %p7018 = scmp.le.s32.totalorder 2, %s18
      // Predicated region
      $region57: #{tpu_custom_call.1} parent=5 // pred_check
        %p7019 = pneg %p7018
      $region58: #{tpu_custom_call.1} parent=5 // pred_check_branch
        %7021 = sbr.rel (%p7019) target = $region60
      $region59: #{tpu_custom_call.1} parent=5 // pred_region
        %s7022 = ssub.s32 %s18, 2
        // Predicated region
        $region61: #{tpu_custom_call.1} parent=59 // pred_check
          %p7023 = pneg %p136
        $region62: #{tpu_custom_call.1} parent=59 // pred_check_branch
          %7025 = sbr.rel (%p7023) target = $region64
        $region63: #{tpu_custom_call.1} parent=59 // pred_region
          %s7026 = sand.u32 %s121, 1
          %s7027 = scalar_lea.sflag [#allocation4], %s7026
          %s7028 = sand.u32 %s121, 1
          %s7029 = smul.addr %s7028, 256
          %s7030 = scalar_lea.vmem [#allocation10], %s7029
          %7031 = dma.done %s7027, 4096
        $region64: #{tpu_custom_call.1} parent=59 // pred_fallthru
          _
      $region60: #{tpu_custom_call.1} parent=5 // pred_fallthru
        _
    $region6: #{tpu_custom_call.1} parent=1 // loop_footer
      %s22 = sadd.s32 1, %s18
    $region7: #{tpu_custom_call.1} parent=1 // loop_footer_branch
      %17 = sbr.rel target = $region3
    $region8: #{tpu_custom_call.1} parent=1 // loop_exit
      _
    %7032 = vsyncpa [#allocation3], 1
    %s7033 = scalar_lea.sflag [#allocation3], 1
    %7034 = vsyncpa %s7033, 1
    %7035 = vsyncpa [#allocation8], 1
    %7036 = vsyncpa [#allocation4], 1
    %s7037 = scalar_lea.sflag [#allocation4], 1
    %7038 = vsyncpa %s7037, 1
    %7039 = vsyncpa [#allocation5], 1
    %s7040 = scalar_lea.sflag [#allocation5], 1
    %7041 = vsyncpa %s7040, 1

</llo_original>
